<compile_context>
chip_gen: v7x
topology: tpu7x:2x2x1
jax: 0.10.0
libtpu: 0.0.40
codegen_flags: <defaults>
</compile_context>

<pallas_src>
import jax
import jax.numpy as jnp
from jax.experimental import pallas as pl
from jax.experimental.pallas import tpu as pltpu


# ----------------------------------------------------------------------------
# Helpers
# ----------------------------------------------------------------------------
def _round_up(x, m):
    return (x + m - 1) // m * m


def _pad2(x, rows, cols):
    pr, pc = rows - x.shape[0], cols - x.shape[1]
    if pr or pc:
        x = jnp.pad(x, ((0, pr), (0, pc)))
    return x


_VMEM_LIMIT = 32 * 1024 * 1024  # explicit scoped-VMEM budget (fits v5e/v6e/v7x)


# ----------------------------------------------------------------------------
# Pallas kernel 1: K-tiled matmul + folded-BN affine + SiLU
#   grid = (M blocks, N blocks, K blocks); f32 accumulator scratch in VMEM.
# ----------------------------------------------------------------------------
def _mm_bn_silu_kernel(x_ref, w_ref, s_ref, b_ref, o_ref, acc_ref):
    @pl.when(pl.program_id(2) == 0)
    def _init():
        acc_ref[...] = jnp.zeros_like(acc_ref)

    acc_ref[...] += jnp.dot(x_ref[...], w_ref[...],
                            preferred_element_type=jnp.float32)

    @pl.when(pl.program_id(2) == pl.num_programs(2) - 1)
    def _finalize():
        y = acc_ref[...] * s_ref[...] + b_ref[...]
        sig = pl.reciprocal(1.0 + jnp.exp(-y), approx=True)   # EUP, not VALU divide
        o_ref[...] = (y * sig).astype(o_ref.dtype)


def matmul_bn_silu(x2d, w, scale, bias, out_dtype=jnp.bfloat16):
    """x2d: (M, K), w: (K, N), scale/bias: (1, N) -> SiLU(x2d @ w * scale + bias)."""
    M, K = x2d.shape
    K2, N = w.shape
    assert K == K2, (K, K2)

    TM = min(512, _round_up(M, 16))
    TK = min(512, _round_up(K, 128))
    TN = min(512, _round_up(N, 128))
    Mp, Kp, Np = _round_up(M, TM), _round_up(K, TK), _round_up(N, TN)

    xb = _pad2(x2d.astype(jnp.bfloat16), Mp, Kp)      # bf16 MXU inputs
    wb = _pad2(w.astype(jnp.bfloat16), Kp, Np)
    sb = _pad2(scale.astype(jnp.float32), 1, Np)
    bb = _pad2(bias.astype(jnp.float32), 1, Np)

    out = pl.pallas_call(
        _mm_bn_silu_kernel,
        out_shape=jax.ShapeDtypeStruct((Mp, Np), out_dtype),
        grid=(Mp // TM, Np // TN, Kp // TK),
        in_specs=[
            pl.BlockSpec((TM, TK), lambda i, j, k: (i, k)),
            pl.BlockSpec((TK, TN), lambda i, j, k: (k, j)),
            pl.BlockSpec((1, TN), lambda i, j, k: (0, j)),
            pl.BlockSpec((1, TN), lambda i, j, k: (0, j)),
        ],
        out_specs=pl.BlockSpec((TM, TN), lambda i, j, k: (i, j)),
        scratch_shapes=[pltpu.VMEM((TM, TN), jnp.float32)],
        compiler_params=pltpu.CompilerParams(
            dimension_semantics=("parallel", "parallel", "arbitrary"),
            vmem_limit_bytes=_VMEM_LIMIT),
    )(xb, wb, sb, bb)
    return out[:M, :N]


# ----------------------------------------------------------------------------
# Pallas kernel 2: split-weight dual-input matmul + BN + SiLU
#   Computes SiLU((A @ Wa + B @ Wb) * scale + bias), i.e. a channel-concat
#   [A | B] followed by a 1x1 conv, WITHOUT materializing the concat in HBM.
# ----------------------------------------------------------------------------
def _mm2_bn_silu_kernel(a_ref, b_ref, wa_ref, wb_ref, s_ref, bias_ref, o_ref):
    acc = jnp.dot(a_ref[...], wa_ref[...], preferred_element_type=jnp.float32)
    acc = acc + jnp.dot(b_ref[...], wb_ref[...], preferred_element_type=jnp.float32)
    y = acc * s_ref[...] + bias_ref[...]
    sig = pl.reciprocal(1.0 + jnp.exp(-y), approx=True)
    o_ref[...] = (y * sig).astype(o_ref.dtype)


def concat_matmul_bn_silu(a2d, b2d, w, scale, bias, out_dtype=jnp.bfloat16):
    """a2d: (M, Ka), b2d: (M, Kb), w: (Ka+Kb, N) split row-wise inside."""
    M, Ka = a2d.shape
    Mb, Kb = b2d.shape
    assert M == Mb, (M, Mb)
    Ktot, N = w.shape
    assert Ktot == Ka + Kb, (Ktot, Ka, Kb)

    TM = min(512, _round_up(M, 16))
    TN = min(512, _round_up(N, 128))
    Mp, Np = _round_up(M, TM), _round_up(N, TN)
    Kap, Kbp = _round_up(Ka, 128), _round_up(Kb, 128)

    ab = _pad2(a2d.astype(jnp.bfloat16), Mp, Kap)
    bb = _pad2(b2d.astype(jnp.bfloat16), Mp, Kbp)
    wa = _pad2(w[:Ka].astype(jnp.bfloat16), Kap, Np)
    wb = _pad2(w[Ka:].astype(jnp.bfloat16), Kbp, Np)
    sb = _pad2(scale.astype(jnp.float32), 1, Np)
    bi = _pad2(bias.astype(jnp.float32), 1, Np)

    out = pl.pallas_call(
        _mm2_bn_silu_kernel,
        out_shape=jax.ShapeDtypeStruct((Mp, Np), out_dtype),
        grid=(Mp // TM, Np // TN),
        in_specs=[
            pl.BlockSpec((TM, Kap), lambda i, j: (i, 0)),
            pl.BlockSpec((TM, Kbp), lambda i, j: (i, 0)),
            pl.BlockSpec((Kap, TN), lambda i, j: (0, j)),
            pl.BlockSpec((Kbp, TN), lambda i, j: (0, j)),
            pl.BlockSpec((1, TN), lambda i, j: (0, j)),
            pl.BlockSpec((1, TN), lambda i, j: (0, j)),
        ],
        out_specs=pl.BlockSpec((TM, TN), lambda i, j: (i, j)),
        compiler_params=pltpu.CompilerParams(
            dimension_semantics=("parallel", "parallel"),
            vmem_limit_bytes=_VMEM_LIMIT),
    )(ab, bb, wa, wb, sb, bi)
    return out[:M, :N]


# ----------------------------------------------------------------------------
# JAX glue: im2col for 3x3 convs (pad=1), nearest 2x upsample (both in bf16)
# ----------------------------------------------------------------------------
def im2col_3x3(x, stride):
    N, H, W, C = x.shape
    xp = jnp.pad(x, ((0, 0), (1, 1), (1, 1), (0, 0)))
    Ho = (H + 2 - 3) // stride + 1
    Wo = (W + 2 - 3) // stride + 1
    cols = []
    for kh in range(3):
        for kw in range(3):
            cols.append(xp[:, kh:kh + stride * Ho:stride,
                           kw:kw + stride * Wo:stride, :])
    x2d = jnp.concatenate(cols, axis=-1).reshape(N * Ho * Wo, 9 * C)
    return x2d, (Ho, Wo)


def upsample2x(x):
    # nn.Upsample(scale_factor=2, mode='nearest') in NHWC
    return jnp.repeat(jnp.repeat(x, 2, axis=1), 2, axis=2)


# ----------------------------------------------------------------------------
# Parameter init (deterministic, synthetic) + block application
# ----------------------------------------------------------------------------
def init_cbs(key, cin, cout, k):
    kw_, kg, kb, km, kv = jax.random.split(key, 5)
    w = jax.random.normal(kw_, (k * k * cin, cout), jnp.float32) / jnp.sqrt(k * k * cin)
    gamma = 1.0 + 0.1 * jax.random.normal(kg, (cout,), jnp.float32)
    beta = 0.1 * jax.random.normal(kb, (cout,), jnp.float32)
    mean = 0.1 * jax.random.normal(km, (cout,), jnp.float32)
    var = 1.0 + 0.1 * jnp.abs(jax.random.normal(kv, (cout,), jnp.float32))
    scale = gamma / jnp.sqrt(var + 1e-5)           # BatchNorm2d eval-mode fold
    bias = beta - mean * scale
    return {"w": w, "scale": scale.reshape(1, cout),
            "bias": bias.reshape(1, cout), "k": k}


def cbs_apply(p, x, stride=1, out_dtype=jnp.bfloat16):
    x = x.astype(jnp.bfloat16)
    N, H, W, C = x.shape
    if p["k"] == 1:
        x2d, (Ho, Wo) = x.reshape(N * H * W, C), (H, W)
    else:
        x2d, (Ho, Wo) = im2col_3x3(x, stride)
    out = matmul_bn_silu(x2d, p["w"], p["scale"], p["bias"], out_dtype=out_dtype)
    return out.reshape(N, Ho, Wo, -1)


def init_c3(key, cin, cout, depth):
    # Standard YOLOv5 C3: cv1/cv2 1x1 -> hidden c_=cout//2, bottlenecks, cv3 1x1.
    c_ = max(cout // 2, 1)
    ks = jax.random.split(key, 3 + 2 * depth)
    cv1 = init_cbs(ks[0], cin, c_, 1)
    cv2 = init_cbs(ks[1], cin, c_, 1)
    # Fuse cv1 | cv2 along output channels: one matmul reads x once.
    cv12 = {"w": jnp.concatenate([cv1["w"], cv2["w"]], axis=1),
            "scale": jnp.concatenate([cv1["scale"], cv2["scale"]], axis=1),
            "bias": jnp.concatenate([cv1["bias"], cv2["bias"]], axis=1)}
    return {
        "c_": c_,
        "cv12": cv12,
        "cv3": init_cbs(ks[2], 2 * c_, cout, 1),
        "m": [{"cv1": init_cbs(ks[3 + 2 * i], c_, c_, 1),
               "cv2": init_cbs(ks[4 + 2 * i], c_, c_, 3)} for i in range(depth)],
    }


def c3_apply(p, x, out_dtype=jnp.bfloat16):
    """x is either an NHWC array or a pair (a, b) meaning channel-concat [a | b]."""
    if isinstance(x, tuple):
        a, b = x
        Nn, Hh, Ww, Ca = a.shape
        y12 = concat_matmul_bn_silu(
            a.reshape(-1, Ca), b.reshape(-1, b.shape[-1]),
            p["cv12"]["w"], p["cv12"]["scale"], p["cv12"]["bias"])
    else:
        Nn, Hh, Ww, C = x.shape
        y12 = matmul_bn_silu(x.reshape(-1, C),
                             p["cv12"]["w"], p["cv12"]["scale"], p["cv12"]["bias"])
    c_ = p["c_"]
    y = y12[:, :c_].reshape(Nn, Hh, Ww, c_)
    y2 = y12[:, c_:].reshape(Nn, Hh, Ww, c_)
    for bp in p["m"]:
        # Bottleneck with shortcut=False -> plain 1x1 then 3x3, no residual add
        y = cbs_apply(bp["cv2"], cbs_apply(bp["cv1"], y), stride=1)
    # cv3 over the *virtual* concat [y | y2] (split-weight sum, no HBM concat)
    out2d = concat_matmul_bn_silu(
        y.reshape(-1, c_), y2.reshape(-1, c_),
        p["cv3"]["w"], p["cv3"]["scale"], p["cv3"]["bias"], out_dtype=out_dtype)
    return out2d.reshape(Nn, Hh, Ww, -1)


# ----------------------------------------------------------------------------
# Neck
# ----------------------------------------------------------------------------
def init_neck(key, wm, dm):
    ac = lambda c: max(int(c * wm), 1)
    ad = lambda d: max(int(d * dm), 1)
    ks = jax.random.split(key, 8)
    return {
        "cbs_k1_s1_c512": init_cbs(ks[0], ac(1024), ac(512), 1),
        "c3_c512_up":     init_c3(ks[1], ac(1024), ac(512), ad(3)),
        "cbs_k1_s1_c256": init_cbs(ks[2], ac(512), ac(256), 1),
        "c3_c256":        init_c3(ks[3], ac(512), ac(256), ad(3)),
        "cbs_k3_s2_c256": init_cbs(ks[4], ac(256), ac(256), 3),
        "c3_c512_down":   init_c3(ks[5], ac(512), ac(512), ad(3)),
        "cbs_k3_s2_c512": init_cbs(ks[6], ac(512), ac(512), 3),
        "c3_c1024":       init_c3(ks[7], ac(1024), ac(1024), ad(3)),
    }


def neck_forward(params, x0, x1, x2):
    # Mirrors Neck.forward; every torch.cat([A, B], dim=1) -> virtual concat (A, B)
    # consumed by a split-weight kernel (operand order preserved).
    y1 = cbs_apply(params["cbs_k1_s1_c512"], x2)
    t = c3_apply(params["c3_c512_up"], (x1, upsample2x(y1)))
    y2 = cbs_apply(params["cbs_k1_s1_c256"], t)
    z1 = c3_apply(params["c3_c256"], (x0, upsample2x(y2)), out_dtype=jnp.float32)
    z2 = c3_apply(params["c3_c512_down"],
                  (cbs_apply(params["cbs_k3_s2_c256"], z1, stride=2), y2),
                  out_dtype=jnp.float32)
    z3 = c3_apply(params["c3_c1024"],
                  (cbs_apply(params["cbs_k3_s2_c512"], z2, stride=2), y1),
                  out_dtype=jnp.float32)
    return z1, z2, z3


if __name__ == "__main__":
    # Small synthetic config: width_multiple=1/64 -> channels (4, 8, 16),
    # depth_multiple=0.34 -> C3 depth 1.  Pyramid spatial sizes 16 / 8 / 4.
    wm, dm = 1.0 / 64.0, 0.34
    C256, C512, C1024 = (max(int(c * wm), 1) for c in (256, 512, 1024))
    S = 16

    key = jax.random.PRNGKey(0)
    kp, k0, k1, k2 = jax.random.split(key, 4)
    params = init_neck(kp, wm, dm)

    x0 = jax.random.normal(k0, (2, S, S, C256), jnp.float32)               # finest
    x1 = jax.random.normal(k1, (2, S // 2, S // 2, C512), jnp.float32)
    x2 = jax.random.normal(k2, (2, S // 4, S // 4, C1024), jnp.float32)    # coarsest

    fwd = jax.jit(lambda a, b, c: neck_forward(params, a, b, c))
    z1, z2, z3 = fwd(x0, x1, x2)
    jax.block_until_ready((z1, z2, z3))

    assert z1.shape == (2, S, S, C256) and z1.dtype == jnp.float32
    assert z2.shape == (2, S // 2, S // 2, C512) and z2.dtype == jnp.float32
    assert z3.shape == (2, S // 4, S // 4, C1024) and z3.dtype == jnp.float32
    print("KERNEL_OK")
</pallas_src>

<mosaic_0001>
module attributes {stable_mosaic.version = 11 : i64} {
  func.func @_mm_bn_silu_kernel(%arg0: i32, %arg1: i32, %arg2: i32, %arg3: memref<32x128xbf16, #tpu.memory_space<vmem>>, %arg4: memref<128x128xbf16, #tpu.memory_space<vmem>>, %arg5: memref<1x128xf32, #tpu.memory_space<vmem>>, %arg6: memref<1x128xf32, #tpu.memory_space<vmem>>, %arg7: memref<32x128xbf16, #tpu.memory_space<vmem>>, %arg8: memref<32x128xf32, #tpu.memory_space<vmem>>) attributes {dimension_semantics = [#tpu.dimension_semantics<parallel>, #tpu.dimension_semantics<parallel>, #tpu.dimension_semantics<arbitrary>], iteration_bounds = array<i64: 1, 1, 1>, scalar_prefetch = 0 : i64, scratch_operands = 1 : i64, tpu.core_type = #tpu.core_type<tc>, window_params = [{transform_indices = @transform_0, window_bounds = array<i64: 32, 128>}, {transform_indices = @transform_1, window_bounds = array<i64: 128, 128>}, {transform_indices = @transform_2, window_bounds = array<i64: 1, 128>}, {transform_indices = @transform_3, window_bounds = array<i64: 1, 128>}, {transform_indices = @transform_4, window_bounds = array<i64: 32, 128>}]} {
    %c0_i32 = arith.constant 0 : i32
    %0 = arith.cmpi eq, %arg2, %c0_i32 : i32
    %1 = arith.extui %0 : i1 to i32
    %c0_i32_0 = arith.constant 0 : i32
    %2 = arith.cmpi ne, %1, %c0_i32_0 : i32
    scf.if %2 {
      %cst_10 = arith.constant 0.000000e+00 : f32
      %12 = vector.broadcast %cst_10 : f32 to vector<32x128xf32>
      %c0_11 = arith.constant 0 : index
      %c0_12 = arith.constant 0 : index
      %13 = vector.load %arg8[%c0_11, %c0_12] : memref<32x128xf32, #tpu.memory_space<vmem>>, vector<32x128xf32>
      tpu.vector_store %arg8[%c0_11, %c0_12], %12 {strides = array<i32>} : memref<32x128xf32, #tpu.memory_space<vmem>>, vector<32x128xf32>,
    } else {
    }
    %c0 = arith.constant 0 : index
    %c0_1 = arith.constant 0 : index
    %3 = vector.load %arg8[%c0, %c0_1] : memref<32x128xf32, #tpu.memory_space<vmem>>, vector<32x128xf32>
    %c0_2 = arith.constant 0 : index
    %c0_3 = arith.constant 0 : index
    %4 = vector.load %arg3[%c0_2, %c0_3] : memref<32x128xbf16, #tpu.memory_space<vmem>>, vector<32x128xbf16>
    %c0_4 = arith.constant 0 : index
    %c0_5 = arith.constant 0 : index
    %5 = vector.load %arg4[%c0_4, %c0_5] : memref<128x128xbf16, #tpu.memory_space<vmem>>, vector<128x128xbf16>
    %cst = arith.constant dense<0.000000e+00> : vector<32x128xf32>
    %6 = tpu.matmul %4, %5, %cst {dimension_numbers = #tpu.dot_dimension_numbers<[1], [0], [0], [1], [0, 0, 1, 1], [], []>} : vector<32x128xbf16>, vector<128x128xbf16>, vector<32x128xf32> -> vector<32x128xf32>
    %7 = arith.addf %3, %6 : vector<32x128xf32>
    %c0_6 = arith.constant 0 : index
    %c0_7 = arith.constant 0 : index
    %8 = vector.load %arg8[%c0_6, %c0_7] : memref<32x128xf32, #tpu.memory_space<vmem>>, vector<32x128xf32>
    tpu.vector_store %arg8[%c0_6, %c0_7], %7 {strides = array<i32>} : memref<32x128xf32, #tpu.memory_space<vmem>>, vector<32x128xf32>,
    %c0_i32_8 = arith.constant 0 : i32
    %9 = arith.cmpi eq, %arg2, %c0_i32_8 : i32
    %10 = arith.extui %9 : i1 to i32
    %c0_i32_9 = arith.constant 0 : i32
    %11 = arith.cmpi ne, %10, %c0_i32_9 : i32
    scf.if %11 {
      %c0_10 = arith.constant 0 : index
      %c0_11 = arith.constant 0 : index
      %12 = vector.load %arg8[%c0_10, %c0_11] : memref<32x128xf32, #tpu.memory_space<vmem>>, vector<32x128xf32>
      %c0_12 = arith.constant 0 : index
      %c0_13 = arith.constant 0 : index
      %13 = vector.load %arg5[%c0_12, %c0_13] : memref<1x128xf32, #tpu.memory_space<vmem>>, vector<1x128xf32>
      %14 = vector.broadcast %13 : vector<1x128xf32> to vector<32x128xf32>
      %15 = arith.mulf %12, %14 : vector<32x128xf32>
      %c0_14 = arith.constant 0 : index
      %c0_15 = arith.constant 0 : index
      %16 = vector.load %arg6[%c0_14, %c0_15] : memref<1x128xf32, #tpu.memory_space<vmem>>, vector<1x128xf32>
      %17 = vector.broadcast %16 : vector<1x128xf32> to vector<32x128xf32>
      %18 = arith.addf %15, %17 : vector<32x128xf32>
      %cst_16 = arith.constant 0.000000e+00 : f32
      %19 = vector.broadcast %cst_16 : f32 to vector<32x128xf32>
      %20 = arith.subf %19, %18 : vector<32x128xf32>
      %21 = math.exp %20 : vector<32x128xf32>
      %cst_17 = arith.constant 1.000000e+00 : f32
      %22 = vector.broadcast %cst_17 : f32 to vector<32x128xf32>
      %23 = arith.addf %22, %21 : vector<32x128xf32>
      %24 = tpu.reciprocal %23 {approx = true} : vector<32x128xf32> -> vector<32x128xf32>
      %25 = arith.mulf %18, %24 : vector<32x128xf32>
      %26 = arith.truncf %25 : vector<32x128xf32> to vector<32x128xbf16>
      %c0_18 = arith.constant 0 : index
      %c0_19 = arith.constant 0 : index
      %27 = vector.load %arg7[%c0_18, %c0_19] : memref<32x128xbf16, #tpu.memory_space<vmem>>, vector<32x128xbf16>
      tpu.vector_store %arg7[%c0_18, %c0_19], %26 {strides = array<i32>} : memref<32x128xbf16, #tpu.memory_space<vmem>>, vector<32x128xbf16>,
    } else {
    }
    return
  }
  func.func @transform_0(%arg0: i32, %arg1: i32, %arg2: i32) -> (i32, i32) {
    %c0_i32 = arith.constant 0 : i32
    return %arg0, %arg2 : i32, i32
  }
  func.func @transform_1(%arg0: i32, %arg1: i32, %arg2: i32) -> (i32, i32) {
    %c0_i32 = arith.constant 0 : i32
    return %arg2, %arg1 : i32, i32
  }
  func.func @transform_2(%arg0: i32, %arg1: i32, %arg2: i32) -> (i32, i32) {
    %c0_i32 = arith.constant 0 : i32
    %c0_i32_0 = arith.constant 0 : i32
    return %c0_i32, %arg1 : i32, i32
  }
  func.func @transform_3(%arg0: i32, %arg1: i32, %arg2: i32) -> (i32, i32) {
    %c0_i32 = arith.constant 0 : i32
    %c0_i32_0 = arith.constant 0 : i32
    return %c0_i32, %arg1 : i32, i32
  }
  func.func @transform_4(%arg0: i32, %arg1: i32, %arg2: i32) -> (i32, i32) {
    %c0_i32 = arith.constant 0 : i32
    return %arg0, %arg1 : i32, i32
  }
}

module attributes {stable_mosaic.version = 11 : i64} {
  func.func @_mm_bn_silu_kernel(%arg0: i32, %arg1: i32, %arg2: i32, %arg3: memref<128x128xbf16, #tpu.memory_space<vmem>>, %arg4: memref<128x128xbf16, #tpu.memory_space<vmem>>, %arg5: memref<1x128xf32, #tpu.memory_space<vmem>>, %arg6: memref<1x128xf32, #tpu.memory_space<vmem>>, %arg7: memref<128x128xbf16, #tpu.memory_space<vmem>>, %arg8: memref<128x128xf32, #tpu.memory_space<vmem>>) attributes {dimension_semantics = [#tpu.dimension_semantics<parallel>, #tpu.dimension_semantics<parallel>, #tpu.dimension_semantics<arbitrary>], iteration_bounds = array<i64: 1, 1, 1>, scalar_prefetch = 0 : i64, scratch_operands = 1 : i64, tpu.core_type = #tpu.core_type<tc>, window_params = [{transform_indices = @transform_0, window_bounds = array<i64: 128, 128>}, {transform_indices = @transform_1, window_bounds = array<i64: 128, 128>}, {transform_indices = @transform_2, window_bounds = array<i64: 1, 128>}, {transform_indices = @transform_3, window_bounds = array<i64: 1, 128>}, {transform_indices = @transform_4, window_bounds = array<i64: 128, 128>}]} {
    %c0_i32 = arith.constant 0 : i32
    %0 = arith.cmpi eq, %arg2, %c0_i32 : i32
    %1 = arith.extui %0 : i1 to i32
    %c0_i32_0 = arith.constant 0 : i32
    %2 = arith.cmpi ne, %1, %c0_i32_0 : i32
    scf.if %2 {
      %cst_10 = arith.constant 0.000000e+00 : f32
      %12 = vector.broadcast %cst_10 : f32 to vector<128x128xf32>
      %c0_11 = arith.constant 0 : index
      %c0_12 = arith.constant 0 : index
      %13 = vector.load %arg8[%c0_11, %c0_12] : memref<128x128xf32, #tpu.memory_space<vmem>>, vector<128x128xf32>
      tpu.vector_store %arg8[%c0_11, %c0_12], %12 {strides = array<i32>} : memref<128x128xf32, #tpu.memory_space<vmem>>, vector<128x128xf32>,
    } else {
    }
    %c0 = arith.constant 0 : index
    %c0_1 = arith.constant 0 : index
    %3 = vector.load %arg8[%c0, %c0_1] : memref<128x128xf32, #tpu.memory_space<vmem>>, vector<128x128xf32>
    %c0_2 = arith.constant 0 : index
    %c0_3 = arith.constant 0 : index
    %4 = vector.load %arg3[%c0_2, %c0_3] : memref<128x128xbf16, #tpu.memory_space<vmem>>, vector<128x128xbf16>
    %c0_4 = arith.constant 0 : index
    %c0_5 = arith.constant 0 : index
    %5 = vector.load %arg4[%c0_4, %c0_5] : memref<128x128xbf16, #tpu.memory_space<vmem>>, vector<128x128xbf16>
    %cst = arith.constant dense<0.000000e+00> : vector<128x128xf32>
    %6 = tpu.matmul %4, %5, %cst {dimension_numbers = #tpu.dot_dimension_numbers<[1], [0], [0], [1], [0, 0, 1, 1], [], []>} : vector<128x128xbf16>, vector<128x128xbf16>, vector<128x128xf32> -> vector<128x128xf32>
    %7 = arith.addf %3, %6 : vector<128x128xf32>
    %c0_6 = arith.constant 0 : index
    %c0_7 = arith.constant 0 : index
    %8 = vector.load %arg8[%c0_6, %c0_7] : memref<128x128xf32, #tpu.memory_space<vmem>>, vector<128x128xf32>
    tpu.vector_store %arg8[%c0_6, %c0_7], %7 {strides = array<i32>} : memref<128x128xf32, #tpu.memory_space<vmem>>, vector<128x128xf32>,
    %c0_i32_8 = arith.constant 0 : i32
    %9 = arith.cmpi eq, %arg2, %c0_i32_8 : i32
    %10 = arith.extui %9 : i1 to i32
    %c0_i32_9 = arith.constant 0 : i32
    %11 = arith.cmpi ne, %10, %c0_i32_9 : i32
    scf.if %11 {
      %c0_10 = arith.constant 0 : index
      %c0_11 = arith.constant 0 : index
      %12 = vector.load %arg8[%c0_10, %c0_11] : memref<128x128xf32, #tpu.memory_space<vmem>>, vector<128x128xf32>
      %c0_12 = arith.constant 0 : index
      %c0_13 = arith.constant 0 : index
      %13 = vector.load %arg5[%c0_12, %c0_13] : memref<1x128xf32, #tpu.memory_space<vmem>>, vector<1x128xf32>
      %14 = vector.broadcast %13 : vector<1x128xf32> to vector<128x128xf32>
      %15 = arith.mulf %12, %14 : vector<128x128xf32>
      %c0_14 = arith.constant 0 : index
      %c0_15 = arith.constant 0 : index
      %16 = vector.load %arg6[%c0_14, %c0_15] : memref<1x128xf32, #tpu.memory_space<vmem>>, vector<1x128xf32>
      %17 = vector.broadcast %16 : vector<1x128xf32> to vector<128x128xf32>
      %18 = arith.addf %15, %17 : vector<128x128xf32>
      %cst_16 = arith.constant 0.000000e+00 : f32
      %19 = vector.broadcast %cst_16 : f32 to vector<128x128xf32>
      %20 = arith.subf %19, %18 : vector<128x128xf32>
      %21 = math.exp %20 : vector<128x128xf32>
      %cst_17 = arith.constant 1.000000e+00 : f32
      %22 = vector.broadcast %cst_17 : f32 to vector<128x128xf32>
      %23 = arith.addf %22, %21 : vector<128x128xf32>
      %24 = tpu.reciprocal %23 {approx = true} : vector<128x128xf32> -> vector<128x128xf32>
      %25 = arith.mulf %18, %24 : vector<128x128xf32>
      %26 = arith.truncf %25 : vector<128x128xf32> to vector<128x128xbf16>
      %c0_18 = arith.constant 0 : index
      %c0_19 = arith.constant 0 : index
      %27 = vector.load %arg7[%c0_18, %c0_19] : memref<128x128xbf16, #tpu.memory_space<vmem>>, vector<128x128xbf16>
      tpu.vector_store %arg7[%c0_18, %c0_19], %26 {strides = array<i32>} : memref<128x128xbf16, #tpu.memory_space<vmem>>, vector<128x128xbf16>,
    } else {
    }
    return
  }
  func.func @transform_0(%arg0: i32, %arg1: i32, %arg2: i32) -> (i32, i32) {
    %c0_i32 = arith.constant 0 : i32
    return %arg0, %arg2 : i32, i32
  }
  func.func @transform_1(%arg0: i32, %arg1: i32, %arg2: i32) -> (i32, i32) {
    %c0_i32 = arith.constant 0 : i32
    return %arg2, %arg1 : i32, i32
  }
  func.func @transform_2(%arg0: i32, %arg1: i32, %arg2: i32) -> (i32, i32) {
    %c0_i32 = arith.constant 0 : i32
    %c0_i32_0 = arith.constant 0 : i32
    return %c0_i32, %arg1 : i32, i32
  }
  func.func @transform_3(%arg0: i32, %arg1: i32, %arg2: i32) -> (i32, i32) {
    %c0_i32 = arith.constant 0 : i32
    %c0_i32_0 = arith.constant 0 : i32
    return %c0_i32, %arg1 : i32, i32
  }
  func.func @transform_4(%arg0: i32, %arg1: i32, %arg2: i32) -> (i32, i32) {
    %c0_i32 = arith.constant 0 : i32
    return %arg0, %arg1 : i32, i32
  }
}

module attributes {stable_mosaic.version = 11 : i64} {
  func.func @_mm2_bn_silu_kernel(%arg0: i32, %arg1: i32, %arg2: memref<128x128xbf16, #tpu.memory_space<vmem>>, %arg3: memref<128x128xbf16, #tpu.memory_space<vmem>>, %arg4: memref<128x128xbf16, #tpu.memory_space<vmem>>, %arg5: memref<128x128xbf16, #tpu.memory_space<vmem>>, %arg6: memref<1x128xf32, #tpu.memory_space<vmem>>, %arg7: memref<1x128xf32, #tpu.memory_space<vmem>>, %arg8: memref<128x128xbf16, #tpu.memory_space<vmem>>) attributes {dimension_semantics = [#tpu.dimension_semantics<parallel>, #tpu.dimension_semantics<parallel>], iteration_bounds = array<i64: 1, 1>, scalar_prefetch = 0 : i64, scratch_operands = 0 : i64, tpu.core_type = #tpu.core_type<tc>, window_params = [{transform_indices = @transform_0, window_bounds = array<i64: 128, 128>}, {transform_indices = @transform_1, window_bounds = array<i64: 128, 128>}, {transform_indices = @transform_2, window_bounds = array<i64: 128, 128>}, {transform_indices = @transform_3, window_bounds = array<i64: 128, 128>}, {transform_indices = @transform_4, window_bounds = array<i64: 1, 128>}, {transform_indices = @transform_5, window_bounds = array<i64: 1, 128>}, {transform_indices = @transform_6, window_bounds = array<i64: 128, 128>}]} {
    %c0 = arith.constant 0 : index
    %c0_0 = arith.constant 0 : index
    %0 = vector.load %arg2[%c0, %c0_0] : memref<128x128xbf16, #tpu.memory_space<vmem>>, vector<128x128xbf16>
    %c0_1 = arith.constant 0 : index
    %c0_2 = arith.constant 0 : index
    %1 = vector.load %arg4[%c0_1, %c0_2] : memref<128x128xbf16, #tpu.memory_space<vmem>>, vector<128x128xbf16>
    %cst = arith.constant dense<0.000000e+00> : vector<128x128xf32>
    %2 = tpu.matmul %0, %1, %cst {dimension_numbers = #tpu.dot_dimension_numbers<[1], [0], [0], [1], [0, 0, 1, 1], [], []>} : vector<128x128xbf16>, vector<128x128xbf16>, vector<128x128xf32> -> vector<128x128xf32>
    %c0_3 = arith.constant 0 : index
    %c0_4 = arith.constant 0 : index
    %3 = vector.load %arg3[%c0_3, %c0_4] : memref<128x128xbf16, #tpu.memory_space<vmem>>, vector<128x128xbf16>
    %c0_5 = arith.constant 0 : index
    %c0_6 = arith.constant 0 : index
    %4 = vector.load %arg5[%c0_5, %c0_6] : memref<128x128xbf16, #tpu.memory_space<vmem>>, vector<128x128xbf16>
    %cst_7 = arith.constant dense<0.000000e+00> : vector<128x128xf32>
    %5 = tpu.matmul %3, %4, %cst_7 {dimension_numbers = #tpu.dot_dimension_numbers<[1], [0], [0], [1], [0, 0, 1, 1], [], []>} : vector<128x128xbf16>, vector<128x128xbf16>, vector<128x128xf32> -> vector<128x128xf32>
    %6 = arith.addf %2, %5 : vector<128x128xf32>
    %c0_8 = arith.constant 0 : index
    %c0_9 = arith.constant 0 : index
    %7 = vector.load %arg6[%c0_8, %c0_9] : memref<1x128xf32, #tpu.memory_space<vmem>>, vector<1x128xf32>
    %8 = vector.broadcast %7 : vector<1x128xf32> to vector<128x128xf32>
    %9 = arith.mulf %6, %8 : vector<128x128xf32>
    %c0_10 = arith.constant 0 : index
    %c0_11 = arith.constant 0 : index
    %10 = vector.load %arg7[%c0_10, %c0_11] : memref<1x128xf32, #tpu.memory_space<vmem>>, vector<1x128xf32>
    %11 = vector.broadcast %10 : vector<1x128xf32> to vector<128x128xf32>
    %12 = arith.addf %9, %11 : vector<128x128xf32>
    %cst_12 = arith.constant 0.000000e+00 : f32
    %13 = vector.broadcast %cst_12 : f32 to vector<128x128xf32>
    %14 = arith.subf %13, %12 : vector<128x128xf32>
    %15 = math.exp %14 : vector<128x128xf32>
    %cst_13 = arith.constant 1.000000e+00 : f32
    %16 = vector.broadcast %cst_13 : f32 to vector<128x128xf32>
    %17 = arith.addf %16, %15 : vector<128x128xf32>
    %18 = tpu.reciprocal %17 {approx = true} : vector<128x128xf32> -> vector<128x128xf32>
    %19 = arith.mulf %12, %18 : vector<128x128xf32>
    %20 = arith.truncf %19 : vector<128x128xf32> to vector<128x128xbf16>
    %c0_14 = arith.constant 0 : index
    %c0_15 = arith.constant 0 : index
    %21 = vector.load %arg8[%c0_14, %c0_15] : memref<128x128xbf16, #tpu.memory_space<vmem>>, vector<128x128xbf16>
    tpu.vector_store %arg8[%c0_14, %c0_15], %20 {strides = array<i32>} : memref<128x128xbf16, #tpu.memory_space<vmem>>, vector<128x128xbf16>,
    return
  }
  func.func @transform_0(%arg0: i32, %arg1: i32) -> (i32, i32) {
    %c0_i32 = arith.constant 0 : i32
    %c0_i32_0 = arith.constant 0 : i32
    return %arg0, %c0_i32 : i32, i32
  }
  func.func @transform_1(%arg0: i32, %arg1: i32) -> (i32, i32) {
    %c0_i32 = arith.constant 0 : i32
    %c0_i32_0 = arith.constant 0 : i32
    return %arg0, %c0_i32 : i32, i32
  }
  func.func @transform_2(%arg0: i32, %arg1: i32) -> (i32, i32) {
    %c0_i32 = arith.constant 0 : i32
    %c0_i32_0 = arith.constant 0 : i32
    return %c0_i32, %arg1 : i32, i32
  }
  func.func @transform_3(%arg0: i32, %arg1: i32) -> (i32, i32) {
    %c0_i32 = arith.constant 0 : i32
    %c0_i32_0 = arith.constant 0 : i32
    return %c0_i32, %arg1 : i32, i32
  }
  func.func @transform_4(%arg0: i32, %arg1: i32) -> (i32, i32) {
    %c0_i32 = arith.constant 0 : i32
    %c0_i32_0 = arith.constant 0 : i32
    return %c0_i32, %arg1 : i32, i32
  }
  func.func @transform_5(%arg0: i32, %arg1: i32) -> (i32, i32) {
    %c0_i32 = arith.constant 0 : i32
    %c0_i32_0 = arith.constant 0 : i32
    return %c0_i32, %arg1 : i32, i32
  }
  func.func @transform_6(%arg0: i32, %arg1: i32) -> (i32, i32) {
    %c0_i32 = arith.constant 0 : i32
    return %arg0, %arg1 : i32, i32
  }
}

module attributes {stable_mosaic.version = 11 : i64} {
  func.func @_mm2_bn_silu_kernel(%arg0: i32, %arg1: i32, %arg2: memref<512x128xbf16, #tpu.memory_space<vmem>>, %arg3: memref<512x128xbf16, #tpu.memory_space<vmem>>, %arg4: memref<128x128xbf16, #tpu.memory_space<vmem>>, %arg5: memref<128x128xbf16, #tpu.memory_space<vmem>>, %arg6: memref<1x128xf32, #tpu.memory_space<vmem>>, %arg7: memref<1x128xf32, #tpu.memory_space<vmem>>, %arg8: memref<512x128xbf16, #tpu.memory_space<vmem>>) attributes {dimension_semantics = [#tpu.dimension_semantics<parallel>, #tpu.dimension_semantics<parallel>], iteration_bounds = array<i64: 1, 1>, scalar_prefetch = 0 : i64, scratch_operands = 0 : i64, tpu.core_type = #tpu.core_type<tc>, window_params = [{transform_indices = @transform_0, window_bounds = array<i64: 512, 128>}, {transform_indices = @transform_1, window_bounds = array<i64: 512, 128>}, {transform_indices = @transform_2, window_bounds = array<i64: 128, 128>}, {transform_indices = @transform_3, window_bounds = array<i64: 128, 128>}, {transform_indices = @transform_4, window_bounds = array<i64: 1, 128>}, {transform_indices = @transform_5, window_bounds = array<i64: 1, 128>}, {transform_indices = @transform_6, window_bounds = array<i64: 512, 128>}]} {
    %c0 = arith.constant 0 : index
    %c0_0 = arith.constant 0 : index
    %0 = vector.load %arg2[%c0, %c0_0] : memref<512x128xbf16, #tpu.memory_space<vmem>>, vector<512x128xbf16>
    %c0_1 = arith.constant 0 : index
    %c0_2 = arith.constant 0 : index
    %1 = vector.load %arg4[%c0_1, %c0_2] : memref<128x128xbf16, #tpu.memory_space<vmem>>, vector<128x128xbf16>
    %cst = arith.constant dense<0.000000e+00> : vector<512x128xf32>
    %2 = tpu.matmul %0, %1, %cst {dimension_numbers = #tpu.dot_dimension_numbers<[1], [0], [0], [1], [0, 0, 1, 1], [], []>} : vector<512x128xbf16>, vector<128x128xbf16>, vector<512x128xf32> -> vector<512x128xf32>
    %c0_3 = arith.constant 0 : index
    %c0_4 = arith.constant 0 : index
    %3 = vector.load %arg3[%c0_3, %c0_4] : memref<512x128xbf16, #tpu.memory_space<vmem>>, vector<512x128xbf16>
    %c0_5 = arith.constant 0 : index
    %c0_6 = arith.constant 0 : index
    %4 = vector.load %arg5[%c0_5, %c0_6] : memref<128x128xbf16, #tpu.memory_space<vmem>>, vector<128x128xbf16>
    %cst_7 = arith.constant dense<0.000000e+00> : vector<512x128xf32>
    %5 = tpu.matmul %3, %4, %cst_7 {dimension_numbers = #tpu.dot_dimension_numbers<[1], [0], [0], [1], [0, 0, 1, 1], [], []>} : vector<512x128xbf16>, vector<128x128xbf16>, vector<512x128xf32> -> vector<512x128xf32>
    %6 = arith.addf %2, %5 : vector<512x128xf32>
    %c0_8 = arith.constant 0 : index
    %c0_9 = arith.constant 0 : index
    %7 = vector.load %arg6[%c0_8, %c0_9] : memref<1x128xf32, #tpu.memory_space<vmem>>, vector<1x128xf32>
    %8 = vector.broadcast %7 : vector<1x128xf32> to vector<512x128xf32>
    %9 = arith.mulf %6, %8 : vector<512x128xf32>
    %c0_10 = arith.constant 0 : index
    %c0_11 = arith.constant 0 : index
    %10 = vector.load %arg7[%c0_10, %c0_11] : memref<1x128xf32, #tpu.memory_space<vmem>>, vector<1x128xf32>
    %11 = vector.broadcast %10 : vector<1x128xf32> to vector<512x128xf32>
    %12 = arith.addf %9, %11 : vector<512x128xf32>
    %cst_12 = arith.constant 0.000000e+00 : f32
    %13 = vector.broadcast %cst_12 : f32 to vector<512x128xf32>
    %14 = arith.subf %13, %12 : vector<512x128xf32>
    %15 = math.exp %14 : vector<512x128xf32>
    %cst_13 = arith.constant 1.000000e+00 : f32
    %16 = vector.broadcast %cst_13 : f32 to vector<512x128xf32>
    %17 = arith.addf %16, %15 : vector<512x128xf32>
    %18 = tpu.reciprocal %17 {approx = true} : vector<512x128xf32> -> vector<512x128xf32>
    %19 = arith.mulf %12, %18 : vector<512x128xf32>
    %20 = arith.truncf %19 : vector<512x128xf32> to vector<512x128xbf16>
    %c0_14 = arith.constant 0 : index
    %c0_15 = arith.constant 0 : index
    %21 = vector.load %arg8[%c0_14, %c0_15] : memref<512x128xbf16, #tpu.memory_space<vmem>>, vector<512x128xbf16>
    tpu.vector_store %arg8[%c0_14, %c0_15], %20 {strides = array<i32>} : memref<512x128xbf16, #tpu.memory_space<vmem>>, vector<512x128xbf16>,
    return
  }
  func.func @transform_0(%arg0: i32, %arg1: i32) -> (i32, i32) {
    %c0_i32 = arith.constant 0 : i32
    %c0_i32_0 = arith.constant 0 : i32
    return %arg0, %c0_i32 : i32, i32
  }
  func.func @transform_1(%arg0: i32, %arg1: i32) -> (i32, i32) {
    %c0_i32 = arith.constant 0 : i32
    %c0_i32_0 = arith.constant 0 : i32
    return %arg0, %c0_i32 : i32, i32
  }
  func.func @transform_2(%arg0: i32, %arg1: i32) -> (i32, i32) {
    %c0_i32 = arith.constant 0 : i32
    %c0_i32_0 = arith.constant 0 : i32
    return %c0_i32, %arg1 : i32, i32
  }
  func.func @transform_3(%arg0: i32, %arg1: i32) -> (i32, i32) {
    %c0_i32 = arith.constant 0 : i32
    %c0_i32_0 = arith.constant 0 : i32
    return %c0_i32, %arg1 : i32, i32
  }
  func.func @transform_4(%arg0: i32, %arg1: i32) -> (i32, i32) {
    %c0_i32 = arith.constant 0 : i32
    %c0_i32_0 = arith.constant 0 : i32
    return %c0_i32, %arg1 : i32, i32
  }
  func.func @transform_5(%arg0: i32, %arg1: i32) -> (i32, i32) {
    %c0_i32 = arith.constant 0 : i32
    %c0_i32_0 = arith.constant 0 : i32
    return %c0_i32, %arg1 : i32, i32
  }
  func.func @transform_6(%arg0: i32, %arg1: i32) -> (i32, i32) {
    %c0_i32 = arith.constant 0 : i32
    return %arg0, %arg1 : i32, i32
  }
}

module attributes {stable_mosaic.version = 11 : i64} {
  func.func @_mm_bn_silu_kernel(%arg0: i32, %arg1: i32, %arg2: i32, %arg3: memref<512x128xbf16, #tpu.memory_space<vmem>>, %arg4: memref<128x128xbf16, #tpu.memory_space<vmem>>, %arg5: memref<1x128xf32, #tpu.memory_space<vmem>>, %arg6: memref<1x128xf32, #tpu.memory_space<vmem>>, %arg7: memref<512x128xbf16, #tpu.memory_space<vmem>>, %arg8: memref<512x128xf32, #tpu.memory_space<vmem>>) attributes {dimension_semantics = [#tpu.dimension_semantics<parallel>, #tpu.dimension_semantics<parallel>, #tpu.dimension_semantics<arbitrary>], iteration_bounds = array<i64: 1, 1, 1>, scalar_prefetch = 0 : i64, scratch_operands = 1 : i64, tpu.core_type = #tpu.core_type<tc>, window_params = [{transform_indices = @transform_0, window_bounds = array<i64: 512, 128>}, {transform_indices = @transform_1, window_bounds = array<i64: 128, 128>}, {transform_indices = @transform_2, window_bounds = array<i64: 1, 128>}, {transform_indices = @transform_3, window_bounds = array<i64: 1, 128>}, {transform_indices = @transform_4, window_bounds = array<i64: 512, 128>}]} {
    %c0_i32 = arith.constant 0 : i32
    %0 = arith.cmpi eq, %arg2, %c0_i32 : i32
    %1 = arith.extui %0 : i1 to i32
    %c0_i32_0 = arith.constant 0 : i32
    %2 = arith.cmpi ne, %1, %c0_i32_0 : i32
    scf.if %2 {
      %cst_10 = arith.constant 0.000000e+00 : f32
      %12 = vector.broadcast %cst_10 : f32 to vector<512x128xf32>
      %c0_11 = arith.constant 0 : index
      %c0_12 = arith.constant 0 : index
      %13 = vector.load %arg8[%c0_11, %c0_12] : memref<512x128xf32, #tpu.memory_space<vmem>>, vector<512x128xf32>
      tpu.vector_store %arg8[%c0_11, %c0_12], %12 {strides = array<i32>} : memref<512x128xf32, #tpu.memory_space<vmem>>, vector<512x128xf32>,
    } else {
    }
    %c0 = arith.constant 0 : index
    %c0_1 = arith.constant 0 : index
    %3 = vector.load %arg8[%c0, %c0_1] : memref<512x128xf32, #tpu.memory_space<vmem>>, vector<512x128xf32>
    %c0_2 = arith.constant 0 : index
    %c0_3 = arith.constant 0 : index
    %4 = vector.load %arg3[%c0_2, %c0_3] : memref<512x128xbf16, #tpu.memory_space<vmem>>, vector<512x128xbf16>
    %c0_4 = arith.constant 0 : index
    %c0_5 = arith.constant 0 : index
    %5 = vector.load %arg4[%c0_4, %c0_5] : memref<128x128xbf16, #tpu.memory_space<vmem>>, vector<128x128xbf16>
    %cst = arith.constant dense<0.000000e+00> : vector<512x128xf32>
    %6 = tpu.matmul %4, %5, %cst {dimension_numbers = #tpu.dot_dimension_numbers<[1], [0], [0], [1], [0, 0, 1, 1], [], []>} : vector<512x128xbf16>, vector<128x128xbf16>, vector<512x128xf32> -> vector<512x128xf32>
    %7 = arith.addf %3, %6 : vector<512x128xf32>
    %c0_6 = arith.constant 0 : index
    %c0_7 = arith.constant 0 : index
    %8 = vector.load %arg8[%c0_6, %c0_7] : memref<512x128xf32, #tpu.memory_space<vmem>>, vector<512x128xf32>
    tpu.vector_store %arg8[%c0_6, %c0_7], %7 {strides = array<i32>} : memref<512x128xf32, #tpu.memory_space<vmem>>, vector<512x128xf32>,
    %c0_i32_8 = arith.constant 0 : i32
    %9 = arith.cmpi eq, %arg2, %c0_i32_8 : i32
    %10 = arith.extui %9 : i1 to i32
    %c0_i32_9 = arith.constant 0 : i32
    %11 = arith.cmpi ne, %10, %c0_i32_9 : i32
    scf.if %11 {
      %c0_10 = arith.constant 0 : index
      %c0_11 = arith.constant 0 : index
      %12 = vector.load %arg8[%c0_10, %c0_11] : memref<512x128xf32, #tpu.memory_space<vmem>>, vector<512x128xf32>
      %c0_12 = arith.constant 0 : index
      %c0_13 = arith.constant 0 : index
      %13 = vector.load %arg5[%c0_12, %c0_13] : memref<1x128xf32, #tpu.memory_space<vmem>>, vector<1x128xf32>
      %14 = vector.broadcast %13 : vector<1x128xf32> to vector<512x128xf32>
      %15 = arith.mulf %12, %14 : vector<512x128xf32>
      %c0_14 = arith.constant 0 : index
      %c0_15 = arith.constant 0 : index
      %16 = vector.load %arg6[%c0_14, %c0_15] : memref<1x128xf32, #tpu.memory_space<vmem>>, vector<1x128xf32>
      %17 = vector.broadcast %16 : vector<1x128xf32> to vector<512x128xf32>
      %18 = arith.addf %15, %17 : vector<512x128xf32>
      %cst_16 = arith.constant 0.000000e+00 : f32
      %19 = vector.broadcast %cst_16 : f32 to vector<512x128xf32>
      %20 = arith.subf %19, %18 : vector<512x128xf32>
      %21 = math.exp %20 : vector<512x128xf32>
      %cst_17 = arith.constant 1.000000e+00 : f32
      %22 = vector.broadcast %cst_17 : f32 to vector<512x128xf32>
      %23 = arith.addf %22, %21 : vector<512x128xf32>
      %24 = tpu.reciprocal %23 {approx = true} : vector<512x128xf32> -> vector<512x128xf32>
      %25 = arith.mulf %18, %24 : vector<512x128xf32>
      %26 = arith.truncf %25 : vector<512x128xf32> to vector<512x128xbf16>
      %c0_18 = arith.constant 0 : index
      %c0_19 = arith.constant 0 : index
      %27 = vector.load %arg7[%c0_18, %c0_19] : memref<512x128xbf16, #tpu.memory_space<vmem>>, vector<512x128xbf16>
      tpu.vector_store %arg7[%c0_18, %c0_19], %26 {strides = array<i32>} : memref<512x128xbf16, #tpu.memory_space<vmem>>, vector<512x128xbf16>,
    } else {
    }
    return
  }
  func.func @transform_0(%arg0: i32, %arg1: i32, %arg2: i32) -> (i32, i32) {
    %c0_i32 = arith.constant 0 : i32
    return %arg0, %arg2 : i32, i32
  }
  func.func @transform_1(%arg0: i32, %arg1: i32, %arg2: i32) -> (i32, i32) {
    %c0_i32 = arith.constant 0 : i32
    return %arg2, %arg1 : i32, i32
  }
  func.func @transform_2(%arg0: i32, %arg1: i32, %arg2: i32) -> (i32, i32) {
    %c0_i32 = arith.constant 0 : i32
    %c0_i32_0 = arith.constant 0 : i32
    return %c0_i32, %arg1 : i32, i32
  }
  func.func @transform_3(%arg0: i32, %arg1: i32, %arg2: i32) -> (i32, i32) {
    %c0_i32 = arith.constant 0 : i32
    %c0_i32_0 = arith.constant 0 : i32
    return %c0_i32, %arg1 : i32, i32
  }
  func.func @transform_4(%arg0: i32, %arg1: i32, %arg2: i32) -> (i32, i32) {
    %c0_i32 = arith.constant 0 : i32
    return %arg0, %arg1 : i32, i32
  }
}

module attributes {stable_mosaic.version = 11 : i64} {
  func.func @_mm2_bn_silu_kernel(%arg0: i32, %arg1: i32, %arg2: memref<512x128xbf16, #tpu.memory_space<vmem>>, %arg3: memref<512x128xbf16, #tpu.memory_space<vmem>>, %arg4: memref<128x128xbf16, #tpu.memory_space<vmem>>, %arg5: memref<128x128xbf16, #tpu.memory_space<vmem>>, %arg6: memref<1x128xf32, #tpu.memory_space<vmem>>, %arg7: memref<1x128xf32, #tpu.memory_space<vmem>>, %arg8: memref<512x128xf32, #tpu.memory_space<vmem>>) attributes {dimension_semantics = [#tpu.dimension_semantics<parallel>, #tpu.dimension_semantics<parallel>], iteration_bounds = array<i64: 1, 1>, scalar_prefetch = 0 : i64, scratch_operands = 0 : i64, tpu.core_type = #tpu.core_type<tc>, window_params = [{transform_indices = @transform_0, window_bounds = array<i64: 512, 128>}, {transform_indices = @transform_1, window_bounds = array<i64: 512, 128>}, {transform_indices = @transform_2, window_bounds = array<i64: 128, 128>}, {transform_indices = @transform_3, window_bounds = array<i64: 128, 128>}, {transform_indices = @transform_4, window_bounds = array<i64: 1, 128>}, {transform_indices = @transform_5, window_bounds = array<i64: 1, 128>}, {transform_indices = @transform_6, window_bounds = array<i64: 512, 128>}]} {
    %c0 = arith.constant 0 : index
    %c0_0 = arith.constant 0 : index
    %0 = vector.load %arg2[%c0, %c0_0] : memref<512x128xbf16, #tpu.memory_space<vmem>>, vector<512x128xbf16>
    %c0_1 = arith.constant 0 : index
    %c0_2 = arith.constant 0 : index
    %1 = vector.load %arg4[%c0_1, %c0_2] : memref<128x128xbf16, #tpu.memory_space<vmem>>, vector<128x128xbf16>
    %cst = arith.constant dense<0.000000e+00> : vector<512x128xf32>
    %2 = tpu.matmul %0, %1, %cst {dimension_numbers = #tpu.dot_dimension_numbers<[1], [0], [0], [1], [0, 0, 1, 1], [], []>} : vector<512x128xbf16>, vector<128x128xbf16>, vector<512x128xf32> -> vector<512x128xf32>
    %c0_3 = arith.constant 0 : index
    %c0_4 = arith.constant 0 : index
    %3 = vector.load %arg3[%c0_3, %c0_4] : memref<512x128xbf16, #tpu.memory_space<vmem>>, vector<512x128xbf16>
    %c0_5 = arith.constant 0 : index
    %c0_6 = arith.constant 0 : index
    %4 = vector.load %arg5[%c0_5, %c0_6] : memref<128x128xbf16, #tpu.memory_space<vmem>>, vector<128x128xbf16>
    %cst_7 = arith.constant dense<0.000000e+00> : vector<512x128xf32>
    %5 = tpu.matmul %3, %4, %cst_7 {dimension_numbers = #tpu.dot_dimension_numbers<[1], [0], [0], [1], [0, 0, 1, 1], [], []>} : vector<512x128xbf16>, vector<128x128xbf16>, vector<512x128xf32> -> vector<512x128xf32>
    %6 = arith.addf %2, %5 : vector<512x128xf32>
    %c0_8 = arith.constant 0 : index
    %c0_9 = arith.constant 0 : index
    %7 = vector.load %arg6[%c0_8, %c0_9] : memref<1x128xf32, #tpu.memory_space<vmem>>, vector<1x128xf32>
    %8 = vector.broadcast %7 : vector<1x128xf32> to vector<512x128xf32>
    %9 = arith.mulf %6, %8 : vector<512x128xf32>
    %c0_10 = arith.constant 0 : index
    %c0_11 = arith.constant 0 : index
    %10 = vector.load %arg7[%c0_10, %c0_11] : memref<1x128xf32, #tpu.memory_space<vmem>>, vector<1x128xf32>
    %11 = vector.broadcast %10 : vector<1x128xf32> to vector<512x128xf32>
    %12 = arith.addf %9, %11 : vector<512x128xf32>
    %cst_12 = arith.constant 0.000000e+00 : f32
    %13 = vector.broadcast %cst_12 : f32 to vector<512x128xf32>
    %14 = arith.subf %13, %12 : vector<512x128xf32>
    %15 = math.exp %14 : vector<512x128xf32>
    %cst_13 = arith.constant 1.000000e+00 : f32
    %16 = vector.broadcast %cst_13 : f32 to vector<512x128xf32>
    %17 = arith.addf %16, %15 : vector<512x128xf32>
    %18 = tpu.reciprocal %17 {approx = true} : vector<512x128xf32> -> vector<512x128xf32>
    %19 = arith.mulf %12, %18 : vector<512x128xf32>
    %c0_14 = arith.constant 0 : index
    %c0_15 = arith.constant 0 : index
    %20 = vector.load %arg8[%c0_14, %c0_15] : memref<512x128xf32, #tpu.memory_space<vmem>>, vector<512x128xf32>
    tpu.vector_store %arg8[%c0_14, %c0_15], %19 {strides = array<i32>} : memref<512x128xf32, #tpu.memory_space<vmem>>, vector<512x128xf32>,
    return
  }
  func.func @transform_0(%arg0: i32, %arg1: i32) -> (i32, i32) {
    %c0_i32 = arith.constant 0 : i32
    %c0_i32_0 = arith.constant 0 : i32
    return %arg0, %c0_i32 : i32, i32
  }
  func.func @transform_1(%arg0: i32, %arg1: i32) -> (i32, i32) {
    %c0_i32 = arith.constant 0 : i32
    %c0_i32_0 = arith.constant 0 : i32
    return %arg0, %c0_i32 : i32, i32
  }
  func.func @transform_2(%arg0: i32, %arg1: i32) -> (i32, i32) {
    %c0_i32 = arith.constant 0 : i32
    %c0_i32_0 = arith.constant 0 : i32
    return %c0_i32, %arg1 : i32, i32
  }
  func.func @transform_3(%arg0: i32, %arg1: i32) -> (i32, i32) {
    %c0_i32 = arith.constant 0 : i32
    %c0_i32_0 = arith.constant 0 : i32
    return %c0_i32, %arg1 : i32, i32
  }
  func.func @transform_4(%arg0: i32, %arg1: i32) -> (i32, i32) {
    %c0_i32 = arith.constant 0 : i32
    %c0_i32_0 = arith.constant 0 : i32
    return %c0_i32, %arg1 : i32, i32
  }
  func.func @transform_5(%arg0: i32, %arg1: i32) -> (i32, i32) {
    %c0_i32 = arith.constant 0 : i32
    %c0_i32_0 = arith.constant 0 : i32
    return %c0_i32, %arg1 : i32, i32
  }
  func.func @transform_6(%arg0: i32, %arg1: i32) -> (i32, i32) {
    %c0_i32 = arith.constant 0 : i32
    return %arg0, %arg1 : i32, i32
  }
}

module attributes {stable_mosaic.version = 11 : i64} {
  func.func @_mm2_bn_silu_kernel(%arg0: i32, %arg1: i32, %arg2: memref<128x128xbf16, #tpu.memory_space<vmem>>, %arg3: memref<128x128xbf16, #tpu.memory_space<vmem>>, %arg4: memref<128x128xbf16, #tpu.memory_space<vmem>>, %arg5: memref<128x128xbf16, #tpu.memory_space<vmem>>, %arg6: memref<1x128xf32, #tpu.memory_space<vmem>>, %arg7: memref<1x128xf32, #tpu.memory_space<vmem>>, %arg8: memref<128x128xf32, #tpu.memory_space<vmem>>) attributes {dimension_semantics = [#tpu.dimension_semantics<parallel>, #tpu.dimension_semantics<parallel>], iteration_bounds = array<i64: 1, 1>, scalar_prefetch = 0 : i64, scratch_operands = 0 : i64, tpu.core_type = #tpu.core_type<tc>, window_params = [{transform_indices = @transform_0, window_bounds = array<i64: 128, 128>}, {transform_indices = @transform_1, window_bounds = array<i64: 128, 128>}, {transform_indices = @transform_2, window_bounds = array<i64: 128, 128>}, {transform_indices = @transform_3, window_bounds = array<i64: 128, 128>}, {transform_indices = @transform_4, window_bounds = array<i64: 1, 128>}, {transform_indices = @transform_5, window_bounds = array<i64: 1, 128>}, {transform_indices = @transform_6, window_bounds = array<i64: 128, 128>}]} {
    %c0 = arith.constant 0 : index
    %c0_0 = arith.constant 0 : index
    %0 = vector.load %arg2[%c0, %c0_0] : memref<128x128xbf16, #tpu.memory_space<vmem>>, vector<128x128xbf16>
    %c0_1 = arith.constant 0 : index
    %c0_2 = arith.constant 0 : index
    %1 = vector.load %arg4[%c0_1, %c0_2] : memref<128x128xbf16, #tpu.memory_space<vmem>>, vector<128x128xbf16>
    %cst = arith.constant dense<0.000000e+00> : vector<128x128xf32>
    %2 = tpu.matmul %0, %1, %cst {dimension_numbers = #tpu.dot_dimension_numbers<[1], [0], [0], [1], [0, 0, 1, 1], [], []>} : vector<128x128xbf16>, vector<128x128xbf16>, vector<128x128xf32> -> vector<128x128xf32>
    %c0_3 = arith.constant 0 : index
    %c0_4 = arith.constant 0 : index
    %3 = vector.load %arg3[%c0_3, %c0_4] : memref<128x128xbf16, #tpu.memory_space<vmem>>, vector<128x128xbf16>
    %c0_5 = arith.constant 0 : index
    %c0_6 = arith.constant 0 : index
    %4 = vector.load %arg5[%c0_5, %c0_6] : memref<128x128xbf16, #tpu.memory_space<vmem>>, vector<128x128xbf16>
    %cst_7 = arith.constant dense<0.000000e+00> : vector<128x128xf32>
    %5 = tpu.matmul %3, %4, %cst_7 {dimension_numbers = #tpu.dot_dimension_numbers<[1], [0], [0], [1], [0, 0, 1, 1], [], []>} : vector<128x128xbf16>, vector<128x128xbf16>, vector<128x128xf32> -> vector<128x128xf32>
    %6 = arith.addf %2, %5 : vector<128x128xf32>
    %c0_8 = arith.constant 0 : index
    %c0_9 = arith.constant 0 : index
    %7 = vector.load %arg6[%c0_8, %c0_9] : memref<1x128xf32, #tpu.memory_space<vmem>>, vector<1x128xf32>
    %8 = vector.broadcast %7 : vector<1x128xf32> to vector<128x128xf32>
    %9 = arith.mulf %6, %8 : vector<128x128xf32>
    %c0_10 = arith.constant 0 : index
    %c0_11 = arith.constant 0 : index
    %10 = vector.load %arg7[%c0_10, %c0_11] : memref<1x128xf32, #tpu.memory_space<vmem>>, vector<1x128xf32>
    %11 = vector.broadcast %10 : vector<1x128xf32> to vector<128x128xf32>
    %12 = arith.addf %9, %11 : vector<128x128xf32>
    %cst_12 = arith.constant 0.000000e+00 : f32
    %13 = vector.broadcast %cst_12 : f32 to vector<128x128xf32>
    %14 = arith.subf %13, %12 : vector<128x128xf32>
    %15 = math.exp %14 : vector<128x128xf32>
    %cst_13 = arith.constant 1.000000e+00 : f32
    %16 = vector.broadcast %cst_13 : f32 to vector<128x128xf32>
    %17 = arith.addf %16, %15 : vector<128x128xf32>
    %18 = tpu.reciprocal %17 {approx = true} : vector<128x128xf32> -> vector<128x128xf32>
    %19 = arith.mulf %12, %18 : vector<128x128xf32>
    %c0_14 = arith.constant 0 : index
    %c0_15 = arith.constant 0 : index
    %20 = vector.load %arg8[%c0_14, %c0_15] : memref<128x128xf32, #tpu.memory_space<vmem>>, vector<128x128xf32>
    tpu.vector_store %arg8[%c0_14, %c0_15], %19 {strides = array<i32>} : memref<128x128xf32, #tpu.memory_space<vmem>>, vector<128x128xf32>,
    return
  }
  func.func @transform_0(%arg0: i32, %arg1: i32) -> (i32, i32) {
    %c0_i32 = arith.constant 0 : i32
    %c0_i32_0 = arith.constant 0 : i32
    return %arg0, %c0_i32 : i32, i32
  }
  func.func @transform_1(%arg0: i32, %arg1: i32) -> (i32, i32) {
    %c0_i32 = arith.constant 0 : i32
    %c0_i32_0 = arith.constant 0 : i32
    return %arg0, %c0_i32 : i32, i32
  }
  func.func @transform_2(%arg0: i32, %arg1: i32) -> (i32, i32) {
    %c0_i32 = arith.constant 0 : i32
    %c0_i32_0 = arith.constant 0 : i32
    return %c0_i32, %arg1 : i32, i32
  }
  func.func @transform_3(%arg0: i32, %arg1: i32) -> (i32, i32) {
    %c0_i32 = arith.constant 0 : i32
    %c0_i32_0 = arith.constant 0 : i32
    return %c0_i32, %arg1 : i32, i32
  }
  func.func @transform_4(%arg0: i32, %arg1: i32) -> (i32, i32) {
    %c0_i32 = arith.constant 0 : i32
    %c0_i32_0 = arith.constant 0 : i32
    return %c0_i32, %arg1 : i32, i32
  }
  func.func @transform_5(%arg0: i32, %arg1: i32) -> (i32, i32) {
    %c0_i32 = arith.constant 0 : i32
    %c0_i32_0 = arith.constant 0 : i32
    return %c0_i32, %arg1 : i32, i32
  }
  func.func @transform_6(%arg0: i32, %arg1: i32) -> (i32, i32) {
    %c0_i32 = arith.constant 0 : i32
    return %arg0, %arg1 : i32, i32
  }
}

module attributes {stable_mosaic.version = 11 : i64} {
  func.func @_mm2_bn_silu_kernel(%arg0: i32, %arg1: i32, %arg2: memref<32x128xbf16, #tpu.memory_space<vmem>>, %arg3: memref<32x128xbf16, #tpu.memory_space<vmem>>, %arg4: memref<128x128xbf16, #tpu.memory_space<vmem>>, %arg5: memref<128x128xbf16, #tpu.memory_space<vmem>>, %arg6: memref<1x128xf32, #tpu.memory_space<vmem>>, %arg7: memref<1x128xf32, #tpu.memory_space<vmem>>, %arg8: memref<32x128xbf16, #tpu.memory_space<vmem>>) attributes {dimension_semantics = [#tpu.dimension_semantics<parallel>, #tpu.dimension_semantics<parallel>], iteration_bounds = array<i64: 1, 1>, scalar_prefetch = 0 : i64, scratch_operands = 0 : i64, tpu.core_type = #tpu.core_type<tc>, window_params = [{transform_indices = @transform_0, window_bounds = array<i64: 32, 128>}, {transform_indices = @transform_1, window_bounds = array<i64: 32, 128>}, {transform_indices = @transform_2, window_bounds = array<i64: 128, 128>}, {transform_indices = @transform_3, window_bounds = array<i64: 128, 128>}, {transform_indices = @transform_4, window_bounds = array<i64: 1, 128>}, {transform_indices = @transform_5, window_bounds = array<i64: 1, 128>}, {transform_indices = @transform_6, window_bounds = array<i64: 32, 128>}]} {
    %c0 = arith.constant 0 : index
    %c0_0 = arith.constant 0 : index
    %0 = vector.load %arg2[%c0, %c0_0] : memref<32x128xbf16, #tpu.memory_space<vmem>>, vector<32x128xbf16>
    %c0_1 = arith.constant 0 : index
    %c0_2 = arith.constant 0 : index
    %1 = vector.load %arg4[%c0_1, %c0_2] : memref<128x128xbf16, #tpu.memory_space<vmem>>, vector<128x128xbf16>
    %cst = arith.constant dense<0.000000e+00> : vector<32x128xf32>
    %2 = tpu.matmul %0, %1, %cst {dimension_numbers = #tpu.dot_dimension_numbers<[1], [0], [0], [1], [0, 0, 1, 1], [], []>} : vector<32x128xbf16>, vector<128x128xbf16>, vector<32x128xf32> -> vector<32x128xf32>
    %c0_3 = arith.constant 0 : index
    %c0_4 = arith.constant 0 : index
    %3 = vector.load %arg3[%c0_3, %c0_4] : memref<32x128xbf16, #tpu.memory_space<vmem>>, vector<32x128xbf16>
    %c0_5 = arith.constant 0 : index
    %c0_6 = arith.constant 0 : index
    %4 = vector.load %arg5[%c0_5, %c0_6] : memref<128x128xbf16, #tpu.memory_space<vmem>>, vector<128x128xbf16>
    %cst_7 = arith.constant dense<0.000000e+00> : vector<32x128xf32>
    %5 = tpu.matmul %3, %4, %cst_7 {dimension_numbers = #tpu.dot_dimension_numbers<[1], [0], [0], [1], [0, 0, 1, 1], [], []>} : vector<32x128xbf16>, vector<128x128xbf16>, vector<32x128xf32> -> vector<32x128xf32>
    %6 = arith.addf %2, %5 : vector<32x128xf32>
    %c0_8 = arith.constant 0 : index
    %c0_9 = arith.constant 0 : index
    %7 = vector.load %arg6[%c0_8, %c0_9] : memref<1x128xf32, #tpu.memory_space<vmem>>, vector<1x128xf32>
    %8 = vector.broadcast %7 : vector<1x128xf32> to vector<32x128xf32>
    %9 = arith.mulf %6, %8 : vector<32x128xf32>
    %c0_10 = arith.constant 0 : index
    %c0_11 = arith.constant 0 : index
    %10 = vector.load %arg7[%c0_10, %c0_11] : memref<1x128xf32, #tpu.memory_space<vmem>>, vector<1x128xf32>
    %11 = vector.broadcast %10 : vector<1x128xf32> to vector<32x128xf32>
    %12 = arith.addf %9, %11 : vector<32x128xf32>
    %cst_12 = arith.constant 0.000000e+00 : f32
    %13 = vector.broadcast %cst_12 : f32 to vector<32x128xf32>
    %14 = arith.subf %13, %12 : vector<32x128xf32>
    %15 = math.exp %14 : vector<32x128xf32>
    %cst_13 = arith.constant 1.000000e+00 : f32
    %16 = vector.broadcast %cst_13 : f32 to vector<32x128xf32>
    %17 = arith.addf %16, %15 : vector<32x128xf32>
    %18 = tpu.reciprocal %17 {approx = true} : vector<32x128xf32> -> vector<32x128xf32>
    %19 = arith.mulf %12, %18 : vector<32x128xf32>
    %20 = arith.truncf %19 : vector<32x128xf32> to vector<32x128xbf16>
    %c0_14 = arith.constant 0 : index
    %c0_15 = arith.constant 0 : index
    %21 = vector.load %arg8[%c0_14, %c0_15] : memref<32x128xbf16, #tpu.memory_space<vmem>>, vector<32x128xbf16>
    tpu.vector_store %arg8[%c0_14, %c0_15], %20 {strides = array<i32>} : memref<32x128xbf16, #tpu.memory_space<vmem>>, vector<32x128xbf16>,
    return
  }
  func.func @transform_0(%arg0: i32, %arg1: i32) -> (i32, i32) {
    %c0_i32 = arith.constant 0 : i32
    %c0_i32_0 = arith.constant 0 : i32
    return %arg0, %c0_i32 : i32, i32
  }
  func.func @transform_1(%arg0: i32, %arg1: i32) -> (i32, i32) {
    %c0_i32 = arith.constant 0 : i32
    %c0_i32_0 = arith.constant 0 : i32
    return %arg0, %c0_i32 : i32, i32
  }
  func.func @transform_2(%arg0: i32, %arg1: i32) -> (i32, i32) {
    %c0_i32 = arith.constant 0 : i32
    %c0_i32_0 = arith.constant 0 : i32
    return %c0_i32, %arg1 : i32, i32
  }
  func.func @transform_3(%arg0: i32, %arg1: i32) -> (i32, i32) {
    %c0_i32 = arith.constant 0 : i32
    %c0_i32_0 = arith.constant 0 : i32
    return %c0_i32, %arg1 : i32, i32
  }
  func.func @transform_4(%arg0: i32, %arg1: i32) -> (i32, i32) {
    %c0_i32 = arith.constant 0 : i32
    %c0_i32_0 = arith.constant 0 : i32
    return %c0_i32, %arg1 : i32, i32
  }
  func.func @transform_5(%arg0: i32, %arg1: i32) -> (i32, i32) {
    %c0_i32 = arith.constant 0 : i32
    %c0_i32_0 = arith.constant 0 : i32
    return %c0_i32, %arg1 : i32, i32
  }
  func.func @transform_6(%arg0: i32, %arg1: i32) -> (i32, i32) {
    %c0_i32 = arith.constant 0 : i32
    return %arg0, %arg1 : i32, i32
  }
}

module attributes {stable_mosaic.version = 11 : i64} {
  func.func @_mm2_bn_silu_kernel(%arg0: i32, %arg1: i32, %arg2: memref<32x128xbf16, #tpu.memory_space<vmem>>, %arg3: memref<32x128xbf16, #tpu.memory_space<vmem>>, %arg4: memref<128x128xbf16, #tpu.memory_space<vmem>>, %arg5: memref<128x128xbf16, #tpu.memory_space<vmem>>, %arg6: memref<1x128xf32, #tpu.memory_space<vmem>>, %arg7: memref<1x128xf32, #tpu.memory_space<vmem>>, %arg8: memref<32x128xf32, #tpu.memory_space<vmem>>) attributes {dimension_semantics = [#tpu.dimension_semantics<parallel>, #tpu.dimension_semantics<parallel>], iteration_bounds = array<i64: 1, 1>, scalar_prefetch = 0 : i64, scratch_operands = 0 : i64, tpu.core_type = #tpu.core_type<tc>, window_params = [{transform_indices = @transform_0, window_bounds = array<i64: 32, 128>}, {transform_indices = @transform_1, window_bounds = array<i64: 32, 128>}, {transform_indices = @transform_2, window_bounds = array<i64: 128, 128>}, {transform_indices = @transform_3, window_bounds = array<i64: 128, 128>}, {transform_indices = @transform_4, window_bounds = array<i64: 1, 128>}, {transform_indices = @transform_5, window_bounds = array<i64: 1, 128>}, {transform_indices = @transform_6, window_bounds = array<i64: 32, 128>}]} {
    %c0 = arith.constant 0 : index
    %c0_0 = arith.constant 0 : index
    %0 = vector.load %arg2[%c0, %c0_0] : memref<32x128xbf16, #tpu.memory_space<vmem>>, vector<32x128xbf16>
    %c0_1 = arith.constant 0 : index
    %c0_2 = arith.constant 0 : index
    %1 = vector.load %arg4[%c0_1, %c0_2] : memref<128x128xbf16, #tpu.memory_space<vmem>>, vector<128x128xbf16>
    %cst = arith.constant dense<0.000000e+00> : vector<32x128xf32>
    %2 = tpu.matmul %0, %1, %cst {dimension_numbers = #tpu.dot_dimension_numbers<[1], [0], [0], [1], [0, 0, 1, 1], [], []>} : vector<32x128xbf16>, vector<128x128xbf16>, vector<32x128xf32> -> vector<32x128xf32>
    %c0_3 = arith.constant 0 : index
    %c0_4 = arith.constant 0 : index
    %3 = vector.load %arg3[%c0_3, %c0_4] : memref<32x128xbf16, #tpu.memory_space<vmem>>, vector<32x128xbf16>
    %c0_5 = arith.constant 0 : index
    %c0_6 = arith.constant 0 : index
    %4 = vector.load %arg5[%c0_5, %c0_6] : memref<128x128xbf16, #tpu.memory_space<vmem>>, vector<128x128xbf16>
    %cst_7 = arith.constant dense<0.000000e+00> : vector<32x128xf32>
    %5 = tpu.matmul %3, %4, %cst_7 {dimension_numbers = #tpu.dot_dimension_numbers<[1], [0], [0], [1], [0, 0, 1, 1], [], []>} : vector<32x128xbf16>, vector<128x128xbf16>, vector<32x128xf32> -> vector<32x128xf32>
    %6 = arith.addf %2, %5 : vector<32x128xf32>
    %c0_8 = arith.constant 0 : index
    %c0_9 = arith.constant 0 : index
    %7 = vector.load %arg6[%c0_8, %c0_9] : memref<1x128xf32, #tpu.memory_space<vmem>>, vector<1x128xf32>
    %8 = vector.broadcast %7 : vector<1x128xf32> to vector<32x128xf32>
    %9 = arith.mulf %6, %8 : vector<32x128xf32>
    %c0_10 = arith.constant 0 : index
    %c0_11 = arith.constant 0 : index
    %10 = vector.load %arg7[%c0_10, %c0_11] : memref<1x128xf32, #tpu.memory_space<vmem>>, vector<1x128xf32>
    %11 = vector.broadcast %10 : vector<1x128xf32> to vector<32x128xf32>
    %12 = arith.addf %9, %11 : vector<32x128xf32>
    %cst_12 = arith.constant 0.000000e+00 : f32
    %13 = vector.broadcast %cst_12 : f32 to vector<32x128xf32>
    %14 = arith.subf %13, %12 : vector<32x128xf32>
    %15 = math.exp %14 : vector<32x128xf32>
    %cst_13 = arith.constant 1.000000e+00 : f32
    %16 = vector.broadcast %cst_13 : f32 to vector<32x128xf32>
    %17 = arith.addf %16, %15 : vector<32x128xf32>
    %18 = tpu.reciprocal %17 {approx = true} : vector<32x128xf32> -> vector<32x128xf32>
    %19 = arith.mulf %12, %18 : vector<32x128xf32>
    %c0_14 = arith.constant 0 : index
    %c0_15 = arith.constant 0 : index
    %20 = vector.load %arg8[%c0_14, %c0_15] : memref<32x128xf32, #tpu.memory_space<vmem>>, vector<32x128xf32>
    tpu.vector_store %arg8[%c0_14, %c0_15], %19 {strides = array<i32>} : memref<32x128xf32, #tpu.memory_space<vmem>>, vector<32x128xf32>,
    return
  }
  func.func @transform_0(%arg0: i32, %arg1: i32) -> (i32, i32) {
    %c0_i32 = arith.constant 0 : i32
    %c0_i32_0 = arith.constant 0 : i32
    return %arg0, %c0_i32 : i32, i32
  }
  func.func @transform_1(%arg0: i32, %arg1: i32) -> (i32, i32) {
    %c0_i32 = arith.constant 0 : i32
    %c0_i32_0 = arith.constant 0 : i32
    return %arg0, %c0_i32 : i32, i32
  }
  func.func @transform_2(%arg0: i32, %arg1: i32) -> (i32, i32) {
    %c0_i32 = arith.constant 0 : i32
    %c0_i32_0 = arith.constant 0 : i32
    return %c0_i32, %arg1 : i32, i32
  }
  func.func @transform_3(%arg0: i32, %arg1: i32) -> (i32, i32) {
    %c0_i32 = arith.constant 0 : i32
    %c0_i32_0 = arith.constant 0 : i32
    return %c0_i32, %arg1 : i32, i32
  }
  func.func @transform_4(%arg0: i32, %arg1: i32) -> (i32, i32) {
    %c0_i32 = arith.constant 0 : i32
    %c0_i32_0 = arith.constant 0 : i32
    return %c0_i32, %arg1 : i32, i32
  }
  func.func @transform_5(%arg0: i32, %arg1: i32) -> (i32, i32) {
    %c0_i32 = arith.constant 0 : i32
    %c0_i32_0 = arith.constant 0 : i32
    return %c0_i32, %arg1 : i32, i32
  }
  func.func @transform_6(%arg0: i32, %arg1: i32) -> (i32, i32) {
    %c0_i32 = arith.constant 0 : i32
    return %arg0, %arg1 : i32, i32
  }
}

</mosaic_0001>

<llo_original>
// kernel: _lambda_.20
$region0: #{_lambda_.20}
  #allocation0 [shape = 'u32[]', space=smem, size = 0x4, offset = 0x4, fixed_abs, tag = 'smem constant byte address 0x4 - core index']
  #allocation1 [shape = 'u32[144,128]{1,0:T(1,128)}', space=vmem, size = 0x12000, scoped, tag = 'internal scratch']
  #allocation2 [shape = 'f32[32,128]{1,0:T(8,128)}', space=vmem, size = 0x4000, scoped, tag = 'scratch operand']
  %s0 = inlined_call_operand.vmem [shape: bf16[32,128], index: 0, kind: input, shape index: {}]
  %s1 = inlined_call_operand.vmem [shape: bf16[128,128], index: 1, kind: input, shape index: {}]
  %s2 = inlined_call_operand.vmem [shape: f32[1,128], index: 2, kind: input, shape index: {}]
  %s3 = inlined_call_operand.vmem [shape: f32[1,128], index: 3, kind: input, shape index: {}]
  %s4 = inlined_call_operand.vmem [shape: bf16[32,128], index: 4, kind: output, shape index: {}]
  %s5 = sld [smem:[#allocation0]]
  $region34: #{_lambda_.20} parent=0
    _
  %s7 = ssub.s32 1, %s5
  %s8 = scalar_select 0, %s7, %s5
  // Predicated region
  $region2: #{_lambda_.20} parent=0 // pred_check
    _
  $region3: #{_lambda_.20} parent=0 // pred_check_branch
    %10 = sbr.rel (0) target = $region5
  $region4: #{_lambda_.20} parent=0 // pred_region
    _
  $region5: #{_lambda_.20} parent=0 // pred_fallthru
    _
  // Predicated region
  $region6: #{_lambda_.20} parent=0 // pred_check
    _
  $region7: #{_lambda_.20} parent=0 // pred_check_branch
    %12 = sbr.rel (0) target = $region9
  $region8: #{_lambda_.20} parent=0 // pred_region
    _
  $region9: #{_lambda_.20} parent=0 // pred_fallthru
    _
  // Predicated region
  $region10: #{_lambda_.20} parent=0 // pred_check
    _
  $region11: #{_lambda_.20} parent=0 // pred_check_branch
    %14 = sbr.rel (0) target = $region13
  $region12: #{_lambda_.20} parent=0 // pred_region
    _
  $region13: #{_lambda_.20} parent=0 // pred_fallthru
    _
  // Predicated region
  $region14: #{_lambda_.20} parent=0 // pred_check
    _
  $region15: #{_lambda_.20} parent=0 // pred_check_branch
    %16 = sbr.rel (0) target = $region17
  $region16: #{_lambda_.20} parent=0 // pred_region
    _
  $region17: #{_lambda_.20} parent=0 // pred_fallthru
    _
  %p18 = scmp.eq.s32.totalorder 0, 0
  // Predicated region
  $region18: #{_lambda_.20} parent=0 // pred_check
    %p19 = pneg %p18
  $region19: #{_lambda_.20} parent=0 // pred_check_branch
    %21 = sbr.rel (%p19) target = $region21
  $region20: #{_lambda_.20} parent=0 // pred_region
    %22 = vst [vmem:[#allocation2] sm:$0xff] 0.0
    %23 = vst [vmem:[#allocation2 + $0x8] sm:$0xff] 0.0
    %24 = vst [vmem:[#allocation2 + $0x10] sm:$0xff] 0.0
    %25 = vst [vmem:[#allocation2 + $0x18] sm:$0xff] 0.0
  $region21: #{_lambda_.20} parent=0 // pred_fallthru
    _
  %v26 = vld [vmem:[#allocation2] sm:$0xff]
  %v27 = vld [vmem:[#allocation2 + $0x8] sm:$0xff]
  %v28 = vld [vmem:[#allocation2 + $0x10] sm:$0xff]
  %v29 = vld [vmem:[#allocation2 + $0x18] sm:$0xff]
  %v30 = vld [vmem:[%s0] sm:$0xf]
  %v31 = vld [vmem:[%s0 + $0x4] sm:$0xf]
  %v32 = vld [vmem:[%s0 + $0x8] sm:$0xf]
  %v33 = vld [vmem:[%s0 + $0xc] sm:$0xf]
  %v34 = vld [vmem:[%s1] sm:$0xf]
  %v35 = vld [vmem:[%s1 + $0x4] sm:$0xf]
  %v36 = vld [vmem:[%s1 + $0x8] sm:$0xf]
  %v37 = vld [vmem:[%s1 + $0xc] sm:$0xf]
  %v38 = vld [vmem:[%s1 + $0x10] sm:$0xf]
  %v39 = vld [vmem:[%s1 + $0x14] sm:$0xf]
  %v40 = vld [vmem:[%s1 + $0x18] sm:$0xf]
  %v41 = vld [vmem:[%s1 + $0x1c] sm:$0xf]
  %v42 = vld [vmem:[%s1 + $0x20] sm:$0xf]
  %v43 = vld [vmem:[%s1 + $0x24] sm:$0xf]
  %v44 = vld [vmem:[%s1 + $0x28] sm:$0xf]
  %v45 = vld [vmem:[%s1 + $0x2c] sm:$0xf]
  %v46 = vld [vmem:[%s1 + $0x30] sm:$0xf]
  %v47 = vld [vmem:[%s1 + $0x34] sm:$0xf]
  %v48 = vld [vmem:[%s1 + $0x38] sm:$0xf]
  %v49 = vld [vmem:[%s1 + $0x3c] sm:$0xf]
  %v54 = vunpack.c.l.b16 %v30
  %v55 = vunpack.c.l.b16 %v31
  %v56 = vunpack.c.l.b16 %v32
  %v57 = vunpack.c.l.b16 %v33
  %v58 = vpack.c.b16 %v55, %v54
  %v59 = vpack.c.b16 %v57, %v56
  %v78 = vunpack.c.l.b16 %v34
  %v79 = vunpack.c.l.b16 %v35
  %v80 = vunpack.c.l.b16 %v36
  %v81 = vunpack.c.l.b16 %v37
  %v82 = vunpack.c.l.b16 %v38
  %v83 = vunpack.c.l.b16 %v39
  %v84 = vunpack.c.l.b16 %v40
  %v85 = vunpack.c.l.b16 %v41
  %v86 = vunpack.c.l.b16 %v42
  %v87 = vunpack.c.l.b16 %v43
  %v88 = vunpack.c.l.b16 %v44
  %v89 = vunpack.c.l.b16 %v45
  %v90 = vunpack.c.l.b16 %v46
  %v91 = vunpack.c.l.b16 %v47
  %v92 = vunpack.c.l.b16 %v48
  %v93 = vunpack.c.l.b16 %v49
  %v94 = vpack.c.b16 %v79, %v78
  %v95 = vpack.c.b16 %v81, %v80
  %v96 = vpack.c.b16 %v83, %v82
  %v97 = vpack.c.b16 %v85, %v84
  %v98 = vpack.c.b16 %v87, %v86
  %v99 = vpack.c.b16 %v89, %v88
  %v100 = vpack.c.b16 %v91, %v90
  %v101 = vpack.c.b16 %v93, %v92
  %110 = vmatprep.subr.bf16.mxu0 0
  %111 = vmatpush1.bf16.msra.mxu0 %v94
  %112 = vmatprep.subr.bf16.mxu0 0
  %113 = vmatpush1.bf16.msra.mxu0 %v95
  %114 = vmatprep.subr.bf16.mxu0 0
  %115 = vmatpush1.bf16.msra.mxu0 %v96
  %116 = vmatprep.subr.bf16.mxu0 0
  %117 = vmatpush1.bf16.msra.mxu0 %v97
  %118 = vmatprep.subr.bf16.mxu0 0
  %119 = vmatpush1.bf16.msra.mxu0 %v98
  %120 = vmatprep.subr.bf16.mxu0 0
  %121 = vmatpush1.bf16.msra.mxu0 %v99
  %122 = vmatprep.subr.bf16.mxu0 0
  %123 = vmatpush1.bf16.msra.mxu0 %v100
  %124 = vmatprep.subr.bf16.mxu0 0
  %125 = vmatpush1.bf16.msra.mxu0 %v101
  %126 = vmatprep.subr.bf16.mxu0 0
  %127 = vmatpush1.bf16.msra.mxu0 0
  %128 = vmatprep.subr.bf16.mxu0 0
  %129 = vmatpush1.bf16.msra.mxu0 0
  %130 = vmatprep.subr.bf16.mxu0 0
  %131 = vmatpush1.bf16.msra.mxu0 0
  %132 = vmatprep.subr.bf16.mxu0 0
  %133 = vmatpush1.bf16.msra.mxu0 0
  %134 = vmatprep.subr.bf16.mxu0 0
  %135 = vmatpush1.bf16.msra.mxu0 0
  %136 = vmatprep.subr.bf16.mxu0 0
  %137 = vmatpush1.bf16.msra.mxu0 0
  %138 = vmatprep.subr.bf16.mxu0 0
  %139 = vmatpush1.bf16.msra.mxu0 0
  %140 = vmatprep.subr.bf16.mxu0 0
  %141 = vmatpush1.bf16.msra.mxu0 0
  %142 = vmatprep.mubr.bf16.mxu0 0
  %143 = vmatmul.mubr.bf16.gmra.mrb[0].mxu0 %v58
  %v144 = vpop.f32.mrb[0].mxu0
  %v145 = vadd.f32 0.0, %v144
  %v146 = vpop.f32.mrb[0].mxu0
  %v147 = vpop.f32.mrb[0].mxu0
  %v148 = vadd.f32 0.0, %v147
  %v149 = vpop.f32.mrb[0].mxu0
  %150 = vmatprep.mubr.bf16.mxu0 0
  %151 = vmatmul.mubr.bf16.gmra.mrb[0].mxu0 %v59
  %v152 = vpop.f32.mrb[0].mxu0
  %v153 = vadd.f32 0.0, %v152
  %v154 = vpop.f32.mrb[0].mxu0
  %v155 = vpop.f32.mrb[0].mxu0
  %v156 = vadd.f32 0.0, %v155
  %v157 = vpop.f32.mrb[0].mxu0
  %158 = vdwg.mxu0
  %v159 = vadd.f32 %v26, %v145
  %v160 = vadd.f32 %v27, %v148
  %v161 = vadd.f32 %v28, %v153
  %v162 = vadd.f32 %v29, %v156
  %163 = vst [vmem:[#allocation2] sm:$0xff] %v159
  %164 = vst [vmem:[#allocation2 + $0x8] sm:$0xff] %v160
  %165 = vst [vmem:[#allocation2 + $0x10] sm:$0xff] %v161
  %166 = vst [vmem:[#allocation2 + $0x18] sm:$0xff] %v162
  // Predicated region
  $region22: #{_lambda_.20} parent=0 // pred_check
    %p167 = pneg %p18
  $region23: #{_lambda_.20} parent=0 // pred_check_branch
    %169 = sbr.rel (%p167) target = $region25
  $region24: #{_lambda_.20} parent=0 // pred_region
    %v170 = vld [vmem:[#allocation2] sm:$0xff]
    %v171 = vld [vmem:[#allocation2 + $0x8] sm:$0xff]
    %v172 = vld [vmem:[#allocation2 + $0x10] sm:$0xff]
    %v173 = vld [vmem:[#allocation2 + $0x18] sm:$0xff]
    %v174 = vld [vmem:[%s2] sm:$0x1]
    %v176 = vlaneseq
    %v177 = vshrl.u32 %v176, 7
    %v178 = vsub.s32 0, %v177
    %v179 = vrot.slane %v174, %v178
    %v181 = vmul.f32 %v170, %v179
    %v182 = vmul.f32 %v171, %v179
    %v183 = vmul.f32 %v172, %v179
    %v184 = vmul.f32 %v173, %v179
    %v185 = vld [vmem:[%s3] sm:$0x1]
    %v187 = vlaneseq
    %v188 = vshrl.u32 %v187, 7
    %v189 = vsub.s32 0, %v188
    %v190 = vrot.slane %v185, %v189
    %v192 = vadd.f32 %v181, %v190
    %v193 = vadd.f32 %v182, %v190
    %v194 = vadd.f32 %v183, %v190
    %v195 = vadd.f32 %v184, %v190
    %v196 = vsub.f32 0.0, %v192
    %v197 = vsub.f32 0.0, %v193
    %v198 = vsub.f32 0.0, %v194
    %v199 = vsub.f32 0.0, %v195
    %v200 = vmul.f32 %v196, 1.442695
    %v201 = vpow.pop %v200
    %v202 = vmul.f32 %v197, 1.442695
    %v203 = vpow.pop %v202
    %v204 = vmul.f32 %v198, 1.442695
    %v205 = vpow.pop %v204
    %v206 = vmul.f32 %v199, 1.442695
    %v207 = vpow.pop %v206
    %v208 = vadd.f32 %v201, 1.0
    %v209 = vadd.f32 %v203, 1.0
    %v210 = vadd.f32 %v205, 1.0
    %v211 = vadd.f32 %v207, 1.0
    %v212 = vrcp.pop %v208
    %v213 = vrcp.pop %v209
    %v214 = vrcp.pop %v210
    %v215 = vrcp.pop %v211
    %v216 = vmul.f32 %v192, %v212
    %v217 = vmul.f32 %v193, %v213
    %v218 = vmul.f32 %v194, %v214
    %v219 = vmul.f32 %v195, %v215
    %v220 = vpack.c.bf16 %v217, %v216
    %v221 = vpack.c.bf16 %v219, %v218
    %v224 = vunpack.c.l.b16 %v220
    %v225 = vunpack.c.h.b16 %v220
    %v226 = vunpack.c.l.b16 %v221
    %v227 = vunpack.c.h.b16 %v221
    %v228 = vpack.c.b16 %v224, %v224
    %v229 = vpack.c.b16 %v225, %v225
    %v230 = vpack.c.b16 %v226, %v226
    %v231 = vpack.c.b16 %v227, %v227
    %236 = vst [vmem:[%s4] sm:$0xf] %v228
    %237 = vst [vmem:[%s4 + $0x4] sm:$0xf] %v229
    %238 = vst [vmem:[%s4 + $0x8] sm:$0xf] %v230
    %239 = vst [vmem:[%s4 + $0xc] sm:$0xf] %v231
  $region25: #{_lambda_.20} parent=0 // pred_fallthru
    _
  // Predicated region
  $region26: #{_lambda_.20} parent=0 // pred_check
    _
  $region27: #{_lambda_.20} parent=0 // pred_check_branch
    %241 = sbr.rel (0) target = $region29
  $region28: #{_lambda_.20} parent=0 // pred_region
    _
  $region29: #{_lambda_.20} parent=0 // pred_fallthru
    _
  // Predicated region
  $region30: #{_lambda_.20} parent=0 // pred_check
    _
  $region31: #{_lambda_.20} parent=0 // pred_check_branch
    %243 = sbr.rel (0) target = $region33
  $region32: #{_lambda_.20} parent=0 // pred_region
    _
  $region33: #{_lambda_.20} parent=0 // pred_fallthru
    _

// kernel: _lambda_.22
$region0: #{_lambda_.22}
  #allocation0 [shape = 'u32[]', space=smem, size = 0x4, offset = 0x4, fixed_abs, tag = 'smem constant byte address 0x4 - core index']
  #allocation1 [shape = 'u32[144,128]{1,0:T(1,128)}', space=vmem, size = 0x12000, scoped, tag = 'internal scratch']
  #allocation2 [shape = 'f32[128,128]{1,0:T(8,128)}', space=vmem, size = 0x10000, scoped, tag = 'scratch operand']
  %s0 = inlined_call_operand.vmem [shape: bf16[128,128], index: 0, kind: input, shape index: {}]
  %s1 = inlined_call_operand.vmem [shape: bf16[128,128], index: 1, kind: input, shape index: {}]
  %s2 = inlined_call_operand.vmem [shape: f32[1,128], index: 2, kind: input, shape index: {}]
  %s3 = inlined_call_operand.vmem [shape: f32[1,128], index: 3, kind: input, shape index: {}]
  %s4 = inlined_call_operand.vmem [shape: bf16[128,128], index: 4, kind: output, shape index: {}]
  %s5 = sld [smem:[#allocation0]]
  $region34: #{_lambda_.22} parent=0
    _
  %s7 = ssub.s32 1, %s5
  %s8 = scalar_select 0, %s7, %s5
  // Predicated region
  $region2: #{_lambda_.22} parent=0 // pred_check
    _
  $region3: #{_lambda_.22} parent=0 // pred_check_branch
    %10 = sbr.rel (0) target = $region5
  $region4: #{_lambda_.22} parent=0 // pred_region
    _
  $region5: #{_lambda_.22} parent=0 // pred_fallthru
    _
  // Predicated region
  $region6: #{_lambda_.22} parent=0 // pred_check
    _
  $region7: #{_lambda_.22} parent=0 // pred_check_branch
    %12 = sbr.rel (0) target = $region9
  $region8: #{_lambda_.22} parent=0 // pred_region
    _
  $region9: #{_lambda_.22} parent=0 // pred_fallthru
    _
  // Predicated region
  $region10: #{_lambda_.22} parent=0 // pred_check
    _
  $region11: #{_lambda_.22} parent=0 // pred_check_branch
    %14 = sbr.rel (0) target = $region13
  $region12: #{_lambda_.22} parent=0 // pred_region
    _
  $region13: #{_lambda_.22} parent=0 // pred_fallthru
    _
  // Predicated region
  $region14: #{_lambda_.22} parent=0 // pred_check
    _
  $region15: #{_lambda_.22} parent=0 // pred_check_branch
    %16 = sbr.rel (0) target = $region17
  $region16: #{_lambda_.22} parent=0 // pred_region
    _
  $region17: #{_lambda_.22} parent=0 // pred_fallthru
    _
  %p18 = scmp.eq.s32.totalorder 0, 0
  // Predicated region
  $region18: #{_lambda_.22} parent=0 // pred_check
    %p19 = pneg %p18
  $region19: #{_lambda_.22} parent=0 // pred_check_branch
    %21 = sbr.rel (%p19) target = $region21
  $region20: #{_lambda_.22} parent=0 // pred_region
    %22 = vst [vmem:[#allocation2] sm:$0xff] 0.0
    %23 = vst [vmem:[#allocation2 + $0x8] sm:$0xff] 0.0
    %24 = vst [vmem:[#allocation2 + $0x10] sm:$0xff] 0.0
    %25 = vst [vmem:[#allocation2 + $0x18] sm:$0xff] 0.0
    %26 = vst [vmem:[#allocation2 + $0x20] sm:$0xff] 0.0
    %27 = vst [vmem:[#allocation2 + $0x28] sm:$0xff] 0.0
    %28 = vst [vmem:[#allocation2 + $0x30] sm:$0xff] 0.0
    %29 = vst [vmem:[#allocation2 + $0x38] sm:$0xff] 0.0
    %30 = vst [vmem:[#allocation2 + $0x40] sm:$0xff] 0.0
    %31 = vst [vmem:[#allocation2 + $0x48] sm:$0xff] 0.0
    %32 = vst [vmem:[#allocation2 + $0x50] sm:$0xff] 0.0
    %33 = vst [vmem:[#allocation2 + $0x58] sm:$0xff] 0.0
    %34 = vst [vmem:[#allocation2 + $0x60] sm:$0xff] 0.0
    %35 = vst [vmem:[#allocation2 + $0x68] sm:$0xff] 0.0
    %36 = vst [vmem:[#allocation2 + $0x70] sm:$0xff] 0.0
    %37 = vst [vmem:[#allocation2 + $0x78] sm:$0xff] 0.0
  $region21: #{_lambda_.22} parent=0 // pred_fallthru
    _
  %v38 = vld [vmem:[#allocation2] sm:$0xff]
  %v39 = vld [vmem:[#allocation2 + $0x8] sm:$0xff]
  %v40 = vld [vmem:[#allocation2 + $0x10] sm:$0xff]
  %v41 = vld [vmem:[#allocation2 + $0x18] sm:$0xff]
  %v42 = vld [vmem:[#allocation2 + $0x20] sm:$0xff]
  %v43 = vld [vmem:[#allocation2 + $0x28] sm:$0xff]
  %v44 = vld [vmem:[#allocation2 + $0x30] sm:$0xff]
  %v45 = vld [vmem:[#allocation2 + $0x38] sm:$0xff]
  %v46 = vld [vmem:[#allocation2 + $0x40] sm:$0xff]
  %v47 = vld [vmem:[#allocation2 + $0x48] sm:$0xff]
  %v48 = vld [vmem:[#allocation2 + $0x50] sm:$0xff]
  %v49 = vld [vmem:[#allocation2 + $0x58] sm:$0xff]
  %v50 = vld [vmem:[#allocation2 + $0x60] sm:$0xff]
  %v51 = vld [vmem:[#allocation2 + $0x68] sm:$0xff]
  %v52 = vld [vmem:[#allocation2 + $0x70] sm:$0xff]
  %v53 = vld [vmem:[#allocation2 + $0x78] sm:$0xff]
  %v54 = vld [vmem:[%s0] sm:$0xf]
  %v55 = vld [vmem:[%s0 + $0x4] sm:$0xf]
  %v56 = vld [vmem:[%s0 + $0x8] sm:$0xf]
  %v57 = vld [vmem:[%s0 + $0xc] sm:$0xf]
  %v58 = vld [vmem:[%s0 + $0x10] sm:$0xf]
  %v59 = vld [vmem:[%s0 + $0x14] sm:$0xf]
  %v60 = vld [vmem:[%s0 + $0x18] sm:$0xf]
  %v61 = vld [vmem:[%s0 + $0x1c] sm:$0xf]
  %v62 = vld [vmem:[%s0 + $0x20] sm:$0xf]
  %v63 = vld [vmem:[%s0 + $0x24] sm:$0xf]
  %v64 = vld [vmem:[%s0 + $0x28] sm:$0xf]
  %v65 = vld [vmem:[%s0 + $0x2c] sm:$0xf]
  %v66 = vld [vmem:[%s0 + $0x30] sm:$0xf]
  %v67 = vld [vmem:[%s0 + $0x34] sm:$0xf]
  %v68 = vld [vmem:[%s0 + $0x38] sm:$0xf]
  %v69 = vld [vmem:[%s0 + $0x3c] sm:$0xf]
  %v70 = vld [vmem:[%s1] sm:$0xf]
  %v71 = vld [vmem:[%s1 + $0x4] sm:$0xf]
  %v72 = vld [vmem:[%s1 + $0x8] sm:$0xf]
  %v73 = vld [vmem:[%s1 + $0xc] sm:$0xf]
  %v74 = vld [vmem:[%s1 + $0x10] sm:$0xf]
  %v75 = vld [vmem:[%s1 + $0x14] sm:$0xf]
  %v76 = vld [vmem:[%s1 + $0x18] sm:$0xf]
  %v77 = vld [vmem:[%s1 + $0x1c] sm:$0xf]
  %v78 = vld [vmem:[%s1 + $0x20] sm:$0xf]
  %v79 = vld [vmem:[%s1 + $0x24] sm:$0xf]
  %v80 = vld [vmem:[%s1 + $0x28] sm:$0xf]
  %v81 = vld [vmem:[%s1 + $0x2c] sm:$0xf]
  %v82 = vld [vmem:[%s1 + $0x30] sm:$0xf]
  %v83 = vld [vmem:[%s1 + $0x34] sm:$0xf]
  %v84 = vld [vmem:[%s1 + $0x38] sm:$0xf]
  %v85 = vld [vmem:[%s1 + $0x3c] sm:$0xf]
  %v102 = vunpack.c.l.b16 %v54
  %v103 = vunpack.c.l.b16 %v55
  %v104 = vunpack.c.l.b16 %v56
  %v105 = vunpack.c.l.b16 %v57
  %v106 = vunpack.c.l.b16 %v58
  %v107 = vunpack.c.l.b16 %v59
  %v108 = vunpack.c.l.b16 %v60
  %v109 = vunpack.c.l.b16 %v61
  %v110 = vunpack.c.l.b16 %v62
  %v111 = vunpack.c.l.b16 %v63
  %v112 = vunpack.c.l.b16 %v64
  %v113 = vunpack.c.l.b16 %v65
  %v114 = vunpack.c.l.b16 %v66
  %v115 = vunpack.c.l.b16 %v67
  %v116 = vunpack.c.l.b16 %v68
  %v117 = vunpack.c.l.b16 %v69
  %v118 = vpack.c.b16 %v103, %v102
  %v119 = vpack.c.b16 %v105, %v104
  %v120 = vpack.c.b16 %v107, %v106
  %v121 = vpack.c.b16 %v109, %v108
  %v122 = vpack.c.b16 %v111, %v110
  %v123 = vpack.c.b16 %v113, %v112
  %v124 = vpack.c.b16 %v115, %v114
  %v125 = vpack.c.b16 %v117, %v116
  %v150 = vunpack.c.l.b16 %v70
  %v151 = vunpack.c.l.b16 %v71
  %v152 = vunpack.c.l.b16 %v72
  %v153 = vunpack.c.l.b16 %v73
  %v154 = vunpack.c.l.b16 %v74
  %v155 = vunpack.c.l.b16 %v75
  %v156 = vunpack.c.l.b16 %v76
  %v157 = vunpack.c.l.b16 %v77
  %v158 = vunpack.c.l.b16 %v78
  %v159 = vunpack.c.l.b16 %v79
  %v160 = vunpack.c.l.b16 %v80
  %v161 = vunpack.c.l.b16 %v81
  %v162 = vunpack.c.l.b16 %v82
  %v163 = vunpack.c.l.b16 %v83
  %v164 = vunpack.c.l.b16 %v84
  %v165 = vunpack.c.l.b16 %v85
  %v166 = vpack.c.b16 %v151, %v150
  %v167 = vpack.c.b16 %v153, %v152
  %v168 = vpack.c.b16 %v155, %v154
  %v169 = vpack.c.b16 %v157, %v156
  %v170 = vpack.c.b16 %v159, %v158
  %v171 = vpack.c.b16 %v161, %v160
  %v172 = vpack.c.b16 %v163, %v162
  %v173 = vpack.c.b16 %v165, %v164
  %182 = vmatprep.subr.bf16.mxu0 0
  %183 = vmatpush1.bf16.msra.mxu0 %v166
  %184 = vmatprep.subr.bf16.mxu0 0
  %185 = vmatpush1.bf16.msra.mxu0 %v167
  %186 = vmatprep.subr.bf16.mxu0 0
  %187 = vmatpush1.bf16.msra.mxu0 %v168
  %188 = vmatprep.subr.bf16.mxu0 0
  %189 = vmatpush1.bf16.msra.mxu0 %v169
  %190 = vmatprep.subr.bf16.mxu0 0
  %191 = vmatpush1.bf16.msra.mxu0 %v170
  %192 = vmatprep.subr.bf16.mxu0 0
  %193 = vmatpush1.bf16.msra.mxu0 %v171
  %194 = vmatprep.subr.bf16.mxu0 0
  %195 = vmatpush1.bf16.msra.mxu0 %v172
  %196 = vmatprep.subr.bf16.mxu0 0
  %197 = vmatpush1.bf16.msra.mxu0 %v173
  %198 = vmatprep.subr.bf16.mxu0 0
  %199 = vmatpush1.bf16.msra.mxu0 0
  %200 = vmatprep.subr.bf16.mxu0 0
  %201 = vmatpush1.bf16.msra.mxu0 0
  %202 = vmatprep.subr.bf16.mxu0 0
  %203 = vmatpush1.bf16.msra.mxu0 0
  %204 = vmatprep.subr.bf16.mxu0 0
  %205 = vmatpush1.bf16.msra.mxu0 0
  %206 = vmatprep.subr.bf16.mxu0 0
  %207 = vmatpush1.bf16.msra.mxu0 0
  %208 = vmatprep.subr.bf16.mxu0 0
  %209 = vmatpush1.bf16.msra.mxu0 0
  %210 = vmatprep.subr.bf16.mxu0 0
  %211 = vmatpush1.bf16.msra.mxu0 0
  %212 = vmatprep.subr.bf16.mxu0 0
  %213 = vmatpush1.bf16.msra.mxu0 0
  %214 = vmatprep.mubr.bf16.mxu0 0
  %215 = vmatmul.mubr.bf16.gmra.mrb[0].mxu0 %v118
  %v216 = vpop.f32.mrb[0].mxu0
  %v217 = vadd.f32 0.0, %v216
  %v218 = vpop.f32.mrb[0].mxu0
  %v219 = vpop.f32.mrb[0].mxu0
  %v220 = vadd.f32 0.0, %v219
  %v221 = vpop.f32.mrb[0].mxu0
  %222 = vmatprep.mubr.bf16.mxu0 0
  %223 = vmatmul.mubr.bf16.gmra.mrb[0].mxu0 %v119
  %v224 = vpop.f32.mrb[0].mxu0
  %v225 = vadd.f32 0.0, %v224
  %v226 = vpop.f32.mrb[0].mxu0
  %v227 = vpop.f32.mrb[0].mxu0
  %v228 = vadd.f32 0.0, %v227
  %v229 = vpop.f32.mrb[0].mxu0
  %230 = vmatprep.mubr.bf16.mxu0 0
  %231 = vmatmul.mubr.bf16.gmra.mrb[0].mxu0 %v120
  %v232 = vpop.f32.mrb[0].mxu0
  %v233 = vadd.f32 0.0, %v232
  %v234 = vpop.f32.mrb[0].mxu0
  %v235 = vpop.f32.mrb[0].mxu0
  %v236 = vadd.f32 0.0, %v235
  %v237 = vpop.f32.mrb[0].mxu0
  %238 = vmatprep.mubr.bf16.mxu0 0
  %239 = vmatmul.mubr.bf16.gmra.mrb[0].mxu0 %v121
  %v240 = vpop.f32.mrb[0].mxu0
  %v241 = vadd.f32 0.0, %v240
  %v242 = vpop.f32.mrb[0].mxu0
  %v243 = vpop.f32.mrb[0].mxu0
  %v244 = vadd.f32 0.0, %v243
  %v245 = vpop.f32.mrb[0].mxu0
  %246 = vmatprep.mubr.bf16.mxu0 0
  %247 = vmatmul.mubr.bf16.gmra.mrb[0].mxu0 %v122
  %v248 = vpop.f32.mrb[0].mxu0
  %v249 = vadd.f32 0.0, %v248
  %v250 = vpop.f32.mrb[0].mxu0
  %v251 = vpop.f32.mrb[0].mxu0
  %v252 = vadd.f32 0.0, %v251
  %v253 = vpop.f32.mrb[0].mxu0
  %254 = vmatprep.mubr.bf16.mxu0 0
  %255 = vmatmul.mubr.bf16.gmra.mrb[0].mxu0 %v123
  %v256 = vpop.f32.mrb[0].mxu0
  %v257 = vadd.f32 0.0, %v256
  %v258 = vpop.f32.mrb[0].mxu0
  %v259 = vpop.f32.mrb[0].mxu0
  %v260 = vadd.f32 0.0, %v259
  %v261 = vpop.f32.mrb[0].mxu0
  %262 = vmatprep.mubr.bf16.mxu0 0
  %263 = vmatmul.mubr.bf16.gmra.mrb[0].mxu0 %v124
  %v264 = vpop.f32.mrb[0].mxu0
  %v265 = vadd.f32 0.0, %v264
  %v266 = vpop.f32.mrb[0].mxu0
  %v267 = vpop.f32.mrb[0].mxu0
  %v268 = vadd.f32 0.0, %v267
  %v269 = vpop.f32.mrb[0].mxu0
  %270 = vmatprep.mubr.bf16.mxu0 0
  %271 = vmatmul.mubr.bf16.gmra.mrb[0].mxu0 %v125
  %v272 = vpop.f32.mrb[0].mxu0
  %v273 = vadd.f32 0.0, %v272
  %v274 = vpop.f32.mrb[0].mxu0
  %v275 = vpop.f32.mrb[0].mxu0
  %v276 = vadd.f32 0.0, %v275
  %v277 = vpop.f32.mrb[0].mxu0
  %278 = vdwg.mxu0
  %v279 = vadd.f32 %v38, %v217
  %v280 = vadd.f32 %v39, %v220
  %v281 = vadd.f32 %v40, %v225
  %v282 = vadd.f32 %v41, %v228
  %v283 = vadd.f32 %v42, %v233
  %v284 = vadd.f32 %v43, %v236
  %v285 = vadd.f32 %v44, %v241
  %v286 = vadd.f32 %v45, %v244
  %v287 = vadd.f32 %v46, %v249
  %v288 = vadd.f32 %v47, %v252
  %v289 = vadd.f32 %v48, %v257
  %v290 = vadd.f32 %v49, %v260
  %v291 = vadd.f32 %v50, %v265
  %v292 = vadd.f32 %v51, %v268
  %v293 = vadd.f32 %v52, %v273
  %v294 = vadd.f32 %v53, %v276
  %295 = vst [vmem:[#allocation2] sm:$0xff] %v279
  %296 = vst [vmem:[#allocation2 + $0x8] sm:$0xff] %v280
  %297 = vst [vmem:[#allocation2 + $0x10] sm:$0xff] %v281
  %298 = vst [vmem:[#allocation2 + $0x18] sm:$0xff] %v282
  %299 = vst [vmem:[#allocation2 + $0x20] sm:$0xff] %v283
  %300 = vst [vmem:[#allocation2 + $0x28] sm:$0xff] %v284
  %301 = vst [vmem:[#allocation2 + $0x30] sm:$0xff] %v285
  %302 = vst [vmem:[#allocation2 + $0x38] sm:$0xff] %v286
  %303 = vst [vmem:[#allocation2 + $0x40] sm:$0xff] %v287
  %304 = vst [vmem:[#allocation2 + $0x48] sm:$0xff] %v288
  %305 = vst [vmem:[#allocation2 + $0x50] sm:$0xff] %v289
  %306 = vst [vmem:[#allocation2 + $0x58] sm:$0xff] %v290
  %307 = vst [vmem:[#allocation2 + $0x60] sm:$0xff] %v291
  %308 = vst [vmem:[#allocation2 + $0x68] sm:$0xff] %v292
  %309 = vst [vmem:[#allocation2 + $0x70] sm:$0xff] %v293
  %310 = vst [vmem:[#allocation2 + $0x78] sm:$0xff] %v294
  // Predicated region
  $region22: #{_lambda_.22} parent=0 // pred_check
    %p311 = pneg %p18
  $region23: #{_lambda_.22} parent=0 // pred_check_branch
    %313 = sbr.rel (%p311) target = $region25
  $region24: #{_lambda_.22} parent=0 // pred_region
    %v314 = vld [vmem:[#allocation2] sm:$0xff]
    %v315 = vld [vmem:[#allocation2 + $0x8] sm:$0xff]
    %v316 = vld [vmem:[#allocation2 + $0x10] sm:$0xff]
    %v317 = vld [vmem:[#allocation2 + $0x18] sm:$0xff]
    %v318 = vld [vmem:[#allocation2 + $0x20] sm:$0xff]
    %v319 = vld [vmem:[#allocation2 + $0x28] sm:$0xff]
    %v320 = vld [vmem:[#allocation2 + $0x30] sm:$0xff]
    %v321 = vld [vmem:[#allocation2 + $0x38] sm:$0xff]
    %v322 = vld [vmem:[#allocation2 + $0x40] sm:$0xff]
    %v323 = vld [vmem:[#allocation2 + $0x48] sm:$0xff]
    %v324 = vld [vmem:[#allocation2 + $0x50] sm:$0xff]
    %v325 = vld [vmem:[#allocation2 + $0x58] sm:$0xff]
    %v326 = vld [vmem:[#allocation2 + $0x60] sm:$0xff]
    %v327 = vld [vmem:[#allocation2 + $0x68] sm:$0xff]
    %v328 = vld [vmem:[#allocation2 + $0x70] sm:$0xff]
    %v329 = vld [vmem:[#allocation2 + $0x78] sm:$0xff]
    %v330 = vld [vmem:[%s2] sm:$0x1]
    %v332 = vlaneseq
    %v333 = vshrl.u32 %v332, 7
    %v334 = vsub.s32 0, %v333
    %v335 = vrot.slane %v330, %v334
    %v337 = vmul.f32 %v314, %v335
    %v338 = vmul.f32 %v315, %v335
    %v339 = vmul.f32 %v316, %v335
    %v340 = vmul.f32 %v317, %v335
    %v341 = vmul.f32 %v318, %v335
    %v342 = vmul.f32 %v319, %v335
    %v343 = vmul.f32 %v320, %v335
    %v344 = vmul.f32 %v321, %v335
    %v345 = vmul.f32 %v322, %v335
    %v346 = vmul.f32 %v323, %v335
    %v347 = vmul.f32 %v324, %v335
    %v348 = vmul.f32 %v325, %v335
    %v349 = vmul.f32 %v326, %v335
    %v350 = vmul.f32 %v327, %v335
    %v351 = vmul.f32 %v328, %v335
    %v352 = vmul.f32 %v329, %v335
    %v353 = vld [vmem:[%s3] sm:$0x1]
    %v355 = vlaneseq
    %v356 = vshrl.u32 %v355, 7
    %v357 = vsub.s32 0, %v356
    %v358 = vrot.slane %v353, %v357
    %v360 = vadd.f32 %v337, %v358
    %v361 = vadd.f32 %v338, %v358
    %v362 = vadd.f32 %v339, %v358
    %v363 = vadd.f32 %v340, %v358
    %v364 = vadd.f32 %v341, %v358
    %v365 = vadd.f32 %v342, %v358
    %v366 = vadd.f32 %v343, %v358
    %v367 = vadd.f32 %v344, %v358
    %v368 = vadd.f32 %v345, %v358
    %v369 = vadd.f32 %v346, %v358
    %v370 = vadd.f32 %v347, %v358
    %v371 = vadd.f32 %v348, %v358
    %v372 = vadd.f32 %v349, %v358
    %v373 = vadd.f32 %v350, %v358
    %v374 = vadd.f32 %v351, %v358
    %v375 = vadd.f32 %v352, %v358
    %v376 = vsub.f32 0.0, %v360
    %v377 = vsub.f32 0.0, %v361
    %v378 = vsub.f32 0.0, %v362
    %v379 = vsub.f32 0.0, %v363
    %v380 = vsub.f32 0.0, %v364
    %v381 = vsub.f32 0.0, %v365
    %v382 = vsub.f32 0.0, %v366
    %v383 = vsub.f32 0.0, %v367
    %v384 = vsub.f32 0.0, %v368
    %v385 = vsub.f32 0.0, %v369
    %v386 = vsub.f32 0.0, %v370
    %v387 = vsub.f32 0.0, %v371
    %v388 = vsub.f32 0.0, %v372
    %v389 = vsub.f32 0.0, %v373
    %v390 = vsub.f32 0.0, %v374
    %v391 = vsub.f32 0.0, %v375
    %v392 = vmul.f32 %v376, 1.442695
    %v393 = vpow.pop %v392
    %v394 = vmul.f32 %v377, 1.442695
    %v395 = vpow.pop %v394
    %v396 = vmul.f32 %v378, 1.442695
    %v397 = vpow.pop %v396
    %v398 = vmul.f32 %v379, 1.442695
    %v399 = vpow.pop %v398
    %v400 = vmul.f32 %v380, 1.442695
    %v401 = vpow.pop %v400
    %v402 = vmul.f32 %v381, 1.442695
    %v403 = vpow.pop %v402
    %v404 = vmul.f32 %v382, 1.442695
    %v405 = vpow.pop %v404
    %v406 = vmul.f32 %v383, 1.442695
    %v407 = vpow.pop %v406
    %v408 = vmul.f32 %v384, 1.442695
    %v409 = vpow.pop %v408
    %v410 = vmul.f32 %v385, 1.442695
    %v411 = vpow.pop %v410
    %v412 = vmul.f32 %v386, 1.442695
    %v413 = vpow.pop %v412
    %v414 = vmul.f32 %v387, 1.442695
    %v415 = vpow.pop %v414
    %v416 = vmul.f32 %v388, 1.442695
    %v417 = vpow.pop %v416
    %v418 = vmul.f32 %v389, 1.442695
    %v419 = vpow.pop %v418
    %v420 = vmul.f32 %v390, 1.442695
    %v421 = vpow.pop %v420
    %v422 = vmul.f32 %v391, 1.442695
    %v423 = vpow.pop %v422
    %v424 = vadd.f32 %v393, 1.0
    %v425 = vadd.f32 %v395, 1.0
    %v426 = vadd.f32 %v397, 1.0
    %v427 = vadd.f32 %v399, 1.0
    %v428 = vadd.f32 %v401, 1.0
    %v429 = vadd.f32 %v403, 1.0
    %v430 = vadd.f32 %v405, 1.0
    %v431 = vadd.f32 %v407, 1.0
    %v432 = vadd.f32 %v409, 1.0
    %v433 = vadd.f32 %v411, 1.0
    %v434 = vadd.f32 %v413, 1.0
    %v435 = vadd.f32 %v415, 1.0
    %v436 = vadd.f32 %v417, 1.0
    %v437 = vadd.f32 %v419, 1.0
    %v438 = vadd.f32 %v421, 1.0
    %v439 = vadd.f32 %v423, 1.0
    %v440 = vrcp.pop %v424
    %v441 = vrcp.pop %v425
    %v442 = vrcp.pop %v426
    %v443 = vrcp.pop %v427
    %v444 = vrcp.pop %v428
    %v445 = vrcp.pop %v429
    %v446 = vrcp.pop %v430
    %v447 = vrcp.pop %v431
    %v448 = vrcp.pop %v432
    %v449 = vrcp.pop %v433
    %v450 = vrcp.pop %v434
    %v451 = vrcp.pop %v435
    %v452 = vrcp.pop %v436
    %v453 = vrcp.pop %v437
    %v454 = vrcp.pop %v438
    %v455 = vrcp.pop %v439
    %v456 = vmul.f32 %v360, %v440
    %v457 = vmul.f32 %v361, %v441
    %v458 = vmul.f32 %v362, %v442
    %v459 = vmul.f32 %v363, %v443
    %v460 = vmul.f32 %v364, %v444
    %v461 = vmul.f32 %v365, %v445
    %v462 = vmul.f32 %v366, %v446
    %v463 = vmul.f32 %v367, %v447
    %v464 = vmul.f32 %v368, %v448
    %v465 = vmul.f32 %v369, %v449
    %v466 = vmul.f32 %v370, %v450
    %v467 = vmul.f32 %v371, %v451
    %v468 = vmul.f32 %v372, %v452
    %v469 = vmul.f32 %v373, %v453
    %v470 = vmul.f32 %v374, %v454
    %v471 = vmul.f32 %v375, %v455
    %v472 = vpack.c.bf16 %v457, %v456
    %v473 = vpack.c.bf16 %v459, %v458
    %v474 = vpack.c.bf16 %v461, %v460
    %v475 = vpack.c.bf16 %v463, %v462
    %v476 = vpack.c.bf16 %v465, %v464
    %v477 = vpack.c.bf16 %v467, %v466
    %v478 = vpack.c.bf16 %v469, %v468
    %v479 = vpack.c.bf16 %v471, %v470
    %v488 = vunpack.c.l.b16 %v472
    %v489 = vunpack.c.h.b16 %v472
    %v490 = vunpack.c.l.b16 %v473
    %v491 = vunpack.c.h.b16 %v473
    %v492 = vunpack.c.l.b16 %v474
    %v493 = vunpack.c.h.b16 %v474
    %v494 = vunpack.c.l.b16 %v475
    %v495 = vunpack.c.h.b16 %v475
    %v496 = vunpack.c.l.b16 %v476
    %v497 = vunpack.c.h.b16 %v476
    %v498 = vunpack.c.l.b16 %v477
    %v499 = vunpack.c.h.b16 %v477
    %v500 = vunpack.c.l.b16 %v478
    %v501 = vunpack.c.h.b16 %v478
    %v502 = vunpack.c.l.b16 %v479
    %v503 = vunpack.c.h.b16 %v479
    %v504 = vpack.c.b16 %v488, %v488
    %v505 = vpack.c.b16 %v489, %v489
    %v506 = vpack.c.b16 %v490, %v490
    %v507 = vpack.c.b16 %v491, %v491
    %v508 = vpack.c.b16 %v492, %v492
    %v509 = vpack.c.b16 %v493, %v493
    %v510 = vpack.c.b16 %v494, %v494
    %v511 = vpack.c.b16 %v495, %v495
    %v512 = vpack.c.b16 %v496, %v496
    %v513 = vpack.c.b16 %v497, %v497
    %v514 = vpack.c.b16 %v498, %v498
    %v515 = vpack.c.b16 %v499, %v499
    %v516 = vpack.c.b16 %v500, %v500
    %v517 = vpack.c.b16 %v501, %v501
    %v518 = vpack.c.b16 %v502, %v502
    %v519 = vpack.c.b16 %v503, %v503
    %536 = vst [vmem:[%s4] sm:$0xf] %v504
    %537 = vst [vmem:[%s4 + $0x4] sm:$0xf] %v505
    %538 = vst [vmem:[%s4 + $0x8] sm:$0xf] %v506
    %539 = vst [vmem:[%s4 + $0xc] sm:$0xf] %v507
    %540 = vst [vmem:[%s4 + $0x10] sm:$0xf] %v508
    %541 = vst [vmem:[%s4 + $0x14] sm:$0xf] %v509
    %542 = vst [vmem:[%s4 + $0x18] sm:$0xf] %v510
    %543 = vst [vmem:[%s4 + $0x1c] sm:$0xf] %v511
    %544 = vst [vmem:[%s4 + $0x20] sm:$0xf] %v512
    %545 = vst [vmem:[%s4 + $0x24] sm:$0xf] %v513
    %546 = vst [vmem:[%s4 + $0x28] sm:$0xf] %v514
    %547 = vst [vmem:[%s4 + $0x2c] sm:$0xf] %v515
    %548 = vst [vmem:[%s4 + $0x30] sm:$0xf] %v516
    %549 = vst [vmem:[%s4 + $0x34] sm:$0xf] %v517
    %550 = vst [vmem:[%s4 + $0x38] sm:$0xf] %v518
    %551 = vst [vmem:[%s4 + $0x3c] sm:$0xf] %v519
  $region25: #{_lambda_.22} parent=0 // pred_fallthru
    _
  // Predicated region
  $region26: #{_lambda_.22} parent=0 // pred_check
    _
  $region27: #{_lambda_.22} parent=0 // pred_check_branch
    %553 = sbr.rel (0) target = $region29
  $region28: #{_lambda_.22} parent=0 // pred_region
    _
  $region29: #{_lambda_.22} parent=0 // pred_fallthru
    _
  // Predicated region
  $region30: #{_lambda_.22} parent=0 // pred_check
    _
  $region31: #{_lambda_.22} parent=0 // pred_check_branch
    %555 = sbr.rel (0) target = $region33
  $region32: #{_lambda_.22} parent=0 // pred_region
    _
  $region33: #{_lambda_.22} parent=0 // pred_fallthru
    _

// kernel: _lambda_.21
$region0: #{_lambda_.21}
  #allocation0 [shape = 'u32[]', space=smem, size = 0x4, offset = 0x4, fixed_abs, tag = 'smem constant byte address 0x4 - core index']
  #allocation1 [shape = 'u32[144,128]{1,0:T(1,128)}', space=vmem, size = 0x12000, scoped, tag = 'internal scratch']
  %s0 = inlined_call_operand.vmem [shape: bf16[128,128], index: 0, kind: input, shape index: {}]
  %s1 = inlined_call_operand.vmem [shape: bf16[128,128], index: 1, kind: input, shape index: {}]
  %s2 = inlined_call_operand.vmem [shape: bf16[128,128], index: 2, kind: input, shape index: {}]
  %s3 = inlined_call_operand.vmem [shape: bf16[128,128], index: 3, kind: input, shape index: {}]
  %s4 = inlined_call_operand.vmem [shape: f32[1,128], index: 4, kind: input, shape index: {}]
  %s5 = inlined_call_operand.vmem [shape: f32[1,128], index: 5, kind: input, shape index: {}]
  %s6 = inlined_call_operand.vmem [shape: bf16[128,128], index: 6, kind: output, shape index: {}]
  %s7 = sld [smem:[#allocation0]]
  $region34: #{_lambda_.21} parent=0
    _
  %s9 = ssub.s32 1, %s7
  %s10 = scalar_select 0, %s9, %s7
  // Predicated region
  $region2: #{_lambda_.21} parent=0 // pred_check
    _
  $region3: #{_lambda_.21} parent=0 // pred_check_branch
    %12 = sbr.rel (0) target = $region5
  $region4: #{_lambda_.21} parent=0 // pred_region
    _
  $region5: #{_lambda_.21} parent=0 // pred_fallthru
    _
  // Predicated region
  $region6: #{_lambda_.21} parent=0 // pred_check
    _
  $region7: #{_lambda_.21} parent=0 // pred_check_branch
    %14 = sbr.rel (0) target = $region9
  $region8: #{_lambda_.21} parent=0 // pred_region
    _
  $region9: #{_lambda_.21} parent=0 // pred_fallthru
    _
  // Predicated region
  $region10: #{_lambda_.21} parent=0 // pred_check
    _
  $region11: #{_lambda_.21} parent=0 // pred_check_branch
    %16 = sbr.rel (0) target = $region13
  $region12: #{_lambda_.21} parent=0 // pred_region
    _
  $region13: #{_lambda_.21} parent=0 // pred_fallthru
    _
  // Predicated region
  $region14: #{_lambda_.21} parent=0 // pred_check
    _
  $region15: #{_lambda_.21} parent=0 // pred_check_branch
    %18 = sbr.rel (0) target = $region17
  $region16: #{_lambda_.21} parent=0 // pred_region
    _
  $region17: #{_lambda_.21} parent=0 // pred_fallthru
    _
  // Predicated region
  $region18: #{_lambda_.21} parent=0 // pred_check
    _
  $region19: #{_lambda_.21} parent=0 // pred_check_branch
    %20 = sbr.rel (0) target = $region21
  $region20: #{_lambda_.21} parent=0 // pred_region
    _
  $region21: #{_lambda_.21} parent=0 // pred_fallthru
    _
  // Predicated region
  $region22: #{_lambda_.21} parent=0 // pred_check
    _
  $region23: #{_lambda_.21} parent=0 // pred_check_branch
    %22 = sbr.rel (0) target = $region25
  $region24: #{_lambda_.21} parent=0 // pred_region
    _
  $region25: #{_lambda_.21} parent=0 // pred_fallthru
    _
  %v24 = vld [vmem:[%s0] sm:$0xf]
  %v25 = vld [vmem:[%s0 + $0x4] sm:$0xf]
  %v26 = vld [vmem:[%s0 + $0x8] sm:$0xf]
  %v27 = vld [vmem:[%s0 + $0xc] sm:$0xf]
  %v28 = vld [vmem:[%s0 + $0x10] sm:$0xf]
  %v29 = vld [vmem:[%s0 + $0x14] sm:$0xf]
  %v30 = vld [vmem:[%s0 + $0x18] sm:$0xf]
  %v31 = vld [vmem:[%s0 + $0x1c] sm:$0xf]
  %v32 = vld [vmem:[%s0 + $0x20] sm:$0xf]
  %v33 = vld [vmem:[%s0 + $0x24] sm:$0xf]
  %v34 = vld [vmem:[%s0 + $0x28] sm:$0xf]
  %v35 = vld [vmem:[%s0 + $0x2c] sm:$0xf]
  %v36 = vld [vmem:[%s0 + $0x30] sm:$0xf]
  %v37 = vld [vmem:[%s0 + $0x34] sm:$0xf]
  %v38 = vld [vmem:[%s0 + $0x38] sm:$0xf]
  %v39 = vld [vmem:[%s0 + $0x3c] sm:$0xf]
  %v40 = vld [vmem:[%s2] sm:$0xf]
  %v41 = vld [vmem:[%s2 + $0x4] sm:$0xf]
  %v42 = vld [vmem:[%s2 + $0x8] sm:$0xf]
  %v43 = vld [vmem:[%s2 + $0xc] sm:$0xf]
  %v44 = vld [vmem:[%s2 + $0x10] sm:$0xf]
  %v45 = vld [vmem:[%s2 + $0x14] sm:$0xf]
  %v46 = vld [vmem:[%s2 + $0x18] sm:$0xf]
  %v47 = vld [vmem:[%s2 + $0x1c] sm:$0xf]
  %v48 = vld [vmem:[%s2 + $0x20] sm:$0xf]
  %v49 = vld [vmem:[%s2 + $0x24] sm:$0xf]
  %v50 = vld [vmem:[%s2 + $0x28] sm:$0xf]
  %v51 = vld [vmem:[%s2 + $0x2c] sm:$0xf]
  %v52 = vld [vmem:[%s2 + $0x30] sm:$0xf]
  %v53 = vld [vmem:[%s2 + $0x34] sm:$0xf]
  %v54 = vld [vmem:[%s2 + $0x38] sm:$0xf]
  %v55 = vld [vmem:[%s2 + $0x3c] sm:$0xf]
  %v56 = vld [vmem:[%s1] sm:$0xf]
  %v57 = vld [vmem:[%s1 + $0x4] sm:$0xf]
  %v58 = vld [vmem:[%s1 + $0x8] sm:$0xf]
  %v59 = vld [vmem:[%s1 + $0xc] sm:$0xf]
  %v60 = vld [vmem:[%s1 + $0x10] sm:$0xf]
  %v61 = vld [vmem:[%s1 + $0x14] sm:$0xf]
  %v62 = vld [vmem:[%s1 + $0x18] sm:$0xf]
  %v63 = vld [vmem:[%s1 + $0x1c] sm:$0xf]
  %v64 = vld [vmem:[%s1 + $0x20] sm:$0xf]
  %v65 = vld [vmem:[%s1 + $0x24] sm:$0xf]
  %v66 = vld [vmem:[%s1 + $0x28] sm:$0xf]
  %v67 = vld [vmem:[%s1 + $0x2c] sm:$0xf]
  %v68 = vld [vmem:[%s1 + $0x30] sm:$0xf]
  %v69 = vld [vmem:[%s1 + $0x34] sm:$0xf]
  %v70 = vld [vmem:[%s1 + $0x38] sm:$0xf]
  %v71 = vld [vmem:[%s1 + $0x3c] sm:$0xf]
  %v72 = vld [vmem:[%s3] sm:$0xf]
  %v73 = vld [vmem:[%s3 + $0x4] sm:$0xf]
  %v74 = vld [vmem:[%s3 + $0x8] sm:$0xf]
  %v75 = vld [vmem:[%s3 + $0xc] sm:$0xf]
  %v76 = vld [vmem:[%s3 + $0x10] sm:$0xf]
  %v77 = vld [vmem:[%s3 + $0x14] sm:$0xf]
  %v78 = vld [vmem:[%s3 + $0x18] sm:$0xf]
  %v79 = vld [vmem:[%s3 + $0x1c] sm:$0xf]
  %v80 = vld [vmem:[%s3 + $0x20] sm:$0xf]
  %v81 = vld [vmem:[%s3 + $0x24] sm:$0xf]
  %v82 = vld [vmem:[%s3 + $0x28] sm:$0xf]
  %v83 = vld [vmem:[%s3 + $0x2c] sm:$0xf]
  %v84 = vld [vmem:[%s3 + $0x30] sm:$0xf]
  %v85 = vld [vmem:[%s3 + $0x34] sm:$0xf]
  %v86 = vld [vmem:[%s3 + $0x38] sm:$0xf]
  %v87 = vld [vmem:[%s3 + $0x3c] sm:$0xf]
  %v104 = vunpack.c.l.b16 %v56
  %v105 = vunpack.c.l.b16 %v57
  %v106 = vunpack.c.l.b16 %v58
  %v107 = vunpack.c.l.b16 %v59
  %v108 = vunpack.c.l.b16 %v60
  %v109 = vunpack.c.l.b16 %v61
  %v110 = vunpack.c.l.b16 %v62
  %v111 = vunpack.c.l.b16 %v63
  %v112 = vunpack.c.l.b16 %v64
  %v113 = vunpack.c.l.b16 %v65
  %v114 = vunpack.c.l.b16 %v66
  %v115 = vunpack.c.l.b16 %v67
  %v116 = vunpack.c.l.b16 %v68
  %v117 = vunpack.c.l.b16 %v69
  %v118 = vunpack.c.l.b16 %v70
  %v119 = vunpack.c.l.b16 %v71
  %v120 = vpack.c.b16 %v105, %v104
  %v121 = vpack.c.b16 %v107, %v106
  %v122 = vpack.c.b16 %v109, %v108
  %v123 = vpack.c.b16 %v111, %v110
  %v124 = vpack.c.b16 %v113, %v112
  %v125 = vpack.c.b16 %v115, %v114
  %v126 = vpack.c.b16 %v117, %v116
  %v127 = vpack.c.b16 %v119, %v118
  %v152 = vunpack.c.l.b16 %v72
  %v153 = vunpack.c.l.b16 %v73
  %v154 = vunpack.c.l.b16 %v74
  %v155 = vunpack.c.l.b16 %v75
  %v156 = vunpack.c.l.b16 %v76
  %v157 = vunpack.c.l.b16 %v77
  %v158 = vunpack.c.l.b16 %v78
  %v159 = vunpack.c.l.b16 %v79
  %v160 = vunpack.c.l.b16 %v80
  %v161 = vunpack.c.l.b16 %v81
  %v162 = vunpack.c.l.b16 %v82
  %v163 = vunpack.c.l.b16 %v83
  %v164 = vunpack.c.l.b16 %v84
  %v165 = vunpack.c.l.b16 %v85
  %v166 = vunpack.c.l.b16 %v86
  %v167 = vunpack.c.l.b16 %v87
  %v168 = vpack.c.b16 %v153, %v152
  %v169 = vpack.c.b16 %v155, %v154
  %v170 = vpack.c.b16 %v157, %v156
  %v171 = vpack.c.b16 %v159, %v158
  %v172 = vpack.c.b16 %v161, %v160
  %v173 = vpack.c.b16 %v163, %v162
  %v174 = vpack.c.b16 %v165, %v164
  %v175 = vpack.c.b16 %v167, %v166
  %184 = vmatprep.subr.bf16.mxu0 0
  %185 = vmatpush1.bf16.msra.mxu0 %v168
  %186 = vmatprep.subr.bf16.mxu0 0
  %187 = vmatpush1.bf16.msra.mxu0 %v169
  %188 = vmatprep.subr.bf16.mxu0 0
  %189 = vmatpush1.bf16.msra.mxu0 %v170
  %190 = vmatprep.subr.bf16.mxu0 0
  %191 = vmatpush1.bf16.msra.mxu0 %v171
  %192 = vmatprep.subr.bf16.mxu0 0
  %193 = vmatpush1.bf16.msra.mxu0 %v172
  %194 = vmatprep.subr.bf16.mxu0 0
  %195 = vmatpush1.bf16.msra.mxu0 %v173
  %196 = vmatprep.subr.bf16.mxu0 0
  %197 = vmatpush1.bf16.msra.mxu0 %v174
  %198 = vmatprep.subr.bf16.mxu0 0
  %199 = vmatpush1.bf16.msra.mxu0 %v175
  %200 = vmatprep.subr.bf16.mxu0 0
  %201 = vmatpush1.bf16.msra.mxu0 0
  %202 = vmatprep.subr.bf16.mxu0 0
  %203 = vmatpush1.bf16.msra.mxu0 0
  %204 = vmatprep.subr.bf16.mxu0 0
  %205 = vmatpush1.bf16.msra.mxu0 0
  %206 = vmatprep.subr.bf16.mxu0 0
  %207 = vmatpush1.bf16.msra.mxu0 0
  %208 = vmatprep.subr.bf16.mxu0 0
  %209 = vmatpush1.bf16.msra.mxu0 0
  %210 = vmatprep.subr.bf16.mxu0 0
  %211 = vmatpush1.bf16.msra.mxu0 0
  %212 = vmatprep.subr.bf16.mxu0 0
  %213 = vmatpush1.bf16.msra.mxu0 0
  %214 = vmatprep.subr.bf16.mxu0 0
  %215 = vmatpush1.bf16.msra.mxu0 0
  %216 = vmatprep.mubr.bf16.mxu0 0
  %217 = vmatmul.mubr.bf16.gmra.mrb[0].mxu0 %v120
  %v218 = vpop.f32.mrb[0].mxu0
  %v219 = vadd.f32 0.0, %v218
  %v220 = vpop.f32.mrb[0].mxu0
  %v221 = vpop.f32.mrb[0].mxu0
  %v222 = vadd.f32 0.0, %v221
  %v223 = vpop.f32.mrb[0].mxu0
  %224 = vmatprep.mubr.bf16.mxu0 0
  %225 = vmatmul.mubr.bf16.gmra.mrb[0].mxu0 %v121
  %v226 = vpop.f32.mrb[0].mxu0
  %v227 = vadd.f32 0.0, %v226
  %v228 = vpop.f32.mrb[0].mxu0
  %v229 = vpop.f32.mrb[0].mxu0
  %v230 = vadd.f32 0.0, %v229
  %v231 = vpop.f32.mrb[0].mxu0
  %232 = vmatprep.mubr.bf16.mxu0 0
  %233 = vmatmul.mubr.bf16.gmra.mrb[0].mxu0 %v122
  %v234 = vpop.f32.mrb[0].mxu0
  %v235 = vadd.f32 0.0, %v234
  %v236 = vpop.f32.mrb[0].mxu0
  %v237 = vpop.f32.mrb[0].mxu0
  %v238 = vadd.f32 0.0, %v237
  %v239 = vpop.f32.mrb[0].mxu0
  %240 = vmatprep.mubr.bf16.mxu0 0
  %241 = vmatmul.mubr.bf16.gmra.mrb[0].mxu0 %v123
  %v242 = vpop.f32.mrb[0].mxu0
  %v243 = vadd.f32 0.0, %v242
  %v244 = vpop.f32.mrb[0].mxu0
  %v245 = vpop.f32.mrb[0].mxu0
  %v246 = vadd.f32 0.0, %v245
  %v247 = vpop.f32.mrb[0].mxu0
  %248 = vmatprep.mubr.bf16.mxu0 0
  %249 = vmatmul.mubr.bf16.gmra.mrb[0].mxu0 %v124
  %v250 = vpop.f32.mrb[0].mxu0
  %v251 = vadd.f32 0.0, %v250
  %v252 = vpop.f32.mrb[0].mxu0
  %v253 = vpop.f32.mrb[0].mxu0
  %v254 = vadd.f32 0.0, %v253
  %v255 = vpop.f32.mrb[0].mxu0
  %256 = vmatprep.mubr.bf16.mxu0 0
  %257 = vmatmul.mubr.bf16.gmra.mrb[0].mxu0 %v125
  %v258 = vpop.f32.mrb[0].mxu0
  %v259 = vadd.f32 0.0, %v258
  %v260 = vpop.f32.mrb[0].mxu0
  %v261 = vpop.f32.mrb[0].mxu0
  %v262 = vadd.f32 0.0, %v261
  %v263 = vpop.f32.mrb[0].mxu0
  %264 = vmatprep.mubr.bf16.mxu0 0
  %265 = vmatmul.mubr.bf16.gmra.mrb[0].mxu0 %v126
  %v266 = vpop.f32.mrb[0].mxu0
  %v267 = vadd.f32 0.0, %v266
  %v268 = vpop.f32.mrb[0].mxu0
  %v269 = vpop.f32.mrb[0].mxu0
  %v270 = vadd.f32 0.0, %v269
  %v271 = vpop.f32.mrb[0].mxu0
  %272 = vmatprep.mubr.bf16.mxu0 0
  %273 = vmatmul.mubr.bf16.gmra.mrb[0].mxu0 %v127
  %v274 = vpop.f32.mrb[0].mxu0
  %v275 = vadd.f32 0.0, %v274
  %v276 = vpop.f32.mrb[0].mxu0
  %v277 = vpop.f32.mrb[0].mxu0
  %v278 = vadd.f32 0.0, %v277
  %v279 = vpop.f32.mrb[0].mxu0
  %280 = vdwg.mxu0
  %v297 = vunpack.c.l.b16 %v24
  %v298 = vunpack.c.l.b16 %v25
  %v299 = vunpack.c.l.b16 %v26
  %v300 = vunpack.c.l.b16 %v27
  %v301 = vunpack.c.l.b16 %v28
  %v302 = vunpack.c.l.b16 %v29
  %v303 = vunpack.c.l.b16 %v30
  %v304 = vunpack.c.l.b16 %v31
  %v305 = vunpack.c.l.b16 %v32
  %v306 = vunpack.c.l.b16 %v33
  %v307 = vunpack.c.l.b16 %v34
  %v308 = vunpack.c.l.b16 %v35
  %v309 = vunpack.c.l.b16 %v36
  %v310 = vunpack.c.l.b16 %v37
  %v311 = vunpack.c.l.b16 %v38
  %v312 = vunpack.c.l.b16 %v39
  %v313 = vpack.c.b16 %v298, %v297
  %v314 = vpack.c.b16 %v300, %v299
  %v315 = vpack.c.b16 %v302, %v301
  %v316 = vpack.c.b16 %v304, %v303
  %v317 = vpack.c.b16 %v306, %v305
  %v318 = vpack.c.b16 %v308, %v307
  %v319 = vpack.c.b16 %v310, %v309
  %v320 = vpack.c.b16 %v312, %v311
  %v345 = vunpack.c.l.b16 %v40
  %v346 = vunpack.c.l.b16 %v41
  %v347 = vunpack.c.l.b16 %v42
  %v348 = vunpack.c.l.b16 %v43
  %v349 = vunpack.c.l.b16 %v44
  %v350 = vunpack.c.l.b16 %v45
  %v351 = vunpack.c.l.b16 %v46
  %v352 = vunpack.c.l.b16 %v47
  %v353 = vunpack.c.l.b16 %v48
  %v354 = vunpack.c.l.b16 %v49
  %v355 = vunpack.c.l.b16 %v50
  %v356 = vunpack.c.l.b16 %v51
  %v357 = vunpack.c.l.b16 %v52
  %v358 = vunpack.c.l.b16 %v53
  %v359 = vunpack.c.l.b16 %v54
  %v360 = vunpack.c.l.b16 %v55
  %v361 = vpack.c.b16 %v346, %v345
  %v362 = vpack.c.b16 %v348, %v347
  %v363 = vpack.c.b16 %v350, %v349
  %v364 = vpack.c.b16 %v352, %v351
  %v365 = vpack.c.b16 %v354, %v353
  %v366 = vpack.c.b16 %v356, %v355
  %v367 = vpack.c.b16 %v358, %v357
  %v368 = vpack.c.b16 %v360, %v359
  %377 = vmatprep.subr.bf16.mxu0 0
  %378 = vmatpush1.bf16.msra.mxu0 %v361
  %379 = vmatprep.subr.bf16.mxu0 0
  %380 = vmatpush1.bf16.msra.mxu0 %v362
  %381 = vmatprep.subr.bf16.mxu0 0
  %382 = vmatpush1.bf16.msra.mxu0 %v363
  %383 = vmatprep.subr.bf16.mxu0 0
  %384 = vmatpush1.bf16.msra.mxu0 %v364
  %385 = vmatprep.subr.bf16.mxu0 0
  %386 = vmatpush1.bf16.msra.mxu0 %v365
  %387 = vmatprep.subr.bf16.mxu0 0
  %388 = vmatpush1.bf16.msra.mxu0 %v366
  %389 = vmatprep.subr.bf16.mxu0 0
  %390 = vmatpush1.bf16.msra.mxu0 %v367
  %391 = vmatprep.subr.bf16.mxu0 0
  %392 = vmatpush1.bf16.msra.mxu0 %v368
  %393 = vmatprep.subr.bf16.mxu0 0
  %394 = vmatpush1.bf16.msra.mxu0 0
  %395 = vmatprep.subr.bf16.mxu0 0
  %396 = vmatpush1.bf16.msra.mxu0 0
  %397 = vmatprep.subr.bf16.mxu0 0
  %398 = vmatpush1.bf16.msra.mxu0 0
  %399 = vmatprep.subr.bf16.mxu0 0
  %400 = vmatpush1.bf16.msra.mxu0 0
  %401 = vmatprep.subr.bf16.mxu0 0
  %402 = vmatpush1.bf16.msra.mxu0 0
  %403 = vmatprep.subr.bf16.mxu0 0
  %404 = vmatpush1.bf16.msra.mxu0 0
  %405 = vmatprep.subr.bf16.mxu0 0
  %406 = vmatpush1.bf16.msra.mxu0 0
  %407 = vmatprep.subr.bf16.mxu0 0
  %408 = vmatpush1.bf16.msra.mxu0 0
  %409 = vmatprep.mubr.bf16.mxu0 0
  %410 = vmatmul.mubr.bf16.gmra.mrb[0].mxu0 %v313
  %v411 = vpop.f32.mrb[0].mxu0
  %v412 = vadd.f32 %v219, %v411
  %v413 = vpop.f32.mrb[0].mxu0
  %v414 = vpop.f32.mrb[0].mxu0
  %v415 = vadd.f32 %v222, %v414
  %v416 = vpop.f32.mrb[0].mxu0
  %417 = vmatprep.mubr.bf16.mxu0 0
  %418 = vmatmul.mubr.bf16.gmra.mrb[0].mxu0 %v314
  %v419 = vpop.f32.mrb[0].mxu0
  %v420 = vadd.f32 %v227, %v419
  %v421 = vpop.f32.mrb[0].mxu0
  %v422 = vpop.f32.mrb[0].mxu0
  %v423 = vadd.f32 %v230, %v422
  %v424 = vpop.f32.mrb[0].mxu0
  %425 = vmatprep.mubr.bf16.mxu0 0
  %426 = vmatmul.mubr.bf16.gmra.mrb[0].mxu0 %v315
  %v427 = vpop.f32.mrb[0].mxu0
  %v428 = vadd.f32 %v235, %v427
  %v429 = vpop.f32.mrb[0].mxu0
  %v430 = vpop.f32.mrb[0].mxu0
  %v431 = vadd.f32 %v238, %v430
  %v432 = vpop.f32.mrb[0].mxu0
  %433 = vmatprep.mubr.bf16.mxu0 0
  %434 = vmatmul.mubr.bf16.gmra.mrb[0].mxu0 %v316
  %v435 = vpop.f32.mrb[0].mxu0
  %v436 = vadd.f32 %v243, %v435
  %v437 = vpop.f32.mrb[0].mxu0
  %v438 = vpop.f32.mrb[0].mxu0
  %v439 = vadd.f32 %v246, %v438
  %v440 = vpop.f32.mrb[0].mxu0
  %441 = vmatprep.mubr.bf16.mxu0 0
  %442 = vmatmul.mubr.bf16.gmra.mrb[0].mxu0 %v317
  %v443 = vpop.f32.mrb[0].mxu0
  %v444 = vadd.f32 %v251, %v443
  %v445 = vpop.f32.mrb[0].mxu0
  %v446 = vpop.f32.mrb[0].mxu0
  %v447 = vadd.f32 %v254, %v446
  %v448 = vpop.f32.mrb[0].mxu0
  %449 = vmatprep.mubr.bf16.mxu0 0
  %450 = vmatmul.mubr.bf16.gmra.mrb[0].mxu0 %v318
  %v451 = vpop.f32.mrb[0].mxu0
  %v452 = vadd.f32 %v259, %v451
  %v453 = vpop.f32.mrb[0].mxu0
  %v454 = vpop.f32.mrb[0].mxu0
  %v455 = vadd.f32 %v262, %v454
  %v456 = vpop.f32.mrb[0].mxu0
  %457 = vmatprep.mubr.bf16.mxu0 0
  %458 = vmatmul.mubr.bf16.gmra.mrb[0].mxu0 %v319
  %v459 = vpop.f32.mrb[0].mxu0
  %v460 = vadd.f32 %v267, %v459
  %v461 = vpop.f32.mrb[0].mxu0
  %v462 = vpop.f32.mrb[0].mxu0
  %v463 = vadd.f32 %v270, %v462
  %v464 = vpop.f32.mrb[0].mxu0
  %465 = vmatprep.mubr.bf16.mxu0 0
  %466 = vmatmul.mubr.bf16.gmra.mrb[0].mxu0 %v320
  %v467 = vpop.f32.mrb[0].mxu0
  %v468 = vadd.f32 %v275, %v467
  %v469 = vpop.f32.mrb[0].mxu0
  %v470 = vpop.f32.mrb[0].mxu0
  %v471 = vadd.f32 %v278, %v470
  %v472 = vpop.f32.mrb[0].mxu0
  %473 = vdwg.mxu0
  %v474 = vld [vmem:[%s4] sm:$0x1]
  %v476 = vlaneseq
  %v477 = vshrl.u32 %v476, 7
  %v478 = vsub.s32 0, %v477
  %v479 = vrot.slane %v474, %v478
  %v481 = vmul.f32 %v412, %v479
  %v482 = vmul.f32 %v415, %v479
  %v483 = vmul.f32 %v420, %v479
  %v484 = vmul.f32 %v423, %v479
  %v485 = vmul.f32 %v428, %v479
  %v486 = vmul.f32 %v431, %v479
  %v487 = vmul.f32 %v436, %v479
  %v488 = vmul.f32 %v439, %v479
  %v489 = vmul.f32 %v444, %v479
  %v490 = vmul.f32 %v447, %v479
  %v491 = vmul.f32 %v452, %v479
  %v492 = vmul.f32 %v455, %v479
  %v493 = vmul.f32 %v460, %v479
  %v494 = vmul.f32 %v463, %v479
  %v495 = vmul.f32 %v468, %v479
  %v496 = vmul.f32 %v471, %v479
  %v497 = vld [vmem:[%s5] sm:$0x1]
  %v499 = vlaneseq
  %v500 = vshrl.u32 %v499, 7
  %v501 = vsub.s32 0, %v500
  %v502 = vrot.slane %v497, %v501
  %v504 = vadd.f32 %v481, %v502
  %v505 = vadd.f32 %v482, %v502
  %v506 = vadd.f32 %v483, %v502
  %v507 = vadd.f32 %v484, %v502
  %v508 = vadd.f32 %v485, %v502
  %v509 = vadd.f32 %v486, %v502
  %v510 = vadd.f32 %v487, %v502
  %v511 = vadd.f32 %v488, %v502
  %v512 = vadd.f32 %v489, %v502
  %v513 = vadd.f32 %v490, %v502
  %v514 = vadd.f32 %v491, %v502
  %v515 = vadd.f32 %v492, %v502
  %v516 = vadd.f32 %v493, %v502
  %v517 = vadd.f32 %v494, %v502
  %v518 = vadd.f32 %v495, %v502
  %v519 = vadd.f32 %v496, %v502
  %v520 = vsub.f32 0.0, %v504
  %v521 = vsub.f32 0.0, %v505
  %v522 = vsub.f32 0.0, %v506
  %v523 = vsub.f32 0.0, %v507
  %v524 = vsub.f32 0.0, %v508
  %v525 = vsub.f32 0.0, %v509
  %v526 = vsub.f32 0.0, %v510
  %v527 = vsub.f32 0.0, %v511
  %v528 = vsub.f32 0.0, %v512
  %v529 = vsub.f32 0.0, %v513
  %v530 = vsub.f32 0.0, %v514
  %v531 = vsub.f32 0.0, %v515
  %v532 = vsub.f32 0.0, %v516
  %v533 = vsub.f32 0.0, %v517
  %v534 = vsub.f32 0.0, %v518
  %v535 = vsub.f32 0.0, %v519
  %v536 = vmul.f32 %v520, 1.442695
  %v537 = vpow.pop %v536
  %v538 = vmul.f32 %v521, 1.442695
  %v539 = vpow.pop %v538
  %v540 = vmul.f32 %v522, 1.442695
  %v541 = vpow.pop %v540
  %v542 = vmul.f32 %v523, 1.442695
  %v543 = vpow.pop %v542
  %v544 = vmul.f32 %v524, 1.442695
  %v545 = vpow.pop %v544
  %v546 = vmul.f32 %v525, 1.442695
  %v547 = vpow.pop %v546
  %v548 = vmul.f32 %v526, 1.442695
  %v549 = vpow.pop %v548
  %v550 = vmul.f32 %v527, 1.442695
  %v551 = vpow.pop %v550
  %v552 = vmul.f32 %v528, 1.442695
  %v553 = vpow.pop %v552
  %v554 = vmul.f32 %v529, 1.442695
  %v555 = vpow.pop %v554
  %v556 = vmul.f32 %v530, 1.442695
  %v557 = vpow.pop %v556
  %v558 = vmul.f32 %v531, 1.442695
  %v559 = vpow.pop %v558
  %v560 = vmul.f32 %v532, 1.442695
  %v561 = vpow.pop %v560
  %v562 = vmul.f32 %v533, 1.442695
  %v563 = vpow.pop %v562
  %v564 = vmul.f32 %v534, 1.442695
  %v565 = vpow.pop %v564
  %v566 = vmul.f32 %v535, 1.442695
  %v567 = vpow.pop %v566
  %v568 = vadd.f32 %v537, 1.0
  %v569 = vadd.f32 %v539, 1.0
  %v570 = vadd.f32 %v541, 1.0
  %v571 = vadd.f32 %v543, 1.0
  %v572 = vadd.f32 %v545, 1.0
  %v573 = vadd.f32 %v547, 1.0
  %v574 = vadd.f32 %v549, 1.0
  %v575 = vadd.f32 %v551, 1.0
  %v576 = vadd.f32 %v553, 1.0
  %v577 = vadd.f32 %v555, 1.0
  %v578 = vadd.f32 %v557, 1.0
  %v579 = vadd.f32 %v559, 1.0
  %v580 = vadd.f32 %v561, 1.0
  %v581 = vadd.f32 %v563, 1.0
  %v582 = vadd.f32 %v565, 1.0
  %v583 = vadd.f32 %v567, 1.0
  %v584 = vrcp.pop %v568
  %v585 = vrcp.pop %v569
  %v586 = vrcp.pop %v570
  %v587 = vrcp.pop %v571
  %v588 = vrcp.pop %v572
  %v589 = vrcp.pop %v573
  %v590 = vrcp.pop %v574
  %v591 = vrcp.pop %v575
  %v592 = vrcp.pop %v576
  %v593 = vrcp.pop %v577
  %v594 = vrcp.pop %v578
  %v595 = vrcp.pop %v579
  %v596 = vrcp.pop %v580
  %v597 = vrcp.pop %v581
  %v598 = vrcp.pop %v582
  %v599 = vrcp.pop %v583
  %v600 = vmul.f32 %v504, %v584
  %v601 = vmul.f32 %v505, %v585
  %v602 = vmul.f32 %v506, %v586
  %v603 = vmul.f32 %v507, %v587
  %v604 = vmul.f32 %v508, %v588
  %v605 = vmul.f32 %v509, %v589
  %v606 = vmul.f32 %v510, %v590
  %v607 = vmul.f32 %v511, %v591
  %v608 = vmul.f32 %v512, %v592
  %v609 = vmul.f32 %v513, %v593
  %v610 = vmul.f32 %v514, %v594
  %v611 = vmul.f32 %v515, %v595
  %v612 = vmul.f32 %v516, %v596
  %v613 = vmul.f32 %v517, %v597
  %v614 = vmul.f32 %v518, %v598
  %v615 = vmul.f32 %v519, %v599
  %v616 = vpack.c.bf16 %v601, %v600
  %v617 = vpack.c.bf16 %v603, %v602
  %v618 = vpack.c.bf16 %v605, %v604
  %v619 = vpack.c.bf16 %v607, %v606
  %v620 = vpack.c.bf16 %v609, %v608
  %v621 = vpack.c.bf16 %v611, %v610
  %v622 = vpack.c.bf16 %v613, %v612
  %v623 = vpack.c.bf16 %v615, %v614
  %v632 = vunpack.c.l.b16 %v616
  %v633 = vunpack.c.h.b16 %v616
  %v634 = vunpack.c.l.b16 %v617
  %v635 = vunpack.c.h.b16 %v617
  %v636 = vunpack.c.l.b16 %v618
  %v637 = vunpack.c.h.b16 %v618
  %v638 = vunpack.c.l.b16 %v619
  %v639 = vunpack.c.h.b16 %v619
  %v640 = vunpack.c.l.b16 %v620
  %v641 = vunpack.c.h.b16 %v620
  %v642 = vunpack.c.l.b16 %v621
  %v643 = vunpack.c.h.b16 %v621
  %v644 = vunpack.c.l.b16 %v622
  %v645 = vunpack.c.h.b16 %v622
  %v646 = vunpack.c.l.b16 %v623
  %v647 = vunpack.c.h.b16 %v623
  %v648 = vpack.c.b16 %v632, %v632
  %v649 = vpack.c.b16 %v633, %v633
  %v650 = vpack.c.b16 %v634, %v634
  %v651 = vpack.c.b16 %v635, %v635
  %v652 = vpack.c.b16 %v636, %v636
  %v653 = vpack.c.b16 %v637, %v637
  %v654 = vpack.c.b16 %v638, %v638
  %v655 = vpack.c.b16 %v639, %v639
  %v656 = vpack.c.b16 %v640, %v640
  %v657 = vpack.c.b16 %v641, %v641
  %v658 = vpack.c.b16 %v642, %v642
  %v659 = vpack.c.b16 %v643, %v643
  %v660 = vpack.c.b16 %v644, %v644
  %v661 = vpack.c.b16 %v645, %v645
  %v662 = vpack.c.b16 %v646, %v646
  %v663 = vpack.c.b16 %v647, %v647
  %680 = vst [vmem:[%s6] sm:$0xf] %v648
  %681 = vst [vmem:[%s6 + $0x4] sm:$0xf] %v649
  %682 = vst [vmem:[%s6 + $0x8] sm:$0xf] %v650
  %683 = vst [vmem:[%s6 + $0xc] sm:$0xf] %v651
  %684 = vst [vmem:[%s6 + $0x10] sm:$0xf] %v652
  %685 = vst [vmem:[%s6 + $0x14] sm:$0xf] %v653
  %686 = vst [vmem:[%s6 + $0x18] sm:$0xf] %v654
  %687 = vst [vmem:[%s6 + $0x1c] sm:$0xf] %v655
  %688 = vst [vmem:[%s6 + $0x20] sm:$0xf] %v656
  %689 = vst [vmem:[%s6 + $0x24] sm:$0xf] %v657
  %690 = vst [vmem:[%s6 + $0x28] sm:$0xf] %v658
  %691 = vst [vmem:[%s6 + $0x2c] sm:$0xf] %v659
  %692 = vst [vmem:[%s6 + $0x30] sm:$0xf] %v660
  %693 = vst [vmem:[%s6 + $0x34] sm:$0xf] %v661
  %694 = vst [vmem:[%s6 + $0x38] sm:$0xf] %v662
  %695 = vst [vmem:[%s6 + $0x3c] sm:$0xf] %v663
  // Predicated region
  $region26: #{_lambda_.21} parent=0 // pred_check
    _
  $region27: #{_lambda_.21} parent=0 // pred_check_branch
    %697 = sbr.rel (0) target = $region29
  $region28: #{_lambda_.21} parent=0 // pred_region
    _
  $region29: #{_lambda_.21} parent=0 // pred_fallthru
    _
  // Predicated region
  $region30: #{_lambda_.21} parent=0 // pred_check
    _
  $region31: #{_lambda_.21} parent=0 // pred_check_branch
    %699 = sbr.rel (0) target = $region33
  $region32: #{_lambda_.21} parent=0 // pred_region
    _
  $region33: #{_lambda_.21} parent=0 // pred_fallthru
    _

// kernel: _lambda_.26
$region0: #{_lambda_.26}
  #allocation0 [shape = 'u32[]', space=smem, size = 0x4, offset = 0x4, fixed_abs, tag = 'smem constant byte address 0x4 - core index']
  #allocation1 [shape = 'u32[144,128]{1,0:T(1,128)}', space=vmem, size = 0x12000, scoped, tag = 'internal scratch']
  %s0 = inlined_call_operand.vmem [shape: bf16[512,128], index: 0, kind: input, shape index: {}]
  %s1 = inlined_call_operand.vmem [shape: bf16[512,128], index: 1, kind: input, shape index: {}]
  %s2 = inlined_call_operand.vmem [shape: bf16[128,128], index: 2, kind: input, shape index: {}]
  %s3 = inlined_call_operand.vmem [shape: bf16[128,128], index: 3, kind: input, shape index: {}]
  %s4 = inlined_call_operand.vmem [shape: f32[1,128], index: 4, kind: input, shape index: {}]
  %s5 = inlined_call_operand.vmem [shape: f32[1,128], index: 5, kind: input, shape index: {}]
  %s6 = inlined_call_operand.vmem [shape: bf16[512,128], index: 6, kind: output, shape index: {}]
  %s7 = sld [smem:[#allocation0]]
  $region34: #{_lambda_.26} parent=0
    _
  %s9 = ssub.s32 1, %s7
  %s10 = scalar_select 0, %s9, %s7
  // Predicated region
  $region2: #{_lambda_.26} parent=0 // pred_check
    _
  $region3: #{_lambda_.26} parent=0 // pred_check_branch
    %12 = sbr.rel (0) target = $region5
  $region4: #{_lambda_.26} parent=0 // pred_region
    _
  $region5: #{_lambda_.26} parent=0 // pred_fallthru
    _
  // Predicated region
  $region6: #{_lambda_.26} parent=0 // pred_check
    _
  $region7: #{_lambda_.26} parent=0 // pred_check_branch
    %14 = sbr.rel (0) target = $region9
  $region8: #{_lambda_.26} parent=0 // pred_region
    _
  $region9: #{_lambda_.26} parent=0 // pred_fallthru
    _
  // Predicated region
  $region10: #{_lambda_.26} parent=0 // pred_check
    _
  $region11: #{_lambda_.26} parent=0 // pred_check_branch
    %16 = sbr.rel (0) target = $region13
  $region12: #{_lambda_.26} parent=0 // pred_region
    _
  $region13: #{_lambda_.26} parent=0 // pred_fallthru
    _
  // Predicated region
  $region14: #{_lambda_.26} parent=0 // pred_check
    _
  $region15: #{_lambda_.26} parent=0 // pred_check_branch
    %18 = sbr.rel (0) target = $region17
  $region16: #{_lambda_.26} parent=0 // pred_region
    _
  $region17: #{_lambda_.26} parent=0 // pred_fallthru
    _
  // Predicated region
  $region18: #{_lambda_.26} parent=0 // pred_check
    _
  $region19: #{_lambda_.26} parent=0 // pred_check_branch
    %20 = sbr.rel (0) target = $region21
  $region20: #{_lambda_.26} parent=0 // pred_region
    _
  $region21: #{_lambda_.26} parent=0 // pred_fallthru
    _
  // Predicated region
  $region22: #{_lambda_.26} parent=0 // pred_check
    _
  $region23: #{_lambda_.26} parent=0 // pred_check_branch
    %22 = sbr.rel (0) target = $region25
  $region24: #{_lambda_.26} parent=0 // pred_region
    _
  $region25: #{_lambda_.26} parent=0 // pred_fallthru
    _
  %v24 = vld [vmem:[%s0] sm:$0xf]
  %v25 = vld [vmem:[%s0 + $0x4] sm:$0xf]
  %v26 = vld [vmem:[%s0 + $0x8] sm:$0xf]
  %v27 = vld [vmem:[%s0 + $0xc] sm:$0xf]
  %v28 = vld [vmem:[%s0 + $0x10] sm:$0xf]
  %v29 = vld [vmem:[%s0 + $0x14] sm:$0xf]
  %v30 = vld [vmem:[%s0 + $0x18] sm:$0xf]
  %v31 = vld [vmem:[%s0 + $0x1c] sm:$0xf]
  %v32 = vld [vmem:[%s0 + $0x20] sm:$0xf]
  %v33 = vld [vmem:[%s0 + $0x24] sm:$0xf]
  %v34 = vld [vmem:[%s0 + $0x28] sm:$0xf]
  %v35 = vld [vmem:[%s0 + $0x2c] sm:$0xf]
  %v36 = vld [vmem:[%s0 + $0x30] sm:$0xf]
  %v37 = vld [vmem:[%s0 + $0x34] sm:$0xf]
  %v38 = vld [vmem:[%s0 + $0x38] sm:$0xf]
  %v39 = vld [vmem:[%s0 + $0x3c] sm:$0xf]
  %v40 = vld [vmem:[%s0 + $0x40] sm:$0xf]
  %v41 = vld [vmem:[%s0 + $0x44] sm:$0xf]
  %v42 = vld [vmem:[%s0 + $0x48] sm:$0xf]
  %v43 = vld [vmem:[%s0 + $0x4c] sm:$0xf]
  %v44 = vld [vmem:[%s0 + $0x50] sm:$0xf]
  %v45 = vld [vmem:[%s0 + $0x54] sm:$0xf]
  %v46 = vld [vmem:[%s0 + $0x58] sm:$0xf]
  %v47 = vld [vmem:[%s0 + $0x5c] sm:$0xf]
  %v48 = vld [vmem:[%s0 + $0x60] sm:$0xf]
  %v49 = vld [vmem:[%s0 + $0x64] sm:$0xf]
  %v50 = vld [vmem:[%s0 + $0x68] sm:$0xf]
  %v51 = vld [vmem:[%s0 + $0x6c] sm:$0xf]
  %v52 = vld [vmem:[%s0 + $0x70] sm:$0xf]
  %v53 = vld [vmem:[%s0 + $0x74] sm:$0xf]
  %v54 = vld [vmem:[%s0 + $0x78] sm:$0xf]
  %v55 = vld [vmem:[%s0 + $0x7c] sm:$0xf]
  %v56 = vld [vmem:[%s0 + $0x80] sm:$0xf]
  %v57 = vld [vmem:[%s0 + $0x84] sm:$0xf]
  %v58 = vld [vmem:[%s0 + $0x88] sm:$0xf]
  %v59 = vld [vmem:[%s0 + $0x8c] sm:$0xf]
  %v60 = vld [vmem:[%s0 + $0x90] sm:$0xf]
  %v61 = vld [vmem:[%s0 + $0x94] sm:$0xf]
  %v62 = vld [vmem:[%s0 + $0x98] sm:$0xf]
  %v63 = vld [vmem:[%s0 + $0x9c] sm:$0xf]
  %v64 = vld [vmem:[%s0 + $0xa0] sm:$0xf]
  %v65 = vld [vmem:[%s0 + $0xa4] sm:$0xf]
  %v66 = vld [vmem:[%s0 + $0xa8] sm:$0xf]
  %v67 = vld [vmem:[%s0 + $0xac] sm:$0xf]
  %v68 = vld [vmem:[%s0 + $0xb0] sm:$0xf]
  %v69 = vld [vmem:[%s0 + $0xb4] sm:$0xf]
  %v70 = vld [vmem:[%s0 + $0xb8] sm:$0xf]
  %v71 = vld [vmem:[%s0 + $0xbc] sm:$0xf]
  %v72 = vld [vmem:[%s0 + $0xc0] sm:$0xf]
  %v73 = vld [vmem:[%s0 + $0xc4] sm:$0xf]
  %v74 = vld [vmem:[%s0 + $0xc8] sm:$0xf]
  %v75 = vld [vmem:[%s0 + $0xcc] sm:$0xf]
  %v76 = vld [vmem:[%s0 + $0xd0] sm:$0xf]
  %v77 = vld [vmem:[%s0 + $0xd4] sm:$0xf]
  %v78 = vld [vmem:[%s0 + $0xd8] sm:$0xf]
  %v79 = vld [vmem:[%s0 + $0xdc] sm:$0xf]
  %v80 = vld [vmem:[%s0 + $0xe0] sm:$0xf]
  %v81 = vld [vmem:[%s0 + $0xe4] sm:$0xf]
  %v82 = vld [vmem:[%s0 + $0xe8] sm:$0xf]
  %v83 = vld [vmem:[%s0 + $0xec] sm:$0xf]
  %v84 = vld [vmem:[%s0 + $0xf0] sm:$0xf]
  %v85 = vld [vmem:[%s0 + $0xf4] sm:$0xf]
  %v86 = vld [vmem:[%s0 + $0xf8] sm:$0xf]
  %v87 = vld [vmem:[%s0 + $0xfc] sm:$0xf]
  %v88 = vld [vmem:[%s2] sm:$0xf]
  %v89 = vld [vmem:[%s2 + $0x4] sm:$0xf]
  %v90 = vld [vmem:[%s2 + $0x8] sm:$0xf]
  %v91 = vld [vmem:[%s2 + $0xc] sm:$0xf]
  %v92 = vld [vmem:[%s2 + $0x10] sm:$0xf]
  %v93 = vld [vmem:[%s2 + $0x14] sm:$0xf]
  %v94 = vld [vmem:[%s2 + $0x18] sm:$0xf]
  %v95 = vld [vmem:[%s2 + $0x1c] sm:$0xf]
  %v96 = vld [vmem:[%s2 + $0x20] sm:$0xf]
  %v97 = vld [vmem:[%s2 + $0x24] sm:$0xf]
  %v98 = vld [vmem:[%s2 + $0x28] sm:$0xf]
  %v99 = vld [vmem:[%s2 + $0x2c] sm:$0xf]
  %v100 = vld [vmem:[%s2 + $0x30] sm:$0xf]
  %v101 = vld [vmem:[%s2 + $0x34] sm:$0xf]
  %v102 = vld [vmem:[%s2 + $0x38] sm:$0xf]
  %v103 = vld [vmem:[%s2 + $0x3c] sm:$0xf]
  %v104 = vld [vmem:[%s1] sm:$0xf]
  %v105 = vld [vmem:[%s1 + $0x4] sm:$0xf]
  %v106 = vld [vmem:[%s1 + $0x8] sm:$0xf]
  %v107 = vld [vmem:[%s1 + $0xc] sm:$0xf]
  %v108 = vld [vmem:[%s1 + $0x10] sm:$0xf]
  %v109 = vld [vmem:[%s1 + $0x14] sm:$0xf]
  %v110 = vld [vmem:[%s1 + $0x18] sm:$0xf]
  %v111 = vld [vmem:[%s1 + $0x1c] sm:$0xf]
  %v112 = vld [vmem:[%s1 + $0x20] sm:$0xf]
  %v113 = vld [vmem:[%s1 + $0x24] sm:$0xf]
  %v114 = vld [vmem:[%s1 + $0x28] sm:$0xf]
  %v115 = vld [vmem:[%s1 + $0x2c] sm:$0xf]
  %v116 = vld [vmem:[%s1 + $0x30] sm:$0xf]
  %v117 = vld [vmem:[%s1 + $0x34] sm:$0xf]
  %v118 = vld [vmem:[%s1 + $0x38] sm:$0xf]
  %v119 = vld [vmem:[%s1 + $0x3c] sm:$0xf]
  %v120 = vld [vmem:[%s1 + $0x40] sm:$0xf]
  %v121 = vld [vmem:[%s1 + $0x44] sm:$0xf]
  %v122 = vld [vmem:[%s1 + $0x48] sm:$0xf]
  %v123 = vld [vmem:[%s1 + $0x4c] sm:$0xf]
  %v124 = vld [vmem:[%s1 + $0x50] sm:$0xf]
  %v125 = vld [vmem:[%s1 + $0x54] sm:$0xf]
  %v126 = vld [vmem:[%s1 + $0x58] sm:$0xf]
  %v127 = vld [vmem:[%s1 + $0x5c] sm:$0xf]
  %v128 = vld [vmem:[%s1 + $0x60] sm:$0xf]
  %v129 = vld [vmem:[%s1 + $0x64] sm:$0xf]
  %v130 = vld [vmem:[%s1 + $0x68] sm:$0xf]
  %v131 = vld [vmem:[%s1 + $0x6c] sm:$0xf]
  %v132 = vld [vmem:[%s1 + $0x70] sm:$0xf]
  %v133 = vld [vmem:[%s1 + $0x74] sm:$0xf]
  %v134 = vld [vmem:[%s1 + $0x78] sm:$0xf]
  %v135 = vld [vmem:[%s1 + $0x7c] sm:$0xf]
  %v136 = vld [vmem:[%s1 + $0x80] sm:$0xf]
  %v137 = vld [vmem:[%s1 + $0x84] sm:$0xf]
  %v138 = vld [vmem:[%s1 + $0x88] sm:$0xf]
  %v139 = vld [vmem:[%s1 + $0x8c] sm:$0xf]
  %v140 = vld [vmem:[%s1 + $0x90] sm:$0xf]
  %v141 = vld [vmem:[%s1 + $0x94] sm:$0xf]
  %v142 = vld [vmem:[%s1 + $0x98] sm:$0xf]
  %v143 = vld [vmem:[%s1 + $0x9c] sm:$0xf]
  %v144 = vld [vmem:[%s1 + $0xa0] sm:$0xf]
  %v145 = vld [vmem:[%s1 + $0xa4] sm:$0xf]
  %v146 = vld [vmem:[%s1 + $0xa8] sm:$0xf]
  %v147 = vld [vmem:[%s1 + $0xac] sm:$0xf]
  %v148 = vld [vmem:[%s1 + $0xb0] sm:$0xf]
  %v149 = vld [vmem:[%s1 + $0xb4] sm:$0xf]
  %v150 = vld [vmem:[%s1 + $0xb8] sm:$0xf]
  %v151 = vld [vmem:[%s1 + $0xbc] sm:$0xf]
  %v152 = vld [vmem:[%s1 + $0xc0] sm:$0xf]
  %v153 = vld [vmem:[%s1 + $0xc4] sm:$0xf]
  %v154 = vld [vmem:[%s1 + $0xc8] sm:$0xf]
  %v155 = vld [vmem:[%s1 + $0xcc] sm:$0xf]
  %v156 = vld [vmem:[%s1 + $0xd0] sm:$0xf]
  %v157 = vld [vmem:[%s1 + $0xd4] sm:$0xf]
  %v158 = vld [vmem:[%s1 + $0xd8] sm:$0xf]
  %v159 = vld [vmem:[%s1 + $0xdc] sm:$0xf]
  %v160 = vld [vmem:[%s1 + $0xe0] sm:$0xf]
  %v161 = vld [vmem:[%s1 + $0xe4] sm:$0xf]
  %v162 = vld [vmem:[%s1 + $0xe8] sm:$0xf]
  %v163 = vld [vmem:[%s1 + $0xec] sm:$0xf]
  %v164 = vld [vmem:[%s1 + $0xf0] sm:$0xf]
  %v165 = vld [vmem:[%s1 + $0xf4] sm:$0xf]
  %v166 = vld [vmem:[%s1 + $0xf8] sm:$0xf]
  %v167 = vld [vmem:[%s1 + $0xfc] sm:$0xf]
  %v168 = vld [vmem:[%s3] sm:$0xf]
  %v169 = vld [vmem:[%s3 + $0x4] sm:$0xf]
  %v170 = vld [vmem:[%s3 + $0x8] sm:$0xf]
  %v171 = vld [vmem:[%s3 + $0xc] sm:$0xf]
  %v172 = vld [vmem:[%s3 + $0x10] sm:$0xf]
  %v173 = vld [vmem:[%s3 + $0x14] sm:$0xf]
  %v174 = vld [vmem:[%s3 + $0x18] sm:$0xf]
  %v175 = vld [vmem:[%s3 + $0x1c] sm:$0xf]
  %v176 = vld [vmem:[%s3 + $0x20] sm:$0xf]
  %v177 = vld [vmem:[%s3 + $0x24] sm:$0xf]
  %v178 = vld [vmem:[%s3 + $0x28] sm:$0xf]
  %v179 = vld [vmem:[%s3 + $0x2c] sm:$0xf]
  %v180 = vld [vmem:[%s3 + $0x30] sm:$0xf]
  %v181 = vld [vmem:[%s3 + $0x34] sm:$0xf]
  %v182 = vld [vmem:[%s3 + $0x38] sm:$0xf]
  %v183 = vld [vmem:[%s3 + $0x3c] sm:$0xf]
  %v248 = vunpack.c.l.b16 %v104
  %v249 = vunpack.c.l.b16 %v105
  %v250 = vunpack.c.l.b16 %v106
  %v251 = vunpack.c.l.b16 %v107
  %v252 = vunpack.c.l.b16 %v108
  %v253 = vunpack.c.l.b16 %v109
  %v254 = vunpack.c.l.b16 %v110
  %v255 = vunpack.c.l.b16 %v111
  %v256 = vunpack.c.l.b16 %v112
  %v257 = vunpack.c.l.b16 %v113
  %v258 = vunpack.c.l.b16 %v114
  %v259 = vunpack.c.l.b16 %v115
  %v260 = vunpack.c.l.b16 %v116
  %v261 = vunpack.c.l.b16 %v117
  %v262 = vunpack.c.l.b16 %v118
  %v263 = vunpack.c.l.b16 %v119
  %v264 = vunpack.c.l.b16 %v120
  %v265 = vunpack.c.l.b16 %v121
  %v266 = vunpack.c.l.b16 %v122
  %v267 = vunpack.c.l.b16 %v123
  %v268 = vunpack.c.l.b16 %v124
  %v269 = vunpack.c.l.b16 %v125
  %v270 = vunpack.c.l.b16 %v126
  %v271 = vunpack.c.l.b16 %v127
  %v272 = vunpack.c.l.b16 %v128
  %v273 = vunpack.c.l.b16 %v129
  %v274 = vunpack.c.l.b16 %v130
  %v275 = vunpack.c.l.b16 %v131
  %v276 = vunpack.c.l.b16 %v132
  %v277 = vunpack.c.l.b16 %v133
  %v278 = vunpack.c.l.b16 %v134
  %v279 = vunpack.c.l.b16 %v135
  %v280 = vunpack.c.l.b16 %v136
  %v281 = vunpack.c.l.b16 %v137
  %v282 = vunpack.c.l.b16 %v138
  %v283 = vunpack.c.l.b16 %v139
  %v284 = vunpack.c.l.b16 %v140
  %v285 = vunpack.c.l.b16 %v141
  %v286 = vunpack.c.l.b16 %v142
  %v287 = vunpack.c.l.b16 %v143
  %v288 = vunpack.c.l.b16 %v144
  %v289 = vunpack.c.l.b16 %v145
  %v290 = vunpack.c.l.b16 %v146
  %v291 = vunpack.c.l.b16 %v147
  %v292 = vunpack.c.l.b16 %v148
  %v293 = vunpack.c.l.b16 %v149
  %v294 = vunpack.c.l.b16 %v150
  %v295 = vunpack.c.l.b16 %v151
  %v296 = vunpack.c.l.b16 %v152
  %v297 = vunpack.c.l.b16 %v153
  %v298 = vunpack.c.l.b16 %v154
  %v299 = vunpack.c.l.b16 %v155
  %v300 = vunpack.c.l.b16 %v156
  %v301 = vunpack.c.l.b16 %v157
  %v302 = vunpack.c.l.b16 %v158
  %v303 = vunpack.c.l.b16 %v159
  %v304 = vunpack.c.l.b16 %v160
  %v305 = vunpack.c.l.b16 %v161
  %v306 = vunpack.c.l.b16 %v162
  %v307 = vunpack.c.l.b16 %v163
  %v308 = vunpack.c.l.b16 %v164
  %v309 = vunpack.c.l.b16 %v165
  %v310 = vunpack.c.l.b16 %v166
  %v311 = vunpack.c.l.b16 %v167
  %v312 = vpack.c.b16 %v249, %v248
  %v313 = vpack.c.b16 %v251, %v250
  %v314 = vpack.c.b16 %v253, %v252
  %v315 = vpack.c.b16 %v255, %v254
  %v316 = vpack.c.b16 %v257, %v256
  %v317 = vpack.c.b16 %v259, %v258
  %v318 = vpack.c.b16 %v261, %v260
  %v319 = vpack.c.b16 %v263, %v262
  %v320 = vpack.c.b16 %v265, %v264
  %v321 = vpack.c.b16 %v267, %v266
  %v322 = vpack.c.b16 %v269, %v268
  %v323 = vpack.c.b16 %v271, %v270
  %v324 = vpack.c.b16 %v273, %v272
  %v325 = vpack.c.b16 %v275, %v274
  %v326 = vpack.c.b16 %v277, %v276
  %v327 = vpack.c.b16 %v279, %v278
  %v328 = vpack.c.b16 %v281, %v280
  %v329 = vpack.c.b16 %v283, %v282
  %v330 = vpack.c.b16 %v285, %v284
  %v331 = vpack.c.b16 %v287, %v286
  %v332 = vpack.c.b16 %v289, %v288
  %v333 = vpack.c.b16 %v291, %v290
  %v334 = vpack.c.b16 %v293, %v292
  %v335 = vpack.c.b16 %v295, %v294
  %v336 = vpack.c.b16 %v297, %v296
  %v337 = vpack.c.b16 %v299, %v298
  %v338 = vpack.c.b16 %v301, %v300
  %v339 = vpack.c.b16 %v303, %v302
  %v340 = vpack.c.b16 %v305, %v304
  %v341 = vpack.c.b16 %v307, %v306
  %v342 = vpack.c.b16 %v309, %v308
  %v343 = vpack.c.b16 %v311, %v310
  %v392 = vunpack.c.l.b16 %v168
  %v393 = vunpack.c.l.b16 %v169
  %v394 = vunpack.c.l.b16 %v170
  %v395 = vunpack.c.l.b16 %v171
  %v396 = vunpack.c.l.b16 %v172
  %v397 = vunpack.c.l.b16 %v173
  %v398 = vunpack.c.l.b16 %v174
  %v399 = vunpack.c.l.b16 %v175
  %v400 = vunpack.c.l.b16 %v176
  %v401 = vunpack.c.l.b16 %v177
  %v402 = vunpack.c.l.b16 %v178
  %v403 = vunpack.c.l.b16 %v179
  %v404 = vunpack.c.l.b16 %v180
  %v405 = vunpack.c.l.b16 %v181
  %v406 = vunpack.c.l.b16 %v182
  %v407 = vunpack.c.l.b16 %v183
  %v408 = vpack.c.b16 %v393, %v392
  %v409 = vpack.c.b16 %v395, %v394
  %v410 = vpack.c.b16 %v397, %v396
  %v411 = vpack.c.b16 %v399, %v398
  %v412 = vpack.c.b16 %v401, %v400
  %v413 = vpack.c.b16 %v403, %v402
  %v414 = vpack.c.b16 %v405, %v404
  %v415 = vpack.c.b16 %v407, %v406
  %424 = vmatprep.subr.bf16.mxu0 0
  %425 = vmatpush1.bf16.msra.mxu0 %v408
  %426 = vmatprep.subr.bf16.mxu0 0
  %427 = vmatpush1.bf16.msra.mxu0 %v409
  %428 = vmatprep.subr.bf16.mxu0 0
  %429 = vmatpush1.bf16.msra.mxu0 %v410
  %430 = vmatprep.subr.bf16.mxu0 0
  %431 = vmatpush1.bf16.msra.mxu0 %v411
  %432 = vmatprep.subr.bf16.mxu0 0
  %433 = vmatpush1.bf16.msra.mxu0 %v412
  %434 = vmatprep.subr.bf16.mxu0 0
  %435 = vmatpush1.bf16.msra.mxu0 %v413
  %436 = vmatprep.subr.bf16.mxu0 0
  %437 = vmatpush1.bf16.msra.mxu0 %v414
  %438 = vmatprep.subr.bf16.mxu0 0
  %439 = vmatpush1.bf16.msra.mxu0 %v415
  %440 = vmatprep.subr.bf16.mxu0 0
  %441 = vmatpush1.bf16.msra.mxu0 0
  %442 = vmatprep.subr.bf16.mxu0 0
  %443 = vmatpush1.bf16.msra.mxu0 0
  %444 = vmatprep.subr.bf16.mxu0 0
  %445 = vmatpush1.bf16.msra.mxu0 0
  %446 = vmatprep.subr.bf16.mxu0 0
  %447 = vmatpush1.bf16.msra.mxu0 0
  %448 = vmatprep.subr.bf16.mxu0 0
  %449 = vmatpush1.bf16.msra.mxu0 0
  %450 = vmatprep.subr.bf16.mxu0 0
  %451 = vmatpush1.bf16.msra.mxu0 0
  %452 = vmatprep.subr.bf16.mxu0 0
  %453 = vmatpush1.bf16.msra.mxu0 0
  %454 = vmatprep.subr.bf16.mxu0 0
  %455 = vmatpush1.bf16.msra.mxu0 0
  %456 = vmatprep.mubr.bf16.mxu0 0
  %457 = vmatmul.mubr.bf16.gmra.mrb[0].mxu0 %v312
  %v458 = vpop.f32.mrb[0].mxu0
  %v459 = vadd.f32 0.0, %v458
  %v460 = vpop.f32.mrb[0].mxu0
  %v461 = vpop.f32.mrb[0].mxu0
  %v462 = vadd.f32 0.0, %v461
  %v463 = vpop.f32.mrb[0].mxu0
  %464 = vmatprep.mubr.bf16.mxu0 0
  %465 = vmatmul.mubr.bf16.gmra.mrb[0].mxu0 %v313
  %v466 = vpop.f32.mrb[0].mxu0
  %v467 = vadd.f32 0.0, %v466
  %v468 = vpop.f32.mrb[0].mxu0
  %v469 = vpop.f32.mrb[0].mxu0
  %v470 = vadd.f32 0.0, %v469
  %v471 = vpop.f32.mrb[0].mxu0
  %472 = vmatprep.mubr.bf16.mxu0 0
  %473 = vmatmul.mubr.bf16.gmra.mrb[0].mxu0 %v314
  %v474 = vpop.f32.mrb[0].mxu0
  %v475 = vadd.f32 0.0, %v474
  %v476 = vpop.f32.mrb[0].mxu0
  %v477 = vpop.f32.mrb[0].mxu0
  %v478 = vadd.f32 0.0, %v477
  %v479 = vpop.f32.mrb[0].mxu0
  %480 = vmatprep.mubr.bf16.mxu0 0
  %481 = vmatmul.mubr.bf16.gmra.mrb[0].mxu0 %v315
  %v482 = vpop.f32.mrb[0].mxu0
  %v483 = vadd.f32 0.0, %v482
  %v484 = vpop.f32.mrb[0].mxu0
  %v485 = vpop.f32.mrb[0].mxu0
  %v486 = vadd.f32 0.0, %v485
  %v487 = vpop.f32.mrb[0].mxu0
  %488 = vmatprep.mubr.bf16.mxu0 0
  %489 = vmatmul.mubr.bf16.gmra.mrb[0].mxu0 %v316
  %v490 = vpop.f32.mrb[0].mxu0
  %v491 = vadd.f32 0.0, %v490
  %v492 = vpop.f32.mrb[0].mxu0
  %v493 = vpop.f32.mrb[0].mxu0
  %v494 = vadd.f32 0.0, %v493
  %v495 = vpop.f32.mrb[0].mxu0
  %496 = vmatprep.mubr.bf16.mxu0 0
  %497 = vmatmul.mubr.bf16.gmra.mrb[0].mxu0 %v317
  %v498 = vpop.f32.mrb[0].mxu0
  %v499 = vadd.f32 0.0, %v498
  %v500 = vpop.f32.mrb[0].mxu0
  %v501 = vpop.f32.mrb[0].mxu0
  %v502 = vadd.f32 0.0, %v501
  %v503 = vpop.f32.mrb[0].mxu0
  %504 = vmatprep.mubr.bf16.mxu0 0
  %505 = vmatmul.mubr.bf16.gmra.mrb[0].mxu0 %v318
  %v506 = vpop.f32.mrb[0].mxu0
  %v507 = vadd.f32 0.0, %v506
  %v508 = vpop.f32.mrb[0].mxu0
  %v509 = vpop.f32.mrb[0].mxu0
  %v510 = vadd.f32 0.0, %v509
  %v511 = vpop.f32.mrb[0].mxu0
  %512 = vmatprep.mubr.bf16.mxu0 0
  %513 = vmatmul.mubr.bf16.gmra.mrb[0].mxu0 %v319
  %v514 = vpop.f32.mrb[0].mxu0
  %v515 = vadd.f32 0.0, %v514
  %v516 = vpop.f32.mrb[0].mxu0
  %v517 = vpop.f32.mrb[0].mxu0
  %v518 = vadd.f32 0.0, %v517
  %v519 = vpop.f32.mrb[0].mxu0
  %520 = vmatprep.mubr.bf16.mxu0 0
  %521 = vmatmul.mubr.bf16.gmra.mrb[0].mxu0 %v320
  %v522 = vpop.f32.mrb[0].mxu0
  %v523 = vadd.f32 0.0, %v522
  %v524 = vpop.f32.mrb[0].mxu0
  %v525 = vpop.f32.mrb[0].mxu0
  %v526 = vadd.f32 0.0, %v525
  %v527 = vpop.f32.mrb[0].mxu0
  %528 = vmatprep.mubr.bf16.mxu0 0
  %529 = vmatmul.mubr.bf16.gmra.mrb[0].mxu0 %v321
  %v530 = vpop.f32.mrb[0].mxu0
  %v531 = vadd.f32 0.0, %v530
  %v532 = vpop.f32.mrb[0].mxu0
  %v533 = vpop.f32.mrb[0].mxu0
  %v534 = vadd.f32 0.0, %v533
  %v535 = vpop.f32.mrb[0].mxu0
  %536 = vmatprep.mubr.bf16.mxu0 0
  %537 = vmatmul.mubr.bf16.gmra.mrb[0].mxu0 %v322
  %v538 = vpop.f32.mrb[0].mxu0
  %v539 = vadd.f32 0.0, %v538
  %v540 = vpop.f32.mrb[0].mxu0
  %v541 = vpop.f32.mrb[0].mxu0
  %v542 = vadd.f32 0.0, %v541
  %v543 = vpop.f32.mrb[0].mxu0
  %544 = vmatprep.mubr.bf16.mxu0 0
  %545 = vmatmul.mubr.bf16.gmra.mrb[0].mxu0 %v323
  %v546 = vpop.f32.mrb[0].mxu0
  %v547 = vadd.f32 0.0, %v546
  %v548 = vpop.f32.mrb[0].mxu0
  %v549 = vpop.f32.mrb[0].mxu0
  %v550 = vadd.f32 0.0, %v549
  %v551 = vpop.f32.mrb[0].mxu0
  %552 = vmatprep.mubr.bf16.mxu0 0
  %553 = vmatmul.mubr.bf16.gmra.mrb[0].mxu0 %v324
  %v554 = vpop.f32.mrb[0].mxu0
  %v555 = vadd.f32 0.0, %v554
  %v556 = vpop.f32.mrb[0].mxu0
  %v557 = vpop.f32.mrb[0].mxu0
  %v558 = vadd.f32 0.0, %v557
  %v559 = vpop.f32.mrb[0].mxu0
  %560 = vmatprep.mubr.bf16.mxu0 0
  %561 = vmatmul.mubr.bf16.gmra.mrb[0].mxu0 %v325
  %v562 = vpop.f32.mrb[0].mxu0
  %v563 = vadd.f32 0.0, %v562
  %v564 = vpop.f32.mrb[0].mxu0
  %v565 = vpop.f32.mrb[0].mxu0
  %v566 = vadd.f32 0.0, %v565
  %v567 = vpop.f32.mrb[0].mxu0
  %568 = vmatprep.mubr.bf16.mxu0 0
  %569 = vmatmul.mubr.bf16.gmra.mrb[0].mxu0 %v326
  %v570 = vpop.f32.mrb[0].mxu0
  %v571 = vadd.f32 0.0, %v570
  %v572 = vpop.f32.mrb[0].mxu0
  %v573 = vpop.f32.mrb[0].mxu0
  %v574 = vadd.f32 0.0, %v573
  %v575 = vpop.f32.mrb[0].mxu0
  %576 = vmatprep.mubr.bf16.mxu0 0
  %577 = vmatmul.mubr.bf16.gmra.mrb[0].mxu0 %v327
  %v578 = vpop.f32.mrb[0].mxu0
  %v579 = vadd.f32 0.0, %v578
  %v580 = vpop.f32.mrb[0].mxu0
  %v581 = vpop.f32.mrb[0].mxu0
  %v582 = vadd.f32 0.0, %v581
  %v583 = vpop.f32.mrb[0].mxu0
  %584 = vmatprep.mubr.bf16.mxu0 0
  %585 = vmatmul.mubr.bf16.gmra.mrb[0].mxu0 %v328
  %v586 = vpop.f32.mrb[0].mxu0
  %v587 = vadd.f32 0.0, %v586
  %v588 = vpop.f32.mrb[0].mxu0
  %v589 = vpop.f32.mrb[0].mxu0
  %v590 = vadd.f32 0.0, %v589
  %v591 = vpop.f32.mrb[0].mxu0
  %592 = vmatprep.mubr.bf16.mxu0 0
  %593 = vmatmul.mubr.bf16.gmra.mrb[0].mxu0 %v329
  %v594 = vpop.f32.mrb[0].mxu0
  %v595 = vadd.f32 0.0, %v594
  %v596 = vpop.f32.mrb[0].mxu0
  %v597 = vpop.f32.mrb[0].mxu0
  %v598 = vadd.f32 0.0, %v597
  %v599 = vpop.f32.mrb[0].mxu0
  %600 = vmatprep.mubr.bf16.mxu0 0
  %601 = vmatmul.mubr.bf16.gmra.mrb[0].mxu0 %v330
  %v602 = vpop.f32.mrb[0].mxu0
  %v603 = vadd.f32 0.0, %v602
  %v604 = vpop.f32.mrb[0].mxu0
  %v605 = vpop.f32.mrb[0].mxu0
  %v606 = vadd.f32 0.0, %v605
  %v607 = vpop.f32.mrb[0].mxu0
  %608 = vmatprep.mubr.bf16.mxu0 0
  %609 = vmatmul.mubr.bf16.gmra.mrb[0].mxu0 %v331
  %v610 = vpop.f32.mrb[0].mxu0
  %v611 = vadd.f32 0.0, %v610
  %v612 = vpop.f32.mrb[0].mxu0
  %v613 = vpop.f32.mrb[0].mxu0
  %v614 = vadd.f32 0.0, %v613
  %v615 = vpop.f32.mrb[0].mxu0
  %616 = vmatprep.mubr.bf16.mxu0 0
  %617 = vmatmul.mubr.bf16.gmra.mrb[0].mxu0 %v332
  %v618 = vpop.f32.mrb[0].mxu0
  %v619 = vadd.f32 0.0, %v618
  %v620 = vpop.f32.mrb[0].mxu0
  %v621 = vpop.f32.mrb[0].mxu0
  %v622 = vadd.f32 0.0, %v621
  %v623 = vpop.f32.mrb[0].mxu0
  %624 = vmatprep.mubr.bf16.mxu0 0
  %625 = vmatmul.mubr.bf16.gmra.mrb[0].mxu0 %v333
  %v626 = vpop.f32.mrb[0].mxu0
  %v627 = vadd.f32 0.0, %v626
  %v628 = vpop.f32.mrb[0].mxu0
  %v629 = vpop.f32.mrb[0].mxu0
  %v630 = vadd.f32 0.0, %v629
  %v631 = vpop.f32.mrb[0].mxu0
  %632 = vmatprep.mubr.bf16.mxu0 0
  %633 = vmatmul.mubr.bf16.gmra.mrb[0].mxu0 %v334
  %v634 = vpop.f32.mrb[0].mxu0
  %v635 = vadd.f32 0.0, %v634
  %v636 = vpop.f32.mrb[0].mxu0
  %v637 = vpop.f32.mrb[0].mxu0
  %v638 = vadd.f32 0.0, %v637
  %v639 = vpop.f32.mrb[0].mxu0
  %640 = vmatprep.mubr.bf16.mxu0 0
  %641 = vmatmul.mubr.bf16.gmra.mrb[0].mxu0 %v335
  %v642 = vpop.f32.mrb[0].mxu0
  %v643 = vadd.f32 0.0, %v642
  %v644 = vpop.f32.mrb[0].mxu0
  %v645 = vpop.f32.mrb[0].mxu0
  %v646 = vadd.f32 0.0, %v645
  %v647 = vpop.f32.mrb[0].mxu0
  %648 = vmatprep.mubr.bf16.mxu0 0
  %649 = vmatmul.mubr.bf16.gmra.mrb[0].mxu0 %v336
  %v650 = vpop.f32.mrb[0].mxu0
  %v651 = vadd.f32 0.0, %v650
  %v652 = vpop.f32.mrb[0].mxu0
  %v653 = vpop.f32.mrb[0].mxu0
  %v654 = vadd.f32 0.0, %v653
  %v655 = vpop.f32.mrb[0].mxu0
  %656 = vmatprep.mubr.bf16.mxu0 0
  %657 = vmatmul.mubr.bf16.gmra.mrb[0].mxu0 %v337
  %v658 = vpop.f32.mrb[0].mxu0
  %v659 = vadd.f32 0.0, %v658
  %v660 = vpop.f32.mrb[0].mxu0
  %v661 = vpop.f32.mrb[0].mxu0
  %v662 = vadd.f32 0.0, %v661
  %v663 = vpop.f32.mrb[0].mxu0
  %664 = vmatprep.mubr.bf16.mxu0 0
  %665 = vmatmul.mubr.bf16.gmra.mrb[0].mxu0 %v338
  %v666 = vpop.f32.mrb[0].mxu0
  %v667 = vadd.f32 0.0, %v666
  %v668 = vpop.f32.mrb[0].mxu0
  %v669 = vpop.f32.mrb[0].mxu0
  %v670 = vadd.f32 0.0, %v669
  %v671 = vpop.f32.mrb[0].mxu0
  %672 = vmatprep.mubr.bf16.mxu0 0
  %673 = vmatmul.mubr.bf16.gmra.mrb[0].mxu0 %v339
  %v674 = vpop.f32.mrb[0].mxu0
  %v675 = vadd.f32 0.0, %v674
  %v676 = vpop.f32.mrb[0].mxu0
  %v677 = vpop.f32.mrb[0].mxu0
  %v678 = vadd.f32 0.0, %v677
  %v679 = vpop.f32.mrb[0].mxu0
  %680 = vmatprep.mubr.bf16.mxu0 0
  %681 = vmatmul.mubr.bf16.gmra.mrb[0].mxu0 %v340
  %v682 = vpop.f32.mrb[0].mxu0
  %v683 = vadd.f32 0.0, %v682
  %v684 = vpop.f32.mrb[0].mxu0
  %v685 = vpop.f32.mrb[0].mxu0
  %v686 = vadd.f32 0.0, %v685
  %v687 = vpop.f32.mrb[0].mxu0
  %688 = vmatprep.mubr.bf16.mxu0 0
  %689 = vmatmul.mubr.bf16.gmra.mrb[0].mxu0 %v341
  %v690 = vpop.f32.mrb[0].mxu0
  %v691 = vadd.f32 0.0, %v690
  %v692 = vpop.f32.mrb[0].mxu0
  %v693 = vpop.f32.mrb[0].mxu0
  %v694 = vadd.f32 0.0, %v693
  %v695 = vpop.f32.mrb[0].mxu0
  %696 = vmatprep.mubr.bf16.mxu0 0
  %697 = vmatmul.mubr.bf16.gmra.mrb[0].mxu0 %v342
  %v698 = vpop.f32.mrb[0].mxu0
  %v699 = vadd.f32 0.0, %v698
  %v700 = vpop.f32.mrb[0].mxu0
  %v701 = vpop.f32.mrb[0].mxu0
  %v702 = vadd.f32 0.0, %v701
  %v703 = vpop.f32.mrb[0].mxu0
  %704 = vmatprep.mubr.bf16.mxu0 0
  %705 = vmatmul.mubr.bf16.gmra.mrb[0].mxu0 %v343
  %v706 = vpop.f32.mrb[0].mxu0
  %v707 = vadd.f32 0.0, %v706
  %v708 = vpop.f32.mrb[0].mxu0
  %v709 = vpop.f32.mrb[0].mxu0
  %v710 = vadd.f32 0.0, %v709
  %v711 = vpop.f32.mrb[0].mxu0
  %712 = vdwg.mxu0
  %v777 = vunpack.c.l.b16 %v24
  %v778 = vunpack.c.l.b16 %v25
  %v779 = vunpack.c.l.b16 %v26
  %v780 = vunpack.c.l.b16 %v27
  %v781 = vunpack.c.l.b16 %v28
  %v782 = vunpack.c.l.b16 %v29
  %v783 = vunpack.c.l.b16 %v30
  %v784 = vunpack.c.l.b16 %v31
  %v785 = vunpack.c.l.b16 %v32
  %v786 = vunpack.c.l.b16 %v33
  %v787 = vunpack.c.l.b16 %v34
  %v788 = vunpack.c.l.b16 %v35
  %v789 = vunpack.c.l.b16 %v36
  %v790 = vunpack.c.l.b16 %v37
  %v791 = vunpack.c.l.b16 %v38
  %v792 = vunpack.c.l.b16 %v39
  %v793 = vunpack.c.l.b16 %v40
  %v794 = vunpack.c.l.b16 %v41
  %v795 = vunpack.c.l.b16 %v42
  %v796 = vunpack.c.l.b16 %v43
  %v797 = vunpack.c.l.b16 %v44
  %v798 = vunpack.c.l.b16 %v45
  %v799 = vunpack.c.l.b16 %v46
  %v800 = vunpack.c.l.b16 %v47
  %v801 = vunpack.c.l.b16 %v48
  %v802 = vunpack.c.l.b16 %v49
  %v803 = vunpack.c.l.b16 %v50
  %v804 = vunpack.c.l.b16 %v51
  %v805 = vunpack.c.l.b16 %v52
  %v806 = vunpack.c.l.b16 %v53
  %v807 = vunpack.c.l.b16 %v54
  %v808 = vunpack.c.l.b16 %v55
  %v809 = vunpack.c.l.b16 %v56
  %v810 = vunpack.c.l.b16 %v57
  %v811 = vunpack.c.l.b16 %v58
  %v812 = vunpack.c.l.b16 %v59
  %v813 = vunpack.c.l.b16 %v60
  %v814 = vunpack.c.l.b16 %v61
  %v815 = vunpack.c.l.b16 %v62
  %v816 = vunpack.c.l.b16 %v63
  %v817 = vunpack.c.l.b16 %v64
  %v818 = vunpack.c.l.b16 %v65
  %v819 = vunpack.c.l.b16 %v66
  %v820 = vunpack.c.l.b16 %v67
  %v821 = vunpack.c.l.b16 %v68
  %v822 = vunpack.c.l.b16 %v69
  %v823 = vunpack.c.l.b16 %v70
  %v824 = vunpack.c.l.b16 %v71
  %v825 = vunpack.c.l.b16 %v72
  %v826 = vunpack.c.l.b16 %v73
  %v827 = vunpack.c.l.b16 %v74
  %v828 = vunpack.c.l.b16 %v75
  %v829 = vunpack.c.l.b16 %v76
  %v830 = vunpack.c.l.b16 %v77
  %v831 = vunpack.c.l.b16 %v78
  %v832 = vunpack.c.l.b16 %v79
  %v833 = vunpack.c.l.b16 %v80
  %v834 = vunpack.c.l.b16 %v81
  %v835 = vunpack.c.l.b16 %v82
  %v836 = vunpack.c.l.b16 %v83
  %v837 = vunpack.c.l.b16 %v84
  %v838 = vunpack.c.l.b16 %v85
  %v839 = vunpack.c.l.b16 %v86
  %v840 = vunpack.c.l.b16 %v87
  %v841 = vpack.c.b16 %v778, %v777
  %v842 = vpack.c.b16 %v780, %v779
  %v843 = vpack.c.b16 %v782, %v781
  %v844 = vpack.c.b16 %v784, %v783
  %v845 = vpack.c.b16 %v786, %v785
  %v846 = vpack.c.b16 %v788, %v787
  %v847 = vpack.c.b16 %v790, %v789
  %v848 = vpack.c.b16 %v792, %v791
  %v849 = vpack.c.b16 %v794, %v793
  %v850 = vpack.c.b16 %v796, %v795
  %v851 = vpack.c.b16 %v798, %v797
  %v852 = vpack.c.b16 %v800, %v799
  %v853 = vpack.c.b16 %v802, %v801
  %v854 = vpack.c.b16 %v804, %v803
  %v855 = vpack.c.b16 %v806, %v805
  %v856 = vpack.c.b16 %v808, %v807
  %v857 = vpack.c.b16 %v810, %v809
  %v858 = vpack.c.b16 %v812, %v811
  %v859 = vpack.c.b16 %v814, %v813
  %v860 = vpack.c.b16 %v816, %v815
  %v861 = vpack.c.b16 %v818, %v817
  %v862 = vpack.c.b16 %v820, %v819
  %v863 = vpack.c.b16 %v822, %v821
  %v864 = vpack.c.b16 %v824, %v823
  %v865 = vpack.c.b16 %v826, %v825
  %v866 = vpack.c.b16 %v828, %v827
  %v867 = vpack.c.b16 %v830, %v829
  %v868 = vpack.c.b16 %v832, %v831
  %v869 = vpack.c.b16 %v834, %v833
  %v870 = vpack.c.b16 %v836, %v835
  %v871 = vpack.c.b16 %v838, %v837
  %v872 = vpack.c.b16 %v840, %v839
  %v921 = vunpack.c.l.b16 %v88
  %v922 = vunpack.c.l.b16 %v89
  %v923 = vunpack.c.l.b16 %v90
  %v924 = vunpack.c.l.b16 %v91
  %v925 = vunpack.c.l.b16 %v92
  %v926 = vunpack.c.l.b16 %v93
  %v927 = vunpack.c.l.b16 %v94
  %v928 = vunpack.c.l.b16 %v95
  %v929 = vunpack.c.l.b16 %v96
  %v930 = vunpack.c.l.b16 %v97
  %v931 = vunpack.c.l.b16 %v98
  %v932 = vunpack.c.l.b16 %v99
  %v933 = vunpack.c.l.b16 %v100
  %v934 = vunpack.c.l.b16 %v101
  %v935 = vunpack.c.l.b16 %v102
  %v936 = vunpack.c.l.b16 %v103
  %v937 = vpack.c.b16 %v922, %v921
  %v938 = vpack.c.b16 %v924, %v923
  %v939 = vpack.c.b16 %v926, %v925
  %v940 = vpack.c.b16 %v928, %v927
  %v941 = vpack.c.b16 %v930, %v929
  %v942 = vpack.c.b16 %v932, %v931
  %v943 = vpack.c.b16 %v934, %v933
  %v944 = vpack.c.b16 %v936, %v935
  %953 = vmatprep.subr.bf16.mxu0 0
  %954 = vmatpush1.bf16.msra.mxu0 %v937
  %955 = vmatprep.subr.bf16.mxu0 0
  %956 = vmatpush1.bf16.msra.mxu0 %v938
  %957 = vmatprep.subr.bf16.mxu0 0
  %958 = vmatpush1.bf16.msra.mxu0 %v939
  %959 = vmatprep.subr.bf16.mxu0 0
  %960 = vmatpush1.bf16.msra.mxu0 %v940
  %961 = vmatprep.subr.bf16.mxu0 0
  %962 = vmatpush1.bf16.msra.mxu0 %v941
  %963 = vmatprep.subr.bf16.mxu0 0
  %964 = vmatpush1.bf16.msra.mxu0 %v942
  %965 = vmatprep.subr.bf16.mxu0 0
  %966 = vmatpush1.bf16.msra.mxu0 %v943
  %967 = vmatprep.subr.bf16.mxu0 0
  %968 = vmatpush1.bf16.msra.mxu0 %v944
  %969 = vmatprep.subr.bf16.mxu0 0
  %970 = vmatpush1.bf16.msra.mxu0 0
  %971 = vmatprep.subr.bf16.mxu0 0
  %972 = vmatpush1.bf16.msra.mxu0 0
  %973 = vmatprep.subr.bf16.mxu0 0
  %974 = vmatpush1.bf16.msra.mxu0 0
  %975 = vmatprep.subr.bf16.mxu0 0
  %976 = vmatpush1.bf16.msra.mxu0 0
  %977 = vmatprep.subr.bf16.mxu0 0
  %978 = vmatpush1.bf16.msra.mxu0 0
  %979 = vmatprep.subr.bf16.mxu0 0
  %980 = vmatpush1.bf16.msra.mxu0 0
  %981 = vmatprep.subr.bf16.mxu0 0
  %982 = vmatpush1.bf16.msra.mxu0 0
  %983 = vmatprep.subr.bf16.mxu0 0
  %984 = vmatpush1.bf16.msra.mxu0 0
  %985 = vmatprep.mubr.bf16.mxu0 0
  %986 = vmatmul.mubr.bf16.gmra.mrb[0].mxu0 %v841
  %v987 = vpop.f32.mrb[0].mxu0
  %v988 = vadd.f32 %v459, %v987
  %v989 = vpop.f32.mrb[0].mxu0
  %v990 = vpop.f32.mrb[0].mxu0
  %v991 = vadd.f32 %v462, %v990
  %v992 = vpop.f32.mrb[0].mxu0
  %993 = vmatprep.mubr.bf16.mxu0 0
  %994 = vmatmul.mubr.bf16.gmra.mrb[0].mxu0 %v842
  %v995 = vpop.f32.mrb[0].mxu0
  %v996 = vadd.f32 %v467, %v995
  %v997 = vpop.f32.mrb[0].mxu0
  %v998 = vpop.f32.mrb[0].mxu0
  %v999 = vadd.f32 %v470, %v998
  %v1000 = vpop.f32.mrb[0].mxu0
  %1001 = vmatprep.mubr.bf16.mxu0 0
  %1002 = vmatmul.mubr.bf16.gmra.mrb[0].mxu0 %v843
  %v1003 = vpop.f32.mrb[0].mxu0
  %v1004 = vadd.f32 %v475, %v1003
  %v1005 = vpop.f32.mrb[0].mxu0
  %v1006 = vpop.f32.mrb[0].mxu0
  %v1007 = vadd.f32 %v478, %v1006
  %v1008 = vpop.f32.mrb[0].mxu0
  %1009 = vmatprep.mubr.bf16.mxu0 0
  %1010 = vmatmul.mubr.bf16.gmra.mrb[0].mxu0 %v844
  %v1011 = vpop.f32.mrb[0].mxu0
  %v1012 = vadd.f32 %v483, %v1011
  %v1013 = vpop.f32.mrb[0].mxu0
  %v1014 = vpop.f32.mrb[0].mxu0
  %v1015 = vadd.f32 %v486, %v1014
  %v1016 = vpop.f32.mrb[0].mxu0
  %1017 = vmatprep.mubr.bf16.mxu0 0
  %1018 = vmatmul.mubr.bf16.gmra.mrb[0].mxu0 %v845
  %v1019 = vpop.f32.mrb[0].mxu0
  %v1020 = vadd.f32 %v491, %v1019
  %v1021 = vpop.f32.mrb[0].mxu0
  %v1022 = vpop.f32.mrb[0].mxu0
  %v1023 = vadd.f32 %v494, %v1022
  %v1024 = vpop.f32.mrb[0].mxu0
  %1025 = vmatprep.mubr.bf16.mxu0 0
  %1026 = vmatmul.mubr.bf16.gmra.mrb[0].mxu0 %v846
  %v1027 = vpop.f32.mrb[0].mxu0
  %v1028 = vadd.f32 %v499, %v1027
  %v1029 = vpop.f32.mrb[0].mxu0
  %v1030 = vpop.f32.mrb[0].mxu0
  %v1031 = vadd.f32 %v502, %v1030
  %v1032 = vpop.f32.mrb[0].mxu0
  %1033 = vmatprep.mubr.bf16.mxu0 0
  %1034 = vmatmul.mubr.bf16.gmra.mrb[0].mxu0 %v847
  %v1035 = vpop.f32.mrb[0].mxu0
  %v1036 = vadd.f32 %v507, %v1035
  %v1037 = vpop.f32.mrb[0].mxu0
  %v1038 = vpop.f32.mrb[0].mxu0
  %v1039 = vadd.f32 %v510, %v1038
  %v1040 = vpop.f32.mrb[0].mxu0
  %1041 = vmatprep.mubr.bf16.mxu0 0
  %1042 = vmatmul.mubr.bf16.gmra.mrb[0].mxu0 %v848
  %v1043 = vpop.f32.mrb[0].mxu0
  %v1044 = vadd.f32 %v515, %v1043
  %v1045 = vpop.f32.mrb[0].mxu0
  %v1046 = vpop.f32.mrb[0].mxu0
  %v1047 = vadd.f32 %v518, %v1046
  %v1048 = vpop.f32.mrb[0].mxu0
  %1049 = vmatprep.mubr.bf16.mxu0 0
  %1050 = vmatmul.mubr.bf16.gmra.mrb[0].mxu0 %v849
  %v1051 = vpop.f32.mrb[0].mxu0
  %v1052 = vadd.f32 %v523, %v1051
  %v1053 = vpop.f32.mrb[0].mxu0
  %v1054 = vpop.f32.mrb[0].mxu0
  %v1055 = vadd.f32 %v526, %v1054
  %v1056 = vpop.f32.mrb[0].mxu0
  %1057 = vmatprep.mubr.bf16.mxu0 0
  %1058 = vmatmul.mubr.bf16.gmra.mrb[0].mxu0 %v850
  %v1059 = vpop.f32.mrb[0].mxu0
  %v1060 = vadd.f32 %v531, %v1059
  %v1061 = vpop.f32.mrb[0].mxu0
  %v1062 = vpop.f32.mrb[0].mxu0
  %v1063 = vadd.f32 %v534, %v1062
  %v1064 = vpop.f32.mrb[0].mxu0
  %1065 = vmatprep.mubr.bf16.mxu0 0
  %1066 = vmatmul.mubr.bf16.gmra.mrb[0].mxu0 %v851
  %v1067 = vpop.f32.mrb[0].mxu0
  %v1068 = vadd.f32 %v539, %v1067
  %v1069 = vpop.f32.mrb[0].mxu0
  %v1070 = vpop.f32.mrb[0].mxu0
  %v1071 = vadd.f32 %v542, %v1070
  %v1072 = vpop.f32.mrb[0].mxu0
  %1073 = vmatprep.mubr.bf16.mxu0 0
  %1074 = vmatmul.mubr.bf16.gmra.mrb[0].mxu0 %v852
  %v1075 = vpop.f32.mrb[0].mxu0
  %v1076 = vadd.f32 %v547, %v1075
  %v1077 = vpop.f32.mrb[0].mxu0
  %v1078 = vpop.f32.mrb[0].mxu0
  %v1079 = vadd.f32 %v550, %v1078
  %v1080 = vpop.f32.mrb[0].mxu0
  %1081 = vmatprep.mubr.bf16.mxu0 0
  %1082 = vmatmul.mubr.bf16.gmra.mrb[0].mxu0 %v853
  %v1083 = vpop.f32.mrb[0].mxu0
  %v1084 = vadd.f32 %v555, %v1083
  %v1085 = vpop.f32.mrb[0].mxu0
  %v1086 = vpop.f32.mrb[0].mxu0
  %v1087 = vadd.f32 %v558, %v1086
  %v1088 = vpop.f32.mrb[0].mxu0
  %1089 = vmatprep.mubr.bf16.mxu0 0
  %1090 = vmatmul.mubr.bf16.gmra.mrb[0].mxu0 %v854
  %v1091 = vpop.f32.mrb[0].mxu0
  %v1092 = vadd.f32 %v563, %v1091
  %v1093 = vpop.f32.mrb[0].mxu0
  %v1094 = vpop.f32.mrb[0].mxu0
  %v1095 = vadd.f32 %v566, %v1094
  %v1096 = vpop.f32.mrb[0].mxu0
  %1097 = vmatprep.mubr.bf16.mxu0 0
  %1098 = vmatmul.mubr.bf16.gmra.mrb[0].mxu0 %v855
  %v1099 = vpop.f32.mrb[0].mxu0
  %v1100 = vadd.f32 %v571, %v1099
  %v1101 = vpop.f32.mrb[0].mxu0
  %v1102 = vpop.f32.mrb[0].mxu0
  %v1103 = vadd.f32 %v574, %v1102
  %v1104 = vpop.f32.mrb[0].mxu0
  %1105 = vmatprep.mubr.bf16.mxu0 0
  %1106 = vmatmul.mubr.bf16.gmra.mrb[0].mxu0 %v856
  %v1107 = vpop.f32.mrb[0].mxu0
  %v1108 = vadd.f32 %v579, %v1107
  %v1109 = vpop.f32.mrb[0].mxu0
  %v1110 = vpop.f32.mrb[0].mxu0
  %v1111 = vadd.f32 %v582, %v1110
  %v1112 = vpop.f32.mrb[0].mxu0
  %1113 = vmatprep.mubr.bf16.mxu0 0
  %1114 = vmatmul.mubr.bf16.gmra.mrb[0].mxu0 %v857
  %v1115 = vpop.f32.mrb[0].mxu0
  %v1116 = vadd.f32 %v587, %v1115
  %v1117 = vpop.f32.mrb[0].mxu0
  %v1118 = vpop.f32.mrb[0].mxu0
  %v1119 = vadd.f32 %v590, %v1118
  %v1120 = vpop.f32.mrb[0].mxu0
  %1121 = vmatprep.mubr.bf16.mxu0 0
  %1122 = vmatmul.mubr.bf16.gmra.mrb[0].mxu0 %v858
  %v1123 = vpop.f32.mrb[0].mxu0
  %v1124 = vadd.f32 %v595, %v1123
  %v1125 = vpop.f32.mrb[0].mxu0
  %v1126 = vpop.f32.mrb[0].mxu0
  %v1127 = vadd.f32 %v598, %v1126
  %v1128 = vpop.f32.mrb[0].mxu0
  %1129 = vmatprep.mubr.bf16.mxu0 0
  %1130 = vmatmul.mubr.bf16.gmra.mrb[0].mxu0 %v859
  %v1131 = vpop.f32.mrb[0].mxu0
  %v1132 = vadd.f32 %v603, %v1131
  %v1133 = vpop.f32.mrb[0].mxu0
  %v1134 = vpop.f32.mrb[0].mxu0
  %v1135 = vadd.f32 %v606, %v1134
  %v1136 = vpop.f32.mrb[0].mxu0
  %1137 = vmatprep.mubr.bf16.mxu0 0
  %1138 = vmatmul.mubr.bf16.gmra.mrb[0].mxu0 %v860
  %v1139 = vpop.f32.mrb[0].mxu0
  %v1140 = vadd.f32 %v611, %v1139
  %v1141 = vpop.f32.mrb[0].mxu0
  %v1142 = vpop.f32.mrb[0].mxu0
  %v1143 = vadd.f32 %v614, %v1142
  %v1144 = vpop.f32.mrb[0].mxu0
  %1145 = vmatprep.mubr.bf16.mxu0 0
  %1146 = vmatmul.mubr.bf16.gmra.mrb[0].mxu0 %v861
  %v1147 = vpop.f32.mrb[0].mxu0
  %v1148 = vadd.f32 %v619, %v1147
  %v1149 = vpop.f32.mrb[0].mxu0
  %v1150 = vpop.f32.mrb[0].mxu0
  %v1151 = vadd.f32 %v622, %v1150
  %v1152 = vpop.f32.mrb[0].mxu0
  %1153 = vmatprep.mubr.bf16.mxu0 0
  %1154 = vmatmul.mubr.bf16.gmra.mrb[0].mxu0 %v862
  %v1155 = vpop.f32.mrb[0].mxu0
  %v1156 = vadd.f32 %v627, %v1155
  %v1157 = vpop.f32.mrb[0].mxu0
  %v1158 = vpop.f32.mrb[0].mxu0
  %v1159 = vadd.f32 %v630, %v1158
  %v1160 = vpop.f32.mrb[0].mxu0
  %1161 = vmatprep.mubr.bf16.mxu0 0
  %1162 = vmatmul.mubr.bf16.gmra.mrb[0].mxu0 %v863
  %v1163 = vpop.f32.mrb[0].mxu0
  %v1164 = vadd.f32 %v635, %v1163
  %v1165 = vpop.f32.mrb[0].mxu0
  %v1166 = vpop.f32.mrb[0].mxu0
  %v1167 = vadd.f32 %v638, %v1166
  %v1168 = vpop.f32.mrb[0].mxu0
  %1169 = vmatprep.mubr.bf16.mxu0 0
  %1170 = vmatmul.mubr.bf16.gmra.mrb[0].mxu0 %v864
  %v1171 = vpop.f32.mrb[0].mxu0
  %v1172 = vadd.f32 %v643, %v1171
  %v1173 = vpop.f32.mrb[0].mxu0
  %v1174 = vpop.f32.mrb[0].mxu0
  %v1175 = vadd.f32 %v646, %v1174
  %v1176 = vpop.f32.mrb[0].mxu0
  %1177 = vmatprep.mubr.bf16.mxu0 0
  %1178 = vmatmul.mubr.bf16.gmra.mrb[0].mxu0 %v865
  %v1179 = vpop.f32.mrb[0].mxu0
  %v1180 = vadd.f32 %v651, %v1179
  %v1181 = vpop.f32.mrb[0].mxu0
  %v1182 = vpop.f32.mrb[0].mxu0
  %v1183 = vadd.f32 %v654, %v1182
  %v1184 = vpop.f32.mrb[0].mxu0
  %1185 = vmatprep.mubr.bf16.mxu0 0
  %1186 = vmatmul.mubr.bf16.gmra.mrb[0].mxu0 %v866
  %v1187 = vpop.f32.mrb[0].mxu0
  %v1188 = vadd.f32 %v659, %v1187
  %v1189 = vpop.f32.mrb[0].mxu0
  %v1190 = vpop.f32.mrb[0].mxu0
  %v1191 = vadd.f32 %v662, %v1190
  %v1192 = vpop.f32.mrb[0].mxu0
  %1193 = vmatprep.mubr.bf16.mxu0 0
  %1194 = vmatmul.mubr.bf16.gmra.mrb[0].mxu0 %v867
  %v1195 = vpop.f32.mrb[0].mxu0
  %v1196 = vadd.f32 %v667, %v1195
  %v1197 = vpop.f32.mrb[0].mxu0
  %v1198 = vpop.f32.mrb[0].mxu0
  %v1199 = vadd.f32 %v670, %v1198
  %v1200 = vpop.f32.mrb[0].mxu0
  %1201 = vmatprep.mubr.bf16.mxu0 0
  %1202 = vmatmul.mubr.bf16.gmra.mrb[0].mxu0 %v868
  %v1203 = vpop.f32.mrb[0].mxu0
  %v1204 = vadd.f32 %v675, %v1203
  %v1205 = vpop.f32.mrb[0].mxu0
  %v1206 = vpop.f32.mrb[0].mxu0
  %v1207 = vadd.f32 %v678, %v1206
  %v1208 = vpop.f32.mrb[0].mxu0
  %1209 = vmatprep.mubr.bf16.mxu0 0
  %1210 = vmatmul.mubr.bf16.gmra.mrb[0].mxu0 %v869
  %v1211 = vpop.f32.mrb[0].mxu0
  %v1212 = vadd.f32 %v683, %v1211
  %v1213 = vpop.f32.mrb[0].mxu0
  %v1214 = vpop.f32.mrb[0].mxu0
  %v1215 = vadd.f32 %v686, %v1214
  %v1216 = vpop.f32.mrb[0].mxu0
  %1217 = vmatprep.mubr.bf16.mxu0 0
  %1218 = vmatmul.mubr.bf16.gmra.mrb[0].mxu0 %v870
  %v1219 = vpop.f32.mrb[0].mxu0
  %v1220 = vadd.f32 %v691, %v1219
  %v1221 = vpop.f32.mrb[0].mxu0
  %v1222 = vpop.f32.mrb[0].mxu0
  %v1223 = vadd.f32 %v694, %v1222
  %v1224 = vpop.f32.mrb[0].mxu0
  %1225 = vmatprep.mubr.bf16.mxu0 0
  %1226 = vmatmul.mubr.bf16.gmra.mrb[0].mxu0 %v871
  %v1227 = vpop.f32.mrb[0].mxu0
  %v1228 = vadd.f32 %v699, %v1227
  %v1229 = vpop.f32.mrb[0].mxu0
  %v1230 = vpop.f32.mrb[0].mxu0
  %v1231 = vadd.f32 %v702, %v1230
  %v1232 = vpop.f32.mrb[0].mxu0
  %1233 = vmatprep.mubr.bf16.mxu0 0
  %1234 = vmatmul.mubr.bf16.gmra.mrb[0].mxu0 %v872
  %v1235 = vpop.f32.mrb[0].mxu0
  %v1236 = vadd.f32 %v707, %v1235
  %v1237 = vpop.f32.mrb[0].mxu0
  %v1238 = vpop.f32.mrb[0].mxu0
  %v1239 = vadd.f32 %v710, %v1238
  %v1240 = vpop.f32.mrb[0].mxu0
  %1241 = vdwg.mxu0
  %v1242 = vld [vmem:[%s4] sm:$0x1]
  %v1244 = vlaneseq
  %v1245 = vshrl.u32 %v1244, 7
  %v1246 = vsub.s32 0, %v1245
  %v1247 = vrot.slane %v1242, %v1246
  %v1249 = vmul.f32 %v988, %v1247
  %v1250 = vmul.f32 %v991, %v1247
  %v1251 = vmul.f32 %v996, %v1247
  %v1252 = vmul.f32 %v999, %v1247
  %v1253 = vmul.f32 %v1004, %v1247
  %v1254 = vmul.f32 %v1007, %v1247
  %v1255 = vmul.f32 %v1012, %v1247
  %v1256 = vmul.f32 %v1015, %v1247
  %v1257 = vmul.f32 %v1020, %v1247
  %v1258 = vmul.f32 %v1023, %v1247
  %v1259 = vmul.f32 %v1028, %v1247
  %v1260 = vmul.f32 %v1031, %v1247
  %v1261 = vmul.f32 %v1036, %v1247
  %v1262 = vmul.f32 %v1039, %v1247
  %v1263 = vmul.f32 %v1044, %v1247
  %v1264 = vmul.f32 %v1047, %v1247
  %v1265 = vmul.f32 %v1052, %v1247
  %v1266 = vmul.f32 %v1055, %v1247
  %v1267 = vmul.f32 %v1060, %v1247
  %v1268 = vmul.f32 %v1063, %v1247
  %v1269 = vmul.f32 %v1068, %v1247
  %v1270 = vmul.f32 %v1071, %v1247
  %v1271 = vmul.f32 %v1076, %v1247
  %v1272 = vmul.f32 %v1079, %v1247
  %v1273 = vmul.f32 %v1084, %v1247
  %v1274 = vmul.f32 %v1087, %v1247
  %v1275 = vmul.f32 %v1092, %v1247
  %v1276 = vmul.f32 %v1095, %v1247
  %v1277 = vmul.f32 %v1100, %v1247
  %v1278 = vmul.f32 %v1103, %v1247
  %v1279 = vmul.f32 %v1108, %v1247
  %v1280 = vmul.f32 %v1111, %v1247
  %v1281 = vmul.f32 %v1116, %v1247
  %v1282 = vmul.f32 %v1119, %v1247
  %v1283 = vmul.f32 %v1124, %v1247
  %v1284 = vmul.f32 %v1127, %v1247
  %v1285 = vmul.f32 %v1132, %v1247
  %v1286 = vmul.f32 %v1135, %v1247
  %v1287 = vmul.f32 %v1140, %v1247
  %v1288 = vmul.f32 %v1143, %v1247
  %v1289 = vmul.f32 %v1148, %v1247
  %v1290 = vmul.f32 %v1151, %v1247
  %v1291 = vmul.f32 %v1156, %v1247
  %v1292 = vmul.f32 %v1159, %v1247
  %v1293 = vmul.f32 %v1164, %v1247
  %v1294 = vmul.f32 %v1167, %v1247
  %v1295 = vmul.f32 %v1172, %v1247
  %v1296 = vmul.f32 %v1175, %v1247
  %v1297 = vmul.f32 %v1180, %v1247
  %v1298 = vmul.f32 %v1183, %v1247
  %v1299 = vmul.f32 %v1188, %v1247
  %v1300 = vmul.f32 %v1191, %v1247
  %v1301 = vmul.f32 %v1196, %v1247
  %v1302 = vmul.f32 %v1199, %v1247
  %v1303 = vmul.f32 %v1204, %v1247
  %v1304 = vmul.f32 %v1207, %v1247
  %v1305 = vmul.f32 %v1212, %v1247
  %v1306 = vmul.f32 %v1215, %v1247
  %v1307 = vmul.f32 %v1220, %v1247
  %v1308 = vmul.f32 %v1223, %v1247
  %v1309 = vmul.f32 %v1228, %v1247
  %v1310 = vmul.f32 %v1231, %v1247
  %v1311 = vmul.f32 %v1236, %v1247
  %v1312 = vmul.f32 %v1239, %v1247
  %v1313 = vld [vmem:[%s5] sm:$0x1]
  %v1315 = vlaneseq
  %v1316 = vshrl.u32 %v1315, 7
  %v1317 = vsub.s32 0, %v1316
  %v1318 = vrot.slane %v1313, %v1317
  %v1320 = vadd.f32 %v1249, %v1318
  %v1321 = vadd.f32 %v1250, %v1318
  %v1322 = vadd.f32 %v1251, %v1318
  %v1323 = vadd.f32 %v1252, %v1318
  %v1324 = vadd.f32 %v1253, %v1318
  %v1325 = vadd.f32 %v1254, %v1318
  %v1326 = vadd.f32 %v1255, %v1318
  %v1327 = vadd.f32 %v1256, %v1318
  %v1328 = vadd.f32 %v1257, %v1318
  %v1329 = vadd.f32 %v1258, %v1318
  %v1330 = vadd.f32 %v1259, %v1318
  %v1331 = vadd.f32 %v1260, %v1318
  %v1332 = vadd.f32 %v1261, %v1318
  %v1333 = vadd.f32 %v1262, %v1318
  %v1334 = vadd.f32 %v1263, %v1318
  %v1335 = vadd.f32 %v1264, %v1318
  %v1336 = vadd.f32 %v1265, %v1318
  %v1337 = vadd.f32 %v1266, %v1318
  %v1338 = vadd.f32 %v1267, %v1318
  %v1339 = vadd.f32 %v1268, %v1318
  %v1340 = vadd.f32 %v1269, %v1318
  %v1341 = vadd.f32 %v1270, %v1318
  %v1342 = vadd.f32 %v1271, %v1318
  %v1343 = vadd.f32 %v1272, %v1318
  %v1344 = vadd.f32 %v1273, %v1318
  %v1345 = vadd.f32 %v1274, %v1318
  %v1346 = vadd.f32 %v1275, %v1318
  %v1347 = vadd.f32 %v1276, %v1318
  %v1348 = vadd.f32 %v1277, %v1318
  %v1349 = vadd.f32 %v1278, %v1318
  %v1350 = vadd.f32 %v1279, %v1318
  %v1351 = vadd.f32 %v1280, %v1318
  %v1352 = vadd.f32 %v1281, %v1318
  %v1353 = vadd.f32 %v1282, %v1318
  %v1354 = vadd.f32 %v1283, %v1318
  %v1355 = vadd.f32 %v1284, %v1318
  %v1356 = vadd.f32 %v1285, %v1318
  %v1357 = vadd.f32 %v1286, %v1318
  %v1358 = vadd.f32 %v1287, %v1318
  %v1359 = vadd.f32 %v1288, %v1318
  %v1360 = vadd.f32 %v1289, %v1318
  %v1361 = vadd.f32 %v1290, %v1318
  %v1362 = vadd.f32 %v1291, %v1318
  %v1363 = vadd.f32 %v1292, %v1318
  %v1364 = vadd.f32 %v1293, %v1318
  %v1365 = vadd.f32 %v1294, %v1318
  %v1366 = vadd.f32 %v1295, %v1318
  %v1367 = vadd.f32 %v1296, %v1318
  %v1368 = vadd.f32 %v1297, %v1318
  %v1369 = vadd.f32 %v1298, %v1318
  %v1370 = vadd.f32 %v1299, %v1318
  %v1371 = vadd.f32 %v1300, %v1318
  %v1372 = vadd.f32 %v1301, %v1318
  %v1373 = vadd.f32 %v1302, %v1318
  %v1374 = vadd.f32 %v1303, %v1318
  %v1375 = vadd.f32 %v1304, %v1318
  %v1376 = vadd.f32 %v1305, %v1318
  %v1377 = vadd.f32 %v1306, %v1318
  %v1378 = vadd.f32 %v1307, %v1318
  %v1379 = vadd.f32 %v1308, %v1318
  %v1380 = vadd.f32 %v1309, %v1318
  %v1381 = vadd.f32 %v1310, %v1318
  %v1382 = vadd.f32 %v1311, %v1318
  %v1383 = vadd.f32 %v1312, %v1318
  %v1384 = vsub.f32 0.0, %v1320
  %v1385 = vsub.f32 0.0, %v1321
  %v1386 = vsub.f32 0.0, %v1322
  %v1387 = vsub.f32 0.0, %v1323
  %v1388 = vsub.f32 0.0, %v1324
  %v1389 = vsub.f32 0.0, %v1325
  %v1390 = vsub.f32 0.0, %v1326
  %v1391 = vsub.f32 0.0, %v1327
  %v1392 = vsub.f32 0.0, %v1328
  %v1393 = vsub.f32 0.0, %v1329
  %v1394 = vsub.f32 0.0, %v1330
  %v1395 = vsub.f32 0.0, %v1331
  %v1396 = vsub.f32 0.0, %v1332
  %v1397 = vsub.f32 0.0, %v1333
  %v1398 = vsub.f32 0.0, %v1334
  %v1399 = vsub.f32 0.0, %v1335
  %v1400 = vsub.f32 0.0, %v1336
  %v1401 = vsub.f32 0.0, %v1337
  %v1402 = vsub.f32 0.0, %v1338
  %v1403 = vsub.f32 0.0, %v1339
  %v1404 = vsub.f32 0.0, %v1340
  %v1405 = vsub.f32 0.0, %v1341
  %v1406 = vsub.f32 0.0, %v1342
  %v1407 = vsub.f32 0.0, %v1343
  %v1408 = vsub.f32 0.0, %v1344
  %v1409 = vsub.f32 0.0, %v1345
  %v1410 = vsub.f32 0.0, %v1346
  %v1411 = vsub.f32 0.0, %v1347
  %v1412 = vsub.f32 0.0, %v1348
  %v1413 = vsub.f32 0.0, %v1349
  %v1414 = vsub.f32 0.0, %v1350
  %v1415 = vsub.f32 0.0, %v1351
  %v1416 = vsub.f32 0.0, %v1352
  %v1417 = vsub.f32 0.0, %v1353
  %v1418 = vsub.f32 0.0, %v1354
  %v1419 = vsub.f32 0.0, %v1355
  %v1420 = vsub.f32 0.0, %v1356
  %v1421 = vsub.f32 0.0, %v1357
  %v1422 = vsub.f32 0.0, %v1358
  %v1423 = vsub.f32 0.0, %v1359
  %v1424 = vsub.f32 0.0, %v1360
  %v1425 = vsub.f32 0.0, %v1361
  %v1426 = vsub.f32 0.0, %v1362
  %v1427 = vsub.f32 0.0, %v1363
  %v1428 = vsub.f32 0.0, %v1364
  %v1429 = vsub.f32 0.0, %v1365
  %v1430 = vsub.f32 0.0, %v1366
  %v1431 = vsub.f32 0.0, %v1367
  %v1432 = vsub.f32 0.0, %v1368
  %v1433 = vsub.f32 0.0, %v1369
  %v1434 = vsub.f32 0.0, %v1370
  %v1435 = vsub.f32 0.0, %v1371
  %v1436 = vsub.f32 0.0, %v1372
  %v1437 = vsub.f32 0.0, %v1373
  %v1438 = vsub.f32 0.0, %v1374
  %v1439 = vsub.f32 0.0, %v1375
  %v1440 = vsub.f32 0.0, %v1376
  %v1441 = vsub.f32 0.0, %v1377
  %v1442 = vsub.f32 0.0, %v1378
  %v1443 = vsub.f32 0.0, %v1379
  %v1444 = vsub.f32 0.0, %v1380
  %v1445 = vsub.f32 0.0, %v1381
  %v1446 = vsub.f32 0.0, %v1382
  %v1447 = vsub.f32 0.0, %v1383
  %v1448 = vmul.f32 %v1384, 1.442695
  %v1449 = vpow.pop %v1448
  %v1450 = vmul.f32 %v1385, 1.442695
  %v1451 = vpow.pop %v1450
  %v1452 = vmul.f32 %v1386, 1.442695
  %v1453 = vpow.pop %v1452
  %v1454 = vmul.f32 %v1387, 1.442695
  %v1455 = vpow.pop %v1454
  %v1456 = vmul.f32 %v1388, 1.442695
  %v1457 = vpow.pop %v1456
  %v1458 = vmul.f32 %v1389, 1.442695
  %v1459 = vpow.pop %v1458
  %v1460 = vmul.f32 %v1390, 1.442695
  %v1461 = vpow.pop %v1460
  %v1462 = vmul.f32 %v1391, 1.442695
  %v1463 = vpow.pop %v1462
  %v1464 = vmul.f32 %v1392, 1.442695
  %v1465 = vpow.pop %v1464
  %v1466 = vmul.f32 %v1393, 1.442695
  %v1467 = vpow.pop %v1466
  %v1468 = vmul.f32 %v1394, 1.442695
  %v1469 = vpow.pop %v1468
  %v1470 = vmul.f32 %v1395, 1.442695
  %v1471 = vpow.pop %v1470
  %v1472 = vmul.f32 %v1396, 1.442695
  %v1473 = vpow.pop %v1472
  %v1474 = vmul.f32 %v1397, 1.442695
  %v1475 = vpow.pop %v1474
  %v1476 = vmul.f32 %v1398, 1.442695
  %v1477 = vpow.pop %v1476
  %v1478 = vmul.f32 %v1399, 1.442695
  %v1479 = vpow.pop %v1478
  %v1480 = vmul.f32 %v1400, 1.442695
  %v1481 = vpow.pop %v1480
  %v1482 = vmul.f32 %v1401, 1.442695
  %v1483 = vpow.pop %v1482
  %v1484 = vmul.f32 %v1402, 1.442695
  %v1485 = vpow.pop %v1484
  %v1486 = vmul.f32 %v1403, 1.442695
  %v1487 = vpow.pop %v1486
  %v1488 = vmul.f32 %v1404, 1.442695
  %v1489 = vpow.pop %v1488
  %v1490 = vmul.f32 %v1405, 1.442695
  %v1491 = vpow.pop %v1490
  %v1492 = vmul.f32 %v1406, 1.442695
  %v1493 = vpow.pop %v1492
  %v1494 = vmul.f32 %v1407, 1.442695
  %v1495 = vpow.pop %v1494
  %v1496 = vmul.f32 %v1408, 1.442695
  %v1497 = vpow.pop %v1496
  %v1498 = vmul.f32 %v1409, 1.442695
  %v1499 = vpow.pop %v1498
  %v1500 = vmul.f32 %v1410, 1.442695
  %v1501 = vpow.pop %v1500
  %v1502 = vmul.f32 %v1411, 1.442695
  %v1503 = vpow.pop %v1502
  %v1504 = vmul.f32 %v1412, 1.442695
  %v1505 = vpow.pop %v1504
  %v1506 = vmul.f32 %v1413, 1.442695
  %v1507 = vpow.pop %v1506
  %v1508 = vmul.f32 %v1414, 1.442695
  %v1509 = vpow.pop %v1508
  %v1510 = vmul.f32 %v1415, 1.442695
  %v1511 = vpow.pop %v1510
  %v1512 = vmul.f32 %v1416, 1.442695
  %v1513 = vpow.pop %v1512
  %v1514 = vmul.f32 %v1417, 1.442695
  %v1515 = vpow.pop %v1514
  %v1516 = vmul.f32 %v1418, 1.442695
  %v1517 = vpow.pop %v1516
  %v1518 = vmul.f32 %v1419, 1.442695
  %v1519 = vpow.pop %v1518
  %v1520 = vmul.f32 %v1420, 1.442695
  %v1521 = vpow.pop %v1520
  %v1522 = vmul.f32 %v1421, 1.442695
  %v1523 = vpow.pop %v1522
  %v1524 = vmul.f32 %v1422, 1.442695
  %v1525 = vpow.pop %v1524
  %v1526 = vmul.f32 %v1423, 1.442695
  %v1527 = vpow.pop %v1526
  %v1528 = vmul.f32 %v1424, 1.442695
  %v1529 = vpow.pop %v1528
  %v1530 = vmul.f32 %v1425, 1.442695
  %v1531 = vpow.pop %v1530
  %v1532 = vmul.f32 %v1426, 1.442695
  %v1533 = vpow.pop %v1532
  %v1534 = vmul.f32 %v1427, 1.442695
  %v1535 = vpow.pop %v1534
  %v1536 = vmul.f32 %v1428, 1.442695
  %v1537 = vpow.pop %v1536
  %v1538 = vmul.f32 %v1429, 1.442695
  %v1539 = vpow.pop %v1538
  %v1540 = vmul.f32 %v1430, 1.442695
  %v1541 = vpow.pop %v1540
  %v1542 = vmul.f32 %v1431, 1.442695
  %v1543 = vpow.pop %v1542
  %v1544 = vmul.f32 %v1432, 1.442695
  %v1545 = vpow.pop %v1544
  %v1546 = vmul.f32 %v1433, 1.442695
  %v1547 = vpow.pop %v1546
  %v1548 = vmul.f32 %v1434, 1.442695
  %v1549 = vpow.pop %v1548
  %v1550 = vmul.f32 %v1435, 1.442695
  %v1551 = vpow.pop %v1550
  %v1552 = vmul.f32 %v1436, 1.442695
  %v1553 = vpow.pop %v1552
  %v1554 = vmul.f32 %v1437, 1.442695
  %v1555 = vpow.pop %v1554
  %v1556 = vmul.f32 %v1438, 1.442695
  %v1557 = vpow.pop %v1556
  %v1558 = vmul.f32 %v1439, 1.442695
  %v1559 = vpow.pop %v1558
  %v1560 = vmul.f32 %v1440, 1.442695
  %v1561 = vpow.pop %v1560
  %v1562 = vmul.f32 %v1441, 1.442695
  %v1563 = vpow.pop %v1562
  %v1564 = vmul.f32 %v1442, 1.442695
  %v1565 = vpow.pop %v1564
  %v1566 = vmul.f32 %v1443, 1.442695
  %v1567 = vpow.pop %v1566
  %v1568 = vmul.f32 %v1444, 1.442695
  %v1569 = vpow.pop %v1568
  %v1570 = vmul.f32 %v1445, 1.442695
  %v1571 = vpow.pop %v1570
  %v1572 = vmul.f32 %v1446, 1.442695
  %v1573 = vpow.pop %v1572
  %v1574 = vmul.f32 %v1447, 1.442695
  %v1575 = vpow.pop %v1574
  %v1576 = vadd.f32 %v1449, 1.0
  %v1577 = vadd.f32 %v1451, 1.0
  %v1578 = vadd.f32 %v1453, 1.0
  %v1579 = vadd.f32 %v1455, 1.0
  %v1580 = vadd.f32 %v1457, 1.0
  %v1581 = vadd.f32 %v1459, 1.0
  %v1582 = vadd.f32 %v1461, 1.0
  %v1583 = vadd.f32 %v1463, 1.0
  %v1584 = vadd.f32 %v1465, 1.0
  %v1585 = vadd.f32 %v1467, 1.0
  %v1586 = vadd.f32 %v1469, 1.0
  %v1587 = vadd.f32 %v1471, 1.0
  %v1588 = vadd.f32 %v1473, 1.0
  %v1589 = vadd.f32 %v1475, 1.0
  %v1590 = vadd.f32 %v1477, 1.0
  %v1591 = vadd.f32 %v1479, 1.0
  %v1592 = vadd.f32 %v1481, 1.0
  %v1593 = vadd.f32 %v1483, 1.0
  %v1594 = vadd.f32 %v1485, 1.0
  %v1595 = vadd.f32 %v1487, 1.0
  %v1596 = vadd.f32 %v1489, 1.0
  %v1597 = vadd.f32 %v1491, 1.0
  %v1598 = vadd.f32 %v1493, 1.0
  %v1599 = vadd.f32 %v1495, 1.0
  %v1600 = vadd.f32 %v1497, 1.0
  %v1601 = vadd.f32 %v1499, 1.0
  %v1602 = vadd.f32 %v1501, 1.0
  %v1603 = vadd.f32 %v1503, 1.0
  %v1604 = vadd.f32 %v1505, 1.0
  %v1605 = vadd.f32 %v1507, 1.0
  %v1606 = vadd.f32 %v1509, 1.0
  %v1607 = vadd.f32 %v1511, 1.0
  %v1608 = vadd.f32 %v1513, 1.0
  %v1609 = vadd.f32 %v1515, 1.0
  %v1610 = vadd.f32 %v1517, 1.0
  %v1611 = vadd.f32 %v1519, 1.0
  %v1612 = vadd.f32 %v1521, 1.0
  %v1613 = vadd.f32 %v1523, 1.0
  %v1614 = vadd.f32 %v1525, 1.0
  %v1615 = vadd.f32 %v1527, 1.0
  %v1616 = vadd.f32 %v1529, 1.0
  %v1617 = vadd.f32 %v1531, 1.0
  %v1618 = vadd.f32 %v1533, 1.0
  %v1619 = vadd.f32 %v1535, 1.0
  %v1620 = vadd.f32 %v1537, 1.0
  %v1621 = vadd.f32 %v1539, 1.0
  %v1622 = vadd.f32 %v1541, 1.0
  %v1623 = vadd.f32 %v1543, 1.0
  %v1624 = vadd.f32 %v1545, 1.0
  %v1625 = vadd.f32 %v1547, 1.0
  %v1626 = vadd.f32 %v1549, 1.0
  %v1627 = vadd.f32 %v1551, 1.0
  %v1628 = vadd.f32 %v1553, 1.0
  %v1629 = vadd.f32 %v1555, 1.0
  %v1630 = vadd.f32 %v1557, 1.0
  %v1631 = vadd.f32 %v1559, 1.0
  %v1632 = vadd.f32 %v1561, 1.0
  %v1633 = vadd.f32 %v1563, 1.0
  %v1634 = vadd.f32 %v1565, 1.0
  %v1635 = vadd.f32 %v1567, 1.0
  %v1636 = vadd.f32 %v1569, 1.0
  %v1637 = vadd.f32 %v1571, 1.0
  %v1638 = vadd.f32 %v1573, 1.0
  %v1639 = vadd.f32 %v1575, 1.0
  %v1640 = vrcp.pop %v1576
  %v1641 = vrcp.pop %v1577
  %v1642 = vrcp.pop %v1578
  %v1643 = vrcp.pop %v1579
  %v1644 = vrcp.pop %v1580
  %v1645 = vrcp.pop %v1581
  %v1646 = vrcp.pop %v1582
  %v1647 = vrcp.pop %v1583
  %v1648 = vrcp.pop %v1584
  %v1649 = vrcp.pop %v1585
  %v1650 = vrcp.pop %v1586
  %v1651 = vrcp.pop %v1587
  %v1652 = vrcp.pop %v1588
  %v1653 = vrcp.pop %v1589
  %v1654 = vrcp.pop %v1590
  %v1655 = vrcp.pop %v1591
  %v1656 = vrcp.pop %v1592
  %v1657 = vrcp.pop %v1593
  %v1658 = vrcp.pop %v1594
  %v1659 = vrcp.pop %v1595
  %v1660 = vrcp.pop %v1596
  %v1661 = vrcp.pop %v1597
  %v1662 = vrcp.pop %v1598
  %v1663 = vrcp.pop %v1599
  %v1664 = vrcp.pop %v1600
  %v1665 = vrcp.pop %v1601
  %v1666 = vrcp.pop %v1602
  %v1667 = vrcp.pop %v1603
  %v1668 = vrcp.pop %v1604
  %v1669 = vrcp.pop %v1605
  %v1670 = vrcp.pop %v1606
  %v1671 = vrcp.pop %v1607
  %v1672 = vrcp.pop %v1608
  %v1673 = vrcp.pop %v1609
  %v1674 = vrcp.pop %v1610
  %v1675 = vrcp.pop %v1611
  %v1676 = vrcp.pop %v1612
  %v1677 = vrcp.pop %v1613
  %v1678 = vrcp.pop %v1614
  %v1679 = vrcp.pop %v1615
  %v1680 = vrcp.pop %v1616
  %v1681 = vrcp.pop %v1617
  %v1682 = vrcp.pop %v1618
  %v1683 = vrcp.pop %v1619
  %v1684 = vrcp.pop %v1620
  %v1685 = vrcp.pop %v1621
  %v1686 = vrcp.pop %v1622
  %v1687 = vrcp.pop %v1623
  %v1688 = vrcp.pop %v1624
  %v1689 = vrcp.pop %v1625
  %v1690 = vrcp.pop %v1626
  %v1691 = vrcp.pop %v1627
  %v1692 = vrcp.pop %v1628
  %v1693 = vrcp.pop %v1629
  %v1694 = vrcp.pop %v1630
  %v1695 = vrcp.pop %v1631
  %v1696 = vrcp.pop %v1632
  %v1697 = vrcp.pop %v1633
  %v1698 = vrcp.pop %v1634
  %v1699 = vrcp.pop %v1635
  %v1700 = vrcp.pop %v1636
  %v1701 = vrcp.pop %v1637
  %v1702 = vrcp.pop %v1638
  %v1703 = vrcp.pop %v1639
  %v1704 = vmul.f32 %v1320, %v1640
  %v1705 = vmul.f32 %v1321, %v1641
  %v1706 = vmul.f32 %v1322, %v1642
  %v1707 = vmul.f32 %v1323, %v1643
  %v1708 = vmul.f32 %v1324, %v1644
  %v1709 = vmul.f32 %v1325, %v1645
  %v1710 = vmul.f32 %v1326, %v1646
  %v1711 = vmul.f32 %v1327, %v1647
  %v1712 = vmul.f32 %v1328, %v1648
  %v1713 = vmul.f32 %v1329, %v1649
  %v1714 = vmul.f32 %v1330, %v1650
  %v1715 = vmul.f32 %v1331, %v1651
  %v1716 = vmul.f32 %v1332, %v1652
  %v1717 = vmul.f32 %v1333, %v1653
  %v1718 = vmul.f32 %v1334, %v1654
  %v1719 = vmul.f32 %v1335, %v1655
  %v1720 = vmul.f32 %v1336, %v1656
  %v1721 = vmul.f32 %v1337, %v1657
  %v1722 = vmul.f32 %v1338, %v1658
  %v1723 = vmul.f32 %v1339, %v1659
  %v1724 = vmul.f32 %v1340, %v1660
  %v1725 = vmul.f32 %v1341, %v1661
  %v1726 = vmul.f32 %v1342, %v1662
  %v1727 = vmul.f32 %v1343, %v1663
  %v1728 = vmul.f32 %v1344, %v1664
  %v1729 = vmul.f32 %v1345, %v1665
  %v1730 = vmul.f32 %v1346, %v1666
  %v1731 = vmul.f32 %v1347, %v1667
  %v1732 = vmul.f32 %v1348, %v1668
  %v1733 = vmul.f32 %v1349, %v1669
  %v1734 = vmul.f32 %v1350, %v1670
  %v1735 = vmul.f32 %v1351, %v1671
  %v1736 = vmul.f32 %v1352, %v1672
  %v1737 = vmul.f32 %v1353, %v1673
  %v1738 = vmul.f32 %v1354, %v1674
  %v1739 = vmul.f32 %v1355, %v1675
  %v1740 = vmul.f32 %v1356, %v1676
  %v1741 = vmul.f32 %v1357, %v1677
  %v1742 = vmul.f32 %v1358, %v1678
  %v1743 = vmul.f32 %v1359, %v1679
  %v1744 = vmul.f32 %v1360, %v1680
  %v1745 = vmul.f32 %v1361, %v1681
  %v1746 = vmul.f32 %v1362, %v1682
  %v1747 = vmul.f32 %v1363, %v1683
  %v1748 = vmul.f32 %v1364, %v1684
  %v1749 = vmul.f32 %v1365, %v1685
  %v1750 = vmul.f32 %v1366, %v1686
  %v1751 = vmul.f32 %v1367, %v1687
  %v1752 = vmul.f32 %v1368, %v1688
  %v1753 = vmul.f32 %v1369, %v1689
  %v1754 = vmul.f32 %v1370, %v1690
  %v1755 = vmul.f32 %v1371, %v1691
  %v1756 = vmul.f32 %v1372, %v1692
  %v1757 = vmul.f32 %v1373, %v1693
  %v1758 = vmul.f32 %v1374, %v1694
  %v1759 = vmul.f32 %v1375, %v1695
  %v1760 = vmul.f32 %v1376, %v1696
  %v1761 = vmul.f32 %v1377, %v1697
  %v1762 = vmul.f32 %v1378, %v1698
  %v1763 = vmul.f32 %v1379, %v1699
  %v1764 = vmul.f32 %v1380, %v1700
  %v1765 = vmul.f32 %v1381, %v1701
  %v1766 = vmul.f32 %v1382, %v1702
  %v1767 = vmul.f32 %v1383, %v1703
  %v1768 = vpack.c.bf16 %v1705, %v1704
  %v1769 = vpack.c.bf16 %v1707, %v1706
  %v1770 = vpack.c.bf16 %v1709, %v1708
  %v1771 = vpack.c.bf16 %v1711, %v1710
  %v1772 = vpack.c.bf16 %v1713, %v1712
  %v1773 = vpack.c.bf16 %v1715, %v1714
  %v1774 = vpack.c.bf16 %v1717, %v1716
  %v1775 = vpack.c.bf16 %v1719, %v1718
  %v1776 = vpack.c.bf16 %v1721, %v1720
  %v1777 = vpack.c.bf16 %v1723, %v1722
  %v1778 = vpack.c.bf16 %v1725, %v1724
  %v1779 = vpack.c.bf16 %v1727, %v1726
  %v1780 = vpack.c.bf16 %v1729, %v1728
  %v1781 = vpack.c.bf16 %v1731, %v1730
  %v1782 = vpack.c.bf16 %v1733, %v1732
  %v1783 = vpack.c.bf16 %v1735, %v1734
  %v1784 = vpack.c.bf16 %v1737, %v1736
  %v1785 = vpack.c.bf16 %v1739, %v1738
  %v1786 = vpack.c.bf16 %v1741, %v1740
  %v1787 = vpack.c.bf16 %v1743, %v1742
  %v1788 = vpack.c.bf16 %v1745, %v1744
  %v1789 = vpack.c.bf16 %v1747, %v1746
  %v1790 = vpack.c.bf16 %v1749, %v1748
  %v1791 = vpack.c.bf16 %v1751, %v1750
  %v1792 = vpack.c.bf16 %v1753, %v1752
  %v1793 = vpack.c.bf16 %v1755, %v1754
  %v1794 = vpack.c.bf16 %v1757, %v1756
  %v1795 = vpack.c.bf16 %v1759, %v1758
  %v1796 = vpack.c.bf16 %v1761, %v1760
  %v1797 = vpack.c.bf16 %v1763, %v1762
  %v1798 = vpack.c.bf16 %v1765, %v1764
  %v1799 = vpack.c.bf16 %v1767, %v1766
  %v1832 = vunpack.c.l.b16 %v1768
  %v1833 = vunpack.c.h.b16 %v1768
  %v1834 = vunpack.c.l.b16 %v1769
  %v1835 = vunpack.c.h.b16 %v1769
  %v1836 = vunpack.c.l.b16 %v1770
  %v1837 = vunpack.c.h.b16 %v1770
  %v1838 = vunpack.c.l.b16 %v1771
  %v1839 = vunpack.c.h.b16 %v1771
  %v1840 = vunpack.c.l.b16 %v1772
  %v1841 = vunpack.c.h.b16 %v1772
  %v1842 = vunpack.c.l.b16 %v1773
  %v1843 = vunpack.c.h.b16 %v1773
  %v1844 = vunpack.c.l.b16 %v1774
  %v1845 = vunpack.c.h.b16 %v1774
  %v1846 = vunpack.c.l.b16 %v1775
  %v1847 = vunpack.c.h.b16 %v1775
  %v1848 = vunpack.c.l.b16 %v1776
  %v1849 = vunpack.c.h.b16 %v1776
  %v1850 = vunpack.c.l.b16 %v1777
  %v1851 = vunpack.c.h.b16 %v1777
  %v1852 = vunpack.c.l.b16 %v1778
  %v1853 = vunpack.c.h.b16 %v1778
  %v1854 = vunpack.c.l.b16 %v1779
  %v1855 = vunpack.c.h.b16 %v1779
  %v1856 = vunpack.c.l.b16 %v1780
  %v1857 = vunpack.c.h.b16 %v1780
  %v1858 = vunpack.c.l.b16 %v1781
  %v1859 = vunpack.c.h.b16 %v1781
  %v1860 = vunpack.c.l.b16 %v1782
  %v1861 = vunpack.c.h.b16 %v1782
  %v1862 = vunpack.c.l.b16 %v1783
  %v1863 = vunpack.c.h.b16 %v1783
  %v1864 = vunpack.c.l.b16 %v1784
  %v1865 = vunpack.c.h.b16 %v1784
  %v1866 = vunpack.c.l.b16 %v1785
  %v1867 = vunpack.c.h.b16 %v1785
  %v1868 = vunpack.c.l.b16 %v1786
  %v1869 = vunpack.c.h.b16 %v1786
  %v1870 = vunpack.c.l.b16 %v1787
  %v1871 = vunpack.c.h.b16 %v1787
  %v1872 = vunpack.c.l.b16 %v1788
  %v1873 = vunpack.c.h.b16 %v1788
  %v1874 = vunpack.c.l.b16 %v1789
  %v1875 = vunpack.c.h.b16 %v1789
  %v1876 = vunpack.c.l.b16 %v1790
  %v1877 = vunpack.c.h.b16 %v1790
  %v1878 = vunpack.c.l.b16 %v1791
  %v1879 = vunpack.c.h.b16 %v1791
  %v1880 = vunpack.c.l.b16 %v1792
  %v1881 = vunpack.c.h.b16 %v1792
  %v1882 = vunpack.c.l.b16 %v1793
  %v1883 = vunpack.c.h.b16 %v1793
  %v1884 = vunpack.c.l.b16 %v1794
  %v1885 = vunpack.c.h.b16 %v1794
  %v1886 = vunpack.c.l.b16 %v1795
  %v1887 = vunpack.c.h.b16 %v1795
  %v1888 = vunpack.c.l.b16 %v1796
  %v1889 = vunpack.c.h.b16 %v1796
  %v1890 = vunpack.c.l.b16 %v1797
  %v1891 = vunpack.c.h.b16 %v1797
  %v1892 = vunpack.c.l.b16 %v1798
  %v1893 = vunpack.c.h.b16 %v1798
  %v1894 = vunpack.c.l.b16 %v1799
  %v1895 = vunpack.c.h.b16 %v1799
  %v1896 = vpack.c.b16 %v1832, %v1832
  %v1897 = vpack.c.b16 %v1833, %v1833
  %v1898 = vpack.c.b16 %v1834, %v1834
  %v1899 = vpack.c.b16 %v1835, %v1835
  %v1900 = vpack.c.b16 %v1836, %v1836
  %v1901 = vpack.c.b16 %v1837, %v1837
  %v1902 = vpack.c.b16 %v1838, %v1838
  %v1903 = vpack.c.b16 %v1839, %v1839
  %v1904 = vpack.c.b16 %v1840, %v1840
  %v1905 = vpack.c.b16 %v1841, %v1841
  %v1906 = vpack.c.b16 %v1842, %v1842
  %v1907 = vpack.c.b16 %v1843, %v1843
  %v1908 = vpack.c.b16 %v1844, %v1844
  %v1909 = vpack.c.b16 %v1845, %v1845
  %v1910 = vpack.c.b16 %v1846, %v1846
  %v1911 = vpack.c.b16 %v1847, %v1847
  %v1912 = vpack.c.b16 %v1848, %v1848
  %v1913 = vpack.c.b16 %v1849, %v1849
  %v1914 = vpack.c.b16 %v1850, %v1850
  %v1915 = vpack.c.b16 %v1851, %v1851
  %v1916 = vpack.c.b16 %v1852, %v1852
  %v1917 = vpack.c.b16 %v1853, %v1853
  %v1918 = vpack.c.b16 %v1854, %v1854
  %v1919 = vpack.c.b16 %v1855, %v1855
  %v1920 = vpack.c.b16 %v1856, %v1856
  %v1921 = vpack.c.b16 %v1857, %v1857
  %v1922 = vpack.c.b16 %v1858, %v1858
  %v1923 = vpack.c.b16 %v1859, %v1859
  %v1924 = vpack.c.b16 %v1860, %v1860
  %v1925 = vpack.c.b16 %v1861, %v1861
  %v1926 = vpack.c.b16 %v1862, %v1862
  %v1927 = vpack.c.b16 %v1863, %v1863
  %v1928 = vpack.c.b16 %v1864, %v1864
  %v1929 = vpack.c.b16 %v1865, %v1865
  %v1930 = vpack.c.b16 %v1866, %v1866
  %v1931 = vpack.c.b16 %v1867, %v1867
  %v1932 = vpack.c.b16 %v1868, %v1868
  %v1933 = vpack.c.b16 %v1869, %v1869
  %v1934 = vpack.c.b16 %v1870, %v1870
  %v1935 = vpack.c.b16 %v1871, %v1871
  %v1936 = vpack.c.b16 %v1872, %v1872
  %v1937 = vpack.c.b16 %v1873, %v1873
  %v1938 = vpack.c.b16 %v1874, %v1874
  %v1939 = vpack.c.b16 %v1875, %v1875
  %v1940 = vpack.c.b16 %v1876, %v1876
  %v1941 = vpack.c.b16 %v1877, %v1877
  %v1942 = vpack.c.b16 %v1878, %v1878
  %v1943 = vpack.c.b16 %v1879, %v1879
  %v1944 = vpack.c.b16 %v1880, %v1880
  %v1945 = vpack.c.b16 %v1881, %v1881
  %v1946 = vpack.c.b16 %v1882, %v1882
  %v1947 = vpack.c.b16 %v1883, %v1883
  %v1948 = vpack.c.b16 %v1884, %v1884
  %v1949 = vpack.c.b16 %v1885, %v1885
  %v1950 = vpack.c.b16 %v1886, %v1886
  %v1951 = vpack.c.b16 %v1887, %v1887
  %v1952 = vpack.c.b16 %v1888, %v1888
  %v1953 = vpack.c.b16 %v1889, %v1889
  %v1954 = vpack.c.b16 %v1890, %v1890
  %v1955 = vpack.c.b16 %v1891, %v1891
  %v1956 = vpack.c.b16 %v1892, %v1892
  %v1957 = vpack.c.b16 %v1893, %v1893
  %v1958 = vpack.c.b16 %v1894, %v1894
  %v1959 = vpack.c.b16 %v1895, %v1895
  %2024 = vst [vmem:[%s6] sm:$0xf] %v1896
  %2025 = vst [vmem:[%s6 + $0x4] sm:$0xf] %v1897
  %2026 = vst [vmem:[%s6 + $0x8] sm:$0xf] %v1898
  %2027 = vst [vmem:[%s6 + $0xc] sm:$0xf] %v1899
  %2028 = vst [vmem:[%s6 + $0x10] sm:$0xf] %v1900
  %2029 = vst [vmem:[%s6 + $0x14] sm:$0xf] %v1901
  %2030 = vst [vmem:[%s6 + $0x18] sm:$0xf] %v1902
  %2031 = vst [vmem:[%s6 + $0x1c] sm:$0xf] %v1903
  %2032 = vst [vmem:[%s6 + $0x20] sm:$0xf] %v1904
  %2033 = vst [vmem:[%s6 + $0x24] sm:$0xf] %v1905
  %2034 = vst [vmem:[%s6 + $0x28] sm:$0xf] %v1906
  %2035 = vst [vmem:[%s6 + $0x2c] sm:$0xf] %v1907
  %2036 = vst [vmem:[%s6 + $0x30] sm:$0xf] %v1908
  %2037 = vst [vmem:[%s6 + $0x34] sm:$0xf] %v1909
  %2038 = vst [vmem:[%s6 + $0x38] sm:$0xf] %v1910
  %2039 = vst [vmem:[%s6 + $0x3c] sm:$0xf] %v1911
  %2040 = vst [vmem:[%s6 + $0x40] sm:$0xf] %v1912
  %2041 = vst [vmem:[%s6 + $0x44] sm:$0xf] %v1913
  %2042 = vst [vmem:[%s6 + $0x48] sm:$0xf] %v1914
  %2043 = vst [vmem:[%s6 + $0x4c] sm:$0xf] %v1915
  %2044 = vst [vmem:[%s6 + $0x50] sm:$0xf] %v1916
  %2045 = vst [vmem:[%s6 + $0x54] sm:$0xf] %v1917
  %2046 = vst [vmem:[%s6 + $0x58] sm:$0xf] %v1918
  %2047 = vst [vmem:[%s6 + $0x5c] sm:$0xf] %v1919
  %2048 = vst [vmem:[%s6 + $0x60] sm:$0xf] %v1920
  %2049 = vst [vmem:[%s6 + $0x64] sm:$0xf] %v1921
  %2050 = vst [vmem:[%s6 + $0x68] sm:$0xf] %v1922
  %2051 = vst [vmem:[%s6 + $0x6c] sm:$0xf] %v1923
  %2052 = vst [vmem:[%s6 + $0x70] sm:$0xf] %v1924
  %2053 = vst [vmem:[%s6 + $0x74] sm:$0xf] %v1925
  %2054 = vst [vmem:[%s6 + $0x78] sm:$0xf] %v1926
  %2055 = vst [vmem:[%s6 + $0x7c] sm:$0xf] %v1927
  %2056 = vst [vmem:[%s6 + $0x80] sm:$0xf] %v1928
  %2057 = vst [vmem:[%s6 + $0x84] sm:$0xf] %v1929
  %2058 = vst [vmem:[%s6 + $0x88] sm:$0xf] %v1930
  %2059 = vst [vmem:[%s6 + $0x8c] sm:$0xf] %v1931
  %2060 = vst [vmem:[%s6 + $0x90] sm:$0xf] %v1932
  %2061 = vst [vmem:[%s6 + $0x94] sm:$0xf] %v1933
  %2062 = vst [vmem:[%s6 + $0x98] sm:$0xf] %v1934
  %2063 = vst [vmem:[%s6 + $0x9c] sm:$0xf] %v1935
  %2064 = vst [vmem:[%s6 + $0xa0] sm:$0xf] %v1936
  %2065 = vst [vmem:[%s6 + $0xa4] sm:$0xf] %v1937
  %2066 = vst [vmem:[%s6 + $0xa8] sm:$0xf] %v1938
  %2067 = vst [vmem:[%s6 + $0xac] sm:$0xf] %v1939
  %2068 = vst [vmem:[%s6 + $0xb0] sm:$0xf] %v1940
  %2069 = vst [vmem:[%s6 + $0xb4] sm:$0xf] %v1941
  %2070 = vst [vmem:[%s6 + $0xb8] sm:$0xf] %v1942
  %2071 = vst [vmem:[%s6 + $0xbc] sm:$0xf] %v1943
  %2072 = vst [vmem:[%s6 + $0xc0] sm:$0xf] %v1944
  %2073 = vst [vmem:[%s6 + $0xc4] sm:$0xf] %v1945
  %2074 = vst [vmem:[%s6 + $0xc8] sm:$0xf] %v1946
  %2075 = vst [vmem:[%s6 + $0xcc] sm:$0xf] %v1947
  %2076 = vst [vmem:[%s6 + $0xd0] sm:$0xf] %v1948
  %2077 = vst [vmem:[%s6 + $0xd4] sm:$0xf] %v1949
  %2078 = vst [vmem:[%s6 + $0xd8] sm:$0xf] %v1950
  %2079 = vst [vmem:[%s6 + $0xdc] sm:$0xf] %v1951
  %2080 = vst [vmem:[%s6 + $0xe0] sm:$0xf] %v1952
  %2081 = vst [vmem:[%s6 + $0xe4] sm:$0xf] %v1953
  %2082 = vst [vmem:[%s6 + $0xe8] sm:$0xf] %v1954
  %2083 = vst [vmem:[%s6 + $0xec] sm:$0xf] %v1955
  %2084 = vst [vmem:[%s6 + $0xf0] sm:$0xf] %v1956
  %2085 = vst [vmem:[%s6 + $0xf4] sm:$0xf] %v1957
  %2086 = vst [vmem:[%s6 + $0xf8] sm:$0xf] %v1958
  %2087 = vst [vmem:[%s6 + $0xfc] sm:$0xf] %v1959
  // Predicated region
  $region26: #{_lambda_.26} parent=0 // pred_check
    _
  $region27: #{_lambda_.26} parent=0 // pred_check_branch
    %2089 = sbr.rel (0) target = $region29
  $region28: #{_lambda_.26} parent=0 // pred_region
    _
  $region29: #{_lambda_.26} parent=0 // pred_fallthru
    _
  // Predicated region
  $region30: #{_lambda_.26} parent=0 // pred_check
    _
  $region31: #{_lambda_.26} parent=0 // pred_check_branch
    %2091 = sbr.rel (0) target = $region33
  $region32: #{_lambda_.26} parent=0 // pred_region
    _
  $region33: #{_lambda_.26} parent=0 // pred_fallthru
    _

// kernel: _lambda_.27
$region0: #{_lambda_.27}
  #allocation0 [shape = 'u32[]', space=smem, size = 0x4, offset = 0x4, fixed_abs, tag = 'smem constant byte address 0x4 - core index']
  #allocation1 [shape = 'u32[144,128]{1,0:T(1,128)}', space=vmem, size = 0x12000, scoped, tag = 'internal scratch']
  #allocation2 [shape = 'f32[512,128]{1,0:T(8,128)}', space=vmem, size = 0x40000, scoped, tag = 'scratch operand']
  %s0 = inlined_call_operand.vmem [shape: bf16[512,128], index: 0, kind: input, shape index: {}]
  %s1 = inlined_call_operand.vmem [shape: bf16[128,128], index: 1, kind: input, shape index: {}]
  %s2 = inlined_call_operand.vmem [shape: f32[1,128], index: 2, kind: input, shape index: {}]
  %s3 = inlined_call_operand.vmem [shape: f32[1,128], index: 3, kind: input, shape index: {}]
  %s4 = inlined_call_operand.vmem [shape: bf16[512,128], index: 4, kind: output, shape index: {}]
  %s5 = sld [smem:[#allocation0]]
  $region34: #{_lambda_.27} parent=0
    _
  %s7 = ssub.s32 1, %s5
  %s8 = scalar_select 0, %s7, %s5
  // Predicated region
  $region2: #{_lambda_.27} parent=0 // pred_check
    _
  $region3: #{_lambda_.27} parent=0 // pred_check_branch
    %10 = sbr.rel (0) target = $region5
  $region4: #{_lambda_.27} parent=0 // pred_region
    _
  $region5: #{_lambda_.27} parent=0 // pred_fallthru
    _
  // Predicated region
  $region6: #{_lambda_.27} parent=0 // pred_check
    _
  $region7: #{_lambda_.27} parent=0 // pred_check_branch
    %12 = sbr.rel (0) target = $region9
  $region8: #{_lambda_.27} parent=0 // pred_region
    _
  $region9: #{_lambda_.27} parent=0 // pred_fallthru
    _
  // Predicated region
  $region10: #{_lambda_.27} parent=0 // pred_check
    _
  $region11: #{_lambda_.27} parent=0 // pred_check_branch
    %14 = sbr.rel (0) target = $region13
  $region12: #{_lambda_.27} parent=0 // pred_region
    _
  $region13: #{_lambda_.27} parent=0 // pred_fallthru
    _
  // Predicated region
  $region14: #{_lambda_.27} parent=0 // pred_check
    _
  $region15: #{_lambda_.27} parent=0 // pred_check_branch
    %16 = sbr.rel (0) target = $region17
  $region16: #{_lambda_.27} parent=0 // pred_region
    _
  $region17: #{_lambda_.27} parent=0 // pred_fallthru
    _
  %p18 = scmp.eq.s32.totalorder 0, 0
  // Predicated region
  $region18: #{_lambda_.27} parent=0 // pred_check
    %p19 = pneg %p18
  $region19: #{_lambda_.27} parent=0 // pred_check_branch
    %21 = sbr.rel (%p19) target = $region21
  $region20: #{_lambda_.27} parent=0 // pred_region
    %22 = vst [vmem:[#allocation2] sm:$0xff] 0.0
    %23 = vst [vmem:[#allocation2 + $0x8] sm:$0xff] 0.0
    %24 = vst [vmem:[#allocation2 + $0x10] sm:$0xff] 0.0
    %25 = vst [vmem:[#allocation2 + $0x18] sm:$0xff] 0.0
    %26 = vst [vmem:[#allocation2 + $0x20] sm:$0xff] 0.0
    %27 = vst [vmem:[#allocation2 + $0x28] sm:$0xff] 0.0
    %28 = vst [vmem:[#allocation2 + $0x30] sm:$0xff] 0.0
    %29 = vst [vmem:[#allocation2 + $0x38] sm:$0xff] 0.0
    %30 = vst [vmem:[#allocation2 + $0x40] sm:$0xff] 0.0
    %31 = vst [vmem:[#allocation2 + $0x48] sm:$0xff] 0.0
    %32 = vst [vmem:[#allocation2 + $0x50] sm:$0xff] 0.0
    %33 = vst [vmem:[#allocation2 + $0x58] sm:$0xff] 0.0
    %34 = vst [vmem:[#allocation2 + $0x60] sm:$0xff] 0.0
    %35 = vst [vmem:[#allocation2 + $0x68] sm:$0xff] 0.0
    %36 = vst [vmem:[#allocation2 + $0x70] sm:$0xff] 0.0
    %37 = vst [vmem:[#allocation2 + $0x78] sm:$0xff] 0.0
    %38 = vst [vmem:[#allocation2 + $0x80] sm:$0xff] 0.0
    %39 = vst [vmem:[#allocation2 + $0x88] sm:$0xff] 0.0
    %40 = vst [vmem:[#allocation2 + $0x90] sm:$0xff] 0.0
    %41 = vst [vmem:[#allocation2 + $0x98] sm:$0xff] 0.0
    %42 = vst [vmem:[#allocation2 + $0xa0] sm:$0xff] 0.0
    %43 = vst [vmem:[#allocation2 + $0xa8] sm:$0xff] 0.0
    %44 = vst [vmem:[#allocation2 + $0xb0] sm:$0xff] 0.0
    %45 = vst [vmem:[#allocation2 + $0xb8] sm:$0xff] 0.0
    %46 = vst [vmem:[#allocation2 + $0xc0] sm:$0xff] 0.0
    %47 = vst [vmem:[#allocation2 + $0xc8] sm:$0xff] 0.0
    %48 = vst [vmem:[#allocation2 + $0xd0] sm:$0xff] 0.0
    %49 = vst [vmem:[#allocation2 + $0xd8] sm:$0xff] 0.0
    %50 = vst [vmem:[#allocation2 + $0xe0] sm:$0xff] 0.0
    %51 = vst [vmem:[#allocation2 + $0xe8] sm:$0xff] 0.0
    %52 = vst [vmem:[#allocation2 + $0xf0] sm:$0xff] 0.0
    %53 = vst [vmem:[#allocation2 + $0xf8] sm:$0xff] 0.0
    %54 = vst [vmem:[#allocation2 + $0x100] sm:$0xff] 0.0
    %55 = vst [vmem:[#allocation2 + $0x108] sm:$0xff] 0.0
    %56 = vst [vmem:[#allocation2 + $0x110] sm:$0xff] 0.0
    %57 = vst [vmem:[#allocation2 + $0x118] sm:$0xff] 0.0
    %58 = vst [vmem:[#allocation2 + $0x120] sm:$0xff] 0.0
    %59 = vst [vmem:[#allocation2 + $0x128] sm:$0xff] 0.0
    %60 = vst [vmem:[#allocation2 + $0x130] sm:$0xff] 0.0
    %61 = vst [vmem:[#allocation2 + $0x138] sm:$0xff] 0.0
    %62 = vst [vmem:[#allocation2 + $0x140] sm:$0xff] 0.0
    %63 = vst [vmem:[#allocation2 + $0x148] sm:$0xff] 0.0
    %64 = vst [vmem:[#allocation2 + $0x150] sm:$0xff] 0.0
    %65 = vst [vmem:[#allocation2 + $0x158] sm:$0xff] 0.0
    %66 = vst [vmem:[#allocation2 + $0x160] sm:$0xff] 0.0
    %67 = vst [vmem:[#allocation2 + $0x168] sm:$0xff] 0.0
    %68 = vst [vmem:[#allocation2 + $0x170] sm:$0xff] 0.0
    %69 = vst [vmem:[#allocation2 + $0x178] sm:$0xff] 0.0
    %70 = vst [vmem:[#allocation2 + $0x180] sm:$0xff] 0.0
    %71 = vst [vmem:[#allocation2 + $0x188] sm:$0xff] 0.0
    %72 = vst [vmem:[#allocation2 + $0x190] sm:$0xff] 0.0
    %73 = vst [vmem:[#allocation2 + $0x198] sm:$0xff] 0.0
    %74 = vst [vmem:[#allocation2 + $0x1a0] sm:$0xff] 0.0
    %75 = vst [vmem:[#allocation2 + $0x1a8] sm:$0xff] 0.0
    %76 = vst [vmem:[#allocation2 + $0x1b0] sm:$0xff] 0.0
    %77 = vst [vmem:[#allocation2 + $0x1b8] sm:$0xff] 0.0
    %78 = vst [vmem:[#allocation2 + $0x1c0] sm:$0xff] 0.0
    %79 = vst [vmem:[#allocation2 + $0x1c8] sm:$0xff] 0.0
    %80 = vst [vmem:[#allocation2 + $0x1d0] sm:$0xff] 0.0
    %81 = vst [vmem:[#allocation2 + $0x1d8] sm:$0xff] 0.0
    %82 = vst [vmem:[#allocation2 + $0x1e0] sm:$0xff] 0.0
    %83 = vst [vmem:[#allocation2 + $0x1e8] sm:$0xff] 0.0
    %84 = vst [vmem:[#allocation2 + $0x1f0] sm:$0xff] 0.0
    %85 = vst [vmem:[#allocation2 + $0x1f8] sm:$0xff] 0.0
  $region21: #{_lambda_.27} parent=0 // pred_fallthru
    _
  %v86 = vld [vmem:[#allocation2] sm:$0xff]
  %v87 = vld [vmem:[#allocation2 + $0x8] sm:$0xff]
  %v88 = vld [vmem:[#allocation2 + $0x10] sm:$0xff]
  %v89 = vld [vmem:[#allocation2 + $0x18] sm:$0xff]
  %v90 = vld [vmem:[#allocation2 + $0x20] sm:$0xff]
  %v91 = vld [vmem:[#allocation2 + $0x28] sm:$0xff]
  %v92 = vld [vmem:[#allocation2 + $0x30] sm:$0xff]
  %v93 = vld [vmem:[#allocation2 + $0x38] sm:$0xff]
  %v94 = vld [vmem:[#allocation2 + $0x40] sm:$0xff]
  %v95 = vld [vmem:[#allocation2 + $0x48] sm:$0xff]
  %v96 = vld [vmem:[#allocation2 + $0x50] sm:$0xff]
  %v97 = vld [vmem:[#allocation2 + $0x58] sm:$0xff]
  %v98 = vld [vmem:[#allocation2 + $0x60] sm:$0xff]
  %v99 = vld [vmem:[#allocation2 + $0x68] sm:$0xff]
  %v100 = vld [vmem:[#allocation2 + $0x70] sm:$0xff]
  %v101 = vld [vmem:[#allocation2 + $0x78] sm:$0xff]
  %v102 = vld [vmem:[#allocation2 + $0x80] sm:$0xff]
  %v103 = vld [vmem:[#allocation2 + $0x88] sm:$0xff]
  %v104 = vld [vmem:[#allocation2 + $0x90] sm:$0xff]
  %v105 = vld [vmem:[#allocation2 + $0x98] sm:$0xff]
  %v106 = vld [vmem:[#allocation2 + $0xa0] sm:$0xff]
  %v107 = vld [vmem:[#allocation2 + $0xa8] sm:$0xff]
  %v108 = vld [vmem:[#allocation2 + $0xb0] sm:$0xff]
  %v109 = vld [vmem:[#allocation2 + $0xb8] sm:$0xff]
  %v110 = vld [vmem:[#allocation2 + $0xc0] sm:$0xff]
  %v111 = vld [vmem:[#allocation2 + $0xc8] sm:$0xff]
  %v112 = vld [vmem:[#allocation2 + $0xd0] sm:$0xff]
  %v113 = vld [vmem:[#allocation2 + $0xd8] sm:$0xff]
  %v114 = vld [vmem:[#allocation2 + $0xe0] sm:$0xff]
  %v115 = vld [vmem:[#allocation2 + $0xe8] sm:$0xff]
  %v116 = vld [vmem:[#allocation2 + $0xf0] sm:$0xff]
  %v117 = vld [vmem:[#allocation2 + $0xf8] sm:$0xff]
  %v118 = vld [vmem:[#allocation2 + $0x100] sm:$0xff]
  %v119 = vld [vmem:[#allocation2 + $0x108] sm:$0xff]
  %v120 = vld [vmem:[#allocation2 + $0x110] sm:$0xff]
  %v121 = vld [vmem:[#allocation2 + $0x118] sm:$0xff]
  %v122 = vld [vmem:[#allocation2 + $0x120] sm:$0xff]
  %v123 = vld [vmem:[#allocation2 + $0x128] sm:$0xff]
  %v124 = vld [vmem:[#allocation2 + $0x130] sm:$0xff]
  %v125 = vld [vmem:[#allocation2 + $0x138] sm:$0xff]
  %v126 = vld [vmem:[#allocation2 + $0x140] sm:$0xff]
  %v127 = vld [vmem:[#allocation2 + $0x148] sm:$0xff]
  %v128 = vld [vmem:[#allocation2 + $0x150] sm:$0xff]
  %v129 = vld [vmem:[#allocation2 + $0x158] sm:$0xff]
  %v130 = vld [vmem:[#allocation2 + $0x160] sm:$0xff]
  %v131 = vld [vmem:[#allocation2 + $0x168] sm:$0xff]
  %v132 = vld [vmem:[#allocation2 + $0x170] sm:$0xff]
  %v133 = vld [vmem:[#allocation2 + $0x178] sm:$0xff]
  %v134 = vld [vmem:[#allocation2 + $0x180] sm:$0xff]
  %v135 = vld [vmem:[#allocation2 + $0x188] sm:$0xff]
  %v136 = vld [vmem:[#allocation2 + $0x190] sm:$0xff]
  %v137 = vld [vmem:[#allocation2 + $0x198] sm:$0xff]
  %v138 = vld [vmem:[#allocation2 + $0x1a0] sm:$0xff]
  %v139 = vld [vmem:[#allocation2 + $0x1a8] sm:$0xff]
  %v140 = vld [vmem:[#allocation2 + $0x1b0] sm:$0xff]
  %v141 = vld [vmem:[#allocation2 + $0x1b8] sm:$0xff]
  %v142 = vld [vmem:[#allocation2 + $0x1c0] sm:$0xff]
  %v143 = vld [vmem:[#allocation2 + $0x1c8] sm:$0xff]
  %v144 = vld [vmem:[#allocation2 + $0x1d0] sm:$0xff]
  %v145 = vld [vmem:[#allocation2 + $0x1d8] sm:$0xff]
  %v146 = vld [vmem:[#allocation2 + $0x1e0] sm:$0xff]
  %v147 = vld [vmem:[#allocation2 + $0x1e8] sm:$0xff]
  %v148 = vld [vmem:[#allocation2 + $0x1f0] sm:$0xff]
  %v149 = vld [vmem:[#allocation2 + $0x1f8] sm:$0xff]
  %v150 = vld [vmem:[%s0] sm:$0xf]
  %v151 = vld [vmem:[%s0 + $0x4] sm:$0xf]
  %v152 = vld [vmem:[%s0 + $0x8] sm:$0xf]
  %v153 = vld [vmem:[%s0 + $0xc] sm:$0xf]
  %v154 = vld [vmem:[%s0 + $0x10] sm:$0xf]
  %v155 = vld [vmem:[%s0 + $0x14] sm:$0xf]
  %v156 = vld [vmem:[%s0 + $0x18] sm:$0xf]
  %v157 = vld [vmem:[%s0 + $0x1c] sm:$0xf]
  %v158 = vld [vmem:[%s0 + $0x20] sm:$0xf]
  %v159 = vld [vmem:[%s0 + $0x24] sm:$0xf]
  %v160 = vld [vmem:[%s0 + $0x28] sm:$0xf]
  %v161 = vld [vmem:[%s0 + $0x2c] sm:$0xf]
  %v162 = vld [vmem:[%s0 + $0x30] sm:$0xf]
  %v163 = vld [vmem:[%s0 + $0x34] sm:$0xf]
  %v164 = vld [vmem:[%s0 + $0x38] sm:$0xf]
  %v165 = vld [vmem:[%s0 + $0x3c] sm:$0xf]
  %v166 = vld [vmem:[%s0 + $0x40] sm:$0xf]
  %v167 = vld [vmem:[%s0 + $0x44] sm:$0xf]
  %v168 = vld [vmem:[%s0 + $0x48] sm:$0xf]
  %v169 = vld [vmem:[%s0 + $0x4c] sm:$0xf]
  %v170 = vld [vmem:[%s0 + $0x50] sm:$0xf]
  %v171 = vld [vmem:[%s0 + $0x54] sm:$0xf]
  %v172 = vld [vmem:[%s0 + $0x58] sm:$0xf]
  %v173 = vld [vmem:[%s0 + $0x5c] sm:$0xf]
  %v174 = vld [vmem:[%s0 + $0x60] sm:$0xf]
  %v175 = vld [vmem:[%s0 + $0x64] sm:$0xf]
  %v176 = vld [vmem:[%s0 + $0x68] sm:$0xf]
  %v177 = vld [vmem:[%s0 + $0x6c] sm:$0xf]
  %v178 = vld [vmem:[%s0 + $0x70] sm:$0xf]
  %v179 = vld [vmem:[%s0 + $0x74] sm:$0xf]
  %v180 = vld [vmem:[%s0 + $0x78] sm:$0xf]
  %v181 = vld [vmem:[%s0 + $0x7c] sm:$0xf]
  %v182 = vld [vmem:[%s0 + $0x80] sm:$0xf]
  %v183 = vld [vmem:[%s0 + $0x84] sm:$0xf]
  %v184 = vld [vmem:[%s0 + $0x88] sm:$0xf]
  %v185 = vld [vmem:[%s0 + $0x8c] sm:$0xf]
  %v186 = vld [vmem:[%s0 + $0x90] sm:$0xf]
  %v187 = vld [vmem:[%s0 + $0x94] sm:$0xf]
  %v188 = vld [vmem:[%s0 + $0x98] sm:$0xf]
  %v189 = vld [vmem:[%s0 + $0x9c] sm:$0xf]
  %v190 = vld [vmem:[%s0 + $0xa0] sm:$0xf]
  %v191 = vld [vmem:[%s0 + $0xa4] sm:$0xf]
  %v192 = vld [vmem:[%s0 + $0xa8] sm:$0xf]
  %v193 = vld [vmem:[%s0 + $0xac] sm:$0xf]
  %v194 = vld [vmem:[%s0 + $0xb0] sm:$0xf]
  %v195 = vld [vmem:[%s0 + $0xb4] sm:$0xf]
  %v196 = vld [vmem:[%s0 + $0xb8] sm:$0xf]
  %v197 = vld [vmem:[%s0 + $0xbc] sm:$0xf]
  %v198 = vld [vmem:[%s0 + $0xc0] sm:$0xf]
  %v199 = vld [vmem:[%s0 + $0xc4] sm:$0xf]
  %v200 = vld [vmem:[%s0 + $0xc8] sm:$0xf]
  %v201 = vld [vmem:[%s0 + $0xcc] sm:$0xf]
  %v202 = vld [vmem:[%s0 + $0xd0] sm:$0xf]
  %v203 = vld [vmem:[%s0 + $0xd4] sm:$0xf]
  %v204 = vld [vmem:[%s0 + $0xd8] sm:$0xf]
  %v205 = vld [vmem:[%s0 + $0xdc] sm:$0xf]
  %v206 = vld [vmem:[%s0 + $0xe0] sm:$0xf]
  %v207 = vld [vmem:[%s0 + $0xe4] sm:$0xf]
  %v208 = vld [vmem:[%s0 + $0xe8] sm:$0xf]
  %v209 = vld [vmem:[%s0 + $0xec] sm:$0xf]
  %v210 = vld [vmem:[%s0 + $0xf0] sm:$0xf]
  %v211 = vld [vmem:[%s0 + $0xf4] sm:$0xf]
  %v212 = vld [vmem:[%s0 + $0xf8] sm:$0xf]
  %v213 = vld [vmem:[%s0 + $0xfc] sm:$0xf]
  %v214 = vld [vmem:[%s1] sm:$0xf]
  %v215 = vld [vmem:[%s1 + $0x4] sm:$0xf]
  %v216 = vld [vmem:[%s1 + $0x8] sm:$0xf]
  %v217 = vld [vmem:[%s1 + $0xc] sm:$0xf]
  %v218 = vld [vmem:[%s1 + $0x10] sm:$0xf]
  %v219 = vld [vmem:[%s1 + $0x14] sm:$0xf]
  %v220 = vld [vmem:[%s1 + $0x18] sm:$0xf]
  %v221 = vld [vmem:[%s1 + $0x1c] sm:$0xf]
  %v222 = vld [vmem:[%s1 + $0x20] sm:$0xf]
  %v223 = vld [vmem:[%s1 + $0x24] sm:$0xf]
  %v224 = vld [vmem:[%s1 + $0x28] sm:$0xf]
  %v225 = vld [vmem:[%s1 + $0x2c] sm:$0xf]
  %v226 = vld [vmem:[%s1 + $0x30] sm:$0xf]
  %v227 = vld [vmem:[%s1 + $0x34] sm:$0xf]
  %v228 = vld [vmem:[%s1 + $0x38] sm:$0xf]
  %v229 = vld [vmem:[%s1 + $0x3c] sm:$0xf]
  %v294 = vunpack.c.l.b16 %v150
  %v295 = vunpack.c.l.b16 %v151
  %v296 = vunpack.c.l.b16 %v152
  %v297 = vunpack.c.l.b16 %v153
  %v298 = vunpack.c.l.b16 %v154
  %v299 = vunpack.c.l.b16 %v155
  %v300 = vunpack.c.l.b16 %v156
  %v301 = vunpack.c.l.b16 %v157
  %v302 = vunpack.c.l.b16 %v158
  %v303 = vunpack.c.l.b16 %v159
  %v304 = vunpack.c.l.b16 %v160
  %v305 = vunpack.c.l.b16 %v161
  %v306 = vunpack.c.l.b16 %v162
  %v307 = vunpack.c.l.b16 %v163
  %v308 = vunpack.c.l.b16 %v164
  %v309 = vunpack.c.l.b16 %v165
  %v310 = vunpack.c.l.b16 %v166
  %v311 = vunpack.c.l.b16 %v167
  %v312 = vunpack.c.l.b16 %v168
  %v313 = vunpack.c.l.b16 %v169
  %v314 = vunpack.c.l.b16 %v170
  %v315 = vunpack.c.l.b16 %v171
  %v316 = vunpack.c.l.b16 %v172
  %v317 = vunpack.c.l.b16 %v173
  %v318 = vunpack.c.l.b16 %v174
  %v319 = vunpack.c.l.b16 %v175
  %v320 = vunpack.c.l.b16 %v176
  %v321 = vunpack.c.l.b16 %v177
  %v322 = vunpack.c.l.b16 %v178
  %v323 = vunpack.c.l.b16 %v179
  %v324 = vunpack.c.l.b16 %v180
  %v325 = vunpack.c.l.b16 %v181
  %v326 = vunpack.c.l.b16 %v182
  %v327 = vunpack.c.l.b16 %v183
  %v328 = vunpack.c.l.b16 %v184
  %v329 = vunpack.c.l.b16 %v185
  %v330 = vunpack.c.l.b16 %v186
  %v331 = vunpack.c.l.b16 %v187
  %v332 = vunpack.c.l.b16 %v188
  %v333 = vunpack.c.l.b16 %v189
  %v334 = vunpack.c.l.b16 %v190
  %v335 = vunpack.c.l.b16 %v191
  %v336 = vunpack.c.l.b16 %v192
  %v337 = vunpack.c.l.b16 %v193
  %v338 = vunpack.c.l.b16 %v194
  %v339 = vunpack.c.l.b16 %v195
  %v340 = vunpack.c.l.b16 %v196
  %v341 = vunpack.c.l.b16 %v197
  %v342 = vunpack.c.l.b16 %v198
  %v343 = vunpack.c.l.b16 %v199
  %v344 = vunpack.c.l.b16 %v200
  %v345 = vunpack.c.l.b16 %v201
  %v346 = vunpack.c.l.b16 %v202
  %v347 = vunpack.c.l.b16 %v203
  %v348 = vunpack.c.l.b16 %v204
  %v349 = vunpack.c.l.b16 %v205
  %v350 = vunpack.c.l.b16 %v206
  %v351 = vunpack.c.l.b16 %v207
  %v352 = vunpack.c.l.b16 %v208
  %v353 = vunpack.c.l.b16 %v209
  %v354 = vunpack.c.l.b16 %v210
  %v355 = vunpack.c.l.b16 %v211
  %v356 = vunpack.c.l.b16 %v212
  %v357 = vunpack.c.l.b16 %v213
  %v358 = vpack.c.b16 %v295, %v294
  %v359 = vpack.c.b16 %v297, %v296
  %v360 = vpack.c.b16 %v299, %v298
  %v361 = vpack.c.b16 %v301, %v300
  %v362 = vpack.c.b16 %v303, %v302
  %v363 = vpack.c.b16 %v305, %v304
  %v364 = vpack.c.b16 %v307, %v306
  %v365 = vpack.c.b16 %v309, %v308
  %v366 = vpack.c.b16 %v311, %v310
  %v367 = vpack.c.b16 %v313, %v312
  %v368 = vpack.c.b16 %v315, %v314
  %v369 = vpack.c.b16 %v317, %v316
  %v370 = vpack.c.b16 %v319, %v318
  %v371 = vpack.c.b16 %v321, %v320
  %v372 = vpack.c.b16 %v323, %v322
  %v373 = vpack.c.b16 %v325, %v324
  %v374 = vpack.c.b16 %v327, %v326
  %v375 = vpack.c.b16 %v329, %v328
  %v376 = vpack.c.b16 %v331, %v330
  %v377 = vpack.c.b16 %v333, %v332
  %v378 = vpack.c.b16 %v335, %v334
  %v379 = vpack.c.b16 %v337, %v336
  %v380 = vpack.c.b16 %v339, %v338
  %v381 = vpack.c.b16 %v341, %v340
  %v382 = vpack.c.b16 %v343, %v342
  %v383 = vpack.c.b16 %v345, %v344
  %v384 = vpack.c.b16 %v347, %v346
  %v385 = vpack.c.b16 %v349, %v348
  %v386 = vpack.c.b16 %v351, %v350
  %v387 = vpack.c.b16 %v353, %v352
  %v388 = vpack.c.b16 %v355, %v354
  %v389 = vpack.c.b16 %v357, %v356
  %v438 = vunpack.c.l.b16 %v214
  %v439 = vunpack.c.l.b16 %v215
  %v440 = vunpack.c.l.b16 %v216
  %v441 = vunpack.c.l.b16 %v217
  %v442 = vunpack.c.l.b16 %v218
  %v443 = vunpack.c.l.b16 %v219
  %v444 = vunpack.c.l.b16 %v220
  %v445 = vunpack.c.l.b16 %v221
  %v446 = vunpack.c.l.b16 %v222
  %v447 = vunpack.c.l.b16 %v223
  %v448 = vunpack.c.l.b16 %v224
  %v449 = vunpack.c.l.b16 %v225
  %v450 = vunpack.c.l.b16 %v226
  %v451 = vunpack.c.l.b16 %v227
  %v452 = vunpack.c.l.b16 %v228
  %v453 = vunpack.c.l.b16 %v229
  %v454 = vpack.c.b16 %v439, %v438
  %v455 = vpack.c.b16 %v441, %v440
  %v456 = vpack.c.b16 %v443, %v442
  %v457 = vpack.c.b16 %v445, %v444
  %v458 = vpack.c.b16 %v447, %v446
  %v459 = vpack.c.b16 %v449, %v448
  %v460 = vpack.c.b16 %v451, %v450
  %v461 = vpack.c.b16 %v453, %v452
  %470 = vmatprep.subr.bf16.mxu0 0
  %471 = vmatpush1.bf16.msra.mxu0 %v454
  %472 = vmatprep.subr.bf16.mxu0 0
  %473 = vmatpush1.bf16.msra.mxu0 %v455
  %474 = vmatprep.subr.bf16.mxu0 0
  %475 = vmatpush1.bf16.msra.mxu0 %v456
  %476 = vmatprep.subr.bf16.mxu0 0
  %477 = vmatpush1.bf16.msra.mxu0 %v457
  %478 = vmatprep.subr.bf16.mxu0 0
  %479 = vmatpush1.bf16.msra.mxu0 %v458
  %480 = vmatprep.subr.bf16.mxu0 0
  %481 = vmatpush1.bf16.msra.mxu0 %v459
  %482 = vmatprep.subr.bf16.mxu0 0
  %483 = vmatpush1.bf16.msra.mxu0 %v460
  %484 = vmatprep.subr.bf16.mxu0 0
  %485 = vmatpush1.bf16.msra.mxu0 %v461
  %486 = vmatprep.subr.bf16.mxu0 0
  %487 = vmatpush1.bf16.msra.mxu0 0
  %488 = vmatprep.subr.bf16.mxu0 0
  %489 = vmatpush1.bf16.msra.mxu0 0
  %490 = vmatprep.subr.bf16.mxu0 0
  %491 = vmatpush1.bf16.msra.mxu0 0
  %492 = vmatprep.subr.bf16.mxu0 0
  %493 = vmatpush1.bf16.msra.mxu0 0
  %494 = vmatprep.subr.bf16.mxu0 0
  %495 = vmatpush1.bf16.msra.mxu0 0
  %496 = vmatprep.subr.bf16.mxu0 0
  %497 = vmatpush1.bf16.msra.mxu0 0
  %498 = vmatprep.subr.bf16.mxu0 0
  %499 = vmatpush1.bf16.msra.mxu0 0
  %500 = vmatprep.subr.bf16.mxu0 0
  %501 = vmatpush1.bf16.msra.mxu0 0
  %502 = vmatprep.mubr.bf16.mxu0 0
  %503 = vmatmul.mubr.bf16.gmra.mrb[0].mxu0 %v358
  %v504 = vpop.f32.mrb[0].mxu0
  %v505 = vadd.f32 0.0, %v504
  %v506 = vpop.f32.mrb[0].mxu0
  %v507 = vpop.f32.mrb[0].mxu0
  %v508 = vadd.f32 0.0, %v507
  %v509 = vpop.f32.mrb[0].mxu0
  %510 = vmatprep.mubr.bf16.mxu0 0
  %511 = vmatmul.mubr.bf16.gmra.mrb[0].mxu0 %v359
  %v512 = vpop.f32.mrb[0].mxu0
  %v513 = vadd.f32 0.0, %v512
  %v514 = vpop.f32.mrb[0].mxu0
  %v515 = vpop.f32.mrb[0].mxu0
  %v516 = vadd.f32 0.0, %v515
  %v517 = vpop.f32.mrb[0].mxu0
  %518 = vmatprep.mubr.bf16.mxu0 0
  %519 = vmatmul.mubr.bf16.gmra.mrb[0].mxu0 %v360
  %v520 = vpop.f32.mrb[0].mxu0
  %v521 = vadd.f32 0.0, %v520
  %v522 = vpop.f32.mrb[0].mxu0
  %v523 = vpop.f32.mrb[0].mxu0
  %v524 = vadd.f32 0.0, %v523
  %v525 = vpop.f32.mrb[0].mxu0
  %526 = vmatprep.mubr.bf16.mxu0 0
  %527 = vmatmul.mubr.bf16.gmra.mrb[0].mxu0 %v361
  %v528 = vpop.f32.mrb[0].mxu0
  %v529 = vadd.f32 0.0, %v528
  %v530 = vpop.f32.mrb[0].mxu0
  %v531 = vpop.f32.mrb[0].mxu0
  %v532 = vadd.f32 0.0, %v531
  %v533 = vpop.f32.mrb[0].mxu0
  %534 = vmatprep.mubr.bf16.mxu0 0
  %535 = vmatmul.mubr.bf16.gmra.mrb[0].mxu0 %v362
  %v536 = vpop.f32.mrb[0].mxu0
  %v537 = vadd.f32 0.0, %v536
  %v538 = vpop.f32.mrb[0].mxu0
  %v539 = vpop.f32.mrb[0].mxu0
  %v540 = vadd.f32 0.0, %v539
  %v541 = vpop.f32.mrb[0].mxu0
  %542 = vmatprep.mubr.bf16.mxu0 0
  %543 = vmatmul.mubr.bf16.gmra.mrb[0].mxu0 %v363
  %v544 = vpop.f32.mrb[0].mxu0
  %v545 = vadd.f32 0.0, %v544
  %v546 = vpop.f32.mrb[0].mxu0
  %v547 = vpop.f32.mrb[0].mxu0
  %v548 = vadd.f32 0.0, %v547
  %v549 = vpop.f32.mrb[0].mxu0
  %550 = vmatprep.mubr.bf16.mxu0 0
  %551 = vmatmul.mubr.bf16.gmra.mrb[0].mxu0 %v364
  %v552 = vpop.f32.mrb[0].mxu0
  %v553 = vadd.f32 0.0, %v552
  %v554 = vpop.f32.mrb[0].mxu0
  %v555 = vpop.f32.mrb[0].mxu0
  %v556 = vadd.f32 0.0, %v555
  %v557 = vpop.f32.mrb[0].mxu0
  %558 = vmatprep.mubr.bf16.mxu0 0
  %559 = vmatmul.mubr.bf16.gmra.mrb[0].mxu0 %v365
  %v560 = vpop.f32.mrb[0].mxu0
  %v561 = vadd.f32 0.0, %v560
  %v562 = vpop.f32.mrb[0].mxu0
  %v563 = vpop.f32.mrb[0].mxu0
  %v564 = vadd.f32 0.0, %v563
  %v565 = vpop.f32.mrb[0].mxu0
  %566 = vmatprep.mubr.bf16.mxu0 0
  %567 = vmatmul.mubr.bf16.gmra.mrb[0].mxu0 %v366
  %v568 = vpop.f32.mrb[0].mxu0
  %v569 = vadd.f32 0.0, %v568
  %v570 = vpop.f32.mrb[0].mxu0
  %v571 = vpop.f32.mrb[0].mxu0
  %v572 = vadd.f32 0.0, %v571
  %v573 = vpop.f32.mrb[0].mxu0
  %574 = vmatprep.mubr.bf16.mxu0 0
  %575 = vmatmul.mubr.bf16.gmra.mrb[0].mxu0 %v367
  %v576 = vpop.f32.mrb[0].mxu0
  %v577 = vadd.f32 0.0, %v576
  %v578 = vpop.f32.mrb[0].mxu0
  %v579 = vpop.f32.mrb[0].mxu0
  %v580 = vadd.f32 0.0, %v579
  %v581 = vpop.f32.mrb[0].mxu0
  %582 = vmatprep.mubr.bf16.mxu0 0
  %583 = vmatmul.mubr.bf16.gmra.mrb[0].mxu0 %v368
  %v584 = vpop.f32.mrb[0].mxu0
  %v585 = vadd.f32 0.0, %v584
  %v586 = vpop.f32.mrb[0].mxu0
  %v587 = vpop.f32.mrb[0].mxu0
  %v588 = vadd.f32 0.0, %v587
  %v589 = vpop.f32.mrb[0].mxu0
  %590 = vmatprep.mubr.bf16.mxu0 0
  %591 = vmatmul.mubr.bf16.gmra.mrb[0].mxu0 %v369
  %v592 = vpop.f32.mrb[0].mxu0
  %v593 = vadd.f32 0.0, %v592
  %v594 = vpop.f32.mrb[0].mxu0
  %v595 = vpop.f32.mrb[0].mxu0
  %v596 = vadd.f32 0.0, %v595
  %v597 = vpop.f32.mrb[0].mxu0
  %598 = vmatprep.mubr.bf16.mxu0 0
  %599 = vmatmul.mubr.bf16.gmra.mrb[0].mxu0 %v370
  %v600 = vpop.f32.mrb[0].mxu0
  %v601 = vadd.f32 0.0, %v600
  %v602 = vpop.f32.mrb[0].mxu0
  %v603 = vpop.f32.mrb[0].mxu0
  %v604 = vadd.f32 0.0, %v603
  %v605 = vpop.f32.mrb[0].mxu0
  %606 = vmatprep.mubr.bf16.mxu0 0
  %607 = vmatmul.mubr.bf16.gmra.mrb[0].mxu0 %v371
  %v608 = vpop.f32.mrb[0].mxu0
  %v609 = vadd.f32 0.0, %v608
  %v610 = vpop.f32.mrb[0].mxu0
  %v611 = vpop.f32.mrb[0].mxu0
  %v612 = vadd.f32 0.0, %v611
  %v613 = vpop.f32.mrb[0].mxu0
  %614 = vmatprep.mubr.bf16.mxu0 0
  %615 = vmatmul.mubr.bf16.gmra.mrb[0].mxu0 %v372
  %v616 = vpop.f32.mrb[0].mxu0
  %v617 = vadd.f32 0.0, %v616
  %v618 = vpop.f32.mrb[0].mxu0
  %v619 = vpop.f32.mrb[0].mxu0
  %v620 = vadd.f32 0.0, %v619
  %v621 = vpop.f32.mrb[0].mxu0
  %622 = vmatprep.mubr.bf16.mxu0 0
  %623 = vmatmul.mubr.bf16.gmra.mrb[0].mxu0 %v373
  %v624 = vpop.f32.mrb[0].mxu0
  %v625 = vadd.f32 0.0, %v624
  %v626 = vpop.f32.mrb[0].mxu0
  %v627 = vpop.f32.mrb[0].mxu0
  %v628 = vadd.f32 0.0, %v627
  %v629 = vpop.f32.mrb[0].mxu0
  %630 = vmatprep.mubr.bf16.mxu0 0
  %631 = vmatmul.mubr.bf16.gmra.mrb[0].mxu0 %v374
  %v632 = vpop.f32.mrb[0].mxu0
  %v633 = vadd.f32 0.0, %v632
  %v634 = vpop.f32.mrb[0].mxu0
  %v635 = vpop.f32.mrb[0].mxu0
  %v636 = vadd.f32 0.0, %v635
  %v637 = vpop.f32.mrb[0].mxu0
  %638 = vmatprep.mubr.bf16.mxu0 0
  %639 = vmatmul.mubr.bf16.gmra.mrb[0].mxu0 %v375
  %v640 = vpop.f32.mrb[0].mxu0
  %v641 = vadd.f32 0.0, %v640
  %v642 = vpop.f32.mrb[0].mxu0
  %v643 = vpop.f32.mrb[0].mxu0
  %v644 = vadd.f32 0.0, %v643
  %v645 = vpop.f32.mrb[0].mxu0
  %646 = vmatprep.mubr.bf16.mxu0 0
  %647 = vmatmul.mubr.bf16.gmra.mrb[0].mxu0 %v376
  %v648 = vpop.f32.mrb[0].mxu0
  %v649 = vadd.f32 0.0, %v648
  %v650 = vpop.f32.mrb[0].mxu0
  %v651 = vpop.f32.mrb[0].mxu0
  %v652 = vadd.f32 0.0, %v651
  %v653 = vpop.f32.mrb[0].mxu0
  %654 = vmatprep.mubr.bf16.mxu0 0
  %655 = vmatmul.mubr.bf16.gmra.mrb[0].mxu0 %v377
  %v656 = vpop.f32.mrb[0].mxu0
  %v657 = vadd.f32 0.0, %v656
  %v658 = vpop.f32.mrb[0].mxu0
  %v659 = vpop.f32.mrb[0].mxu0
  %v660 = vadd.f32 0.0, %v659
  %v661 = vpop.f32.mrb[0].mxu0
  %662 = vmatprep.mubr.bf16.mxu0 0
  %663 = vmatmul.mubr.bf16.gmra.mrb[0].mxu0 %v378
  %v664 = vpop.f32.mrb[0].mxu0
  %v665 = vadd.f32 0.0, %v664
  %v666 = vpop.f32.mrb[0].mxu0
  %v667 = vpop.f32.mrb[0].mxu0
  %v668 = vadd.f32 0.0, %v667
  %v669 = vpop.f32.mrb[0].mxu0
  %670 = vmatprep.mubr.bf16.mxu0 0
  %671 = vmatmul.mubr.bf16.gmra.mrb[0].mxu0 %v379
  %v672 = vpop.f32.mrb[0].mxu0
  %v673 = vadd.f32 0.0, %v672
  %v674 = vpop.f32.mrb[0].mxu0
  %v675 = vpop.f32.mrb[0].mxu0
  %v676 = vadd.f32 0.0, %v675
  %v677 = vpop.f32.mrb[0].mxu0
  %678 = vmatprep.mubr.bf16.mxu0 0
  %679 = vmatmul.mubr.bf16.gmra.mrb[0].mxu0 %v380
  %v680 = vpop.f32.mrb[0].mxu0
  %v681 = vadd.f32 0.0, %v680
  %v682 = vpop.f32.mrb[0].mxu0
  %v683 = vpop.f32.mrb[0].mxu0
  %v684 = vadd.f32 0.0, %v683
  %v685 = vpop.f32.mrb[0].mxu0
  %686 = vmatprep.mubr.bf16.mxu0 0
  %687 = vmatmul.mubr.bf16.gmra.mrb[0].mxu0 %v381
  %v688 = vpop.f32.mrb[0].mxu0
  %v689 = vadd.f32 0.0, %v688
  %v690 = vpop.f32.mrb[0].mxu0
  %v691 = vpop.f32.mrb[0].mxu0
  %v692 = vadd.f32 0.0, %v691
  %v693 = vpop.f32.mrb[0].mxu0
  %694 = vmatprep.mubr.bf16.mxu0 0
  %695 = vmatmul.mubr.bf16.gmra.mrb[0].mxu0 %v382
  %v696 = vpop.f32.mrb[0].mxu0
  %v697 = vadd.f32 0.0, %v696
  %v698 = vpop.f32.mrb[0].mxu0
  %v699 = vpop.f32.mrb[0].mxu0
  %v700 = vadd.f32 0.0, %v699
  %v701 = vpop.f32.mrb[0].mxu0
  %702 = vmatprep.mubr.bf16.mxu0 0
  %703 = vmatmul.mubr.bf16.gmra.mrb[0].mxu0 %v383
  %v704 = vpop.f32.mrb[0].mxu0
  %v705 = vadd.f32 0.0, %v704
  %v706 = vpop.f32.mrb[0].mxu0
  %v707 = vpop.f32.mrb[0].mxu0
  %v708 = vadd.f32 0.0, %v707
  %v709 = vpop.f32.mrb[0].mxu0
  %710 = vmatprep.mubr.bf16.mxu0 0
  %711 = vmatmul.mubr.bf16.gmra.mrb[0].mxu0 %v384
  %v712 = vpop.f32.mrb[0].mxu0
  %v713 = vadd.f32 0.0, %v712
  %v714 = vpop.f32.mrb[0].mxu0
  %v715 = vpop.f32.mrb[0].mxu0
  %v716 = vadd.f32 0.0, %v715
  %v717 = vpop.f32.mrb[0].mxu0
  %718 = vmatprep.mubr.bf16.mxu0 0
  %719 = vmatmul.mubr.bf16.gmra.mrb[0].mxu0 %v385
  %v720 = vpop.f32.mrb[0].mxu0
  %v721 = vadd.f32 0.0, %v720
  %v722 = vpop.f32.mrb[0].mxu0
  %v723 = vpop.f32.mrb[0].mxu0
  %v724 = vadd.f32 0.0, %v723
  %v725 = vpop.f32.mrb[0].mxu0
  %726 = vmatprep.mubr.bf16.mxu0 0
  %727 = vmatmul.mubr.bf16.gmra.mrb[0].mxu0 %v386
  %v728 = vpop.f32.mrb[0].mxu0
  %v729 = vadd.f32 0.0, %v728
  %v730 = vpop.f32.mrb[0].mxu0
  %v731 = vpop.f32.mrb[0].mxu0
  %v732 = vadd.f32 0.0, %v731
  %v733 = vpop.f32.mrb[0].mxu0
  %734 = vmatprep.mubr.bf16.mxu0 0
  %735 = vmatmul.mubr.bf16.gmra.mrb[0].mxu0 %v387
  %v736 = vpop.f32.mrb[0].mxu0
  %v737 = vadd.f32 0.0, %v736
  %v738 = vpop.f32.mrb[0].mxu0
  %v739 = vpop.f32.mrb[0].mxu0
  %v740 = vadd.f32 0.0, %v739
  %v741 = vpop.f32.mrb[0].mxu0
  %742 = vmatprep.mubr.bf16.mxu0 0
  %743 = vmatmul.mubr.bf16.gmra.mrb[0].mxu0 %v388
  %v744 = vpop.f32.mrb[0].mxu0
  %v745 = vadd.f32 0.0, %v744
  %v746 = vpop.f32.mrb[0].mxu0
  %v747 = vpop.f32.mrb[0].mxu0
  %v748 = vadd.f32 0.0, %v747
  %v749 = vpop.f32.mrb[0].mxu0
  %750 = vmatprep.mubr.bf16.mxu0 0
  %751 = vmatmul.mubr.bf16.gmra.mrb[0].mxu0 %v389
  %v752 = vpop.f32.mrb[0].mxu0
  %v753 = vadd.f32 0.0, %v752
  %v754 = vpop.f32.mrb[0].mxu0
  %v755 = vpop.f32.mrb[0].mxu0
  %v756 = vadd.f32 0.0, %v755
  %v757 = vpop.f32.mrb[0].mxu0
  %758 = vdwg.mxu0
  %v759 = vadd.f32 %v86, %v505
  %v760 = vadd.f32 %v87, %v508
  %v761 = vadd.f32 %v88, %v513
  %v762 = vadd.f32 %v89, %v516
  %v763 = vadd.f32 %v90, %v521
  %v764 = vadd.f32 %v91, %v524
  %v765 = vadd.f32 %v92, %v529
  %v766 = vadd.f32 %v93, %v532
  %v767 = vadd.f32 %v94, %v537
  %v768 = vadd.f32 %v95, %v540
  %v769 = vadd.f32 %v96, %v545
  %v770 = vadd.f32 %v97, %v548
  %v771 = vadd.f32 %v98, %v553
  %v772 = vadd.f32 %v99, %v556
  %v773 = vadd.f32 %v100, %v561
  %v774 = vadd.f32 %v101, %v564
  %v775 = vadd.f32 %v102, %v569
  %v776 = vadd.f32 %v103, %v572
  %v777 = vadd.f32 %v104, %v577
  %v778 = vadd.f32 %v105, %v580
  %v779 = vadd.f32 %v106, %v585
  %v780 = vadd.f32 %v107, %v588
  %v781 = vadd.f32 %v108, %v593
  %v782 = vadd.f32 %v109, %v596
  %v783 = vadd.f32 %v110, %v601
  %v784 = vadd.f32 %v111, %v604
  %v785 = vadd.f32 %v112, %v609
  %v786 = vadd.f32 %v113, %v612
  %v787 = vadd.f32 %v114, %v617
  %v788 = vadd.f32 %v115, %v620
  %v789 = vadd.f32 %v116, %v625
  %v790 = vadd.f32 %v117, %v628
  %v791 = vadd.f32 %v118, %v633
  %v792 = vadd.f32 %v119, %v636
  %v793 = vadd.f32 %v120, %v641
  %v794 = vadd.f32 %v121, %v644
  %v795 = vadd.f32 %v122, %v649
  %v796 = vadd.f32 %v123, %v652
  %v797 = vadd.f32 %v124, %v657
  %v798 = vadd.f32 %v125, %v660
  %v799 = vadd.f32 %v126, %v665
  %v800 = vadd.f32 %v127, %v668
  %v801 = vadd.f32 %v128, %v673
  %v802 = vadd.f32 %v129, %v676
  %v803 = vadd.f32 %v130, %v681
  %v804 = vadd.f32 %v131, %v684
  %v805 = vadd.f32 %v132, %v689
  %v806 = vadd.f32 %v133, %v692
  %v807 = vadd.f32 %v134, %v697
  %v808 = vadd.f32 %v135, %v700
  %v809 = vadd.f32 %v136, %v705
  %v810 = vadd.f32 %v137, %v708
  %v811 = vadd.f32 %v138, %v713
  %v812 = vadd.f32 %v139, %v716
  %v813 = vadd.f32 %v140, %v721
  %v814 = vadd.f32 %v141, %v724
  %v815 = vadd.f32 %v142, %v729
  %v816 = vadd.f32 %v143, %v732
  %v817 = vadd.f32 %v144, %v737
  %v818 = vadd.f32 %v145, %v740
  %v819 = vadd.f32 %v146, %v745
  %v820 = vadd.f32 %v147, %v748
  %v821 = vadd.f32 %v148, %v753
  %v822 = vadd.f32 %v149, %v756
  %823 = vst [vmem:[#allocation2] sm:$0xff] %v759
  %824 = vst [vmem:[#allocation2 + $0x8] sm:$0xff] %v760
  %825 = vst [vmem:[#allocation2 + $0x10] sm:$0xff] %v761
  %826 = vst [vmem:[#allocation2 + $0x18] sm:$0xff] %v762
  %827 = vst [vmem:[#allocation2 + $0x20] sm:$0xff] %v763
  %828 = vst [vmem:[#allocation2 + $0x28] sm:$0xff] %v764
  %829 = vst [vmem:[#allocation2 + $0x30] sm:$0xff] %v765
  %830 = vst [vmem:[#allocation2 + $0x38] sm:$0xff] %v766
  %831 = vst [vmem:[#allocation2 + $0x40] sm:$0xff] %v767
  %832 = vst [vmem:[#allocation2 + $0x48] sm:$0xff] %v768
  %833 = vst [vmem:[#allocation2 + $0x50] sm:$0xff] %v769
  %834 = vst [vmem:[#allocation2 + $0x58] sm:$0xff] %v770
  %835 = vst [vmem:[#allocation2 + $0x60] sm:$0xff] %v771
  %836 = vst [vmem:[#allocation2 + $0x68] sm:$0xff] %v772
  %837 = vst [vmem:[#allocation2 + $0x70] sm:$0xff] %v773
  %838 = vst [vmem:[#allocation2 + $0x78] sm:$0xff] %v774
  %839 = vst [vmem:[#allocation2 + $0x80] sm:$0xff] %v775
  %840 = vst [vmem:[#allocation2 + $0x88] sm:$0xff] %v776
  %841 = vst [vmem:[#allocation2 + $0x90] sm:$0xff] %v777
  %842 = vst [vmem:[#allocation2 + $0x98] sm:$0xff] %v778
  %843 = vst [vmem:[#allocation2 + $0xa0] sm:$0xff] %v779
  %844 = vst [vmem:[#allocation2 + $0xa8] sm:$0xff] %v780
  %845 = vst [vmem:[#allocation2 + $0xb0] sm:$0xff] %v781
  %846 = vst [vmem:[#allocation2 + $0xb8] sm:$0xff] %v782
  %847 = vst [vmem:[#allocation2 + $0xc0] sm:$0xff] %v783
  %848 = vst [vmem:[#allocation2 + $0xc8] sm:$0xff] %v784
  %849 = vst [vmem:[#allocation2 + $0xd0] sm:$0xff] %v785
  %850 = vst [vmem:[#allocation2 + $0xd8] sm:$0xff] %v786
  %851 = vst [vmem:[#allocation2 + $0xe0] sm:$0xff] %v787
  %852 = vst [vmem:[#allocation2 + $0xe8] sm:$0xff] %v788
  %853 = vst [vmem:[#allocation2 + $0xf0] sm:$0xff] %v789
  %854 = vst [vmem:[#allocation2 + $0xf8] sm:$0xff] %v790
  %855 = vst [vmem:[#allocation2 + $0x100] sm:$0xff] %v791
  %856 = vst [vmem:[#allocation2 + $0x108] sm:$0xff] %v792
  %857 = vst [vmem:[#allocation2 + $0x110] sm:$0xff] %v793
  %858 = vst [vmem:[#allocation2 + $0x118] sm:$0xff] %v794
  %859 = vst [vmem:[#allocation2 + $0x120] sm:$0xff] %v795
  %860 = vst [vmem:[#allocation2 + $0x128] sm:$0xff] %v796
  %861 = vst [vmem:[#allocation2 + $0x130] sm:$0xff] %v797
  %862 = vst [vmem:[#allocation2 + $0x138] sm:$0xff] %v798
  %863 = vst [vmem:[#allocation2 + $0x140] sm:$0xff] %v799
  %864 = vst [vmem:[#allocation2 + $0x148] sm:$0xff] %v800
  %865 = vst [vmem:[#allocation2 + $0x150] sm:$0xff] %v801
  %866 = vst [vmem:[#allocation2 + $0x158] sm:$0xff] %v802
  %867 = vst [vmem:[#allocation2 + $0x160] sm:$0xff] %v803
  %868 = vst [vmem:[#allocation2 + $0x168] sm:$0xff] %v804
  %869 = vst [vmem:[#allocation2 + $0x170] sm:$0xff] %v805
  %870 = vst [vmem:[#allocation2 + $0x178] sm:$0xff] %v806
  %871 = vst [vmem:[#allocation2 + $0x180] sm:$0xff] %v807
  %872 = vst [vmem:[#allocation2 + $0x188] sm:$0xff] %v808
  %873 = vst [vmem:[#allocation2 + $0x190] sm:$0xff] %v809
  %874 = vst [vmem:[#allocation2 + $0x198] sm:$0xff] %v810
  %875 = vst [vmem:[#allocation2 + $0x1a0] sm:$0xff] %v811
  %876 = vst [vmem:[#allocation2 + $0x1a8] sm:$0xff] %v812
  %877 = vst [vmem:[#allocation2 + $0x1b0] sm:$0xff] %v813
  %878 = vst [vmem:[#allocation2 + $0x1b8] sm:$0xff] %v814
  %879 = vst [vmem:[#allocation2 + $0x1c0] sm:$0xff] %v815
  %880 = vst [vmem:[#allocation2 + $0x1c8] sm:$0xff] %v816
  %881 = vst [vmem:[#allocation2 + $0x1d0] sm:$0xff] %v817
  %882 = vst [vmem:[#allocation2 + $0x1d8] sm:$0xff] %v818
  %883 = vst [vmem:[#allocation2 + $0x1e0] sm:$0xff] %v819
  %884 = vst [vmem:[#allocation2 + $0x1e8] sm:$0xff] %v820
  %885 = vst [vmem:[#allocation2 + $0x1f0] sm:$0xff] %v821
  %886 = vst [vmem:[#allocation2 + $0x1f8] sm:$0xff] %v822
  // Predicated region
  $region22: #{_lambda_.27} parent=0 // pred_check
    %p887 = pneg %p18
  $region23: #{_lambda_.27} parent=0 // pred_check_branch
    %889 = sbr.rel (%p887) target = $region25
  $region24: #{_lambda_.27} parent=0 // pred_region
    %v890 = vld [vmem:[#allocation2] sm:$0xff]
    %v891 = vld [vmem:[#allocation2 + $0x8] sm:$0xff]
    %v892 = vld [vmem:[#allocation2 + $0x10] sm:$0xff]
    %v893 = vld [vmem:[#allocation2 + $0x18] sm:$0xff]
    %v894 = vld [vmem:[#allocation2 + $0x20] sm:$0xff]
    %v895 = vld [vmem:[#allocation2 + $0x28] sm:$0xff]
    %v896 = vld [vmem:[#allocation2 + $0x30] sm:$0xff]
    %v897 = vld [vmem:[#allocation2 + $0x38] sm:$0xff]
    %v898 = vld [vmem:[#allocation2 + $0x40] sm:$0xff]
    %v899 = vld [vmem:[#allocation2 + $0x48] sm:$0xff]
    %v900 = vld [vmem:[#allocation2 + $0x50] sm:$0xff]
    %v901 = vld [vmem:[#allocation2 + $0x58] sm:$0xff]
    %v902 = vld [vmem:[#allocation2 + $0x60] sm:$0xff]
    %v903 = vld [vmem:[#allocation2 + $0x68] sm:$0xff]
    %v904 = vld [vmem:[#allocation2 + $0x70] sm:$0xff]
    %v905 = vld [vmem:[#allocation2 + $0x78] sm:$0xff]
    %v906 = vld [vmem:[#allocation2 + $0x80] sm:$0xff]
    %v907 = vld [vmem:[#allocation2 + $0x88] sm:$0xff]
    %v908 = vld [vmem:[#allocation2 + $0x90] sm:$0xff]
    %v909 = vld [vmem:[#allocation2 + $0x98] sm:$0xff]
    %v910 = vld [vmem:[#allocation2 + $0xa0] sm:$0xff]
    %v911 = vld [vmem:[#allocation2 + $0xa8] sm:$0xff]
    %v912 = vld [vmem:[#allocation2 + $0xb0] sm:$0xff]
    %v913 = vld [vmem:[#allocation2 + $0xb8] sm:$0xff]
    %v914 = vld [vmem:[#allocation2 + $0xc0] sm:$0xff]
    %v915 = vld [vmem:[#allocation2 + $0xc8] sm:$0xff]
    %v916 = vld [vmem:[#allocation2 + $0xd0] sm:$0xff]
    %v917 = vld [vmem:[#allocation2 + $0xd8] sm:$0xff]
    %v918 = vld [vmem:[#allocation2 + $0xe0] sm:$0xff]
    %v919 = vld [vmem:[#allocation2 + $0xe8] sm:$0xff]
    %v920 = vld [vmem:[#allocation2 + $0xf0] sm:$0xff]
    %v921 = vld [vmem:[#allocation2 + $0xf8] sm:$0xff]
    %v922 = vld [vmem:[#allocation2 + $0x100] sm:$0xff]
    %v923 = vld [vmem:[#allocation2 + $0x108] sm:$0xff]
    %v924 = vld [vmem:[#allocation2 + $0x110] sm:$0xff]
    %v925 = vld [vmem:[#allocation2 + $0x118] sm:$0xff]
    %v926 = vld [vmem:[#allocation2 + $0x120] sm:$0xff]
    %v927 = vld [vmem:[#allocation2 + $0x128] sm:$0xff]
    %v928 = vld [vmem:[#allocation2 + $0x130] sm:$0xff]
    %v929 = vld [vmem:[#allocation2 + $0x138] sm:$0xff]
    %v930 = vld [vmem:[#allocation2 + $0x140] sm:$0xff]
    %v931 = vld [vmem:[#allocation2 + $0x148] sm:$0xff]
    %v932 = vld [vmem:[#allocation2 + $0x150] sm:$0xff]
    %v933 = vld [vmem:[#allocation2 + $0x158] sm:$0xff]
    %v934 = vld [vmem:[#allocation2 + $0x160] sm:$0xff]
    %v935 = vld [vmem:[#allocation2 + $0x168] sm:$0xff]
    %v936 = vld [vmem:[#allocation2 + $0x170] sm:$0xff]
    %v937 = vld [vmem:[#allocation2 + $0x178] sm:$0xff]
    %v938 = vld [vmem:[#allocation2 + $0x180] sm:$0xff]
    %v939 = vld [vmem:[#allocation2 + $0x188] sm:$0xff]
    %v940 = vld [vmem:[#allocation2 + $0x190] sm:$0xff]
    %v941 = vld [vmem:[#allocation2 + $0x198] sm:$0xff]
    %v942 = vld [vmem:[#allocation2 + $0x1a0] sm:$0xff]
    %v943 = vld [vmem:[#allocation2 + $0x1a8] sm:$0xff]
    %v944 = vld [vmem:[#allocation2 + $0x1b0] sm:$0xff]
    %v945 = vld [vmem:[#allocation2 + $0x1b8] sm:$0xff]
    %v946 = vld [vmem:[#allocation2 + $0x1c0] sm:$0xff]
    %v947 = vld [vmem:[#allocation2 + $0x1c8] sm:$0xff]
    %v948 = vld [vmem:[#allocation2 + $0x1d0] sm:$0xff]
    %v949 = vld [vmem:[#allocation2 + $0x1d8] sm:$0xff]
    %v950 = vld [vmem:[#allocation2 + $0x1e0] sm:$0xff]
    %v951 = vld [vmem:[#allocation2 + $0x1e8] sm:$0xff]
    %v952 = vld [vmem:[#allocation2 + $0x1f0] sm:$0xff]
    %v953 = vld [vmem:[#allocation2 + $0x1f8] sm:$0xff]
    %v954 = vld [vmem:[%s2] sm:$0x1]
    %v956 = vlaneseq
    %v957 = vshrl.u32 %v956, 7
    %v958 = vsub.s32 0, %v957
    %v959 = vrot.slane %v954, %v958
    %v961 = vmul.f32 %v890, %v959
    %v962 = vmul.f32 %v891, %v959
    %v963 = vmul.f32 %v892, %v959
    %v964 = vmul.f32 %v893, %v959
    %v965 = vmul.f32 %v894, %v959
    %v966 = vmul.f32 %v895, %v959
    %v967 = vmul.f32 %v896, %v959
    %v968 = vmul.f32 %v897, %v959
    %v969 = vmul.f32 %v898, %v959
    %v970 = vmul.f32 %v899, %v959
    %v971 = vmul.f32 %v900, %v959
    %v972 = vmul.f32 %v901, %v959
    %v973 = vmul.f32 %v902, %v959
    %v974 = vmul.f32 %v903, %v959
    %v975 = vmul.f32 %v904, %v959
    %v976 = vmul.f32 %v905, %v959
    %v977 = vmul.f32 %v906, %v959
    %v978 = vmul.f32 %v907, %v959
    %v979 = vmul.f32 %v908, %v959
    %v980 = vmul.f32 %v909, %v959
    %v981 = vmul.f32 %v910, %v959
    %v982 = vmul.f32 %v911, %v959
    %v983 = vmul.f32 %v912, %v959
    %v984 = vmul.f32 %v913, %v959
    %v985 = vmul.f32 %v914, %v959
    %v986 = vmul.f32 %v915, %v959
    %v987 = vmul.f32 %v916, %v959
    %v988 = vmul.f32 %v917, %v959
    %v989 = vmul.f32 %v918, %v959
    %v990 = vmul.f32 %v919, %v959
    %v991 = vmul.f32 %v920, %v959
    %v992 = vmul.f32 %v921, %v959
    %v993 = vmul.f32 %v922, %v959
    %v994 = vmul.f32 %v923, %v959
    %v995 = vmul.f32 %v924, %v959
    %v996 = vmul.f32 %v925, %v959
    %v997 = vmul.f32 %v926, %v959
    %v998 = vmul.f32 %v927, %v959
    %v999 = vmul.f32 %v928, %v959
    %v1000 = vmul.f32 %v929, %v959
    %v1001 = vmul.f32 %v930, %v959
    %v1002 = vmul.f32 %v931, %v959
    %v1003 = vmul.f32 %v932, %v959
    %v1004 = vmul.f32 %v933, %v959
    %v1005 = vmul.f32 %v934, %v959
    %v1006 = vmul.f32 %v935, %v959
    %v1007 = vmul.f32 %v936, %v959
    %v1008 = vmul.f32 %v937, %v959
    %v1009 = vmul.f32 %v938, %v959
    %v1010 = vmul.f32 %v939, %v959
    %v1011 = vmul.f32 %v940, %v959
    %v1012 = vmul.f32 %v941, %v959
    %v1013 = vmul.f32 %v942, %v959
    %v1014 = vmul.f32 %v943, %v959
    %v1015 = vmul.f32 %v944, %v959
    %v1016 = vmul.f32 %v945, %v959
    %v1017 = vmul.f32 %v946, %v959
    %v1018 = vmul.f32 %v947, %v959
    %v1019 = vmul.f32 %v948, %v959
    %v1020 = vmul.f32 %v949, %v959
    %v1021 = vmul.f32 %v950, %v959
    %v1022 = vmul.f32 %v951, %v959
    %v1023 = vmul.f32 %v952, %v959
    %v1024 = vmul.f32 %v953, %v959
    %v1025 = vld [vmem:[%s3] sm:$0x1]
    %v1027 = vlaneseq
    %v1028 = vshrl.u32 %v1027, 7
    %v1029 = vsub.s32 0, %v1028
    %v1030 = vrot.slane %v1025, %v1029
    %v1032 = vadd.f32 %v961, %v1030
    %v1033 = vadd.f32 %v962, %v1030
    %v1034 = vadd.f32 %v963, %v1030
    %v1035 = vadd.f32 %v964, %v1030
    %v1036 = vadd.f32 %v965, %v1030
    %v1037 = vadd.f32 %v966, %v1030
    %v1038 = vadd.f32 %v967, %v1030
    %v1039 = vadd.f32 %v968, %v1030
    %v1040 = vadd.f32 %v969, %v1030
    %v1041 = vadd.f32 %v970, %v1030
    %v1042 = vadd.f32 %v971, %v1030
    %v1043 = vadd.f32 %v972, %v1030
    %v1044 = vadd.f32 %v973, %v1030
    %v1045 = vadd.f32 %v974, %v1030
    %v1046 = vadd.f32 %v975, %v1030
    %v1047 = vadd.f32 %v976, %v1030
    %v1048 = vadd.f32 %v977, %v1030
    %v1049 = vadd.f32 %v978, %v1030
    %v1050 = vadd.f32 %v979, %v1030
    %v1051 = vadd.f32 %v980, %v1030
    %v1052 = vadd.f32 %v981, %v1030
    %v1053 = vadd.f32 %v982, %v1030
    %v1054 = vadd.f32 %v983, %v1030
    %v1055 = vadd.f32 %v984, %v1030
    %v1056 = vadd.f32 %v985, %v1030
    %v1057 = vadd.f32 %v986, %v1030
    %v1058 = vadd.f32 %v987, %v1030
    %v1059 = vadd.f32 %v988, %v1030
    %v1060 = vadd.f32 %v989, %v1030
    %v1061 = vadd.f32 %v990, %v1030
    %v1062 = vadd.f32 %v991, %v1030
    %v1063 = vadd.f32 %v992, %v1030
    %v1064 = vadd.f32 %v993, %v1030
    %v1065 = vadd.f32 %v994, %v1030
    %v1066 = vadd.f32 %v995, %v1030
    %v1067 = vadd.f32 %v996, %v1030
    %v1068 = vadd.f32 %v997, %v1030
    %v1069 = vadd.f32 %v998, %v1030
    %v1070 = vadd.f32 %v999, %v1030
    %v1071 = vadd.f32 %v1000, %v1030
    %v1072 = vadd.f32 %v1001, %v1030
    %v1073 = vadd.f32 %v1002, %v1030
    %v1074 = vadd.f32 %v1003, %v1030
    %v1075 = vadd.f32 %v1004, %v1030
    %v1076 = vadd.f32 %v1005, %v1030
    %v1077 = vadd.f32 %v1006, %v1030
    %v1078 = vadd.f32 %v1007, %v1030
    %v1079 = vadd.f32 %v1008, %v1030
    %v1080 = vadd.f32 %v1009, %v1030
    %v1081 = vadd.f32 %v1010, %v1030
    %v1082 = vadd.f32 %v1011, %v1030
    %v1083 = vadd.f32 %v1012, %v1030
    %v1084 = vadd.f32 %v1013, %v1030
    %v1085 = vadd.f32 %v1014, %v1030
    %v1086 = vadd.f32 %v1015, %v1030
    %v1087 = vadd.f32 %v1016, %v1030
    %v1088 = vadd.f32 %v1017, %v1030
    %v1089 = vadd.f32 %v1018, %v1030
    %v1090 = vadd.f32 %v1019, %v1030
    %v1091 = vadd.f32 %v1020, %v1030
    %v1092 = vadd.f32 %v1021, %v1030
    %v1093 = vadd.f32 %v1022, %v1030
    %v1094 = vadd.f32 %v1023, %v1030
    %v1095 = vadd.f32 %v1024, %v1030
    %v1096 = vsub.f32 0.0, %v1032
    %v1097 = vsub.f32 0.0, %v1033
    %v1098 = vsub.f32 0.0, %v1034
    %v1099 = vsub.f32 0.0, %v1035
    %v1100 = vsub.f32 0.0, %v1036
    %v1101 = vsub.f32 0.0, %v1037
    %v1102 = vsub.f32 0.0, %v1038
    %v1103 = vsub.f32 0.0, %v1039
    %v1104 = vsub.f32 0.0, %v1040
    %v1105 = vsub.f32 0.0, %v1041
    %v1106 = vsub.f32 0.0, %v1042
    %v1107 = vsub.f32 0.0, %v1043
    %v1108 = vsub.f32 0.0, %v1044
    %v1109 = vsub.f32 0.0, %v1045
    %v1110 = vsub.f32 0.0, %v1046
    %v1111 = vsub.f32 0.0, %v1047
    %v1112 = vsub.f32 0.0, %v1048
    %v1113 = vsub.f32 0.0, %v1049
    %v1114 = vsub.f32 0.0, %v1050
    %v1115 = vsub.f32 0.0, %v1051
    %v1116 = vsub.f32 0.0, %v1052
    %v1117 = vsub.f32 0.0, %v1053
    %v1118 = vsub.f32 0.0, %v1054
    %v1119 = vsub.f32 0.0, %v1055
    %v1120 = vsub.f32 0.0, %v1056
    %v1121 = vsub.f32 0.0, %v1057
    %v1122 = vsub.f32 0.0, %v1058
    %v1123 = vsub.f32 0.0, %v1059
    %v1124 = vsub.f32 0.0, %v1060
    %v1125 = vsub.f32 0.0, %v1061
    %v1126 = vsub.f32 0.0, %v1062
    %v1127 = vsub.f32 0.0, %v1063
    %v1128 = vsub.f32 0.0, %v1064
    %v1129 = vsub.f32 0.0, %v1065
    %v1130 = vsub.f32 0.0, %v1066
    %v1131 = vsub.f32 0.0, %v1067
    %v1132 = vsub.f32 0.0, %v1068
    %v1133 = vsub.f32 0.0, %v1069
    %v1134 = vsub.f32 0.0, %v1070
    %v1135 = vsub.f32 0.0, %v1071
    %v1136 = vsub.f32 0.0, %v1072
    %v1137 = vsub.f32 0.0, %v1073
    %v1138 = vsub.f32 0.0, %v1074
    %v1139 = vsub.f32 0.0, %v1075
    %v1140 = vsub.f32 0.0, %v1076
    %v1141 = vsub.f32 0.0, %v1077
    %v1142 = vsub.f32 0.0, %v1078
    %v1143 = vsub.f32 0.0, %v1079
    %v1144 = vsub.f32 0.0, %v1080
    %v1145 = vsub.f32 0.0, %v1081
    %v1146 = vsub.f32 0.0, %v1082
    %v1147 = vsub.f32 0.0, %v1083
    %v1148 = vsub.f32 0.0, %v1084
    %v1149 = vsub.f32 0.0, %v1085
    %v1150 = vsub.f32 0.0, %v1086
    %v1151 = vsub.f32 0.0, %v1087
    %v1152 = vsub.f32 0.0, %v1088
    %v1153 = vsub.f32 0.0, %v1089
    %v1154 = vsub.f32 0.0, %v1090
    %v1155 = vsub.f32 0.0, %v1091
    %v1156 = vsub.f32 0.0, %v1092
    %v1157 = vsub.f32 0.0, %v1093
    %v1158 = vsub.f32 0.0, %v1094
    %v1159 = vsub.f32 0.0, %v1095
    %v1160 = vmul.f32 %v1096, 1.442695
    %v1161 = vpow.pop %v1160
    %v1162 = vmul.f32 %v1097, 1.442695
    %v1163 = vpow.pop %v1162
    %v1164 = vmul.f32 %v1098, 1.442695
    %v1165 = vpow.pop %v1164
    %v1166 = vmul.f32 %v1099, 1.442695
    %v1167 = vpow.pop %v1166
    %v1168 = vmul.f32 %v1100, 1.442695
    %v1169 = vpow.pop %v1168
    %v1170 = vmul.f32 %v1101, 1.442695
    %v1171 = vpow.pop %v1170
    %v1172 = vmul.f32 %v1102, 1.442695
    %v1173 = vpow.pop %v1172
    %v1174 = vmul.f32 %v1103, 1.442695
    %v1175 = vpow.pop %v1174
    %v1176 = vmul.f32 %v1104, 1.442695
    %v1177 = vpow.pop %v1176
    %v1178 = vmul.f32 %v1105, 1.442695
    %v1179 = vpow.pop %v1178
    %v1180 = vmul.f32 %v1106, 1.442695
    %v1181 = vpow.pop %v1180
    %v1182 = vmul.f32 %v1107, 1.442695
    %v1183 = vpow.pop %v1182
    %v1184 = vmul.f32 %v1108, 1.442695
    %v1185 = vpow.pop %v1184
    %v1186 = vmul.f32 %v1109, 1.442695
    %v1187 = vpow.pop %v1186
    %v1188 = vmul.f32 %v1110, 1.442695
    %v1189 = vpow.pop %v1188
    %v1190 = vmul.f32 %v1111, 1.442695
    %v1191 = vpow.pop %v1190
    %v1192 = vmul.f32 %v1112, 1.442695
    %v1193 = vpow.pop %v1192
    %v1194 = vmul.f32 %v1113, 1.442695
    %v1195 = vpow.pop %v1194
    %v1196 = vmul.f32 %v1114, 1.442695
    %v1197 = vpow.pop %v1196
    %v1198 = vmul.f32 %v1115, 1.442695
    %v1199 = vpow.pop %v1198
    %v1200 = vmul.f32 %v1116, 1.442695
    %v1201 = vpow.pop %v1200
    %v1202 = vmul.f32 %v1117, 1.442695
    %v1203 = vpow.pop %v1202
    %v1204 = vmul.f32 %v1118, 1.442695
    %v1205 = vpow.pop %v1204
    %v1206 = vmul.f32 %v1119, 1.442695
    %v1207 = vpow.pop %v1206
    %v1208 = vmul.f32 %v1120, 1.442695
    %v1209 = vpow.pop %v1208
    %v1210 = vmul.f32 %v1121, 1.442695
    %v1211 = vpow.pop %v1210
    %v1212 = vmul.f32 %v1122, 1.442695
    %v1213 = vpow.pop %v1212
    %v1214 = vmul.f32 %v1123, 1.442695
    %v1215 = vpow.pop %v1214
    %v1216 = vmul.f32 %v1124, 1.442695
    %v1217 = vpow.pop %v1216
    %v1218 = vmul.f32 %v1125, 1.442695
    %v1219 = vpow.pop %v1218
    %v1220 = vmul.f32 %v1126, 1.442695
    %v1221 = vpow.pop %v1220
    %v1222 = vmul.f32 %v1127, 1.442695
    %v1223 = vpow.pop %v1222
    %v1224 = vmul.f32 %v1128, 1.442695
    %v1225 = vpow.pop %v1224
    %v1226 = vmul.f32 %v1129, 1.442695
    %v1227 = vpow.pop %v1226
    %v1228 = vmul.f32 %v1130, 1.442695
    %v1229 = vpow.pop %v1228
    %v1230 = vmul.f32 %v1131, 1.442695
    %v1231 = vpow.pop %v1230
    %v1232 = vmul.f32 %v1132, 1.442695
    %v1233 = vpow.pop %v1232
    %v1234 = vmul.f32 %v1133, 1.442695
    %v1235 = vpow.pop %v1234
    %v1236 = vmul.f32 %v1134, 1.442695
    %v1237 = vpow.pop %v1236
    %v1238 = vmul.f32 %v1135, 1.442695
    %v1239 = vpow.pop %v1238
    %v1240 = vmul.f32 %v1136, 1.442695
    %v1241 = vpow.pop %v1240
    %v1242 = vmul.f32 %v1137, 1.442695
    %v1243 = vpow.pop %v1242
    %v1244 = vmul.f32 %v1138, 1.442695
    %v1245 = vpow.pop %v1244
    %v1246 = vmul.f32 %v1139, 1.442695
    %v1247 = vpow.pop %v1246
    %v1248 = vmul.f32 %v1140, 1.442695
    %v1249 = vpow.pop %v1248
    %v1250 = vmul.f32 %v1141, 1.442695
    %v1251 = vpow.pop %v1250
    %v1252 = vmul.f32 %v1142, 1.442695
    %v1253 = vpow.pop %v1252
    %v1254 = vmul.f32 %v1143, 1.442695
    %v1255 = vpow.pop %v1254
    %v1256 = vmul.f32 %v1144, 1.442695
    %v1257 = vpow.pop %v1256
    %v1258 = vmul.f32 %v1145, 1.442695
    %v1259 = vpow.pop %v1258
    %v1260 = vmul.f32 %v1146, 1.442695
    %v1261 = vpow.pop %v1260
    %v1262 = vmul.f32 %v1147, 1.442695
    %v1263 = vpow.pop %v1262
    %v1264 = vmul.f32 %v1148, 1.442695
    %v1265 = vpow.pop %v1264
    %v1266 = vmul.f32 %v1149, 1.442695
    %v1267 = vpow.pop %v1266
    %v1268 = vmul.f32 %v1150, 1.442695
    %v1269 = vpow.pop %v1268
    %v1270 = vmul.f32 %v1151, 1.442695
    %v1271 = vpow.pop %v1270
    %v1272 = vmul.f32 %v1152, 1.442695
    %v1273 = vpow.pop %v1272
    %v1274 = vmul.f32 %v1153, 1.442695
    %v1275 = vpow.pop %v1274
    %v1276 = vmul.f32 %v1154, 1.442695
    %v1277 = vpow.pop %v1276
    %v1278 = vmul.f32 %v1155, 1.442695
    %v1279 = vpow.pop %v1278
    %v1280 = vmul.f32 %v1156, 1.442695
    %v1281 = vpow.pop %v1280
    %v1282 = vmul.f32 %v1157, 1.442695
    %v1283 = vpow.pop %v1282
    %v1284 = vmul.f32 %v1158, 1.442695
    %v1285 = vpow.pop %v1284
    %v1286 = vmul.f32 %v1159, 1.442695
    %v1287 = vpow.pop %v1286
    %v1288 = vadd.f32 %v1161, 1.0
    %v1289 = vadd.f32 %v1163, 1.0
    %v1290 = vadd.f32 %v1165, 1.0
    %v1291 = vadd.f32 %v1167, 1.0
    %v1292 = vadd.f32 %v1169, 1.0
    %v1293 = vadd.f32 %v1171, 1.0
    %v1294 = vadd.f32 %v1173, 1.0
    %v1295 = vadd.f32 %v1175, 1.0
    %v1296 = vadd.f32 %v1177, 1.0
    %v1297 = vadd.f32 %v1179, 1.0
    %v1298 = vadd.f32 %v1181, 1.0
    %v1299 = vadd.f32 %v1183, 1.0
    %v1300 = vadd.f32 %v1185, 1.0
    %v1301 = vadd.f32 %v1187, 1.0
    %v1302 = vadd.f32 %v1189, 1.0
    %v1303 = vadd.f32 %v1191, 1.0
    %v1304 = vadd.f32 %v1193, 1.0
    %v1305 = vadd.f32 %v1195, 1.0
    %v1306 = vadd.f32 %v1197, 1.0
    %v1307 = vadd.f32 %v1199, 1.0
    %v1308 = vadd.f32 %v1201, 1.0
    %v1309 = vadd.f32 %v1203, 1.0
    %v1310 = vadd.f32 %v1205, 1.0
    %v1311 = vadd.f32 %v1207, 1.0
    %v1312 = vadd.f32 %v1209, 1.0
    %v1313 = vadd.f32 %v1211, 1.0
    %v1314 = vadd.f32 %v1213, 1.0
    %v1315 = vadd.f32 %v1215, 1.0
    %v1316 = vadd.f32 %v1217, 1.0
    %v1317 = vadd.f32 %v1219, 1.0
    %v1318 = vadd.f32 %v1221, 1.0
    %v1319 = vadd.f32 %v1223, 1.0
    %v1320 = vadd.f32 %v1225, 1.0
    %v1321 = vadd.f32 %v1227, 1.0
    %v1322 = vadd.f32 %v1229, 1.0
    %v1323 = vadd.f32 %v1231, 1.0
    %v1324 = vadd.f32 %v1233, 1.0
    %v1325 = vadd.f32 %v1235, 1.0
    %v1326 = vadd.f32 %v1237, 1.0
    %v1327 = vadd.f32 %v1239, 1.0
    %v1328 = vadd.f32 %v1241, 1.0
    %v1329 = vadd.f32 %v1243, 1.0
    %v1330 = vadd.f32 %v1245, 1.0
    %v1331 = vadd.f32 %v1247, 1.0
    %v1332 = vadd.f32 %v1249, 1.0
    %v1333 = vadd.f32 %v1251, 1.0
    %v1334 = vadd.f32 %v1253, 1.0
    %v1335 = vadd.f32 %v1255, 1.0
    %v1336 = vadd.f32 %v1257, 1.0
    %v1337 = vadd.f32 %v1259, 1.0
    %v1338 = vadd.f32 %v1261, 1.0
    %v1339 = vadd.f32 %v1263, 1.0
    %v1340 = vadd.f32 %v1265, 1.0
    %v1341 = vadd.f32 %v1267, 1.0
    %v1342 = vadd.f32 %v1269, 1.0
    %v1343 = vadd.f32 %v1271, 1.0
    %v1344 = vadd.f32 %v1273, 1.0
    %v1345 = vadd.f32 %v1275, 1.0
    %v1346 = vadd.f32 %v1277, 1.0
    %v1347 = vadd.f32 %v1279, 1.0
    %v1348 = vadd.f32 %v1281, 1.0
    %v1349 = vadd.f32 %v1283, 1.0
    %v1350 = vadd.f32 %v1285, 1.0
    %v1351 = vadd.f32 %v1287, 1.0
    %v1352 = vrcp.pop %v1288
    %v1353 = vrcp.pop %v1289
    %v1354 = vrcp.pop %v1290
    %v1355 = vrcp.pop %v1291
    %v1356 = vrcp.pop %v1292
    %v1357 = vrcp.pop %v1293
    %v1358 = vrcp.pop %v1294
    %v1359 = vrcp.pop %v1295
    %v1360 = vrcp.pop %v1296
    %v1361 = vrcp.pop %v1297
    %v1362 = vrcp.pop %v1298
    %v1363 = vrcp.pop %v1299
    %v1364 = vrcp.pop %v1300
    %v1365 = vrcp.pop %v1301
    %v1366 = vrcp.pop %v1302
    %v1367 = vrcp.pop %v1303
    %v1368 = vrcp.pop %v1304
    %v1369 = vrcp.pop %v1305
    %v1370 = vrcp.pop %v1306
    %v1371 = vrcp.pop %v1307
    %v1372 = vrcp.pop %v1308
    %v1373 = vrcp.pop %v1309
    %v1374 = vrcp.pop %v1310
    %v1375 = vrcp.pop %v1311
    %v1376 = vrcp.pop %v1312
    %v1377 = vrcp.pop %v1313
    %v1378 = vrcp.pop %v1314
    %v1379 = vrcp.pop %v1315
    %v1380 = vrcp.pop %v1316
    %v1381 = vrcp.pop %v1317
    %v1382 = vrcp.pop %v1318
    %v1383 = vrcp.pop %v1319
    %v1384 = vrcp.pop %v1320
    %v1385 = vrcp.pop %v1321
    %v1386 = vrcp.pop %v1322
    %v1387 = vrcp.pop %v1323
    %v1388 = vrcp.pop %v1324
    %v1389 = vrcp.pop %v1325
    %v1390 = vrcp.pop %v1326
    %v1391 = vrcp.pop %v1327
    %v1392 = vrcp.pop %v1328
    %v1393 = vrcp.pop %v1329
    %v1394 = vrcp.pop %v1330
    %v1395 = vrcp.pop %v1331
    %v1396 = vrcp.pop %v1332
    %v1397 = vrcp.pop %v1333
    %v1398 = vrcp.pop %v1334
    %v1399 = vrcp.pop %v1335
    %v1400 = vrcp.pop %v1336
    %v1401 = vrcp.pop %v1337
    %v1402 = vrcp.pop %v1338
    %v1403 = vrcp.pop %v1339
    %v1404 = vrcp.pop %v1340
    %v1405 = vrcp.pop %v1341
    %v1406 = vrcp.pop %v1342
    %v1407 = vrcp.pop %v1343
    %v1408 = vrcp.pop %v1344
    %v1409 = vrcp.pop %v1345
    %v1410 = vrcp.pop %v1346
    %v1411 = vrcp.pop %v1347
    %v1412 = vrcp.pop %v1348
    %v1413 = vrcp.pop %v1349
    %v1414 = vrcp.pop %v1350
    %v1415 = vrcp.pop %v1351
    %v1416 = vmul.f32 %v1032, %v1352
    %v1417 = vmul.f32 %v1033, %v1353
    %v1418 = vmul.f32 %v1034, %v1354
    %v1419 = vmul.f32 %v1035, %v1355
    %v1420 = vmul.f32 %v1036, %v1356
    %v1421 = vmul.f32 %v1037, %v1357
    %v1422 = vmul.f32 %v1038, %v1358
    %v1423 = vmul.f32 %v1039, %v1359
    %v1424 = vmul.f32 %v1040, %v1360
    %v1425 = vmul.f32 %v1041, %v1361
    %v1426 = vmul.f32 %v1042, %v1362
    %v1427 = vmul.f32 %v1043, %v1363
    %v1428 = vmul.f32 %v1044, %v1364
    %v1429 = vmul.f32 %v1045, %v1365
    %v1430 = vmul.f32 %v1046, %v1366
    %v1431 = vmul.f32 %v1047, %v1367
    %v1432 = vmul.f32 %v1048, %v1368
    %v1433 = vmul.f32 %v1049, %v1369
    %v1434 = vmul.f32 %v1050, %v1370
    %v1435 = vmul.f32 %v1051, %v1371
    %v1436 = vmul.f32 %v1052, %v1372
    %v1437 = vmul.f32 %v1053, %v1373
    %v1438 = vmul.f32 %v1054, %v1374
    %v1439 = vmul.f32 %v1055, %v1375
    %v1440 = vmul.f32 %v1056, %v1376
    %v1441 = vmul.f32 %v1057, %v1377
    %v1442 = vmul.f32 %v1058, %v1378
    %v1443 = vmul.f32 %v1059, %v1379
    %v1444 = vmul.f32 %v1060, %v1380
    %v1445 = vmul.f32 %v1061, %v1381
    %v1446 = vmul.f32 %v1062, %v1382
    %v1447 = vmul.f32 %v1063, %v1383
    %v1448 = vmul.f32 %v1064, %v1384
    %v1449 = vmul.f32 %v1065, %v1385
    %v1450 = vmul.f32 %v1066, %v1386
    %v1451 = vmul.f32 %v1067, %v1387
    %v1452 = vmul.f32 %v1068, %v1388
    %v1453 = vmul.f32 %v1069, %v1389
    %v1454 = vmul.f32 %v1070, %v1390
    %v1455 = vmul.f32 %v1071, %v1391
    %v1456 = vmul.f32 %v1072, %v1392
    %v1457 = vmul.f32 %v1073, %v1393
    %v1458 = vmul.f32 %v1074, %v1394
    %v1459 = vmul.f32 %v1075, %v1395
    %v1460 = vmul.f32 %v1076, %v1396
    %v1461 = vmul.f32 %v1077, %v1397
    %v1462 = vmul.f32 %v1078, %v1398
    %v1463 = vmul.f32 %v1079, %v1399
    %v1464 = vmul.f32 %v1080, %v1400
    %v1465 = vmul.f32 %v1081, %v1401
    %v1466 = vmul.f32 %v1082, %v1402
    %v1467 = vmul.f32 %v1083, %v1403
    %v1468 = vmul.f32 %v1084, %v1404
    %v1469 = vmul.f32 %v1085, %v1405
    %v1470 = vmul.f32 %v1086, %v1406
    %v1471 = vmul.f32 %v1087, %v1407
    %v1472 = vmul.f32 %v1088, %v1408
    %v1473 = vmul.f32 %v1089, %v1409
    %v1474 = vmul.f32 %v1090, %v1410
    %v1475 = vmul.f32 %v1091, %v1411
    %v1476 = vmul.f32 %v1092, %v1412
    %v1477 = vmul.f32 %v1093, %v1413
    %v1478 = vmul.f32 %v1094, %v1414
    %v1479 = vmul.f32 %v1095, %v1415
    %v1480 = vpack.c.bf16 %v1417, %v1416
    %v1481 = vpack.c.bf16 %v1419, %v1418
    %v1482 = vpack.c.bf16 %v1421, %v1420
    %v1483 = vpack.c.bf16 %v1423, %v1422
    %v1484 = vpack.c.bf16 %v1425, %v1424
    %v1485 = vpack.c.bf16 %v1427, %v1426
    %v1486 = vpack.c.bf16 %v1429, %v1428
    %v1487 = vpack.c.bf16 %v1431, %v1430
    %v1488 = vpack.c.bf16 %v1433, %v1432
    %v1489 = vpack.c.bf16 %v1435, %v1434
    %v1490 = vpack.c.bf16 %v1437, %v1436
    %v1491 = vpack.c.bf16 %v1439, %v1438
    %v1492 = vpack.c.bf16 %v1441, %v1440
    %v1493 = vpack.c.bf16 %v1443, %v1442
    %v1494 = vpack.c.bf16 %v1445, %v1444
    %v1495 = vpack.c.bf16 %v1447, %v1446
    %v1496 = vpack.c.bf16 %v1449, %v1448
    %v1497 = vpack.c.bf16 %v1451, %v1450
    %v1498 = vpack.c.bf16 %v1453, %v1452
    %v1499 = vpack.c.bf16 %v1455, %v1454
    %v1500 = vpack.c.bf16 %v1457, %v1456
    %v1501 = vpack.c.bf16 %v1459, %v1458
    %v1502 = vpack.c.bf16 %v1461, %v1460
    %v1503 = vpack.c.bf16 %v1463, %v1462
    %v1504 = vpack.c.bf16 %v1465, %v1464
    %v1505 = vpack.c.bf16 %v1467, %v1466
    %v1506 = vpack.c.bf16 %v1469, %v1468
    %v1507 = vpack.c.bf16 %v1471, %v1470
    %v1508 = vpack.c.bf16 %v1473, %v1472
    %v1509 = vpack.c.bf16 %v1475, %v1474
    %v1510 = vpack.c.bf16 %v1477, %v1476
    %v1511 = vpack.c.bf16 %v1479, %v1478
    %v1544 = vunpack.c.l.b16 %v1480
    %v1545 = vunpack.c.h.b16 %v1480
    %v1546 = vunpack.c.l.b16 %v1481
    %v1547 = vunpack.c.h.b16 %v1481
    %v1548 = vunpack.c.l.b16 %v1482
    %v1549 = vunpack.c.h.b16 %v1482
    %v1550 = vunpack.c.l.b16 %v1483
    %v1551 = vunpack.c.h.b16 %v1483
    %v1552 = vunpack.c.l.b16 %v1484
    %v1553 = vunpack.c.h.b16 %v1484
    %v1554 = vunpack.c.l.b16 %v1485
    %v1555 = vunpack.c.h.b16 %v1485
    %v1556 = vunpack.c.l.b16 %v1486
    %v1557 = vunpack.c.h.b16 %v1486
    %v1558 = vunpack.c.l.b16 %v1487
    %v1559 = vunpack.c.h.b16 %v1487
    %v1560 = vunpack.c.l.b16 %v1488
    %v1561 = vunpack.c.h.b16 %v1488
    %v1562 = vunpack.c.l.b16 %v1489
    %v1563 = vunpack.c.h.b16 %v1489
    %v1564 = vunpack.c.l.b16 %v1490
    %v1565 = vunpack.c.h.b16 %v1490
    %v1566 = vunpack.c.l.b16 %v1491
    %v1567 = vunpack.c.h.b16 %v1491
    %v1568 = vunpack.c.l.b16 %v1492
    %v1569 = vunpack.c.h.b16 %v1492
    %v1570 = vunpack.c.l.b16 %v1493
    %v1571 = vunpack.c.h.b16 %v1493
    %v1572 = vunpack.c.l.b16 %v1494
    %v1573 = vunpack.c.h.b16 %v1494
    %v1574 = vunpack.c.l.b16 %v1495
    %v1575 = vunpack.c.h.b16 %v1495
    %v1576 = vunpack.c.l.b16 %v1496
    %v1577 = vunpack.c.h.b16 %v1496
    %v1578 = vunpack.c.l.b16 %v1497
    %v1579 = vunpack.c.h.b16 %v1497
    %v1580 = vunpack.c.l.b16 %v1498
    %v1581 = vunpack.c.h.b16 %v1498
    %v1582 = vunpack.c.l.b16 %v1499
    %v1583 = vunpack.c.h.b16 %v1499
    %v1584 = vunpack.c.l.b16 %v1500
    %v1585 = vunpack.c.h.b16 %v1500
    %v1586 = vunpack.c.l.b16 %v1501
    %v1587 = vunpack.c.h.b16 %v1501
    %v1588 = vunpack.c.l.b16 %v1502
    %v1589 = vunpack.c.h.b16 %v1502
    %v1590 = vunpack.c.l.b16 %v1503
    %v1591 = vunpack.c.h.b16 %v1503
    %v1592 = vunpack.c.l.b16 %v1504
    %v1593 = vunpack.c.h.b16 %v1504
    %v1594 = vunpack.c.l.b16 %v1505
    %v1595 = vunpack.c.h.b16 %v1505
    %v1596 = vunpack.c.l.b16 %v1506
    %v1597 = vunpack.c.h.b16 %v1506
    %v1598 = vunpack.c.l.b16 %v1507
    %v1599 = vunpack.c.h.b16 %v1507
    %v1600 = vunpack.c.l.b16 %v1508
    %v1601 = vunpack.c.h.b16 %v1508
    %v1602 = vunpack.c.l.b16 %v1509
    %v1603 = vunpack.c.h.b16 %v1509
    %v1604 = vunpack.c.l.b16 %v1510
    %v1605 = vunpack.c.h.b16 %v1510
    %v1606 = vunpack.c.l.b16 %v1511
    %v1607 = vunpack.c.h.b16 %v1511
    %v1608 = vpack.c.b16 %v1544, %v1544
    %v1609 = vpack.c.b16 %v1545, %v1545
    %v1610 = vpack.c.b16 %v1546, %v1546
    %v1611 = vpack.c.b16 %v1547, %v1547
    %v1612 = vpack.c.b16 %v1548, %v1548
    %v1613 = vpack.c.b16 %v1549, %v1549
    %v1614 = vpack.c.b16 %v1550, %v1550
    %v1615 = vpack.c.b16 %v1551, %v1551
    %v1616 = vpack.c.b16 %v1552, %v1552
    %v1617 = vpack.c.b16 %v1553, %v1553
    %v1618 = vpack.c.b16 %v1554, %v1554
    %v1619 = vpack.c.b16 %v1555, %v1555
    %v1620 = vpack.c.b16 %v1556, %v1556
    %v1621 = vpack.c.b16 %v1557, %v1557
    %v1622 = vpack.c.b16 %v1558, %v1558
    %v1623 = vpack.c.b16 %v1559, %v1559
    %v1624 = vpack.c.b16 %v1560, %v1560
    %v1625 = vpack.c.b16 %v1561, %v1561
    %v1626 = vpack.c.b16 %v1562, %v1562
    %v1627 = vpack.c.b16 %v1563, %v1563
    %v1628 = vpack.c.b16 %v1564, %v1564
    %v1629 = vpack.c.b16 %v1565, %v1565
    %v1630 = vpack.c.b16 %v1566, %v1566
    %v1631 = vpack.c.b16 %v1567, %v1567
    %v1632 = vpack.c.b16 %v1568, %v1568
    %v1633 = vpack.c.b16 %v1569, %v1569
    %v1634 = vpack.c.b16 %v1570, %v1570
    %v1635 = vpack.c.b16 %v1571, %v1571
    %v1636 = vpack.c.b16 %v1572, %v1572
    %v1637 = vpack.c.b16 %v1573, %v1573
    %v1638 = vpack.c.b16 %v1574, %v1574
    %v1639 = vpack.c.b16 %v1575, %v1575
    %v1640 = vpack.c.b16 %v1576, %v1576
    %v1641 = vpack.c.b16 %v1577, %v1577
    %v1642 = vpack.c.b16 %v1578, %v1578
    %v1643 = vpack.c.b16 %v1579, %v1579
    %v1644 = vpack.c.b16 %v1580, %v1580
    %v1645 = vpack.c.b16 %v1581, %v1581
    %v1646 = vpack.c.b16 %v1582, %v1582
    %v1647 = vpack.c.b16 %v1583, %v1583
    %v1648 = vpack.c.b16 %v1584, %v1584
    %v1649 = vpack.c.b16 %v1585, %v1585
    %v1650 = vpack.c.b16 %v1586, %v1586
    %v1651 = vpack.c.b16 %v1587, %v1587
    %v1652 = vpack.c.b16 %v1588, %v1588
    %v1653 = vpack.c.b16 %v1589, %v1589
    %v1654 = vpack.c.b16 %v1590, %v1590
    %v1655 = vpack.c.b16 %v1591, %v1591
    %v1656 = vpack.c.b16 %v1592, %v1592
    %v1657 = vpack.c.b16 %v1593, %v1593
    %v1658 = vpack.c.b16 %v1594, %v1594
    %v1659 = vpack.c.b16 %v1595, %v1595
    %v1660 = vpack.c.b16 %v1596, %v1596
    %v1661 = vpack.c.b16 %v1597, %v1597
    %v1662 = vpack.c.b16 %v1598, %v1598
    %v1663 = vpack.c.b16 %v1599, %v1599
    %v1664 = vpack.c.b16 %v1600, %v1600
    %v1665 = vpack.c.b16 %v1601, %v1601
    %v1666 = vpack.c.b16 %v1602, %v1602
    %v1667 = vpack.c.b16 %v1603, %v1603
    %v1668 = vpack.c.b16 %v1604, %v1604
    %v1669 = vpack.c.b16 %v1605, %v1605
    %v1670 = vpack.c.b16 %v1606, %v1606
    %v1671 = vpack.c.b16 %v1607, %v1607
    %1736 = vst [vmem:[%s4] sm:$0xf] %v1608
    %1737 = vst [vmem:[%s4 + $0x4] sm:$0xf] %v1609
    %1738 = vst [vmem:[%s4 + $0x8] sm:$0xf] %v1610
    %1739 = vst [vmem:[%s4 + $0xc] sm:$0xf] %v1611
    %1740 = vst [vmem:[%s4 + $0x10] sm:$0xf] %v1612
    %1741 = vst [vmem:[%s4 + $0x14] sm:$0xf] %v1613
    %1742 = vst [vmem:[%s4 + $0x18] sm:$0xf] %v1614
    %1743 = vst [vmem:[%s4 + $0x1c] sm:$0xf] %v1615
    %1744 = vst [vmem:[%s4 + $0x20] sm:$0xf] %v1616
    %1745 = vst [vmem:[%s4 + $0x24] sm:$0xf] %v1617
    %1746 = vst [vmem:[%s4 + $0x28] sm:$0xf] %v1618
    %1747 = vst [vmem:[%s4 + $0x2c] sm:$0xf] %v1619
    %1748 = vst [vmem:[%s4 + $0x30] sm:$0xf] %v1620
    %1749 = vst [vmem:[%s4 + $0x34] sm:$0xf] %v1621
    %1750 = vst [vmem:[%s4 + $0x38] sm:$0xf] %v1622
    %1751 = vst [vmem:[%s4 + $0x3c] sm:$0xf] %v1623
    %1752 = vst [vmem:[%s4 + $0x40] sm:$0xf] %v1624
    %1753 = vst [vmem:[%s4 + $0x44] sm:$0xf] %v1625
    %1754 = vst [vmem:[%s4 + $0x48] sm:$0xf] %v1626
    %1755 = vst [vmem:[%s4 + $0x4c] sm:$0xf] %v1627
    %1756 = vst [vmem:[%s4 + $0x50] sm:$0xf] %v1628
    %1757 = vst [vmem:[%s4 + $0x54] sm:$0xf] %v1629
    %1758 = vst [vmem:[%s4 + $0x58] sm:$0xf] %v1630
    %1759 = vst [vmem:[%s4 + $0x5c] sm:$0xf] %v1631
    %1760 = vst [vmem:[%s4 + $0x60] sm:$0xf] %v1632
    %1761 = vst [vmem:[%s4 + $0x64] sm:$0xf] %v1633
    %1762 = vst [vmem:[%s4 + $0x68] sm:$0xf] %v1634
    %1763 = vst [vmem:[%s4 + $0x6c] sm:$0xf] %v1635
    %1764 = vst [vmem:[%s4 + $0x70] sm:$0xf] %v1636
    %1765 = vst [vmem:[%s4 + $0x74] sm:$0xf] %v1637
    %1766 = vst [vmem:[%s4 + $0x78] sm:$0xf] %v1638
    %1767 = vst [vmem:[%s4 + $0x7c] sm:$0xf] %v1639
    %1768 = vst [vmem:[%s4 + $0x80] sm:$0xf] %v1640
    %1769 = vst [vmem:[%s4 + $0x84] sm:$0xf] %v1641
    %1770 = vst [vmem:[%s4 + $0x88] sm:$0xf] %v1642
    %1771 = vst [vmem:[%s4 + $0x8c] sm:$0xf] %v1643
    %1772 = vst [vmem:[%s4 + $0x90] sm:$0xf] %v1644
    %1773 = vst [vmem:[%s4 + $0x94] sm:$0xf] %v1645
    %1774 = vst [vmem:[%s4 + $0x98] sm:$0xf] %v1646
    %1775 = vst [vmem:[%s4 + $0x9c] sm:$0xf] %v1647
    %1776 = vst [vmem:[%s4 + $0xa0] sm:$0xf] %v1648
    %1777 = vst [vmem:[%s4 + $0xa4] sm:$0xf] %v1649
    %1778 = vst [vmem:[%s4 + $0xa8] sm:$0xf] %v1650
    %1779 = vst [vmem:[%s4 + $0xac] sm:$0xf] %v1651
    %1780 = vst [vmem:[%s4 + $0xb0] sm:$0xf] %v1652
    %1781 = vst [vmem:[%s4 + $0xb4] sm:$0xf] %v1653
    %1782 = vst [vmem:[%s4 + $0xb8] sm:$0xf] %v1654
    %1783 = vst [vmem:[%s4 + $0xbc] sm:$0xf] %v1655
    %1784 = vst [vmem:[%s4 + $0xc0] sm:$0xf] %v1656
    %1785 = vst [vmem:[%s4 + $0xc4] sm:$0xf] %v1657
    %1786 = vst [vmem:[%s4 + $0xc8] sm:$0xf] %v1658
    %1787 = vst [vmem:[%s4 + $0xcc] sm:$0xf] %v1659
    %1788 = vst [vmem:[%s4 + $0xd0] sm:$0xf] %v1660
    %1789 = vst [vmem:[%s4 + $0xd4] sm:$0xf] %v1661
    %1790 = vst [vmem:[%s4 + $0xd8] sm:$0xf] %v1662
    %1791 = vst [vmem:[%s4 + $0xdc] sm:$0xf] %v1663
    %1792 = vst [vmem:[%s4 + $0xe0] sm:$0xf] %v1664
    %1793 = vst [vmem:[%s4 + $0xe4] sm:$0xf] %v1665
    %1794 = vst [vmem:[%s4 + $0xe8] sm:$0xf] %v1666
    %1795 = vst [vmem:[%s4 + $0xec] sm:$0xf] %v1667
    %1796 = vst [vmem:[%s4 + $0xf0] sm:$0xf] %v1668
    %1797 = vst [vmem:[%s4 + $0xf4] sm:$0xf] %v1669
    %1798 = vst [vmem:[%s4 + $0xf8] sm:$0xf] %v1670
    %1799 = vst [vmem:[%s4 + $0xfc] sm:$0xf] %v1671
  $region25: #{_lambda_.27} parent=0 // pred_fallthru
    _
  // Predicated region
  $region26: #{_lambda_.27} parent=0 // pred_check
    _
  $region27: #{_lambda_.27} parent=0 // pred_check_branch
    %1801 = sbr.rel (0) target = $region29
  $region28: #{_lambda_.27} parent=0 // pred_region
    _
  $region29: #{_lambda_.27} parent=0 // pred_fallthru
    _
  // Predicated region
  $region30: #{_lambda_.27} parent=0 // pred_check
    _
  $region31: #{_lambda_.27} parent=0 // pred_check_branch
    %1803 = sbr.rel (0) target = $region33
  $region32: #{_lambda_.27} parent=0 // pred_region
    _
  $region33: #{_lambda_.27} parent=0 // pred_fallthru
    _

// kernel: _lambda_.29
$region0: #{_lambda_.29}
  #allocation0 [shape = 'u32[]', space=smem, size = 0x4, offset = 0x4, fixed_abs, tag = 'smem constant byte address 0x4 - core index']
  #allocation1 [shape = 'u32[144,128]{1,0:T(1,128)}', space=vmem, size = 0x12000, scoped, tag = 'internal scratch']
  %s0 = inlined_call_operand.vmem [shape: bf16[512,128], index: 0, kind: input, shape index: {}]
  %s1 = inlined_call_operand.vmem [shape: bf16[512,128], index: 1, kind: input, shape index: {}]
  %s2 = inlined_call_operand.vmem [shape: bf16[128,128], index: 2, kind: input, shape index: {}]
  %s3 = inlined_call_operand.vmem [shape: bf16[128,128], index: 3, kind: input, shape index: {}]
  %s4 = inlined_call_operand.vmem [shape: f32[1,128], index: 4, kind: input, shape index: {}]
  %s5 = inlined_call_operand.vmem [shape: f32[1,128], index: 5, kind: input, shape index: {}]
  %s6 = inlined_call_operand.vmem [shape: f32[512,128], index: 6, kind: output, shape index: {}]
  %s7 = sld [smem:[#allocation0]]
  $region34: #{_lambda_.29} parent=0
    _
  %s9 = ssub.s32 1, %s7
  %s10 = scalar_select 0, %s9, %s7
  // Predicated region
  $region2: #{_lambda_.29} parent=0 // pred_check
    _
  $region3: #{_lambda_.29} parent=0 // pred_check_branch
    %12 = sbr.rel (0) target = $region5
  $region4: #{_lambda_.29} parent=0 // pred_region
    _
  $region5: #{_lambda_.29} parent=0 // pred_fallthru
    _
  // Predicated region
  $region6: #{_lambda_.29} parent=0 // pred_check
    _
  $region7: #{_lambda_.29} parent=0 // pred_check_branch
    %14 = sbr.rel (0) target = $region9
  $region8: #{_lambda_.29} parent=0 // pred_region
    _
  $region9: #{_lambda_.29} parent=0 // pred_fallthru
    _
  // Predicated region
  $region10: #{_lambda_.29} parent=0 // pred_check
    _
  $region11: #{_lambda_.29} parent=0 // pred_check_branch
    %16 = sbr.rel (0) target = $region13
  $region12: #{_lambda_.29} parent=0 // pred_region
    _
  $region13: #{_lambda_.29} parent=0 // pred_fallthru
    _
  // Predicated region
  $region14: #{_lambda_.29} parent=0 // pred_check
    _
  $region15: #{_lambda_.29} parent=0 // pred_check_branch
    %18 = sbr.rel (0) target = $region17
  $region16: #{_lambda_.29} parent=0 // pred_region
    _
  $region17: #{_lambda_.29} parent=0 // pred_fallthru
    _
  // Predicated region
  $region18: #{_lambda_.29} parent=0 // pred_check
    _
  $region19: #{_lambda_.29} parent=0 // pred_check_branch
    %20 = sbr.rel (0) target = $region21
  $region20: #{_lambda_.29} parent=0 // pred_region
    _
  $region21: #{_lambda_.29} parent=0 // pred_fallthru
    _
  // Predicated region
  $region22: #{_lambda_.29} parent=0 // pred_check
    _
  $region23: #{_lambda_.29} parent=0 // pred_check_branch
    %22 = sbr.rel (0) target = $region25
  $region24: #{_lambda_.29} parent=0 // pred_region
    _
  $region25: #{_lambda_.29} parent=0 // pred_fallthru
    _
  %v24 = vld [vmem:[%s0] sm:$0xf]
  %v25 = vld [vmem:[%s0 + $0x4] sm:$0xf]
  %v26 = vld [vmem:[%s0 + $0x8] sm:$0xf]
  %v27 = vld [vmem:[%s0 + $0xc] sm:$0xf]
  %v28 = vld [vmem:[%s0 + $0x10] sm:$0xf]
  %v29 = vld [vmem:[%s0 + $0x14] sm:$0xf]
  %v30 = vld [vmem:[%s0 + $0x18] sm:$0xf]
  %v31 = vld [vmem:[%s0 + $0x1c] sm:$0xf]
  %v32 = vld [vmem:[%s0 + $0x20] sm:$0xf]
  %v33 = vld [vmem:[%s0 + $0x24] sm:$0xf]
  %v34 = vld [vmem:[%s0 + $0x28] sm:$0xf]
  %v35 = vld [vmem:[%s0 + $0x2c] sm:$0xf]
  %v36 = vld [vmem:[%s0 + $0x30] sm:$0xf]
  %v37 = vld [vmem:[%s0 + $0x34] sm:$0xf]
  %v38 = vld [vmem:[%s0 + $0x38] sm:$0xf]
  %v39 = vld [vmem:[%s0 + $0x3c] sm:$0xf]
  %v40 = vld [vmem:[%s0 + $0x40] sm:$0xf]
  %v41 = vld [vmem:[%s0 + $0x44] sm:$0xf]
  %v42 = vld [vmem:[%s0 + $0x48] sm:$0xf]
  %v43 = vld [vmem:[%s0 + $0x4c] sm:$0xf]
  %v44 = vld [vmem:[%s0 + $0x50] sm:$0xf]
  %v45 = vld [vmem:[%s0 + $0x54] sm:$0xf]
  %v46 = vld [vmem:[%s0 + $0x58] sm:$0xf]
  %v47 = vld [vmem:[%s0 + $0x5c] sm:$0xf]
  %v48 = vld [vmem:[%s0 + $0x60] sm:$0xf]
  %v49 = vld [vmem:[%s0 + $0x64] sm:$0xf]
  %v50 = vld [vmem:[%s0 + $0x68] sm:$0xf]
  %v51 = vld [vmem:[%s0 + $0x6c] sm:$0xf]
  %v52 = vld [vmem:[%s0 + $0x70] sm:$0xf]
  %v53 = vld [vmem:[%s0 + $0x74] sm:$0xf]
  %v54 = vld [vmem:[%s0 + $0x78] sm:$0xf]
  %v55 = vld [vmem:[%s0 + $0x7c] sm:$0xf]
  %v56 = vld [vmem:[%s0 + $0x80] sm:$0xf]
  %v57 = vld [vmem:[%s0 + $0x84] sm:$0xf]
  %v58 = vld [vmem:[%s0 + $0x88] sm:$0xf]
  %v59 = vld [vmem:[%s0 + $0x8c] sm:$0xf]
  %v60 = vld [vmem:[%s0 + $0x90] sm:$0xf]
  %v61 = vld [vmem:[%s0 + $0x94] sm:$0xf]
  %v62 = vld [vmem:[%s0 + $0x98] sm:$0xf]
  %v63 = vld [vmem:[%s0 + $0x9c] sm:$0xf]
  %v64 = vld [vmem:[%s0 + $0xa0] sm:$0xf]
  %v65 = vld [vmem:[%s0 + $0xa4] sm:$0xf]
  %v66 = vld [vmem:[%s0 + $0xa8] sm:$0xf]
  %v67 = vld [vmem:[%s0 + $0xac] sm:$0xf]
  %v68 = vld [vmem:[%s0 + $0xb0] sm:$0xf]
  %v69 = vld [vmem:[%s0 + $0xb4] sm:$0xf]
  %v70 = vld [vmem:[%s0 + $0xb8] sm:$0xf]
  %v71 = vld [vmem:[%s0 + $0xbc] sm:$0xf]
  %v72 = vld [vmem:[%s0 + $0xc0] sm:$0xf]
  %v73 = vld [vmem:[%s0 + $0xc4] sm:$0xf]
  %v74 = vld [vmem:[%s0 + $0xc8] sm:$0xf]
  %v75 = vld [vmem:[%s0 + $0xcc] sm:$0xf]
  %v76 = vld [vmem:[%s0 + $0xd0] sm:$0xf]
  %v77 = vld [vmem:[%s0 + $0xd4] sm:$0xf]
  %v78 = vld [vmem:[%s0 + $0xd8] sm:$0xf]
  %v79 = vld [vmem:[%s0 + $0xdc] sm:$0xf]
  %v80 = vld [vmem:[%s0 + $0xe0] sm:$0xf]
  %v81 = vld [vmem:[%s0 + $0xe4] sm:$0xf]
  %v82 = vld [vmem:[%s0 + $0xe8] sm:$0xf]
  %v83 = vld [vmem:[%s0 + $0xec] sm:$0xf]
  %v84 = vld [vmem:[%s0 + $0xf0] sm:$0xf]
  %v85 = vld [vmem:[%s0 + $0xf4] sm:$0xf]
  %v86 = vld [vmem:[%s0 + $0xf8] sm:$0xf]
  %v87 = vld [vmem:[%s0 + $0xfc] sm:$0xf]
  %v88 = vld [vmem:[%s2] sm:$0xf]
  %v89 = vld [vmem:[%s2 + $0x4] sm:$0xf]
  %v90 = vld [vmem:[%s2 + $0x8] sm:$0xf]
  %v91 = vld [vmem:[%s2 + $0xc] sm:$0xf]
  %v92 = vld [vmem:[%s2 + $0x10] sm:$0xf]
  %v93 = vld [vmem:[%s2 + $0x14] sm:$0xf]
  %v94 = vld [vmem:[%s2 + $0x18] sm:$0xf]
  %v95 = vld [vmem:[%s2 + $0x1c] sm:$0xf]
  %v96 = vld [vmem:[%s2 + $0x20] sm:$0xf]
  %v97 = vld [vmem:[%s2 + $0x24] sm:$0xf]
  %v98 = vld [vmem:[%s2 + $0x28] sm:$0xf]
  %v99 = vld [vmem:[%s2 + $0x2c] sm:$0xf]
  %v100 = vld [vmem:[%s2 + $0x30] sm:$0xf]
  %v101 = vld [vmem:[%s2 + $0x34] sm:$0xf]
  %v102 = vld [vmem:[%s2 + $0x38] sm:$0xf]
  %v103 = vld [vmem:[%s2 + $0x3c] sm:$0xf]
  %v104 = vld [vmem:[%s1] sm:$0xf]
  %v105 = vld [vmem:[%s1 + $0x4] sm:$0xf]
  %v106 = vld [vmem:[%s1 + $0x8] sm:$0xf]
  %v107 = vld [vmem:[%s1 + $0xc] sm:$0xf]
  %v108 = vld [vmem:[%s1 + $0x10] sm:$0xf]
  %v109 = vld [vmem:[%s1 + $0x14] sm:$0xf]
  %v110 = vld [vmem:[%s1 + $0x18] sm:$0xf]
  %v111 = vld [vmem:[%s1 + $0x1c] sm:$0xf]
  %v112 = vld [vmem:[%s1 + $0x20] sm:$0xf]
  %v113 = vld [vmem:[%s1 + $0x24] sm:$0xf]
  %v114 = vld [vmem:[%s1 + $0x28] sm:$0xf]
  %v115 = vld [vmem:[%s1 + $0x2c] sm:$0xf]
  %v116 = vld [vmem:[%s1 + $0x30] sm:$0xf]
  %v117 = vld [vmem:[%s1 + $0x34] sm:$0xf]
  %v118 = vld [vmem:[%s1 + $0x38] sm:$0xf]
  %v119 = vld [vmem:[%s1 + $0x3c] sm:$0xf]
  %v120 = vld [vmem:[%s1 + $0x40] sm:$0xf]
  %v121 = vld [vmem:[%s1 + $0x44] sm:$0xf]
  %v122 = vld [vmem:[%s1 + $0x48] sm:$0xf]
  %v123 = vld [vmem:[%s1 + $0x4c] sm:$0xf]
  %v124 = vld [vmem:[%s1 + $0x50] sm:$0xf]
  %v125 = vld [vmem:[%s1 + $0x54] sm:$0xf]
  %v126 = vld [vmem:[%s1 + $0x58] sm:$0xf]
  %v127 = vld [vmem:[%s1 + $0x5c] sm:$0xf]
  %v128 = vld [vmem:[%s1 + $0x60] sm:$0xf]
  %v129 = vld [vmem:[%s1 + $0x64] sm:$0xf]
  %v130 = vld [vmem:[%s1 + $0x68] sm:$0xf]
  %v131 = vld [vmem:[%s1 + $0x6c] sm:$0xf]
  %v132 = vld [vmem:[%s1 + $0x70] sm:$0xf]
  %v133 = vld [vmem:[%s1 + $0x74] sm:$0xf]
  %v134 = vld [vmem:[%s1 + $0x78] sm:$0xf]
  %v135 = vld [vmem:[%s1 + $0x7c] sm:$0xf]
  %v136 = vld [vmem:[%s1 + $0x80] sm:$0xf]
  %v137 = vld [vmem:[%s1 + $0x84] sm:$0xf]
  %v138 = vld [vmem:[%s1 + $0x88] sm:$0xf]
  %v139 = vld [vmem:[%s1 + $0x8c] sm:$0xf]
  %v140 = vld [vmem:[%s1 + $0x90] sm:$0xf]
  %v141 = vld [vmem:[%s1 + $0x94] sm:$0xf]
  %v142 = vld [vmem:[%s1 + $0x98] sm:$0xf]
  %v143 = vld [vmem:[%s1 + $0x9c] sm:$0xf]
  %v144 = vld [vmem:[%s1 + $0xa0] sm:$0xf]
  %v145 = vld [vmem:[%s1 + $0xa4] sm:$0xf]
  %v146 = vld [vmem:[%s1 + $0xa8] sm:$0xf]
  %v147 = vld [vmem:[%s1 + $0xac] sm:$0xf]
  %v148 = vld [vmem:[%s1 + $0xb0] sm:$0xf]
  %v149 = vld [vmem:[%s1 + $0xb4] sm:$0xf]
  %v150 = vld [vmem:[%s1 + $0xb8] sm:$0xf]
  %v151 = vld [vmem:[%s1 + $0xbc] sm:$0xf]
  %v152 = vld [vmem:[%s1 + $0xc0] sm:$0xf]
  %v153 = vld [vmem:[%s1 + $0xc4] sm:$0xf]
  %v154 = vld [vmem:[%s1 + $0xc8] sm:$0xf]
  %v155 = vld [vmem:[%s1 + $0xcc] sm:$0xf]
  %v156 = vld [vmem:[%s1 + $0xd0] sm:$0xf]
  %v157 = vld [vmem:[%s1 + $0xd4] sm:$0xf]
  %v158 = vld [vmem:[%s1 + $0xd8] sm:$0xf]
  %v159 = vld [vmem:[%s1 + $0xdc] sm:$0xf]
  %v160 = vld [vmem:[%s1 + $0xe0] sm:$0xf]
  %v161 = vld [vmem:[%s1 + $0xe4] sm:$0xf]
  %v162 = vld [vmem:[%s1 + $0xe8] sm:$0xf]
  %v163 = vld [vmem:[%s1 + $0xec] sm:$0xf]
  %v164 = vld [vmem:[%s1 + $0xf0] sm:$0xf]
  %v165 = vld [vmem:[%s1 + $0xf4] sm:$0xf]
  %v166 = vld [vmem:[%s1 + $0xf8] sm:$0xf]
  %v167 = vld [vmem:[%s1 + $0xfc] sm:$0xf]
  %v168 = vld [vmem:[%s3] sm:$0xf]
  %v169 = vld [vmem:[%s3 + $0x4] sm:$0xf]
  %v170 = vld [vmem:[%s3 + $0x8] sm:$0xf]
  %v171 = vld [vmem:[%s3 + $0xc] sm:$0xf]
  %v172 = vld [vmem:[%s3 + $0x10] sm:$0xf]
  %v173 = vld [vmem:[%s3 + $0x14] sm:$0xf]
  %v174 = vld [vmem:[%s3 + $0x18] sm:$0xf]
  %v175 = vld [vmem:[%s3 + $0x1c] sm:$0xf]
  %v176 = vld [vmem:[%s3 + $0x20] sm:$0xf]
  %v177 = vld [vmem:[%s3 + $0x24] sm:$0xf]
  %v178 = vld [vmem:[%s3 + $0x28] sm:$0xf]
  %v179 = vld [vmem:[%s3 + $0x2c] sm:$0xf]
  %v180 = vld [vmem:[%s3 + $0x30] sm:$0xf]
  %v181 = vld [vmem:[%s3 + $0x34] sm:$0xf]
  %v182 = vld [vmem:[%s3 + $0x38] sm:$0xf]
  %v183 = vld [vmem:[%s3 + $0x3c] sm:$0xf]
  %v248 = vunpack.c.l.b16 %v104
  %v249 = vunpack.c.l.b16 %v105
  %v250 = vunpack.c.l.b16 %v106
  %v251 = vunpack.c.l.b16 %v107
  %v252 = vunpack.c.l.b16 %v108
  %v253 = vunpack.c.l.b16 %v109
  %v254 = vunpack.c.l.b16 %v110
  %v255 = vunpack.c.l.b16 %v111
  %v256 = vunpack.c.l.b16 %v112
  %v257 = vunpack.c.l.b16 %v113
  %v258 = vunpack.c.l.b16 %v114
  %v259 = vunpack.c.l.b16 %v115
  %v260 = vunpack.c.l.b16 %v116
  %v261 = vunpack.c.l.b16 %v117
  %v262 = vunpack.c.l.b16 %v118
  %v263 = vunpack.c.l.b16 %v119
  %v264 = vunpack.c.l.b16 %v120
  %v265 = vunpack.c.l.b16 %v121
  %v266 = vunpack.c.l.b16 %v122
  %v267 = vunpack.c.l.b16 %v123
  %v268 = vunpack.c.l.b16 %v124
  %v269 = vunpack.c.l.b16 %v125
  %v270 = vunpack.c.l.b16 %v126
  %v271 = vunpack.c.l.b16 %v127
  %v272 = vunpack.c.l.b16 %v128
  %v273 = vunpack.c.l.b16 %v129
  %v274 = vunpack.c.l.b16 %v130
  %v275 = vunpack.c.l.b16 %v131
  %v276 = vunpack.c.l.b16 %v132
  %v277 = vunpack.c.l.b16 %v133
  %v278 = vunpack.c.l.b16 %v134
  %v279 = vunpack.c.l.b16 %v135
  %v280 = vunpack.c.l.b16 %v136
  %v281 = vunpack.c.l.b16 %v137
  %v282 = vunpack.c.l.b16 %v138
  %v283 = vunpack.c.l.b16 %v139
  %v284 = vunpack.c.l.b16 %v140
  %v285 = vunpack.c.l.b16 %v141
  %v286 = vunpack.c.l.b16 %v142
  %v287 = vunpack.c.l.b16 %v143
  %v288 = vunpack.c.l.b16 %v144
  %v289 = vunpack.c.l.b16 %v145
  %v290 = vunpack.c.l.b16 %v146
  %v291 = vunpack.c.l.b16 %v147
  %v292 = vunpack.c.l.b16 %v148
  %v293 = vunpack.c.l.b16 %v149
  %v294 = vunpack.c.l.b16 %v150
  %v295 = vunpack.c.l.b16 %v151
  %v296 = vunpack.c.l.b16 %v152
  %v297 = vunpack.c.l.b16 %v153
  %v298 = vunpack.c.l.b16 %v154
  %v299 = vunpack.c.l.b16 %v155
  %v300 = vunpack.c.l.b16 %v156
  %v301 = vunpack.c.l.b16 %v157
  %v302 = vunpack.c.l.b16 %v158
  %v303 = vunpack.c.l.b16 %v159
  %v304 = vunpack.c.l.b16 %v160
  %v305 = vunpack.c.l.b16 %v161
  %v306 = vunpack.c.l.b16 %v162
  %v307 = vunpack.c.l.b16 %v163
  %v308 = vunpack.c.l.b16 %v164
  %v309 = vunpack.c.l.b16 %v165
  %v310 = vunpack.c.l.b16 %v166
  %v311 = vunpack.c.l.b16 %v167
  %v312 = vpack.c.b16 %v249, %v248
  %v313 = vpack.c.b16 %v251, %v250
  %v314 = vpack.c.b16 %v253, %v252
  %v315 = vpack.c.b16 %v255, %v254
  %v316 = vpack.c.b16 %v257, %v256
  %v317 = vpack.c.b16 %v259, %v258
  %v318 = vpack.c.b16 %v261, %v260
  %v319 = vpack.c.b16 %v263, %v262
  %v320 = vpack.c.b16 %v265, %v264
  %v321 = vpack.c.b16 %v267, %v266
  %v322 = vpack.c.b16 %v269, %v268
  %v323 = vpack.c.b16 %v271, %v270
  %v324 = vpack.c.b16 %v273, %v272
  %v325 = vpack.c.b16 %v275, %v274
  %v326 = vpack.c.b16 %v277, %v276
  %v327 = vpack.c.b16 %v279, %v278
  %v328 = vpack.c.b16 %v281, %v280
  %v329 = vpack.c.b16 %v283, %v282
  %v330 = vpack.c.b16 %v285, %v284
  %v331 = vpack.c.b16 %v287, %v286
  %v332 = vpack.c.b16 %v289, %v288
  %v333 = vpack.c.b16 %v291, %v290
  %v334 = vpack.c.b16 %v293, %v292
  %v335 = vpack.c.b16 %v295, %v294
  %v336 = vpack.c.b16 %v297, %v296
  %v337 = vpack.c.b16 %v299, %v298
  %v338 = vpack.c.b16 %v301, %v300
  %v339 = vpack.c.b16 %v303, %v302
  %v340 = vpack.c.b16 %v305, %v304
  %v341 = vpack.c.b16 %v307, %v306
  %v342 = vpack.c.b16 %v309, %v308
  %v343 = vpack.c.b16 %v311, %v310
  %v392 = vunpack.c.l.b16 %v168
  %v393 = vunpack.c.l.b16 %v169
  %v394 = vunpack.c.l.b16 %v170
  %v395 = vunpack.c.l.b16 %v171
  %v396 = vunpack.c.l.b16 %v172
  %v397 = vunpack.c.l.b16 %v173
  %v398 = vunpack.c.l.b16 %v174
  %v399 = vunpack.c.l.b16 %v175
  %v400 = vunpack.c.l.b16 %v176
  %v401 = vunpack.c.l.b16 %v177
  %v402 = vunpack.c.l.b16 %v178
  %v403 = vunpack.c.l.b16 %v179
  %v404 = vunpack.c.l.b16 %v180
  %v405 = vunpack.c.l.b16 %v181
  %v406 = vunpack.c.l.b16 %v182
  %v407 = vunpack.c.l.b16 %v183
  %v408 = vpack.c.b16 %v393, %v392
  %v409 = vpack.c.b16 %v395, %v394
  %v410 = vpack.c.b16 %v397, %v396
  %v411 = vpack.c.b16 %v399, %v398
  %v412 = vpack.c.b16 %v401, %v400
  %v413 = vpack.c.b16 %v403, %v402
  %v414 = vpack.c.b16 %v405, %v404
  %v415 = vpack.c.b16 %v407, %v406
  %424 = vmatprep.subr.bf16.mxu0 0
  %425 = vmatpush1.bf16.msra.mxu0 %v408
  %426 = vmatprep.subr.bf16.mxu0 0
  %427 = vmatpush1.bf16.msra.mxu0 %v409
  %428 = vmatprep.subr.bf16.mxu0 0
  %429 = vmatpush1.bf16.msra.mxu0 %v410
  %430 = vmatprep.subr.bf16.mxu0 0
  %431 = vmatpush1.bf16.msra.mxu0 %v411
  %432 = vmatprep.subr.bf16.mxu0 0
  %433 = vmatpush1.bf16.msra.mxu0 %v412
  %434 = vmatprep.subr.bf16.mxu0 0
  %435 = vmatpush1.bf16.msra.mxu0 %v413
  %436 = vmatprep.subr.bf16.mxu0 0
  %437 = vmatpush1.bf16.msra.mxu0 %v414
  %438 = vmatprep.subr.bf16.mxu0 0
  %439 = vmatpush1.bf16.msra.mxu0 %v415
  %440 = vmatprep.subr.bf16.mxu0 0
  %441 = vmatpush1.bf16.msra.mxu0 0
  %442 = vmatprep.subr.bf16.mxu0 0
  %443 = vmatpush1.bf16.msra.mxu0 0
  %444 = vmatprep.subr.bf16.mxu0 0
  %445 = vmatpush1.bf16.msra.mxu0 0
  %446 = vmatprep.subr.bf16.mxu0 0
  %447 = vmatpush1.bf16.msra.mxu0 0
  %448 = vmatprep.subr.bf16.mxu0 0
  %449 = vmatpush1.bf16.msra.mxu0 0
  %450 = vmatprep.subr.bf16.mxu0 0
  %451 = vmatpush1.bf16.msra.mxu0 0
  %452 = vmatprep.subr.bf16.mxu0 0
  %453 = vmatpush1.bf16.msra.mxu0 0
  %454 = vmatprep.subr.bf16.mxu0 0
  %455 = vmatpush1.bf16.msra.mxu0 0
  %456 = vmatprep.mubr.bf16.mxu0 0
  %457 = vmatmul.mubr.bf16.gmra.mrb[0].mxu0 %v312
  %v458 = vpop.f32.mrb[0].mxu0
  %v459 = vadd.f32 0.0, %v458
  %v460 = vpop.f32.mrb[0].mxu0
  %v461 = vpop.f32.mrb[0].mxu0
  %v462 = vadd.f32 0.0, %v461
  %v463 = vpop.f32.mrb[0].mxu0
  %464 = vmatprep.mubr.bf16.mxu0 0
  %465 = vmatmul.mubr.bf16.gmra.mrb[0].mxu0 %v313
  %v466 = vpop.f32.mrb[0].mxu0
  %v467 = vadd.f32 0.0, %v466
  %v468 = vpop.f32.mrb[0].mxu0
  %v469 = vpop.f32.mrb[0].mxu0
  %v470 = vadd.f32 0.0, %v469
  %v471 = vpop.f32.mrb[0].mxu0
  %472 = vmatprep.mubr.bf16.mxu0 0
  %473 = vmatmul.mubr.bf16.gmra.mrb[0].mxu0 %v314
  %v474 = vpop.f32.mrb[0].mxu0
  %v475 = vadd.f32 0.0, %v474
  %v476 = vpop.f32.mrb[0].mxu0
  %v477 = vpop.f32.mrb[0].mxu0
  %v478 = vadd.f32 0.0, %v477
  %v479 = vpop.f32.mrb[0].mxu0
  %480 = vmatprep.mubr.bf16.mxu0 0
  %481 = vmatmul.mubr.bf16.gmra.mrb[0].mxu0 %v315
  %v482 = vpop.f32.mrb[0].mxu0
  %v483 = vadd.f32 0.0, %v482
  %v484 = vpop.f32.mrb[0].mxu0
  %v485 = vpop.f32.mrb[0].mxu0
  %v486 = vadd.f32 0.0, %v485
  %v487 = vpop.f32.mrb[0].mxu0
  %488 = vmatprep.mubr.bf16.mxu0 0
  %489 = vmatmul.mubr.bf16.gmra.mrb[0].mxu0 %v316
  %v490 = vpop.f32.mrb[0].mxu0
  %v491 = vadd.f32 0.0, %v490
  %v492 = vpop.f32.mrb[0].mxu0
  %v493 = vpop.f32.mrb[0].mxu0
  %v494 = vadd.f32 0.0, %v493
  %v495 = vpop.f32.mrb[0].mxu0
  %496 = vmatprep.mubr.bf16.mxu0 0
  %497 = vmatmul.mubr.bf16.gmra.mrb[0].mxu0 %v317
  %v498 = vpop.f32.mrb[0].mxu0
  %v499 = vadd.f32 0.0, %v498
  %v500 = vpop.f32.mrb[0].mxu0
  %v501 = vpop.f32.mrb[0].mxu0
  %v502 = vadd.f32 0.0, %v501
  %v503 = vpop.f32.mrb[0].mxu0
  %504 = vmatprep.mubr.bf16.mxu0 0
  %505 = vmatmul.mubr.bf16.gmra.mrb[0].mxu0 %v318
  %v506 = vpop.f32.mrb[0].mxu0
  %v507 = vadd.f32 0.0, %v506
  %v508 = vpop.f32.mrb[0].mxu0
  %v509 = vpop.f32.mrb[0].mxu0
  %v510 = vadd.f32 0.0, %v509
  %v511 = vpop.f32.mrb[0].mxu0
  %512 = vmatprep.mubr.bf16.mxu0 0
  %513 = vmatmul.mubr.bf16.gmra.mrb[0].mxu0 %v319
  %v514 = vpop.f32.mrb[0].mxu0
  %v515 = vadd.f32 0.0, %v514
  %v516 = vpop.f32.mrb[0].mxu0
  %v517 = vpop.f32.mrb[0].mxu0
  %v518 = vadd.f32 0.0, %v517
  %v519 = vpop.f32.mrb[0].mxu0
  %520 = vmatprep.mubr.bf16.mxu0 0
  %521 = vmatmul.mubr.bf16.gmra.mrb[0].mxu0 %v320
  %v522 = vpop.f32.mrb[0].mxu0
  %v523 = vadd.f32 0.0, %v522
  %v524 = vpop.f32.mrb[0].mxu0
  %v525 = vpop.f32.mrb[0].mxu0
  %v526 = vadd.f32 0.0, %v525
  %v527 = vpop.f32.mrb[0].mxu0
  %528 = vmatprep.mubr.bf16.mxu0 0
  %529 = vmatmul.mubr.bf16.gmra.mrb[0].mxu0 %v321
  %v530 = vpop.f32.mrb[0].mxu0
  %v531 = vadd.f32 0.0, %v530
  %v532 = vpop.f32.mrb[0].mxu0
  %v533 = vpop.f32.mrb[0].mxu0
  %v534 = vadd.f32 0.0, %v533
  %v535 = vpop.f32.mrb[0].mxu0
  %536 = vmatprep.mubr.bf16.mxu0 0
  %537 = vmatmul.mubr.bf16.gmra.mrb[0].mxu0 %v322
  %v538 = vpop.f32.mrb[0].mxu0
  %v539 = vadd.f32 0.0, %v538
  %v540 = vpop.f32.mrb[0].mxu0
  %v541 = vpop.f32.mrb[0].mxu0
  %v542 = vadd.f32 0.0, %v541
  %v543 = vpop.f32.mrb[0].mxu0
  %544 = vmatprep.mubr.bf16.mxu0 0
  %545 = vmatmul.mubr.bf16.gmra.mrb[0].mxu0 %v323
  %v546 = vpop.f32.mrb[0].mxu0
  %v547 = vadd.f32 0.0, %v546
  %v548 = vpop.f32.mrb[0].mxu0
  %v549 = vpop.f32.mrb[0].mxu0
  %v550 = vadd.f32 0.0, %v549
  %v551 = vpop.f32.mrb[0].mxu0
  %552 = vmatprep.mubr.bf16.mxu0 0
  %553 = vmatmul.mubr.bf16.gmra.mrb[0].mxu0 %v324
  %v554 = vpop.f32.mrb[0].mxu0
  %v555 = vadd.f32 0.0, %v554
  %v556 = vpop.f32.mrb[0].mxu0
  %v557 = vpop.f32.mrb[0].mxu0
  %v558 = vadd.f32 0.0, %v557
  %v559 = vpop.f32.mrb[0].mxu0
  %560 = vmatprep.mubr.bf16.mxu0 0
  %561 = vmatmul.mubr.bf16.gmra.mrb[0].mxu0 %v325
  %v562 = vpop.f32.mrb[0].mxu0
  %v563 = vadd.f32 0.0, %v562
  %v564 = vpop.f32.mrb[0].mxu0
  %v565 = vpop.f32.mrb[0].mxu0
  %v566 = vadd.f32 0.0, %v565
  %v567 = vpop.f32.mrb[0].mxu0
  %568 = vmatprep.mubr.bf16.mxu0 0
  %569 = vmatmul.mubr.bf16.gmra.mrb[0].mxu0 %v326
  %v570 = vpop.f32.mrb[0].mxu0
  %v571 = vadd.f32 0.0, %v570
  %v572 = vpop.f32.mrb[0].mxu0
  %v573 = vpop.f32.mrb[0].mxu0
  %v574 = vadd.f32 0.0, %v573
  %v575 = vpop.f32.mrb[0].mxu0
  %576 = vmatprep.mubr.bf16.mxu0 0
  %577 = vmatmul.mubr.bf16.gmra.mrb[0].mxu0 %v327
  %v578 = vpop.f32.mrb[0].mxu0
  %v579 = vadd.f32 0.0, %v578
  %v580 = vpop.f32.mrb[0].mxu0
  %v581 = vpop.f32.mrb[0].mxu0
  %v582 = vadd.f32 0.0, %v581
  %v583 = vpop.f32.mrb[0].mxu0
  %584 = vmatprep.mubr.bf16.mxu0 0
  %585 = vmatmul.mubr.bf16.gmra.mrb[0].mxu0 %v328
  %v586 = vpop.f32.mrb[0].mxu0
  %v587 = vadd.f32 0.0, %v586
  %v588 = vpop.f32.mrb[0].mxu0
  %v589 = vpop.f32.mrb[0].mxu0
  %v590 = vadd.f32 0.0, %v589
  %v591 = vpop.f32.mrb[0].mxu0
  %592 = vmatprep.mubr.bf16.mxu0 0
  %593 = vmatmul.mubr.bf16.gmra.mrb[0].mxu0 %v329
  %v594 = vpop.f32.mrb[0].mxu0
  %v595 = vadd.f32 0.0, %v594
  %v596 = vpop.f32.mrb[0].mxu0
  %v597 = vpop.f32.mrb[0].mxu0
  %v598 = vadd.f32 0.0, %v597
  %v599 = vpop.f32.mrb[0].mxu0
  %600 = vmatprep.mubr.bf16.mxu0 0
  %601 = vmatmul.mubr.bf16.gmra.mrb[0].mxu0 %v330
  %v602 = vpop.f32.mrb[0].mxu0
  %v603 = vadd.f32 0.0, %v602
  %v604 = vpop.f32.mrb[0].mxu0
  %v605 = vpop.f32.mrb[0].mxu0
  %v606 = vadd.f32 0.0, %v605
  %v607 = vpop.f32.mrb[0].mxu0
  %608 = vmatprep.mubr.bf16.mxu0 0
  %609 = vmatmul.mubr.bf16.gmra.mrb[0].mxu0 %v331
  %v610 = vpop.f32.mrb[0].mxu0
  %v611 = vadd.f32 0.0, %v610
  %v612 = vpop.f32.mrb[0].mxu0
  %v613 = vpop.f32.mrb[0].mxu0
  %v614 = vadd.f32 0.0, %v613
  %v615 = vpop.f32.mrb[0].mxu0
  %616 = vmatprep.mubr.bf16.mxu0 0
  %617 = vmatmul.mubr.bf16.gmra.mrb[0].mxu0 %v332
  %v618 = vpop.f32.mrb[0].mxu0
  %v619 = vadd.f32 0.0, %v618
  %v620 = vpop.f32.mrb[0].mxu0
  %v621 = vpop.f32.mrb[0].mxu0
  %v622 = vadd.f32 0.0, %v621
  %v623 = vpop.f32.mrb[0].mxu0
  %624 = vmatprep.mubr.bf16.mxu0 0
  %625 = vmatmul.mubr.bf16.gmra.mrb[0].mxu0 %v333
  %v626 = vpop.f32.mrb[0].mxu0
  %v627 = vadd.f32 0.0, %v626
  %v628 = vpop.f32.mrb[0].mxu0
  %v629 = vpop.f32.mrb[0].mxu0
  %v630 = vadd.f32 0.0, %v629
  %v631 = vpop.f32.mrb[0].mxu0
  %632 = vmatprep.mubr.bf16.mxu0 0
  %633 = vmatmul.mubr.bf16.gmra.mrb[0].mxu0 %v334
  %v634 = vpop.f32.mrb[0].mxu0
  %v635 = vadd.f32 0.0, %v634
  %v636 = vpop.f32.mrb[0].mxu0
  %v637 = vpop.f32.mrb[0].mxu0
  %v638 = vadd.f32 0.0, %v637
  %v639 = vpop.f32.mrb[0].mxu0
  %640 = vmatprep.mubr.bf16.mxu0 0
  %641 = vmatmul.mubr.bf16.gmra.mrb[0].mxu0 %v335
  %v642 = vpop.f32.mrb[0].mxu0
  %v643 = vadd.f32 0.0, %v642
  %v644 = vpop.f32.mrb[0].mxu0
  %v645 = vpop.f32.mrb[0].mxu0
  %v646 = vadd.f32 0.0, %v645
  %v647 = vpop.f32.mrb[0].mxu0
  %648 = vmatprep.mubr.bf16.mxu0 0
  %649 = vmatmul.mubr.bf16.gmra.mrb[0].mxu0 %v336
  %v650 = vpop.f32.mrb[0].mxu0
  %v651 = vadd.f32 0.0, %v650
  %v652 = vpop.f32.mrb[0].mxu0
  %v653 = vpop.f32.mrb[0].mxu0
  %v654 = vadd.f32 0.0, %v653
  %v655 = vpop.f32.mrb[0].mxu0
  %656 = vmatprep.mubr.bf16.mxu0 0
  %657 = vmatmul.mubr.bf16.gmra.mrb[0].mxu0 %v337
  %v658 = vpop.f32.mrb[0].mxu0
  %v659 = vadd.f32 0.0, %v658
  %v660 = vpop.f32.mrb[0].mxu0
  %v661 = vpop.f32.mrb[0].mxu0
  %v662 = vadd.f32 0.0, %v661
  %v663 = vpop.f32.mrb[0].mxu0
  %664 = vmatprep.mubr.bf16.mxu0 0
  %665 = vmatmul.mubr.bf16.gmra.mrb[0].mxu0 %v338
  %v666 = vpop.f32.mrb[0].mxu0
  %v667 = vadd.f32 0.0, %v666
  %v668 = vpop.f32.mrb[0].mxu0
  %v669 = vpop.f32.mrb[0].mxu0
  %v670 = vadd.f32 0.0, %v669
  %v671 = vpop.f32.mrb[0].mxu0
  %672 = vmatprep.mubr.bf16.mxu0 0
  %673 = vmatmul.mubr.bf16.gmra.mrb[0].mxu0 %v339
  %v674 = vpop.f32.mrb[0].mxu0
  %v675 = vadd.f32 0.0, %v674
  %v676 = vpop.f32.mrb[0].mxu0
  %v677 = vpop.f32.mrb[0].mxu0
  %v678 = vadd.f32 0.0, %v677
  %v679 = vpop.f32.mrb[0].mxu0
  %680 = vmatprep.mubr.bf16.mxu0 0
  %681 = vmatmul.mubr.bf16.gmra.mrb[0].mxu0 %v340
  %v682 = vpop.f32.mrb[0].mxu0
  %v683 = vadd.f32 0.0, %v682
  %v684 = vpop.f32.mrb[0].mxu0
  %v685 = vpop.f32.mrb[0].mxu0
  %v686 = vadd.f32 0.0, %v685
  %v687 = vpop.f32.mrb[0].mxu0
  %688 = vmatprep.mubr.bf16.mxu0 0
  %689 = vmatmul.mubr.bf16.gmra.mrb[0].mxu0 %v341
  %v690 = vpop.f32.mrb[0].mxu0
  %v691 = vadd.f32 0.0, %v690
  %v692 = vpop.f32.mrb[0].mxu0
  %v693 = vpop.f32.mrb[0].mxu0
  %v694 = vadd.f32 0.0, %v693
  %v695 = vpop.f32.mrb[0].mxu0
  %696 = vmatprep.mubr.bf16.mxu0 0
  %697 = vmatmul.mubr.bf16.gmra.mrb[0].mxu0 %v342
  %v698 = vpop.f32.mrb[0].mxu0
  %v699 = vadd.f32 0.0, %v698
  %v700 = vpop.f32.mrb[0].mxu0
  %v701 = vpop.f32.mrb[0].mxu0
  %v702 = vadd.f32 0.0, %v701
  %v703 = vpop.f32.mrb[0].mxu0
  %704 = vmatprep.mubr.bf16.mxu0 0
  %705 = vmatmul.mubr.bf16.gmra.mrb[0].mxu0 %v343
  %v706 = vpop.f32.mrb[0].mxu0
  %v707 = vadd.f32 0.0, %v706
  %v708 = vpop.f32.mrb[0].mxu0
  %v709 = vpop.f32.mrb[0].mxu0
  %v710 = vadd.f32 0.0, %v709
  %v711 = vpop.f32.mrb[0].mxu0
  %712 = vdwg.mxu0
  %v777 = vunpack.c.l.b16 %v24
  %v778 = vunpack.c.l.b16 %v25
  %v779 = vunpack.c.l.b16 %v26
  %v780 = vunpack.c.l.b16 %v27
  %v781 = vunpack.c.l.b16 %v28
  %v782 = vunpack.c.l.b16 %v29
  %v783 = vunpack.c.l.b16 %v30
  %v784 = vunpack.c.l.b16 %v31
  %v785 = vunpack.c.l.b16 %v32
  %v786 = vunpack.c.l.b16 %v33
  %v787 = vunpack.c.l.b16 %v34
  %v788 = vunpack.c.l.b16 %v35
  %v789 = vunpack.c.l.b16 %v36
  %v790 = vunpack.c.l.b16 %v37
  %v791 = vunpack.c.l.b16 %v38
  %v792 = vunpack.c.l.b16 %v39
  %v793 = vunpack.c.l.b16 %v40
  %v794 = vunpack.c.l.b16 %v41
  %v795 = vunpack.c.l.b16 %v42
  %v796 = vunpack.c.l.b16 %v43
  %v797 = vunpack.c.l.b16 %v44
  %v798 = vunpack.c.l.b16 %v45
  %v799 = vunpack.c.l.b16 %v46
  %v800 = vunpack.c.l.b16 %v47
  %v801 = vunpack.c.l.b16 %v48
  %v802 = vunpack.c.l.b16 %v49
  %v803 = vunpack.c.l.b16 %v50
  %v804 = vunpack.c.l.b16 %v51
  %v805 = vunpack.c.l.b16 %v52
  %v806 = vunpack.c.l.b16 %v53
  %v807 = vunpack.c.l.b16 %v54
  %v808 = vunpack.c.l.b16 %v55
  %v809 = vunpack.c.l.b16 %v56
  %v810 = vunpack.c.l.b16 %v57
  %v811 = vunpack.c.l.b16 %v58
  %v812 = vunpack.c.l.b16 %v59
  %v813 = vunpack.c.l.b16 %v60
  %v814 = vunpack.c.l.b16 %v61
  %v815 = vunpack.c.l.b16 %v62
  %v816 = vunpack.c.l.b16 %v63
  %v817 = vunpack.c.l.b16 %v64
  %v818 = vunpack.c.l.b16 %v65
  %v819 = vunpack.c.l.b16 %v66
  %v820 = vunpack.c.l.b16 %v67
  %v821 = vunpack.c.l.b16 %v68
  %v822 = vunpack.c.l.b16 %v69
  %v823 = vunpack.c.l.b16 %v70
  %v824 = vunpack.c.l.b16 %v71
  %v825 = vunpack.c.l.b16 %v72
  %v826 = vunpack.c.l.b16 %v73
  %v827 = vunpack.c.l.b16 %v74
  %v828 = vunpack.c.l.b16 %v75
  %v829 = vunpack.c.l.b16 %v76
  %v830 = vunpack.c.l.b16 %v77
  %v831 = vunpack.c.l.b16 %v78
  %v832 = vunpack.c.l.b16 %v79
  %v833 = vunpack.c.l.b16 %v80
  %v834 = vunpack.c.l.b16 %v81
  %v835 = vunpack.c.l.b16 %v82
  %v836 = vunpack.c.l.b16 %v83
  %v837 = vunpack.c.l.b16 %v84
  %v838 = vunpack.c.l.b16 %v85
  %v839 = vunpack.c.l.b16 %v86
  %v840 = vunpack.c.l.b16 %v87
  %v841 = vpack.c.b16 %v778, %v777
  %v842 = vpack.c.b16 %v780, %v779
  %v843 = vpack.c.b16 %v782, %v781
  %v844 = vpack.c.b16 %v784, %v783
  %v845 = vpack.c.b16 %v786, %v785
  %v846 = vpack.c.b16 %v788, %v787
  %v847 = vpack.c.b16 %v790, %v789
  %v848 = vpack.c.b16 %v792, %v791
  %v849 = vpack.c.b16 %v794, %v793
  %v850 = vpack.c.b16 %v796, %v795
  %v851 = vpack.c.b16 %v798, %v797
  %v852 = vpack.c.b16 %v800, %v799
  %v853 = vpack.c.b16 %v802, %v801
  %v854 = vpack.c.b16 %v804, %v803
  %v855 = vpack.c.b16 %v806, %v805
  %v856 = vpack.c.b16 %v808, %v807
  %v857 = vpack.c.b16 %v810, %v809
  %v858 = vpack.c.b16 %v812, %v811
  %v859 = vpack.c.b16 %v814, %v813
  %v860 = vpack.c.b16 %v816, %v815
  %v861 = vpack.c.b16 %v818, %v817
  %v862 = vpack.c.b16 %v820, %v819
  %v863 = vpack.c.b16 %v822, %v821
  %v864 = vpack.c.b16 %v824, %v823
  %v865 = vpack.c.b16 %v826, %v825
  %v866 = vpack.c.b16 %v828, %v827
  %v867 = vpack.c.b16 %v830, %v829
  %v868 = vpack.c.b16 %v832, %v831
  %v869 = vpack.c.b16 %v834, %v833
  %v870 = vpack.c.b16 %v836, %v835
  %v871 = vpack.c.b16 %v838, %v837
  %v872 = vpack.c.b16 %v840, %v839
  %v921 = vunpack.c.l.b16 %v88
  %v922 = vunpack.c.l.b16 %v89
  %v923 = vunpack.c.l.b16 %v90
  %v924 = vunpack.c.l.b16 %v91
  %v925 = vunpack.c.l.b16 %v92
  %v926 = vunpack.c.l.b16 %v93
  %v927 = vunpack.c.l.b16 %v94
  %v928 = vunpack.c.l.b16 %v95
  %v929 = vunpack.c.l.b16 %v96
  %v930 = vunpack.c.l.b16 %v97
  %v931 = vunpack.c.l.b16 %v98
  %v932 = vunpack.c.l.b16 %v99
  %v933 = vunpack.c.l.b16 %v100
  %v934 = vunpack.c.l.b16 %v101
  %v935 = vunpack.c.l.b16 %v102
  %v936 = vunpack.c.l.b16 %v103
  %v937 = vpack.c.b16 %v922, %v921
  %v938 = vpack.c.b16 %v924, %v923
  %v939 = vpack.c.b16 %v926, %v925
  %v940 = vpack.c.b16 %v928, %v927
  %v941 = vpack.c.b16 %v930, %v929
  %v942 = vpack.c.b16 %v932, %v931
  %v943 = vpack.c.b16 %v934, %v933
  %v944 = vpack.c.b16 %v936, %v935
  %953 = vmatprep.subr.bf16.mxu0 0
  %954 = vmatpush1.bf16.msra.mxu0 %v937
  %955 = vmatprep.subr.bf16.mxu0 0
  %956 = vmatpush1.bf16.msra.mxu0 %v938
  %957 = vmatprep.subr.bf16.mxu0 0
  %958 = vmatpush1.bf16.msra.mxu0 %v939
  %959 = vmatprep.subr.bf16.mxu0 0
  %960 = vmatpush1.bf16.msra.mxu0 %v940
  %961 = vmatprep.subr.bf16.mxu0 0
  %962 = vmatpush1.bf16.msra.mxu0 %v941
  %963 = vmatprep.subr.bf16.mxu0 0
  %964 = vmatpush1.bf16.msra.mxu0 %v942
  %965 = vmatprep.subr.bf16.mxu0 0
  %966 = vmatpush1.bf16.msra.mxu0 %v943
  %967 = vmatprep.subr.bf16.mxu0 0
  %968 = vmatpush1.bf16.msra.mxu0 %v944
  %969 = vmatprep.subr.bf16.mxu0 0
  %970 = vmatpush1.bf16.msra.mxu0 0
  %971 = vmatprep.subr.bf16.mxu0 0
  %972 = vmatpush1.bf16.msra.mxu0 0
  %973 = vmatprep.subr.bf16.mxu0 0
  %974 = vmatpush1.bf16.msra.mxu0 0
  %975 = vmatprep.subr.bf16.mxu0 0
  %976 = vmatpush1.bf16.msra.mxu0 0
  %977 = vmatprep.subr.bf16.mxu0 0
  %978 = vmatpush1.bf16.msra.mxu0 0
  %979 = vmatprep.subr.bf16.mxu0 0
  %980 = vmatpush1.bf16.msra.mxu0 0
  %981 = vmatprep.subr.bf16.mxu0 0
  %982 = vmatpush1.bf16.msra.mxu0 0
  %983 = vmatprep.subr.bf16.mxu0 0
  %984 = vmatpush1.bf16.msra.mxu0 0
  %985 = vmatprep.mubr.bf16.mxu0 0
  %986 = vmatmul.mubr.bf16.gmra.mrb[0].mxu0 %v841
  %v987 = vpop.f32.mrb[0].mxu0
  %v988 = vadd.f32 %v459, %v987
  %v989 = vpop.f32.mrb[0].mxu0
  %v990 = vpop.f32.mrb[0].mxu0
  %v991 = vadd.f32 %v462, %v990
  %v992 = vpop.f32.mrb[0].mxu0
  %993 = vmatprep.mubr.bf16.mxu0 0
  %994 = vmatmul.mubr.bf16.gmra.mrb[0].mxu0 %v842
  %v995 = vpop.f32.mrb[0].mxu0
  %v996 = vadd.f32 %v467, %v995
  %v997 = vpop.f32.mrb[0].mxu0
  %v998 = vpop.f32.mrb[0].mxu0
  %v999 = vadd.f32 %v470, %v998
  %v1000 = vpop.f32.mrb[0].mxu0
  %1001 = vmatprep.mubr.bf16.mxu0 0
  %1002 = vmatmul.mubr.bf16.gmra.mrb[0].mxu0 %v843
  %v1003 = vpop.f32.mrb[0].mxu0
  %v1004 = vadd.f32 %v475, %v1003
  %v1005 = vpop.f32.mrb[0].mxu0
  %v1006 = vpop.f32.mrb[0].mxu0
  %v1007 = vadd.f32 %v478, %v1006
  %v1008 = vpop.f32.mrb[0].mxu0
  %1009 = vmatprep.mubr.bf16.mxu0 0
  %1010 = vmatmul.mubr.bf16.gmra.mrb[0].mxu0 %v844
  %v1011 = vpop.f32.mrb[0].mxu0
  %v1012 = vadd.f32 %v483, %v1011
  %v1013 = vpop.f32.mrb[0].mxu0
  %v1014 = vpop.f32.mrb[0].mxu0
  %v1015 = vadd.f32 %v486, %v1014
  %v1016 = vpop.f32.mrb[0].mxu0
  %1017 = vmatprep.mubr.bf16.mxu0 0
  %1018 = vmatmul.mubr.bf16.gmra.mrb[0].mxu0 %v845
  %v1019 = vpop.f32.mrb[0].mxu0
  %v1020 = vadd.f32 %v491, %v1019
  %v1021 = vpop.f32.mrb[0].mxu0
  %v1022 = vpop.f32.mrb[0].mxu0
  %v1023 = vadd.f32 %v494, %v1022
  %v1024 = vpop.f32.mrb[0].mxu0
  %1025 = vmatprep.mubr.bf16.mxu0 0
  %1026 = vmatmul.mubr.bf16.gmra.mrb[0].mxu0 %v846
  %v1027 = vpop.f32.mrb[0].mxu0
  %v1028 = vadd.f32 %v499, %v1027
  %v1029 = vpop.f32.mrb[0].mxu0
  %v1030 = vpop.f32.mrb[0].mxu0
  %v1031 = vadd.f32 %v502, %v1030
  %v1032 = vpop.f32.mrb[0].mxu0
  %1033 = vmatprep.mubr.bf16.mxu0 0
  %1034 = vmatmul.mubr.bf16.gmra.mrb[0].mxu0 %v847
  %v1035 = vpop.f32.mrb[0].mxu0
  %v1036 = vadd.f32 %v507, %v1035
  %v1037 = vpop.f32.mrb[0].mxu0
  %v1038 = vpop.f32.mrb[0].mxu0
  %v1039 = vadd.f32 %v510, %v1038
  %v1040 = vpop.f32.mrb[0].mxu0
  %1041 = vmatprep.mubr.bf16.mxu0 0
  %1042 = vmatmul.mubr.bf16.gmra.mrb[0].mxu0 %v848
  %v1043 = vpop.f32.mrb[0].mxu0
  %v1044 = vadd.f32 %v515, %v1043
  %v1045 = vpop.f32.mrb[0].mxu0
  %v1046 = vpop.f32.mrb[0].mxu0
  %v1047 = vadd.f32 %v518, %v1046
  %v1048 = vpop.f32.mrb[0].mxu0
  %1049 = vmatprep.mubr.bf16.mxu0 0
  %1050 = vmatmul.mubr.bf16.gmra.mrb[0].mxu0 %v849
  %v1051 = vpop.f32.mrb[0].mxu0
  %v1052 = vadd.f32 %v523, %v1051
  %v1053 = vpop.f32.mrb[0].mxu0
  %v1054 = vpop.f32.mrb[0].mxu0
  %v1055 = vadd.f32 %v526, %v1054
  %v1056 = vpop.f32.mrb[0].mxu0
  %1057 = vmatprep.mubr.bf16.mxu0 0
  %1058 = vmatmul.mubr.bf16.gmra.mrb[0].mxu0 %v850
  %v1059 = vpop.f32.mrb[0].mxu0
  %v1060 = vadd.f32 %v531, %v1059
  %v1061 = vpop.f32.mrb[0].mxu0
  %v1062 = vpop.f32.mrb[0].mxu0
  %v1063 = vadd.f32 %v534, %v1062
  %v1064 = vpop.f32.mrb[0].mxu0
  %1065 = vmatprep.mubr.bf16.mxu0 0
  %1066 = vmatmul.mubr.bf16.gmra.mrb[0].mxu0 %v851
  %v1067 = vpop.f32.mrb[0].mxu0
  %v1068 = vadd.f32 %v539, %v1067
  %v1069 = vpop.f32.mrb[0].mxu0
  %v1070 = vpop.f32.mrb[0].mxu0
  %v1071 = vadd.f32 %v542, %v1070
  %v1072 = vpop.f32.mrb[0].mxu0
  %1073 = vmatprep.mubr.bf16.mxu0 0
  %1074 = vmatmul.mubr.bf16.gmra.mrb[0].mxu0 %v852
  %v1075 = vpop.f32.mrb[0].mxu0
  %v1076 = vadd.f32 %v547, %v1075
  %v1077 = vpop.f32.mrb[0].mxu0
  %v1078 = vpop.f32.mrb[0].mxu0
  %v1079 = vadd.f32 %v550, %v1078
  %v1080 = vpop.f32.mrb[0].mxu0
  %1081 = vmatprep.mubr.bf16.mxu0 0
  %1082 = vmatmul.mubr.bf16.gmra.mrb[0].mxu0 %v853
  %v1083 = vpop.f32.mrb[0].mxu0
  %v1084 = vadd.f32 %v555, %v1083
  %v1085 = vpop.f32.mrb[0].mxu0
  %v1086 = vpop.f32.mrb[0].mxu0
  %v1087 = vadd.f32 %v558, %v1086
  %v1088 = vpop.f32.mrb[0].mxu0
  %1089 = vmatprep.mubr.bf16.mxu0 0
  %1090 = vmatmul.mubr.bf16.gmra.mrb[0].mxu0 %v854
  %v1091 = vpop.f32.mrb[0].mxu0
  %v1092 = vadd.f32 %v563, %v1091
  %v1093 = vpop.f32.mrb[0].mxu0
  %v1094 = vpop.f32.mrb[0].mxu0
  %v1095 = vadd.f32 %v566, %v1094
  %v1096 = vpop.f32.mrb[0].mxu0
  %1097 = vmatprep.mubr.bf16.mxu0 0
  %1098 = vmatmul.mubr.bf16.gmra.mrb[0].mxu0 %v855
  %v1099 = vpop.f32.mrb[0].mxu0
  %v1100 = vadd.f32 %v571, %v1099
  %v1101 = vpop.f32.mrb[0].mxu0
  %v1102 = vpop.f32.mrb[0].mxu0
  %v1103 = vadd.f32 %v574, %v1102
  %v1104 = vpop.f32.mrb[0].mxu0
  %1105 = vmatprep.mubr.bf16.mxu0 0
  %1106 = vmatmul.mubr.bf16.gmra.mrb[0].mxu0 %v856
  %v1107 = vpop.f32.mrb[0].mxu0
  %v1108 = vadd.f32 %v579, %v1107
  %v1109 = vpop.f32.mrb[0].mxu0
  %v1110 = vpop.f32.mrb[0].mxu0
  %v1111 = vadd.f32 %v582, %v1110
  %v1112 = vpop.f32.mrb[0].mxu0
  %1113 = vmatprep.mubr.bf16.mxu0 0
  %1114 = vmatmul.mubr.bf16.gmra.mrb[0].mxu0 %v857
  %v1115 = vpop.f32.mrb[0].mxu0
  %v1116 = vadd.f32 %v587, %v1115
  %v1117 = vpop.f32.mrb[0].mxu0
  %v1118 = vpop.f32.mrb[0].mxu0
  %v1119 = vadd.f32 %v590, %v1118
  %v1120 = vpop.f32.mrb[0].mxu0
  %1121 = vmatprep.mubr.bf16.mxu0 0
  %1122 = vmatmul.mubr.bf16.gmra.mrb[0].mxu0 %v858
  %v1123 = vpop.f32.mrb[0].mxu0
  %v1124 = vadd.f32 %v595, %v1123
  %v1125 = vpop.f32.mrb[0].mxu0
  %v1126 = vpop.f32.mrb[0].mxu0
  %v1127 = vadd.f32 %v598, %v1126
  %v1128 = vpop.f32.mrb[0].mxu0
  %1129 = vmatprep.mubr.bf16.mxu0 0
  %1130 = vmatmul.mubr.bf16.gmra.mrb[0].mxu0 %v859
  %v1131 = vpop.f32.mrb[0].mxu0
  %v1132 = vadd.f32 %v603, %v1131
  %v1133 = vpop.f32.mrb[0].mxu0
  %v1134 = vpop.f32.mrb[0].mxu0
  %v1135 = vadd.f32 %v606, %v1134
  %v1136 = vpop.f32.mrb[0].mxu0
  %1137 = vmatprep.mubr.bf16.mxu0 0
  %1138 = vmatmul.mubr.bf16.gmra.mrb[0].mxu0 %v860
  %v1139 = vpop.f32.mrb[0].mxu0
  %v1140 = vadd.f32 %v611, %v1139
  %v1141 = vpop.f32.mrb[0].mxu0
  %v1142 = vpop.f32.mrb[0].mxu0
  %v1143 = vadd.f32 %v614, %v1142
  %v1144 = vpop.f32.mrb[0].mxu0
  %1145 = vmatprep.mubr.bf16.mxu0 0
  %1146 = vmatmul.mubr.bf16.gmra.mrb[0].mxu0 %v861
  %v1147 = vpop.f32.mrb[0].mxu0
  %v1148 = vadd.f32 %v619, %v1147
  %v1149 = vpop.f32.mrb[0].mxu0
  %v1150 = vpop.f32.mrb[0].mxu0
  %v1151 = vadd.f32 %v622, %v1150
  %v1152 = vpop.f32.mrb[0].mxu0
  %1153 = vmatprep.mubr.bf16.mxu0 0
  %1154 = vmatmul.mubr.bf16.gmra.mrb[0].mxu0 %v862
  %v1155 = vpop.f32.mrb[0].mxu0
  %v1156 = vadd.f32 %v627, %v1155
  %v1157 = vpop.f32.mrb[0].mxu0
  %v1158 = vpop.f32.mrb[0].mxu0
  %v1159 = vadd.f32 %v630, %v1158
  %v1160 = vpop.f32.mrb[0].mxu0
  %1161 = vmatprep.mubr.bf16.mxu0 0
  %1162 = vmatmul.mubr.bf16.gmra.mrb[0].mxu0 %v863
  %v1163 = vpop.f32.mrb[0].mxu0
  %v1164 = vadd.f32 %v635, %v1163
  %v1165 = vpop.f32.mrb[0].mxu0
  %v1166 = vpop.f32.mrb[0].mxu0
  %v1167 = vadd.f32 %v638, %v1166
  %v1168 = vpop.f32.mrb[0].mxu0
  %1169 = vmatprep.mubr.bf16.mxu0 0
  %1170 = vmatmul.mubr.bf16.gmra.mrb[0].mxu0 %v864
  %v1171 = vpop.f32.mrb[0].mxu0
  %v1172 = vadd.f32 %v643, %v1171
  %v1173 = vpop.f32.mrb[0].mxu0
  %v1174 = vpop.f32.mrb[0].mxu0
  %v1175 = vadd.f32 %v646, %v1174
  %v1176 = vpop.f32.mrb[0].mxu0
  %1177 = vmatprep.mubr.bf16.mxu0 0
  %1178 = vmatmul.mubr.bf16.gmra.mrb[0].mxu0 %v865
  %v1179 = vpop.f32.mrb[0].mxu0
  %v1180 = vadd.f32 %v651, %v1179
  %v1181 = vpop.f32.mrb[0].mxu0
  %v1182 = vpop.f32.mrb[0].mxu0
  %v1183 = vadd.f32 %v654, %v1182
  %v1184 = vpop.f32.mrb[0].mxu0
  %1185 = vmatprep.mubr.bf16.mxu0 0
  %1186 = vmatmul.mubr.bf16.gmra.mrb[0].mxu0 %v866
  %v1187 = vpop.f32.mrb[0].mxu0
  %v1188 = vadd.f32 %v659, %v1187
  %v1189 = vpop.f32.mrb[0].mxu0
  %v1190 = vpop.f32.mrb[0].mxu0
  %v1191 = vadd.f32 %v662, %v1190
  %v1192 = vpop.f32.mrb[0].mxu0
  %1193 = vmatprep.mubr.bf16.mxu0 0
  %1194 = vmatmul.mubr.bf16.gmra.mrb[0].mxu0 %v867
  %v1195 = vpop.f32.mrb[0].mxu0
  %v1196 = vadd.f32 %v667, %v1195
  %v1197 = vpop.f32.mrb[0].mxu0
  %v1198 = vpop.f32.mrb[0].mxu0
  %v1199 = vadd.f32 %v670, %v1198
  %v1200 = vpop.f32.mrb[0].mxu0
  %1201 = vmatprep.mubr.bf16.mxu0 0
  %1202 = vmatmul.mubr.bf16.gmra.mrb[0].mxu0 %v868
  %v1203 = vpop.f32.mrb[0].mxu0
  %v1204 = vadd.f32 %v675, %v1203
  %v1205 = vpop.f32.mrb[0].mxu0
  %v1206 = vpop.f32.mrb[0].mxu0
  %v1207 = vadd.f32 %v678, %v1206
  %v1208 = vpop.f32.mrb[0].mxu0
  %1209 = vmatprep.mubr.bf16.mxu0 0
  %1210 = vmatmul.mubr.bf16.gmra.mrb[0].mxu0 %v869
  %v1211 = vpop.f32.mrb[0].mxu0
  %v1212 = vadd.f32 %v683, %v1211
  %v1213 = vpop.f32.mrb[0].mxu0
  %v1214 = vpop.f32.mrb[0].mxu0
  %v1215 = vadd.f32 %v686, %v1214
  %v1216 = vpop.f32.mrb[0].mxu0
  %1217 = vmatprep.mubr.bf16.mxu0 0
  %1218 = vmatmul.mubr.bf16.gmra.mrb[0].mxu0 %v870
  %v1219 = vpop.f32.mrb[0].mxu0
  %v1220 = vadd.f32 %v691, %v1219
  %v1221 = vpop.f32.mrb[0].mxu0
  %v1222 = vpop.f32.mrb[0].mxu0
  %v1223 = vadd.f32 %v694, %v1222
  %v1224 = vpop.f32.mrb[0].mxu0
  %1225 = vmatprep.mubr.bf16.mxu0 0
  %1226 = vmatmul.mubr.bf16.gmra.mrb[0].mxu0 %v871
  %v1227 = vpop.f32.mrb[0].mxu0
  %v1228 = vadd.f32 %v699, %v1227
  %v1229 = vpop.f32.mrb[0].mxu0
  %v1230 = vpop.f32.mrb[0].mxu0
  %v1231 = vadd.f32 %v702, %v1230
  %v1232 = vpop.f32.mrb[0].mxu0
  %1233 = vmatprep.mubr.bf16.mxu0 0
  %1234 = vmatmul.mubr.bf16.gmra.mrb[0].mxu0 %v872
  %v1235 = vpop.f32.mrb[0].mxu0
  %v1236 = vadd.f32 %v707, %v1235
  %v1237 = vpop.f32.mrb[0].mxu0
  %v1238 = vpop.f32.mrb[0].mxu0
  %v1239 = vadd.f32 %v710, %v1238
  %v1240 = vpop.f32.mrb[0].mxu0
  %1241 = vdwg.mxu0
  %v1242 = vld [vmem:[%s4] sm:$0x1]
  %v1244 = vlaneseq
  %v1245 = vshrl.u32 %v1244, 7
  %v1246 = vsub.s32 0, %v1245
  %v1247 = vrot.slane %v1242, %v1246
  %v1249 = vmul.f32 %v988, %v1247
  %v1250 = vmul.f32 %v991, %v1247
  %v1251 = vmul.f32 %v996, %v1247
  %v1252 = vmul.f32 %v999, %v1247
  %v1253 = vmul.f32 %v1004, %v1247
  %v1254 = vmul.f32 %v1007, %v1247
  %v1255 = vmul.f32 %v1012, %v1247
  %v1256 = vmul.f32 %v1015, %v1247
  %v1257 = vmul.f32 %v1020, %v1247
  %v1258 = vmul.f32 %v1023, %v1247
  %v1259 = vmul.f32 %v1028, %v1247
  %v1260 = vmul.f32 %v1031, %v1247
  %v1261 = vmul.f32 %v1036, %v1247
  %v1262 = vmul.f32 %v1039, %v1247
  %v1263 = vmul.f32 %v1044, %v1247
  %v1264 = vmul.f32 %v1047, %v1247
  %v1265 = vmul.f32 %v1052, %v1247
  %v1266 = vmul.f32 %v1055, %v1247
  %v1267 = vmul.f32 %v1060, %v1247
  %v1268 = vmul.f32 %v1063, %v1247
  %v1269 = vmul.f32 %v1068, %v1247
  %v1270 = vmul.f32 %v1071, %v1247
  %v1271 = vmul.f32 %v1076, %v1247
  %v1272 = vmul.f32 %v1079, %v1247
  %v1273 = vmul.f32 %v1084, %v1247
  %v1274 = vmul.f32 %v1087, %v1247
  %v1275 = vmul.f32 %v1092, %v1247
  %v1276 = vmul.f32 %v1095, %v1247
  %v1277 = vmul.f32 %v1100, %v1247
  %v1278 = vmul.f32 %v1103, %v1247
  %v1279 = vmul.f32 %v1108, %v1247
  %v1280 = vmul.f32 %v1111, %v1247
  %v1281 = vmul.f32 %v1116, %v1247
  %v1282 = vmul.f32 %v1119, %v1247
  %v1283 = vmul.f32 %v1124, %v1247
  %v1284 = vmul.f32 %v1127, %v1247
  %v1285 = vmul.f32 %v1132, %v1247
  %v1286 = vmul.f32 %v1135, %v1247
  %v1287 = vmul.f32 %v1140, %v1247
  %v1288 = vmul.f32 %v1143, %v1247
  %v1289 = vmul.f32 %v1148, %v1247
  %v1290 = vmul.f32 %v1151, %v1247
  %v1291 = vmul.f32 %v1156, %v1247
  %v1292 = vmul.f32 %v1159, %v1247
  %v1293 = vmul.f32 %v1164, %v1247
  %v1294 = vmul.f32 %v1167, %v1247
  %v1295 = vmul.f32 %v1172, %v1247
  %v1296 = vmul.f32 %v1175, %v1247
  %v1297 = vmul.f32 %v1180, %v1247
  %v1298 = vmul.f32 %v1183, %v1247
  %v1299 = vmul.f32 %v1188, %v1247
  %v1300 = vmul.f32 %v1191, %v1247
  %v1301 = vmul.f32 %v1196, %v1247
  %v1302 = vmul.f32 %v1199, %v1247
  %v1303 = vmul.f32 %v1204, %v1247
  %v1304 = vmul.f32 %v1207, %v1247
  %v1305 = vmul.f32 %v1212, %v1247
  %v1306 = vmul.f32 %v1215, %v1247
  %v1307 = vmul.f32 %v1220, %v1247
  %v1308 = vmul.f32 %v1223, %v1247
  %v1309 = vmul.f32 %v1228, %v1247
  %v1310 = vmul.f32 %v1231, %v1247
  %v1311 = vmul.f32 %v1236, %v1247
  %v1312 = vmul.f32 %v1239, %v1247
  %v1313 = vld [vmem:[%s5] sm:$0x1]
  %v1315 = vlaneseq
  %v1316 = vshrl.u32 %v1315, 7
  %v1317 = vsub.s32 0, %v1316
  %v1318 = vrot.slane %v1313, %v1317
  %v1320 = vadd.f32 %v1249, %v1318
  %v1321 = vadd.f32 %v1250, %v1318
  %v1322 = vadd.f32 %v1251, %v1318
  %v1323 = vadd.f32 %v1252, %v1318
  %v1324 = vadd.f32 %v1253, %v1318
  %v1325 = vadd.f32 %v1254, %v1318
  %v1326 = vadd.f32 %v1255, %v1318
  %v1327 = vadd.f32 %v1256, %v1318
  %v1328 = vadd.f32 %v1257, %v1318
  %v1329 = vadd.f32 %v1258, %v1318
  %v1330 = vadd.f32 %v1259, %v1318
  %v1331 = vadd.f32 %v1260, %v1318
  %v1332 = vadd.f32 %v1261, %v1318
  %v1333 = vadd.f32 %v1262, %v1318
  %v1334 = vadd.f32 %v1263, %v1318
  %v1335 = vadd.f32 %v1264, %v1318
  %v1336 = vadd.f32 %v1265, %v1318
  %v1337 = vadd.f32 %v1266, %v1318
  %v1338 = vadd.f32 %v1267, %v1318
  %v1339 = vadd.f32 %v1268, %v1318
  %v1340 = vadd.f32 %v1269, %v1318
  %v1341 = vadd.f32 %v1270, %v1318
  %v1342 = vadd.f32 %v1271, %v1318
  %v1343 = vadd.f32 %v1272, %v1318
  %v1344 = vadd.f32 %v1273, %v1318
  %v1345 = vadd.f32 %v1274, %v1318
  %v1346 = vadd.f32 %v1275, %v1318
  %v1347 = vadd.f32 %v1276, %v1318
  %v1348 = vadd.f32 %v1277, %v1318
  %v1349 = vadd.f32 %v1278, %v1318
  %v1350 = vadd.f32 %v1279, %v1318
  %v1351 = vadd.f32 %v1280, %v1318
  %v1352 = vadd.f32 %v1281, %v1318
  %v1353 = vadd.f32 %v1282, %v1318
  %v1354 = vadd.f32 %v1283, %v1318
  %v1355 = vadd.f32 %v1284, %v1318
  %v1356 = vadd.f32 %v1285, %v1318
  %v1357 = vadd.f32 %v1286, %v1318
  %v1358 = vadd.f32 %v1287, %v1318
  %v1359 = vadd.f32 %v1288, %v1318
  %v1360 = vadd.f32 %v1289, %v1318
  %v1361 = vadd.f32 %v1290, %v1318
  %v1362 = vadd.f32 %v1291, %v1318
  %v1363 = vadd.f32 %v1292, %v1318
  %v1364 = vadd.f32 %v1293, %v1318
  %v1365 = vadd.f32 %v1294, %v1318
  %v1366 = vadd.f32 %v1295, %v1318
  %v1367 = vadd.f32 %v1296, %v1318
  %v1368 = vadd.f32 %v1297, %v1318
  %v1369 = vadd.f32 %v1298, %v1318
  %v1370 = vadd.f32 %v1299, %v1318
  %v1371 = vadd.f32 %v1300, %v1318
  %v1372 = vadd.f32 %v1301, %v1318
  %v1373 = vadd.f32 %v1302, %v1318
  %v1374 = vadd.f32 %v1303, %v1318
  %v1375 = vadd.f32 %v1304, %v1318
  %v1376 = vadd.f32 %v1305, %v1318
  %v1377 = vadd.f32 %v1306, %v1318
  %v1378 = vadd.f32 %v1307, %v1318
  %v1379 = vadd.f32 %v1308, %v1318
  %v1380 = vadd.f32 %v1309, %v1318
  %v1381 = vadd.f32 %v1310, %v1318
  %v1382 = vadd.f32 %v1311, %v1318
  %v1383 = vadd.f32 %v1312, %v1318
  %v1384 = vsub.f32 0.0, %v1320
  %v1385 = vsub.f32 0.0, %v1321
  %v1386 = vsub.f32 0.0, %v1322
  %v1387 = vsub.f32 0.0, %v1323
  %v1388 = vsub.f32 0.0, %v1324
  %v1389 = vsub.f32 0.0, %v1325
  %v1390 = vsub.f32 0.0, %v1326
  %v1391 = vsub.f32 0.0, %v1327
  %v1392 = vsub.f32 0.0, %v1328
  %v1393 = vsub.f32 0.0, %v1329
  %v1394 = vsub.f32 0.0, %v1330
  %v1395 = vsub.f32 0.0, %v1331
  %v1396 = vsub.f32 0.0, %v1332
  %v1397 = vsub.f32 0.0, %v1333
  %v1398 = vsub.f32 0.0, %v1334
  %v1399 = vsub.f32 0.0, %v1335
  %v1400 = vsub.f32 0.0, %v1336
  %v1401 = vsub.f32 0.0, %v1337
  %v1402 = vsub.f32 0.0, %v1338
  %v1403 = vsub.f32 0.0, %v1339
  %v1404 = vsub.f32 0.0, %v1340
  %v1405 = vsub.f32 0.0, %v1341
  %v1406 = vsub.f32 0.0, %v1342
  %v1407 = vsub.f32 0.0, %v1343
  %v1408 = vsub.f32 0.0, %v1344
  %v1409 = vsub.f32 0.0, %v1345
  %v1410 = vsub.f32 0.0, %v1346
  %v1411 = vsub.f32 0.0, %v1347
  %v1412 = vsub.f32 0.0, %v1348
  %v1413 = vsub.f32 0.0, %v1349
  %v1414 = vsub.f32 0.0, %v1350
  %v1415 = vsub.f32 0.0, %v1351
  %v1416 = vsub.f32 0.0, %v1352
  %v1417 = vsub.f32 0.0, %v1353
  %v1418 = vsub.f32 0.0, %v1354
  %v1419 = vsub.f32 0.0, %v1355
  %v1420 = vsub.f32 0.0, %v1356
  %v1421 = vsub.f32 0.0, %v1357
  %v1422 = vsub.f32 0.0, %v1358
  %v1423 = vsub.f32 0.0, %v1359
  %v1424 = vsub.f32 0.0, %v1360
  %v1425 = vsub.f32 0.0, %v1361
  %v1426 = vsub.f32 0.0, %v1362
  %v1427 = vsub.f32 0.0, %v1363
  %v1428 = vsub.f32 0.0, %v1364
  %v1429 = vsub.f32 0.0, %v1365
  %v1430 = vsub.f32 0.0, %v1366
  %v1431 = vsub.f32 0.0, %v1367
  %v1432 = vsub.f32 0.0, %v1368
  %v1433 = vsub.f32 0.0, %v1369
  %v1434 = vsub.f32 0.0, %v1370
  %v1435 = vsub.f32 0.0, %v1371
  %v1436 = vsub.f32 0.0, %v1372
  %v1437 = vsub.f32 0.0, %v1373
  %v1438 = vsub.f32 0.0, %v1374
  %v1439 = vsub.f32 0.0, %v1375
  %v1440 = vsub.f32 0.0, %v1376
  %v1441 = vsub.f32 0.0, %v1377
  %v1442 = vsub.f32 0.0, %v1378
  %v1443 = vsub.f32 0.0, %v1379
  %v1444 = vsub.f32 0.0, %v1380
  %v1445 = vsub.f32 0.0, %v1381
  %v1446 = vsub.f32 0.0, %v1382
  %v1447 = vsub.f32 0.0, %v1383
  %v1448 = vmul.f32 %v1384, 1.442695
  %v1449 = vpow.pop %v1448
  %v1450 = vmul.f32 %v1385, 1.442695
  %v1451 = vpow.pop %v1450
  %v1452 = vmul.f32 %v1386, 1.442695
  %v1453 = vpow.pop %v1452
  %v1454 = vmul.f32 %v1387, 1.442695
  %v1455 = vpow.pop %v1454
  %v1456 = vmul.f32 %v1388, 1.442695
  %v1457 = vpow.pop %v1456
  %v1458 = vmul.f32 %v1389, 1.442695
  %v1459 = vpow.pop %v1458
  %v1460 = vmul.f32 %v1390, 1.442695
  %v1461 = vpow.pop %v1460
  %v1462 = vmul.f32 %v1391, 1.442695
  %v1463 = vpow.pop %v1462
  %v1464 = vmul.f32 %v1392, 1.442695
  %v1465 = vpow.pop %v1464
  %v1466 = vmul.f32 %v1393, 1.442695
  %v1467 = vpow.pop %v1466
  %v1468 = vmul.f32 %v1394, 1.442695
  %v1469 = vpow.pop %v1468
  %v1470 = vmul.f32 %v1395, 1.442695
  %v1471 = vpow.pop %v1470
  %v1472 = vmul.f32 %v1396, 1.442695
  %v1473 = vpow.pop %v1472
  %v1474 = vmul.f32 %v1397, 1.442695
  %v1475 = vpow.pop %v1474
  %v1476 = vmul.f32 %v1398, 1.442695
  %v1477 = vpow.pop %v1476
  %v1478 = vmul.f32 %v1399, 1.442695
  %v1479 = vpow.pop %v1478
  %v1480 = vmul.f32 %v1400, 1.442695
  %v1481 = vpow.pop %v1480
  %v1482 = vmul.f32 %v1401, 1.442695
  %v1483 = vpow.pop %v1482
  %v1484 = vmul.f32 %v1402, 1.442695
  %v1485 = vpow.pop %v1484
  %v1486 = vmul.f32 %v1403, 1.442695
  %v1487 = vpow.pop %v1486
  %v1488 = vmul.f32 %v1404, 1.442695
  %v1489 = vpow.pop %v1488
  %v1490 = vmul.f32 %v1405, 1.442695
  %v1491 = vpow.pop %v1490
  %v1492 = vmul.f32 %v1406, 1.442695
  %v1493 = vpow.pop %v1492
  %v1494 = vmul.f32 %v1407, 1.442695
  %v1495 = vpow.pop %v1494
  %v1496 = vmul.f32 %v1408, 1.442695
  %v1497 = vpow.pop %v1496
  %v1498 = vmul.f32 %v1409, 1.442695
  %v1499 = vpow.pop %v1498
  %v1500 = vmul.f32 %v1410, 1.442695
  %v1501 = vpow.pop %v1500
  %v1502 = vmul.f32 %v1411, 1.442695
  %v1503 = vpow.pop %v1502
  %v1504 = vmul.f32 %v1412, 1.442695
  %v1505 = vpow.pop %v1504
  %v1506 = vmul.f32 %v1413, 1.442695
  %v1507 = vpow.pop %v1506
  %v1508 = vmul.f32 %v1414, 1.442695
  %v1509 = vpow.pop %v1508
  %v1510 = vmul.f32 %v1415, 1.442695
  %v1511 = vpow.pop %v1510
  %v1512 = vmul.f32 %v1416, 1.442695
  %v1513 = vpow.pop %v1512
  %v1514 = vmul.f32 %v1417, 1.442695
  %v1515 = vpow.pop %v1514
  %v1516 = vmul.f32 %v1418, 1.442695
  %v1517 = vpow.pop %v1516
  %v1518 = vmul.f32 %v1419, 1.442695
  %v1519 = vpow.pop %v1518
  %v1520 = vmul.f32 %v1420, 1.442695
  %v1521 = vpow.pop %v1520
  %v1522 = vmul.f32 %v1421, 1.442695
  %v1523 = vpow.pop %v1522
  %v1524 = vmul.f32 %v1422, 1.442695
  %v1525 = vpow.pop %v1524
  %v1526 = vmul.f32 %v1423, 1.442695
  %v1527 = vpow.pop %v1526
  %v1528 = vmul.f32 %v1424, 1.442695
  %v1529 = vpow.pop %v1528
  %v1530 = vmul.f32 %v1425, 1.442695
  %v1531 = vpow.pop %v1530
  %v1532 = vmul.f32 %v1426, 1.442695
  %v1533 = vpow.pop %v1532
  %v1534 = vmul.f32 %v1427, 1.442695
  %v1535 = vpow.pop %v1534
  %v1536 = vmul.f32 %v1428, 1.442695
  %v1537 = vpow.pop %v1536
  %v1538 = vmul.f32 %v1429, 1.442695
  %v1539 = vpow.pop %v1538
  %v1540 = vmul.f32 %v1430, 1.442695
  %v1541 = vpow.pop %v1540
  %v1542 = vmul.f32 %v1431, 1.442695
  %v1543 = vpow.pop %v1542
  %v1544 = vmul.f32 %v1432, 1.442695
  %v1545 = vpow.pop %v1544
  %v1546 = vmul.f32 %v1433, 1.442695
  %v1547 = vpow.pop %v1546
  %v1548 = vmul.f32 %v1434, 1.442695
  %v1549 = vpow.pop %v1548
  %v1550 = vmul.f32 %v1435, 1.442695
  %v1551 = vpow.pop %v1550
  %v1552 = vmul.f32 %v1436, 1.442695
  %v1553 = vpow.pop %v1552
  %v1554 = vmul.f32 %v1437, 1.442695
  %v1555 = vpow.pop %v1554
  %v1556 = vmul.f32 %v1438, 1.442695
  %v1557 = vpow.pop %v1556
  %v1558 = vmul.f32 %v1439, 1.442695
  %v1559 = vpow.pop %v1558
  %v1560 = vmul.f32 %v1440, 1.442695
  %v1561 = vpow.pop %v1560
  %v1562 = vmul.f32 %v1441, 1.442695
  %v1563 = vpow.pop %v1562
  %v1564 = vmul.f32 %v1442, 1.442695
  %v1565 = vpow.pop %v1564
  %v1566 = vmul.f32 %v1443, 1.442695
  %v1567 = vpow.pop %v1566
  %v1568 = vmul.f32 %v1444, 1.442695
  %v1569 = vpow.pop %v1568
  %v1570 = vmul.f32 %v1445, 1.442695
  %v1571 = vpow.pop %v1570
  %v1572 = vmul.f32 %v1446, 1.442695
  %v1573 = vpow.pop %v1572
  %v1574 = vmul.f32 %v1447, 1.442695
  %v1575 = vpow.pop %v1574
  %v1576 = vadd.f32 %v1449, 1.0
  %v1577 = vadd.f32 %v1451, 1.0
  %v1578 = vadd.f32 %v1453, 1.0
  %v1579 = vadd.f32 %v1455, 1.0
  %v1580 = vadd.f32 %v1457, 1.0
  %v1581 = vadd.f32 %v1459, 1.0
  %v1582 = vadd.f32 %v1461, 1.0
  %v1583 = vadd.f32 %v1463, 1.0
  %v1584 = vadd.f32 %v1465, 1.0
  %v1585 = vadd.f32 %v1467, 1.0
  %v1586 = vadd.f32 %v1469, 1.0
  %v1587 = vadd.f32 %v1471, 1.0
  %v1588 = vadd.f32 %v1473, 1.0
  %v1589 = vadd.f32 %v1475, 1.0
  %v1590 = vadd.f32 %v1477, 1.0
  %v1591 = vadd.f32 %v1479, 1.0
  %v1592 = vadd.f32 %v1481, 1.0
  %v1593 = vadd.f32 %v1483, 1.0
  %v1594 = vadd.f32 %v1485, 1.0
  %v1595 = vadd.f32 %v1487, 1.0
  %v1596 = vadd.f32 %v1489, 1.0
  %v1597 = vadd.f32 %v1491, 1.0
  %v1598 = vadd.f32 %v1493, 1.0
  %v1599 = vadd.f32 %v1495, 1.0
  %v1600 = vadd.f32 %v1497, 1.0
  %v1601 = vadd.f32 %v1499, 1.0
  %v1602 = vadd.f32 %v1501, 1.0
  %v1603 = vadd.f32 %v1503, 1.0
  %v1604 = vadd.f32 %v1505, 1.0
  %v1605 = vadd.f32 %v1507, 1.0
  %v1606 = vadd.f32 %v1509, 1.0
  %v1607 = vadd.f32 %v1511, 1.0
  %v1608 = vadd.f32 %v1513, 1.0
  %v1609 = vadd.f32 %v1515, 1.0
  %v1610 = vadd.f32 %v1517, 1.0
  %v1611 = vadd.f32 %v1519, 1.0
  %v1612 = vadd.f32 %v1521, 1.0
  %v1613 = vadd.f32 %v1523, 1.0
  %v1614 = vadd.f32 %v1525, 1.0
  %v1615 = vadd.f32 %v1527, 1.0
  %v1616 = vadd.f32 %v1529, 1.0
  %v1617 = vadd.f32 %v1531, 1.0
  %v1618 = vadd.f32 %v1533, 1.0
  %v1619 = vadd.f32 %v1535, 1.0
  %v1620 = vadd.f32 %v1537, 1.0
  %v1621 = vadd.f32 %v1539, 1.0
  %v1622 = vadd.f32 %v1541, 1.0
  %v1623 = vadd.f32 %v1543, 1.0
  %v1624 = vadd.f32 %v1545, 1.0
  %v1625 = vadd.f32 %v1547, 1.0
  %v1626 = vadd.f32 %v1549, 1.0
  %v1627 = vadd.f32 %v1551, 1.0
  %v1628 = vadd.f32 %v1553, 1.0
  %v1629 = vadd.f32 %v1555, 1.0
  %v1630 = vadd.f32 %v1557, 1.0
  %v1631 = vadd.f32 %v1559, 1.0
  %v1632 = vadd.f32 %v1561, 1.0
  %v1633 = vadd.f32 %v1563, 1.0
  %v1634 = vadd.f32 %v1565, 1.0
  %v1635 = vadd.f32 %v1567, 1.0
  %v1636 = vadd.f32 %v1569, 1.0
  %v1637 = vadd.f32 %v1571, 1.0
  %v1638 = vadd.f32 %v1573, 1.0
  %v1639 = vadd.f32 %v1575, 1.0
  %v1640 = vrcp.pop %v1576
  %v1641 = vrcp.pop %v1577
  %v1642 = vrcp.pop %v1578
  %v1643 = vrcp.pop %v1579
  %v1644 = vrcp.pop %v1580
  %v1645 = vrcp.pop %v1581
  %v1646 = vrcp.pop %v1582
  %v1647 = vrcp.pop %v1583
  %v1648 = vrcp.pop %v1584
  %v1649 = vrcp.pop %v1585
  %v1650 = vrcp.pop %v1586
  %v1651 = vrcp.pop %v1587
  %v1652 = vrcp.pop %v1588
  %v1653 = vrcp.pop %v1589
  %v1654 = vrcp.pop %v1590
  %v1655 = vrcp.pop %v1591
  %v1656 = vrcp.pop %v1592
  %v1657 = vrcp.pop %v1593
  %v1658 = vrcp.pop %v1594
  %v1659 = vrcp.pop %v1595
  %v1660 = vrcp.pop %v1596
  %v1661 = vrcp.pop %v1597
  %v1662 = vrcp.pop %v1598
  %v1663 = vrcp.pop %v1599
  %v1664 = vrcp.pop %v1600
  %v1665 = vrcp.pop %v1601
  %v1666 = vrcp.pop %v1602
  %v1667 = vrcp.pop %v1603
  %v1668 = vrcp.pop %v1604
  %v1669 = vrcp.pop %v1605
  %v1670 = vrcp.pop %v1606
  %v1671 = vrcp.pop %v1607
  %v1672 = vrcp.pop %v1608
  %v1673 = vrcp.pop %v1609
  %v1674 = vrcp.pop %v1610
  %v1675 = vrcp.pop %v1611
  %v1676 = vrcp.pop %v1612
  %v1677 = vrcp.pop %v1613
  %v1678 = vrcp.pop %v1614
  %v1679 = vrcp.pop %v1615
  %v1680 = vrcp.pop %v1616
  %v1681 = vrcp.pop %v1617
  %v1682 = vrcp.pop %v1618
  %v1683 = vrcp.pop %v1619
  %v1684 = vrcp.pop %v1620
  %v1685 = vrcp.pop %v1621
  %v1686 = vrcp.pop %v1622
  %v1687 = vrcp.pop %v1623
  %v1688 = vrcp.pop %v1624
  %v1689 = vrcp.pop %v1625
  %v1690 = vrcp.pop %v1626
  %v1691 = vrcp.pop %v1627
  %v1692 = vrcp.pop %v1628
  %v1693 = vrcp.pop %v1629
  %v1694 = vrcp.pop %v1630
  %v1695 = vrcp.pop %v1631
  %v1696 = vrcp.pop %v1632
  %v1697 = vrcp.pop %v1633
  %v1698 = vrcp.pop %v1634
  %v1699 = vrcp.pop %v1635
  %v1700 = vrcp.pop %v1636
  %v1701 = vrcp.pop %v1637
  %v1702 = vrcp.pop %v1638
  %v1703 = vrcp.pop %v1639
  %v1704 = vmul.f32 %v1320, %v1640
  %v1705 = vmul.f32 %v1321, %v1641
  %v1706 = vmul.f32 %v1322, %v1642
  %v1707 = vmul.f32 %v1323, %v1643
  %v1708 = vmul.f32 %v1324, %v1644
  %v1709 = vmul.f32 %v1325, %v1645
  %v1710 = vmul.f32 %v1326, %v1646
  %v1711 = vmul.f32 %v1327, %v1647
  %v1712 = vmul.f32 %v1328, %v1648
  %v1713 = vmul.f32 %v1329, %v1649
  %v1714 = vmul.f32 %v1330, %v1650
  %v1715 = vmul.f32 %v1331, %v1651
  %v1716 = vmul.f32 %v1332, %v1652
  %v1717 = vmul.f32 %v1333, %v1653
  %v1718 = vmul.f32 %v1334, %v1654
  %v1719 = vmul.f32 %v1335, %v1655
  %v1720 = vmul.f32 %v1336, %v1656
  %v1721 = vmul.f32 %v1337, %v1657
  %v1722 = vmul.f32 %v1338, %v1658
  %v1723 = vmul.f32 %v1339, %v1659
  %v1724 = vmul.f32 %v1340, %v1660
  %v1725 = vmul.f32 %v1341, %v1661
  %v1726 = vmul.f32 %v1342, %v1662
  %v1727 = vmul.f32 %v1343, %v1663
  %v1728 = vmul.f32 %v1344, %v1664
  %v1729 = vmul.f32 %v1345, %v1665
  %v1730 = vmul.f32 %v1346, %v1666
  %v1731 = vmul.f32 %v1347, %v1667
  %v1732 = vmul.f32 %v1348, %v1668
  %v1733 = vmul.f32 %v1349, %v1669
  %v1734 = vmul.f32 %v1350, %v1670
  %v1735 = vmul.f32 %v1351, %v1671
  %v1736 = vmul.f32 %v1352, %v1672
  %v1737 = vmul.f32 %v1353, %v1673
  %v1738 = vmul.f32 %v1354, %v1674
  %v1739 = vmul.f32 %v1355, %v1675
  %v1740 = vmul.f32 %v1356, %v1676
  %v1741 = vmul.f32 %v1357, %v1677
  %v1742 = vmul.f32 %v1358, %v1678
  %v1743 = vmul.f32 %v1359, %v1679
  %v1744 = vmul.f32 %v1360, %v1680
  %v1745 = vmul.f32 %v1361, %v1681
  %v1746 = vmul.f32 %v1362, %v1682
  %v1747 = vmul.f32 %v1363, %v1683
  %v1748 = vmul.f32 %v1364, %v1684
  %v1749 = vmul.f32 %v1365, %v1685
  %v1750 = vmul.f32 %v1366, %v1686
  %v1751 = vmul.f32 %v1367, %v1687
  %v1752 = vmul.f32 %v1368, %v1688
  %v1753 = vmul.f32 %v1369, %v1689
  %v1754 = vmul.f32 %v1370, %v1690
  %v1755 = vmul.f32 %v1371, %v1691
  %v1756 = vmul.f32 %v1372, %v1692
  %v1757 = vmul.f32 %v1373, %v1693
  %v1758 = vmul.f32 %v1374, %v1694
  %v1759 = vmul.f32 %v1375, %v1695
  %v1760 = vmul.f32 %v1376, %v1696
  %v1761 = vmul.f32 %v1377, %v1697
  %v1762 = vmul.f32 %v1378, %v1698
  %v1763 = vmul.f32 %v1379, %v1699
  %v1764 = vmul.f32 %v1380, %v1700
  %v1765 = vmul.f32 %v1381, %v1701
  %v1766 = vmul.f32 %v1382, %v1702
  %v1767 = vmul.f32 %v1383, %v1703
  %1768 = vst [vmem:[%s6] sm:$0xff] %v1704
  %1769 = vst [vmem:[%s6 + $0x8] sm:$0xff] %v1705
  %1770 = vst [vmem:[%s6 + $0x10] sm:$0xff] %v1706
  %1771 = vst [vmem:[%s6 + $0x18] sm:$0xff] %v1707
  %1772 = vst [vmem:[%s6 + $0x20] sm:$0xff] %v1708
  %1773 = vst [vmem:[%s6 + $0x28] sm:$0xff] %v1709
  %1774 = vst [vmem:[%s6 + $0x30] sm:$0xff] %v1710
  %1775 = vst [vmem:[%s6 + $0x38] sm:$0xff] %v1711
  %1776 = vst [vmem:[%s6 + $0x40] sm:$0xff] %v1712
  %1777 = vst [vmem:[%s6 + $0x48] sm:$0xff] %v1713
  %1778 = vst [vmem:[%s6 + $0x50] sm:$0xff] %v1714
  %1779 = vst [vmem:[%s6 + $0x58] sm:$0xff] %v1715
  %1780 = vst [vmem:[%s6 + $0x60] sm:$0xff] %v1716
  %1781 = vst [vmem:[%s6 + $0x68] sm:$0xff] %v1717
  %1782 = vst [vmem:[%s6 + $0x70] sm:$0xff] %v1718
  %1783 = vst [vmem:[%s6 + $0x78] sm:$0xff] %v1719
  %1784 = vst [vmem:[%s6 + $0x80] sm:$0xff] %v1720
  %1785 = vst [vmem:[%s6 + $0x88] sm:$0xff] %v1721
  %1786 = vst [vmem:[%s6 + $0x90] sm:$0xff] %v1722
  %1787 = vst [vmem:[%s6 + $0x98] sm:$0xff] %v1723
  %1788 = vst [vmem:[%s6 + $0xa0] sm:$0xff] %v1724
  %1789 = vst [vmem:[%s6 + $0xa8] sm:$0xff] %v1725
  %1790 = vst [vmem:[%s6 + $0xb0] sm:$0xff] %v1726
  %1791 = vst [vmem:[%s6 + $0xb8] sm:$0xff] %v1727
  %1792 = vst [vmem:[%s6 + $0xc0] sm:$0xff] %v1728
  %1793 = vst [vmem:[%s6 + $0xc8] sm:$0xff] %v1729
  %1794 = vst [vmem:[%s6 + $0xd0] sm:$0xff] %v1730
  %1795 = vst [vmem:[%s6 + $0xd8] sm:$0xff] %v1731
  %1796 = vst [vmem:[%s6 + $0xe0] sm:$0xff] %v1732
  %1797 = vst [vmem:[%s6 + $0xe8] sm:$0xff] %v1733
  %1798 = vst [vmem:[%s6 + $0xf0] sm:$0xff] %v1734
  %1799 = vst [vmem:[%s6 + $0xf8] sm:$0xff] %v1735
  %1800 = vst [vmem:[%s6 + $0x100] sm:$0xff] %v1736
  %1801 = vst [vmem:[%s6 + $0x108] sm:$0xff] %v1737
  %1802 = vst [vmem:[%s6 + $0x110] sm:$0xff] %v1738
  %1803 = vst [vmem:[%s6 + $0x118] sm:$0xff] %v1739
  %1804 = vst [vmem:[%s6 + $0x120] sm:$0xff] %v1740
  %1805 = vst [vmem:[%s6 + $0x128] sm:$0xff] %v1741
  %1806 = vst [vmem:[%s6 + $0x130] sm:$0xff] %v1742
  %1807 = vst [vmem:[%s6 + $0x138] sm:$0xff] %v1743
  %1808 = vst [vmem:[%s6 + $0x140] sm:$0xff] %v1744
  %1809 = vst [vmem:[%s6 + $0x148] sm:$0xff] %v1745
  %1810 = vst [vmem:[%s6 + $0x150] sm:$0xff] %v1746
  %1811 = vst [vmem:[%s6 + $0x158] sm:$0xff] %v1747
  %1812 = vst [vmem:[%s6 + $0x160] sm:$0xff] %v1748
  %1813 = vst [vmem:[%s6 + $0x168] sm:$0xff] %v1749
  %1814 = vst [vmem:[%s6 + $0x170] sm:$0xff] %v1750
  %1815 = vst [vmem:[%s6 + $0x178] sm:$0xff] %v1751
  %1816 = vst [vmem:[%s6 + $0x180] sm:$0xff] %v1752
  %1817 = vst [vmem:[%s6 + $0x188] sm:$0xff] %v1753
  %1818 = vst [vmem:[%s6 + $0x190] sm:$0xff] %v1754
  %1819 = vst [vmem:[%s6 + $0x198] sm:$0xff] %v1755
  %1820 = vst [vmem:[%s6 + $0x1a0] sm:$0xff] %v1756
  %1821 = vst [vmem:[%s6 + $0x1a8] sm:$0xff] %v1757
  %1822 = vst [vmem:[%s6 + $0x1b0] sm:$0xff] %v1758
  %1823 = vst [vmem:[%s6 + $0x1b8] sm:$0xff] %v1759
  %1824 = vst [vmem:[%s6 + $0x1c0] sm:$0xff] %v1760
  %1825 = vst [vmem:[%s6 + $0x1c8] sm:$0xff] %v1761
  %1826 = vst [vmem:[%s6 + $0x1d0] sm:$0xff] %v1762
  %1827 = vst [vmem:[%s6 + $0x1d8] sm:$0xff] %v1763
  %1828 = vst [vmem:[%s6 + $0x1e0] sm:$0xff] %v1764
  %1829 = vst [vmem:[%s6 + $0x1e8] sm:$0xff] %v1765
  %1830 = vst [vmem:[%s6 + $0x1f0] sm:$0xff] %v1766
  %1831 = vst [vmem:[%s6 + $0x1f8] sm:$0xff] %v1767
  // Predicated region
  $region26: #{_lambda_.29} parent=0 // pred_check
    _
  $region27: #{_lambda_.29} parent=0 // pred_check_branch
    %1833 = sbr.rel (0) target = $region29
  $region28: #{_lambda_.29} parent=0 // pred_region
    _
  $region29: #{_lambda_.29} parent=0 // pred_fallthru
    _
  // Predicated region
  $region30: #{_lambda_.29} parent=0 // pred_check
    _
  $region31: #{_lambda_.29} parent=0 // pred_check_branch
    %1835 = sbr.rel (0) target = $region33
  $region32: #{_lambda_.29} parent=0 // pred_region
    _
  $region33: #{_lambda_.29} parent=0 // pred_fallthru
    _

// kernel: _lambda_.34
$region0: #{_lambda_.34}
  #allocation0 [shape = 'u32[]', space=smem, size = 0x4, offset = 0x4, fixed_abs, tag = 'smem constant byte address 0x4 - core index']
  #allocation1 [shape = 'u32[144,128]{1,0:T(1,128)}', space=vmem, size = 0x12000, scoped, tag = 'internal scratch']
  %s0 = inlined_call_operand.vmem [shape: bf16[128,128], index: 0, kind: input, shape index: {}]
  %s1 = inlined_call_operand.vmem [shape: bf16[128,128], index: 1, kind: input, shape index: {}]
  %s2 = inlined_call_operand.vmem [shape: bf16[128,128], index: 2, kind: input, shape index: {}]
  %s3 = inlined_call_operand.vmem [shape: bf16[128,128], index: 3, kind: input, shape index: {}]
  %s4 = inlined_call_operand.vmem [shape: f32[1,128], index: 4, kind: input, shape index: {}]
  %s5 = inlined_call_operand.vmem [shape: f32[1,128], index: 5, kind: input, shape index: {}]
  %s6 = inlined_call_operand.vmem [shape: f32[128,128], index: 6, kind: output, shape index: {}]
  %s7 = sld [smem:[#allocation0]]
  $region34: #{_lambda_.34} parent=0
    _
  %s9 = ssub.s32 1, %s7
  %s10 = scalar_select 0, %s9, %s7
  // Predicated region
  $region2: #{_lambda_.34} parent=0 // pred_check
    _
  $region3: #{_lambda_.34} parent=0 // pred_check_branch
    %12 = sbr.rel (0) target = $region5
  $region4: #{_lambda_.34} parent=0 // pred_region
    _
  $region5: #{_lambda_.34} parent=0 // pred_fallthru
    _
  // Predicated region
  $region6: #{_lambda_.34} parent=0 // pred_check
    _
  $region7: #{_lambda_.34} parent=0 // pred_check_branch
    %14 = sbr.rel (0) target = $region9
  $region8: #{_lambda_.34} parent=0 // pred_region
    _
  $region9: #{_lambda_.34} parent=0 // pred_fallthru
    _
  // Predicated region
  $region10: #{_lambda_.34} parent=0 // pred_check
    _
  $region11: #{_lambda_.34} parent=0 // pred_check_branch
    %16 = sbr.rel (0) target = $region13
  $region12: #{_lambda_.34} parent=0 // pred_region
    _
  $region13: #{_lambda_.34} parent=0 // pred_fallthru
    _
  // Predicated region
  $region14: #{_lambda_.34} parent=0 // pred_check
    _
  $region15: #{_lambda_.34} parent=0 // pred_check_branch
    %18 = sbr.rel (0) target = $region17
  $region16: #{_lambda_.34} parent=0 // pred_region
    _
  $region17: #{_lambda_.34} parent=0 // pred_fallthru
    _
  // Predicated region
  $region18: #{_lambda_.34} parent=0 // pred_check
    _
  $region19: #{_lambda_.34} parent=0 // pred_check_branch
    %20 = sbr.rel (0) target = $region21
  $region20: #{_lambda_.34} parent=0 // pred_region
    _
  $region21: #{_lambda_.34} parent=0 // pred_fallthru
    _
  // Predicated region
  $region22: #{_lambda_.34} parent=0 // pred_check
    _
  $region23: #{_lambda_.34} parent=0 // pred_check_branch
    %22 = sbr.rel (0) target = $region25
  $region24: #{_lambda_.34} parent=0 // pred_region
    _
  $region25: #{_lambda_.34} parent=0 // pred_fallthru
    _
  %v24 = vld [vmem:[%s0] sm:$0xf]
  %v25 = vld [vmem:[%s0 + $0x4] sm:$0xf]
  %v26 = vld [vmem:[%s0 + $0x8] sm:$0xf]
  %v27 = vld [vmem:[%s0 + $0xc] sm:$0xf]
  %v28 = vld [vmem:[%s0 + $0x10] sm:$0xf]
  %v29 = vld [vmem:[%s0 + $0x14] sm:$0xf]
  %v30 = vld [vmem:[%s0 + $0x18] sm:$0xf]
  %v31 = vld [vmem:[%s0 + $0x1c] sm:$0xf]
  %v32 = vld [vmem:[%s0 + $0x20] sm:$0xf]
  %v33 = vld [vmem:[%s0 + $0x24] sm:$0xf]
  %v34 = vld [vmem:[%s0 + $0x28] sm:$0xf]
  %v35 = vld [vmem:[%s0 + $0x2c] sm:$0xf]
  %v36 = vld [vmem:[%s0 + $0x30] sm:$0xf]
  %v37 = vld [vmem:[%s0 + $0x34] sm:$0xf]
  %v38 = vld [vmem:[%s0 + $0x38] sm:$0xf]
  %v39 = vld [vmem:[%s0 + $0x3c] sm:$0xf]
  %v40 = vld [vmem:[%s2] sm:$0xf]
  %v41 = vld [vmem:[%s2 + $0x4] sm:$0xf]
  %v42 = vld [vmem:[%s2 + $0x8] sm:$0xf]
  %v43 = vld [vmem:[%s2 + $0xc] sm:$0xf]
  %v44 = vld [vmem:[%s2 + $0x10] sm:$0xf]
  %v45 = vld [vmem:[%s2 + $0x14] sm:$0xf]
  %v46 = vld [vmem:[%s2 + $0x18] sm:$0xf]
  %v47 = vld [vmem:[%s2 + $0x1c] sm:$0xf]
  %v48 = vld [vmem:[%s2 + $0x20] sm:$0xf]
  %v49 = vld [vmem:[%s2 + $0x24] sm:$0xf]
  %v50 = vld [vmem:[%s2 + $0x28] sm:$0xf]
  %v51 = vld [vmem:[%s2 + $0x2c] sm:$0xf]
  %v52 = vld [vmem:[%s2 + $0x30] sm:$0xf]
  %v53 = vld [vmem:[%s2 + $0x34] sm:$0xf]
  %v54 = vld [vmem:[%s2 + $0x38] sm:$0xf]
  %v55 = vld [vmem:[%s2 + $0x3c] sm:$0xf]
  %v56 = vld [vmem:[%s1] sm:$0xf]
  %v57 = vld [vmem:[%s1 + $0x4] sm:$0xf]
  %v58 = vld [vmem:[%s1 + $0x8] sm:$0xf]
  %v59 = vld [vmem:[%s1 + $0xc] sm:$0xf]
  %v60 = vld [vmem:[%s1 + $0x10] sm:$0xf]
  %v61 = vld [vmem:[%s1 + $0x14] sm:$0xf]
  %v62 = vld [vmem:[%s1 + $0x18] sm:$0xf]
  %v63 = vld [vmem:[%s1 + $0x1c] sm:$0xf]
  %v64 = vld [vmem:[%s1 + $0x20] sm:$0xf]
  %v65 = vld [vmem:[%s1 + $0x24] sm:$0xf]
  %v66 = vld [vmem:[%s1 + $0x28] sm:$0xf]
  %v67 = vld [vmem:[%s1 + $0x2c] sm:$0xf]
  %v68 = vld [vmem:[%s1 + $0x30] sm:$0xf]
  %v69 = vld [vmem:[%s1 + $0x34] sm:$0xf]
  %v70 = vld [vmem:[%s1 + $0x38] sm:$0xf]
  %v71 = vld [vmem:[%s1 + $0x3c] sm:$0xf]
  %v72 = vld [vmem:[%s3] sm:$0xf]
  %v73 = vld [vmem:[%s3 + $0x4] sm:$0xf]
  %v74 = vld [vmem:[%s3 + $0x8] sm:$0xf]
  %v75 = vld [vmem:[%s3 + $0xc] sm:$0xf]
  %v76 = vld [vmem:[%s3 + $0x10] sm:$0xf]
  %v77 = vld [vmem:[%s3 + $0x14] sm:$0xf]
  %v78 = vld [vmem:[%s3 + $0x18] sm:$0xf]
  %v79 = vld [vmem:[%s3 + $0x1c] sm:$0xf]
  %v80 = vld [vmem:[%s3 + $0x20] sm:$0xf]
  %v81 = vld [vmem:[%s3 + $0x24] sm:$0xf]
  %v82 = vld [vmem:[%s3 + $0x28] sm:$0xf]
  %v83 = vld [vmem:[%s3 + $0x2c] sm:$0xf]
  %v84 = vld [vmem:[%s3 + $0x30] sm:$0xf]
  %v85 = vld [vmem:[%s3 + $0x34] sm:$0xf]
  %v86 = vld [vmem:[%s3 + $0x38] sm:$0xf]
  %v87 = vld [vmem:[%s3 + $0x3c] sm:$0xf]
  %v104 = vunpack.c.l.b16 %v56
  %v105 = vunpack.c.l.b16 %v57
  %v106 = vunpack.c.l.b16 %v58
  %v107 = vunpack.c.l.b16 %v59
  %v108 = vunpack.c.l.b16 %v60
  %v109 = vunpack.c.l.b16 %v61
  %v110 = vunpack.c.l.b16 %v62
  %v111 = vunpack.c.l.b16 %v63
  %v112 = vunpack.c.l.b16 %v64
  %v113 = vunpack.c.l.b16 %v65
  %v114 = vunpack.c.l.b16 %v66
  %v115 = vunpack.c.l.b16 %v67
  %v116 = vunpack.c.l.b16 %v68
  %v117 = vunpack.c.l.b16 %v69
  %v118 = vunpack.c.l.b16 %v70
  %v119 = vunpack.c.l.b16 %v71
  %v120 = vpack.c.b16 %v105, %v104
  %v121 = vpack.c.b16 %v107, %v106
  %v122 = vpack.c.b16 %v109, %v108
  %v123 = vpack.c.b16 %v111, %v110
  %v124 = vpack.c.b16 %v113, %v112
  %v125 = vpack.c.b16 %v115, %v114
  %v126 = vpack.c.b16 %v117, %v116
  %v127 = vpack.c.b16 %v119, %v118
  %v152 = vunpack.c.l.b16 %v72
  %v153 = vunpack.c.l.b16 %v73
  %v154 = vunpack.c.l.b16 %v74
  %v155 = vunpack.c.l.b16 %v75
  %v156 = vunpack.c.l.b16 %v76
  %v157 = vunpack.c.l.b16 %v77
  %v158 = vunpack.c.l.b16 %v78
  %v159 = vunpack.c.l.b16 %v79
  %v160 = vunpack.c.l.b16 %v80
  %v161 = vunpack.c.l.b16 %v81
  %v162 = vunpack.c.l.b16 %v82
  %v163 = vunpack.c.l.b16 %v83
  %v164 = vunpack.c.l.b16 %v84
  %v165 = vunpack.c.l.b16 %v85
  %v166 = vunpack.c.l.b16 %v86
  %v167 = vunpack.c.l.b16 %v87
  %v168 = vpack.c.b16 %v153, %v152
  %v169 = vpack.c.b16 %v155, %v154
  %v170 = vpack.c.b16 %v157, %v156
  %v171 = vpack.c.b16 %v159, %v158
  %v172 = vpack.c.b16 %v161, %v160
  %v173 = vpack.c.b16 %v163, %v162
  %v174 = vpack.c.b16 %v165, %v164
  %v175 = vpack.c.b16 %v167, %v166
  %184 = vmatprep.subr.bf16.mxu0 0
  %185 = vmatpush1.bf16.msra.mxu0 %v168
  %186 = vmatprep.subr.bf16.mxu0 0
  %187 = vmatpush1.bf16.msra.mxu0 %v169
  %188 = vmatprep.subr.bf16.mxu0 0
  %189 = vmatpush1.bf16.msra.mxu0 %v170
  %190 = vmatprep.subr.bf16.mxu0 0
  %191 = vmatpush1.bf16.msra.mxu0 %v171
  %192 = vmatprep.subr.bf16.mxu0 0
  %193 = vmatpush1.bf16.msra.mxu0 %v172
  %194 = vmatprep.subr.bf16.mxu0 0
  %195 = vmatpush1.bf16.msra.mxu0 %v173
  %196 = vmatprep.subr.bf16.mxu0 0
  %197 = vmatpush1.bf16.msra.mxu0 %v174
  %198 = vmatprep.subr.bf16.mxu0 0
  %199 = vmatpush1.bf16.msra.mxu0 %v175
  %200 = vmatprep.subr.bf16.mxu0 0
  %201 = vmatpush1.bf16.msra.mxu0 0
  %202 = vmatprep.subr.bf16.mxu0 0
  %203 = vmatpush1.bf16.msra.mxu0 0
  %204 = vmatprep.subr.bf16.mxu0 0
  %205 = vmatpush1.bf16.msra.mxu0 0
  %206 = vmatprep.subr.bf16.mxu0 0
  %207 = vmatpush1.bf16.msra.mxu0 0
  %208 = vmatprep.subr.bf16.mxu0 0
  %209 = vmatpush1.bf16.msra.mxu0 0
  %210 = vmatprep.subr.bf16.mxu0 0
  %211 = vmatpush1.bf16.msra.mxu0 0
  %212 = vmatprep.subr.bf16.mxu0 0
  %213 = vmatpush1.bf16.msra.mxu0 0
  %214 = vmatprep.subr.bf16.mxu0 0
  %215 = vmatpush1.bf16.msra.mxu0 0
  %216 = vmatprep.mubr.bf16.mxu0 0
  %217 = vmatmul.mubr.bf16.gmra.mrb[0].mxu0 %v120
  %v218 = vpop.f32.mrb[0].mxu0
  %v219 = vadd.f32 0.0, %v218
  %v220 = vpop.f32.mrb[0].mxu0
  %v221 = vpop.f32.mrb[0].mxu0
  %v222 = vadd.f32 0.0, %v221
  %v223 = vpop.f32.mrb[0].mxu0
  %224 = vmatprep.mubr.bf16.mxu0 0
  %225 = vmatmul.mubr.bf16.gmra.mrb[0].mxu0 %v121
  %v226 = vpop.f32.mrb[0].mxu0
  %v227 = vadd.f32 0.0, %v226
  %v228 = vpop.f32.mrb[0].mxu0
  %v229 = vpop.f32.mrb[0].mxu0
  %v230 = vadd.f32 0.0, %v229
  %v231 = vpop.f32.mrb[0].mxu0
  %232 = vmatprep.mubr.bf16.mxu0 0
  %233 = vmatmul.mubr.bf16.gmra.mrb[0].mxu0 %v122
  %v234 = vpop.f32.mrb[0].mxu0
  %v235 = vadd.f32 0.0, %v234
  %v236 = vpop.f32.mrb[0].mxu0
  %v237 = vpop.f32.mrb[0].mxu0
  %v238 = vadd.f32 0.0, %v237
  %v239 = vpop.f32.mrb[0].mxu0
  %240 = vmatprep.mubr.bf16.mxu0 0
  %241 = vmatmul.mubr.bf16.gmra.mrb[0].mxu0 %v123
  %v242 = vpop.f32.mrb[0].mxu0
  %v243 = vadd.f32 0.0, %v242
  %v244 = vpop.f32.mrb[0].mxu0
  %v245 = vpop.f32.mrb[0].mxu0
  %v246 = vadd.f32 0.0, %v245
  %v247 = vpop.f32.mrb[0].mxu0
  %248 = vmatprep.mubr.bf16.mxu0 0
  %249 = vmatmul.mubr.bf16.gmra.mrb[0].mxu0 %v124
  %v250 = vpop.f32.mrb[0].mxu0
  %v251 = vadd.f32 0.0, %v250
  %v252 = vpop.f32.mrb[0].mxu0
  %v253 = vpop.f32.mrb[0].mxu0
  %v254 = vadd.f32 0.0, %v253
  %v255 = vpop.f32.mrb[0].mxu0
  %256 = vmatprep.mubr.bf16.mxu0 0
  %257 = vmatmul.mubr.bf16.gmra.mrb[0].mxu0 %v125
  %v258 = vpop.f32.mrb[0].mxu0
  %v259 = vadd.f32 0.0, %v258
  %v260 = vpop.f32.mrb[0].mxu0
  %v261 = vpop.f32.mrb[0].mxu0
  %v262 = vadd.f32 0.0, %v261
  %v263 = vpop.f32.mrb[0].mxu0
  %264 = vmatprep.mubr.bf16.mxu0 0
  %265 = vmatmul.mubr.bf16.gmra.mrb[0].mxu0 %v126
  %v266 = vpop.f32.mrb[0].mxu0
  %v267 = vadd.f32 0.0, %v266
  %v268 = vpop.f32.mrb[0].mxu0
  %v269 = vpop.f32.mrb[0].mxu0
  %v270 = vadd.f32 0.0, %v269
  %v271 = vpop.f32.mrb[0].mxu0
  %272 = vmatprep.mubr.bf16.mxu0 0
  %273 = vmatmul.mubr.bf16.gmra.mrb[0].mxu0 %v127
  %v274 = vpop.f32.mrb[0].mxu0
  %v275 = vadd.f32 0.0, %v274
  %v276 = vpop.f32.mrb[0].mxu0
  %v277 = vpop.f32.mrb[0].mxu0
  %v278 = vadd.f32 0.0, %v277
  %v279 = vpop.f32.mrb[0].mxu0
  %280 = vdwg.mxu0
  %v297 = vunpack.c.l.b16 %v24
  %v298 = vunpack.c.l.b16 %v25
  %v299 = vunpack.c.l.b16 %v26
  %v300 = vunpack.c.l.b16 %v27
  %v301 = vunpack.c.l.b16 %v28
  %v302 = vunpack.c.l.b16 %v29
  %v303 = vunpack.c.l.b16 %v30
  %v304 = vunpack.c.l.b16 %v31
  %v305 = vunpack.c.l.b16 %v32
  %v306 = vunpack.c.l.b16 %v33
  %v307 = vunpack.c.l.b16 %v34
  %v308 = vunpack.c.l.b16 %v35
  %v309 = vunpack.c.l.b16 %v36
  %v310 = vunpack.c.l.b16 %v37
  %v311 = vunpack.c.l.b16 %v38
  %v312 = vunpack.c.l.b16 %v39
  %v313 = vpack.c.b16 %v298, %v297
  %v314 = vpack.c.b16 %v300, %v299
  %v315 = vpack.c.b16 %v302, %v301
  %v316 = vpack.c.b16 %v304, %v303
  %v317 = vpack.c.b16 %v306, %v305
  %v318 = vpack.c.b16 %v308, %v307
  %v319 = vpack.c.b16 %v310, %v309
  %v320 = vpack.c.b16 %v312, %v311
  %v345 = vunpack.c.l.b16 %v40
  %v346 = vunpack.c.l.b16 %v41
  %v347 = vunpack.c.l.b16 %v42
  %v348 = vunpack.c.l.b16 %v43
  %v349 = vunpack.c.l.b16 %v44
  %v350 = vunpack.c.l.b16 %v45
  %v351 = vunpack.c.l.b16 %v46
  %v352 = vunpack.c.l.b16 %v47
  %v353 = vunpack.c.l.b16 %v48
  %v354 = vunpack.c.l.b16 %v49
  %v355 = vunpack.c.l.b16 %v50
  %v356 = vunpack.c.l.b16 %v51
  %v357 = vunpack.c.l.b16 %v52
  %v358 = vunpack.c.l.b16 %v53
  %v359 = vunpack.c.l.b16 %v54
  %v360 = vunpack.c.l.b16 %v55
  %v361 = vpack.c.b16 %v346, %v345
  %v362 = vpack.c.b16 %v348, %v347
  %v363 = vpack.c.b16 %v350, %v349
  %v364 = vpack.c.b16 %v352, %v351
  %v365 = vpack.c.b16 %v354, %v353
  %v366 = vpack.c.b16 %v356, %v355
  %v367 = vpack.c.b16 %v358, %v357
  %v368 = vpack.c.b16 %v360, %v359
  %377 = vmatprep.subr.bf16.mxu0 0
  %378 = vmatpush1.bf16.msra.mxu0 %v361
  %379 = vmatprep.subr.bf16.mxu0 0
  %380 = vmatpush1.bf16.msra.mxu0 %v362
  %381 = vmatprep.subr.bf16.mxu0 0
  %382 = vmatpush1.bf16.msra.mxu0 %v363
  %383 = vmatprep.subr.bf16.mxu0 0
  %384 = vmatpush1.bf16.msra.mxu0 %v364
  %385 = vmatprep.subr.bf16.mxu0 0
  %386 = vmatpush1.bf16.msra.mxu0 %v365
  %387 = vmatprep.subr.bf16.mxu0 0
  %388 = vmatpush1.bf16.msra.mxu0 %v366
  %389 = vmatprep.subr.bf16.mxu0 0
  %390 = vmatpush1.bf16.msra.mxu0 %v367
  %391 = vmatprep.subr.bf16.mxu0 0
  %392 = vmatpush1.bf16.msra.mxu0 %v368
  %393 = vmatprep.subr.bf16.mxu0 0
  %394 = vmatpush1.bf16.msra.mxu0 0
  %395 = vmatprep.subr.bf16.mxu0 0
  %396 = vmatpush1.bf16.msra.mxu0 0
  %397 = vmatprep.subr.bf16.mxu0 0
  %398 = vmatpush1.bf16.msra.mxu0 0
  %399 = vmatprep.subr.bf16.mxu0 0
  %400 = vmatpush1.bf16.msra.mxu0 0
  %401 = vmatprep.subr.bf16.mxu0 0
  %402 = vmatpush1.bf16.msra.mxu0 0
  %403 = vmatprep.subr.bf16.mxu0 0
  %404 = vmatpush1.bf16.msra.mxu0 0
  %405 = vmatprep.subr.bf16.mxu0 0
  %406 = vmatpush1.bf16.msra.mxu0 0
  %407 = vmatprep.subr.bf16.mxu0 0
  %408 = vmatpush1.bf16.msra.mxu0 0
  %409 = vmatprep.mubr.bf16.mxu0 0
  %410 = vmatmul.mubr.bf16.gmra.mrb[0].mxu0 %v313
  %v411 = vpop.f32.mrb[0].mxu0
  %v412 = vadd.f32 %v219, %v411
  %v413 = vpop.f32.mrb[0].mxu0
  %v414 = vpop.f32.mrb[0].mxu0
  %v415 = vadd.f32 %v222, %v414
  %v416 = vpop.f32.mrb[0].mxu0
  %417 = vmatprep.mubr.bf16.mxu0 0
  %418 = vmatmul.mubr.bf16.gmra.mrb[0].mxu0 %v314
  %v419 = vpop.f32.mrb[0].mxu0
  %v420 = vadd.f32 %v227, %v419
  %v421 = vpop.f32.mrb[0].mxu0
  %v422 = vpop.f32.mrb[0].mxu0
  %v423 = vadd.f32 %v230, %v422
  %v424 = vpop.f32.mrb[0].mxu0
  %425 = vmatprep.mubr.bf16.mxu0 0
  %426 = vmatmul.mubr.bf16.gmra.mrb[0].mxu0 %v315
  %v427 = vpop.f32.mrb[0].mxu0
  %v428 = vadd.f32 %v235, %v427
  %v429 = vpop.f32.mrb[0].mxu0
  %v430 = vpop.f32.mrb[0].mxu0
  %v431 = vadd.f32 %v238, %v430
  %v432 = vpop.f32.mrb[0].mxu0
  %433 = vmatprep.mubr.bf16.mxu0 0
  %434 = vmatmul.mubr.bf16.gmra.mrb[0].mxu0 %v316
  %v435 = vpop.f32.mrb[0].mxu0
  %v436 = vadd.f32 %v243, %v435
  %v437 = vpop.f32.mrb[0].mxu0
  %v438 = vpop.f32.mrb[0].mxu0
  %v439 = vadd.f32 %v246, %v438
  %v440 = vpop.f32.mrb[0].mxu0
  %441 = vmatprep.mubr.bf16.mxu0 0
  %442 = vmatmul.mubr.bf16.gmra.mrb[0].mxu0 %v317
  %v443 = vpop.f32.mrb[0].mxu0
  %v444 = vadd.f32 %v251, %v443
  %v445 = vpop.f32.mrb[0].mxu0
  %v446 = vpop.f32.mrb[0].mxu0
  %v447 = vadd.f32 %v254, %v446
  %v448 = vpop.f32.mrb[0].mxu0
  %449 = vmatprep.mubr.bf16.mxu0 0
  %450 = vmatmul.mubr.bf16.gmra.mrb[0].mxu0 %v318
  %v451 = vpop.f32.mrb[0].mxu0
  %v452 = vadd.f32 %v259, %v451
  %v453 = vpop.f32.mrb[0].mxu0
  %v454 = vpop.f32.mrb[0].mxu0
  %v455 = vadd.f32 %v262, %v454
  %v456 = vpop.f32.mrb[0].mxu0
  %457 = vmatprep.mubr.bf16.mxu0 0
  %458 = vmatmul.mubr.bf16.gmra.mrb[0].mxu0 %v319
  %v459 = vpop.f32.mrb[0].mxu0
  %v460 = vadd.f32 %v267, %v459
  %v461 = vpop.f32.mrb[0].mxu0
  %v462 = vpop.f32.mrb[0].mxu0
  %v463 = vadd.f32 %v270, %v462
  %v464 = vpop.f32.mrb[0].mxu0
  %465 = vmatprep.mubr.bf16.mxu0 0
  %466 = vmatmul.mubr.bf16.gmra.mrb[0].mxu0 %v320
  %v467 = vpop.f32.mrb[0].mxu0
  %v468 = vadd.f32 %v275, %v467
  %v469 = vpop.f32.mrb[0].mxu0
  %v470 = vpop.f32.mrb[0].mxu0
  %v471 = vadd.f32 %v278, %v470
  %v472 = vpop.f32.mrb[0].mxu0
  %473 = vdwg.mxu0
  %v474 = vld [vmem:[%s4] sm:$0x1]
  %v476 = vlaneseq
  %v477 = vshrl.u32 %v476, 7
  %v478 = vsub.s32 0, %v477
  %v479 = vrot.slane %v474, %v478
  %v481 = vmul.f32 %v412, %v479
  %v482 = vmul.f32 %v415, %v479
  %v483 = vmul.f32 %v420, %v479
  %v484 = vmul.f32 %v423, %v479
  %v485 = vmul.f32 %v428, %v479
  %v486 = vmul.f32 %v431, %v479
  %v487 = vmul.f32 %v436, %v479
  %v488 = vmul.f32 %v439, %v479
  %v489 = vmul.f32 %v444, %v479
  %v490 = vmul.f32 %v447, %v479
  %v491 = vmul.f32 %v452, %v479
  %v492 = vmul.f32 %v455, %v479
  %v493 = vmul.f32 %v460, %v479
  %v494 = vmul.f32 %v463, %v479
  %v495 = vmul.f32 %v468, %v479
  %v496 = vmul.f32 %v471, %v479
  %v497 = vld [vmem:[%s5] sm:$0x1]
  %v499 = vlaneseq
  %v500 = vshrl.u32 %v499, 7
  %v501 = vsub.s32 0, %v500
  %v502 = vrot.slane %v497, %v501
  %v504 = vadd.f32 %v481, %v502
  %v505 = vadd.f32 %v482, %v502
  %v506 = vadd.f32 %v483, %v502
  %v507 = vadd.f32 %v484, %v502
  %v508 = vadd.f32 %v485, %v502
  %v509 = vadd.f32 %v486, %v502
  %v510 = vadd.f32 %v487, %v502
  %v511 = vadd.f32 %v488, %v502
  %v512 = vadd.f32 %v489, %v502
  %v513 = vadd.f32 %v490, %v502
  %v514 = vadd.f32 %v491, %v502
  %v515 = vadd.f32 %v492, %v502
  %v516 = vadd.f32 %v493, %v502
  %v517 = vadd.f32 %v494, %v502
  %v518 = vadd.f32 %v495, %v502
  %v519 = vadd.f32 %v496, %v502
  %v520 = vsub.f32 0.0, %v504
  %v521 = vsub.f32 0.0, %v505
  %v522 = vsub.f32 0.0, %v506
  %v523 = vsub.f32 0.0, %v507
  %v524 = vsub.f32 0.0, %v508
  %v525 = vsub.f32 0.0, %v509
  %v526 = vsub.f32 0.0, %v510
  %v527 = vsub.f32 0.0, %v511
  %v528 = vsub.f32 0.0, %v512
  %v529 = vsub.f32 0.0, %v513
  %v530 = vsub.f32 0.0, %v514
  %v531 = vsub.f32 0.0, %v515
  %v532 = vsub.f32 0.0, %v516
  %v533 = vsub.f32 0.0, %v517
  %v534 = vsub.f32 0.0, %v518
  %v535 = vsub.f32 0.0, %v519
  %v536 = vmul.f32 %v520, 1.442695
  %v537 = vpow.pop %v536
  %v538 = vmul.f32 %v521, 1.442695
  %v539 = vpow.pop %v538
  %v540 = vmul.f32 %v522, 1.442695
  %v541 = vpow.pop %v540
  %v542 = vmul.f32 %v523, 1.442695
  %v543 = vpow.pop %v542
  %v544 = vmul.f32 %v524, 1.442695
  %v545 = vpow.pop %v544
  %v546 = vmul.f32 %v525, 1.442695
  %v547 = vpow.pop %v546
  %v548 = vmul.f32 %v526, 1.442695
  %v549 = vpow.pop %v548
  %v550 = vmul.f32 %v527, 1.442695
  %v551 = vpow.pop %v550
  %v552 = vmul.f32 %v528, 1.442695
  %v553 = vpow.pop %v552
  %v554 = vmul.f32 %v529, 1.442695
  %v555 = vpow.pop %v554
  %v556 = vmul.f32 %v530, 1.442695
  %v557 = vpow.pop %v556
  %v558 = vmul.f32 %v531, 1.442695
  %v559 = vpow.pop %v558
  %v560 = vmul.f32 %v532, 1.442695
  %v561 = vpow.pop %v560
  %v562 = vmul.f32 %v533, 1.442695
  %v563 = vpow.pop %v562
  %v564 = vmul.f32 %v534, 1.442695
  %v565 = vpow.pop %v564
  %v566 = vmul.f32 %v535, 1.442695
  %v567 = vpow.pop %v566
  %v568 = vadd.f32 %v537, 1.0
  %v569 = vadd.f32 %v539, 1.0
  %v570 = vadd.f32 %v541, 1.0
  %v571 = vadd.f32 %v543, 1.0
  %v572 = vadd.f32 %v545, 1.0
  %v573 = vadd.f32 %v547, 1.0
  %v574 = vadd.f32 %v549, 1.0
  %v575 = vadd.f32 %v551, 1.0
  %v576 = vadd.f32 %v553, 1.0
  %v577 = vadd.f32 %v555, 1.0
  %v578 = vadd.f32 %v557, 1.0
  %v579 = vadd.f32 %v559, 1.0
  %v580 = vadd.f32 %v561, 1.0
  %v581 = vadd.f32 %v563, 1.0
  %v582 = vadd.f32 %v565, 1.0
  %v583 = vadd.f32 %v567, 1.0
  %v584 = vrcp.pop %v568
  %v585 = vrcp.pop %v569
  %v586 = vrcp.pop %v570
  %v587 = vrcp.pop %v571
  %v588 = vrcp.pop %v572
  %v589 = vrcp.pop %v573
  %v590 = vrcp.pop %v574
  %v591 = vrcp.pop %v575
  %v592 = vrcp.pop %v576
  %v593 = vrcp.pop %v577
  %v594 = vrcp.pop %v578
  %v595 = vrcp.pop %v579
  %v596 = vrcp.pop %v580
  %v597 = vrcp.pop %v581
  %v598 = vrcp.pop %v582
  %v599 = vrcp.pop %v583
  %v600 = vmul.f32 %v504, %v584
  %v601 = vmul.f32 %v505, %v585
  %v602 = vmul.f32 %v506, %v586
  %v603 = vmul.f32 %v507, %v587
  %v604 = vmul.f32 %v508, %v588
  %v605 = vmul.f32 %v509, %v589
  %v606 = vmul.f32 %v510, %v590
  %v607 = vmul.f32 %v511, %v591
  %v608 = vmul.f32 %v512, %v592
  %v609 = vmul.f32 %v513, %v593
  %v610 = vmul.f32 %v514, %v594
  %v611 = vmul.f32 %v515, %v595
  %v612 = vmul.f32 %v516, %v596
  %v613 = vmul.f32 %v517, %v597
  %v614 = vmul.f32 %v518, %v598
  %v615 = vmul.f32 %v519, %v599
  %616 = vst [vmem:[%s6] sm:$0xff] %v600
  %617 = vst [vmem:[%s6 + $0x8] sm:$0xff] %v601
  %618 = vst [vmem:[%s6 + $0x10] sm:$0xff] %v602
  %619 = vst [vmem:[%s6 + $0x18] sm:$0xff] %v603
  %620 = vst [vmem:[%s6 + $0x20] sm:$0xff] %v604
  %621 = vst [vmem:[%s6 + $0x28] sm:$0xff] %v605
  %622 = vst [vmem:[%s6 + $0x30] sm:$0xff] %v606
  %623 = vst [vmem:[%s6 + $0x38] sm:$0xff] %v607
  %624 = vst [vmem:[%s6 + $0x40] sm:$0xff] %v608
  %625 = vst [vmem:[%s6 + $0x48] sm:$0xff] %v609
  %626 = vst [vmem:[%s6 + $0x50] sm:$0xff] %v610
  %627 = vst [vmem:[%s6 + $0x58] sm:$0xff] %v611
  %628 = vst [vmem:[%s6 + $0x60] sm:$0xff] %v612
  %629 = vst [vmem:[%s6 + $0x68] sm:$0xff] %v613
  %630 = vst [vmem:[%s6 + $0x70] sm:$0xff] %v614
  %631 = vst [vmem:[%s6 + $0x78] sm:$0xff] %v615
  // Predicated region
  $region26: #{_lambda_.34} parent=0 // pred_check
    _
  $region27: #{_lambda_.34} parent=0 // pred_check_branch
    %633 = sbr.rel (0) target = $region29
  $region28: #{_lambda_.34} parent=0 // pred_region
    _
  $region29: #{_lambda_.34} parent=0 // pred_fallthru
    _
  // Predicated region
  $region30: #{_lambda_.34} parent=0 // pred_check
    _
  $region31: #{_lambda_.34} parent=0 // pred_check_branch
    %635 = sbr.rel (0) target = $region33
  $region32: #{_lambda_.34} parent=0 // pred_region
    _
  $region33: #{_lambda_.34} parent=0 // pred_fallthru
    _

// kernel: _lambda_.36
$region0: #{_lambda_.36}
  #allocation0 [shape = 'u32[]', space=smem, size = 0x4, offset = 0x4, fixed_abs, tag = 'smem constant byte address 0x4 - core index']
  #allocation1 [shape = 'u32[144,128]{1,0:T(1,128)}', space=vmem, size = 0x12000, scoped, tag = 'internal scratch']
  %s0 = inlined_call_operand.vmem [shape: bf16[32,128], index: 0, kind: input, shape index: {}]
  %s1 = inlined_call_operand.vmem [shape: bf16[32,128], index: 1, kind: input, shape index: {}]
  %s2 = inlined_call_operand.vmem [shape: bf16[128,128], index: 2, kind: input, shape index: {}]
  %s3 = inlined_call_operand.vmem [shape: bf16[128,128], index: 3, kind: input, shape index: {}]
  %s4 = inlined_call_operand.vmem [shape: f32[1,128], index: 4, kind: input, shape index: {}]
  %s5 = inlined_call_operand.vmem [shape: f32[1,128], index: 5, kind: input, shape index: {}]
  %s6 = inlined_call_operand.vmem [shape: bf16[32,128], index: 6, kind: output, shape index: {}]
  %s7 = sld [smem:[#allocation0]]
  $region34: #{_lambda_.36} parent=0
    _
  %s9 = ssub.s32 1, %s7
  %s10 = scalar_select 0, %s9, %s7
  // Predicated region
  $region2: #{_lambda_.36} parent=0 // pred_check
    _
  $region3: #{_lambda_.36} parent=0 // pred_check_branch
    %12 = sbr.rel (0) target = $region5
  $region4: #{_lambda_.36} parent=0 // pred_region
    _
  $region5: #{_lambda_.36} parent=0 // pred_fallthru
    _
  // Predicated region
  $region6: #{_lambda_.36} parent=0 // pred_check
    _
  $region7: #{_lambda_.36} parent=0 // pred_check_branch
    %14 = sbr.rel (0) target = $region9
  $region8: #{_lambda_.36} parent=0 // pred_region
    _
  $region9: #{_lambda_.36} parent=0 // pred_fallthru
    _
  // Predicated region
  $region10: #{_lambda_.36} parent=0 // pred_check
    _
  $region11: #{_lambda_.36} parent=0 // pred_check_branch
    %16 = sbr.rel (0) target = $region13
  $region12: #{_lambda_.36} parent=0 // pred_region
    _
  $region13: #{_lambda_.36} parent=0 // pred_fallthru
    _
  // Predicated region
  $region14: #{_lambda_.36} parent=0 // pred_check
    _
  $region15: #{_lambda_.36} parent=0 // pred_check_branch
    %18 = sbr.rel (0) target = $region17
  $region16: #{_lambda_.36} parent=0 // pred_region
    _
  $region17: #{_lambda_.36} parent=0 // pred_fallthru
    _
  // Predicated region
  $region18: #{_lambda_.36} parent=0 // pred_check
    _
  $region19: #{_lambda_.36} parent=0 // pred_check_branch
    %20 = sbr.rel (0) target = $region21
  $region20: #{_lambda_.36} parent=0 // pred_region
    _
  $region21: #{_lambda_.36} parent=0 // pred_fallthru
    _
  // Predicated region
  $region22: #{_lambda_.36} parent=0 // pred_check
    _
  $region23: #{_lambda_.36} parent=0 // pred_check_branch
    %22 = sbr.rel (0) target = $region25
  $region24: #{_lambda_.36} parent=0 // pred_region
    _
  $region25: #{_lambda_.36} parent=0 // pred_fallthru
    _
  %v24 = vld [vmem:[%s0] sm:$0xf]
  %v25 = vld [vmem:[%s0 + $0x4] sm:$0xf]
  %v26 = vld [vmem:[%s0 + $0x8] sm:$0xf]
  %v27 = vld [vmem:[%s0 + $0xc] sm:$0xf]
  %v28 = vld [vmem:[%s2] sm:$0xf]
  %v29 = vld [vmem:[%s2 + $0x4] sm:$0xf]
  %v30 = vld [vmem:[%s2 + $0x8] sm:$0xf]
  %v31 = vld [vmem:[%s2 + $0xc] sm:$0xf]
  %v32 = vld [vmem:[%s2 + $0x10] sm:$0xf]
  %v33 = vld [vmem:[%s2 + $0x14] sm:$0xf]
  %v34 = vld [vmem:[%s2 + $0x18] sm:$0xf]
  %v35 = vld [vmem:[%s2 + $0x1c] sm:$0xf]
  %v36 = vld [vmem:[%s2 + $0x20] sm:$0xf]
  %v37 = vld [vmem:[%s2 + $0x24] sm:$0xf]
  %v38 = vld [vmem:[%s2 + $0x28] sm:$0xf]
  %v39 = vld [vmem:[%s2 + $0x2c] sm:$0xf]
  %v40 = vld [vmem:[%s2 + $0x30] sm:$0xf]
  %v41 = vld [vmem:[%s2 + $0x34] sm:$0xf]
  %v42 = vld [vmem:[%s2 + $0x38] sm:$0xf]
  %v43 = vld [vmem:[%s2 + $0x3c] sm:$0xf]
  %v44 = vld [vmem:[%s1] sm:$0xf]
  %v45 = vld [vmem:[%s1 + $0x4] sm:$0xf]
  %v46 = vld [vmem:[%s1 + $0x8] sm:$0xf]
  %v47 = vld [vmem:[%s1 + $0xc] sm:$0xf]
  %v48 = vld [vmem:[%s3] sm:$0xf]
  %v49 = vld [vmem:[%s3 + $0x4] sm:$0xf]
  %v50 = vld [vmem:[%s3 + $0x8] sm:$0xf]
  %v51 = vld [vmem:[%s3 + $0xc] sm:$0xf]
  %v52 = vld [vmem:[%s3 + $0x10] sm:$0xf]
  %v53 = vld [vmem:[%s3 + $0x14] sm:$0xf]
  %v54 = vld [vmem:[%s3 + $0x18] sm:$0xf]
  %v55 = vld [vmem:[%s3 + $0x1c] sm:$0xf]
  %v56 = vld [vmem:[%s3 + $0x20] sm:$0xf]
  %v57 = vld [vmem:[%s3 + $0x24] sm:$0xf]
  %v58 = vld [vmem:[%s3 + $0x28] sm:$0xf]
  %v59 = vld [vmem:[%s3 + $0x2c] sm:$0xf]
  %v60 = vld [vmem:[%s3 + $0x30] sm:$0xf]
  %v61 = vld [vmem:[%s3 + $0x34] sm:$0xf]
  %v62 = vld [vmem:[%s3 + $0x38] sm:$0xf]
  %v63 = vld [vmem:[%s3 + $0x3c] sm:$0xf]
  %v68 = vunpack.c.l.b16 %v44
  %v69 = vunpack.c.l.b16 %v45
  %v70 = vunpack.c.l.b16 %v46
  %v71 = vunpack.c.l.b16 %v47
  %v72 = vpack.c.b16 %v69, %v68
  %v73 = vpack.c.b16 %v71, %v70
  %v92 = vunpack.c.l.b16 %v48
  %v93 = vunpack.c.l.b16 %v49
  %v94 = vunpack.c.l.b16 %v50
  %v95 = vunpack.c.l.b16 %v51
  %v96 = vunpack.c.l.b16 %v52
  %v97 = vunpack.c.l.b16 %v53
  %v98 = vunpack.c.l.b16 %v54
  %v99 = vunpack.c.l.b16 %v55
  %v100 = vunpack.c.l.b16 %v56
  %v101 = vunpack.c.l.b16 %v57
  %v102 = vunpack.c.l.b16 %v58
  %v103 = vunpack.c.l.b16 %v59
  %v104 = vunpack.c.l.b16 %v60
  %v105 = vunpack.c.l.b16 %v61
  %v106 = vunpack.c.l.b16 %v62
  %v107 = vunpack.c.l.b16 %v63
  %v108 = vpack.c.b16 %v93, %v92
  %v109 = vpack.c.b16 %v95, %v94
  %v110 = vpack.c.b16 %v97, %v96
  %v111 = vpack.c.b16 %v99, %v98
  %v112 = vpack.c.b16 %v101, %v100
  %v113 = vpack.c.b16 %v103, %v102
  %v114 = vpack.c.b16 %v105, %v104
  %v115 = vpack.c.b16 %v107, %v106
  %124 = vmatprep.subr.bf16.mxu0 0
  %125 = vmatpush1.bf16.msra.mxu0 %v108
  %126 = vmatprep.subr.bf16.mxu0 0
  %127 = vmatpush1.bf16.msra.mxu0 %v109
  %128 = vmatprep.subr.bf16.mxu0 0
  %129 = vmatpush1.bf16.msra.mxu0 %v110
  %130 = vmatprep.subr.bf16.mxu0 0
  %131 = vmatpush1.bf16.msra.mxu0 %v111
  %132 = vmatprep.subr.bf16.mxu0 0
  %133 = vmatpush1.bf16.msra.mxu0 %v112
  %134 = vmatprep.subr.bf16.mxu0 0
  %135 = vmatpush1.bf16.msra.mxu0 %v113
  %136 = vmatprep.subr.bf16.mxu0 0
  %137 = vmatpush1.bf16.msra.mxu0 %v114
  %138 = vmatprep.subr.bf16.mxu0 0
  %139 = vmatpush1.bf16.msra.mxu0 %v115
  %140 = vmatprep.subr.bf16.mxu0 0
  %141 = vmatpush1.bf16.msra.mxu0 0
  %142 = vmatprep.subr.bf16.mxu0 0
  %143 = vmatpush1.bf16.msra.mxu0 0
  %144 = vmatprep.subr.bf16.mxu0 0
  %145 = vmatpush1.bf16.msra.mxu0 0
  %146 = vmatprep.subr.bf16.mxu0 0
  %147 = vmatpush1.bf16.msra.mxu0 0
  %148 = vmatprep.subr.bf16.mxu0 0
  %149 = vmatpush1.bf16.msra.mxu0 0
  %150 = vmatprep.subr.bf16.mxu0 0
  %151 = vmatpush1.bf16.msra.mxu0 0
  %152 = vmatprep.subr.bf16.mxu0 0
  %153 = vmatpush1.bf16.msra.mxu0 0
  %154 = vmatprep.subr.bf16.mxu0 0
  %155 = vmatpush1.bf16.msra.mxu0 0
  %156 = vmatprep.mubr.bf16.mxu0 0
  %157 = vmatmul.mubr.bf16.gmra.mrb[0].mxu0 %v72
  %v158 = vpop.f32.mrb[0].mxu0
  %v159 = vadd.f32 0.0, %v158
  %v160 = vpop.f32.mrb[0].mxu0
  %v161 = vpop.f32.mrb[0].mxu0
  %v162 = vadd.f32 0.0, %v161
  %v163 = vpop.f32.mrb[0].mxu0
  %164 = vmatprep.mubr.bf16.mxu0 0
  %165 = vmatmul.mubr.bf16.gmra.mrb[0].mxu0 %v73
  %v166 = vpop.f32.mrb[0].mxu0
  %v167 = vadd.f32 0.0, %v166
  %v168 = vpop.f32.mrb[0].mxu0
  %v169 = vpop.f32.mrb[0].mxu0
  %v170 = vadd.f32 0.0, %v169
  %v171 = vpop.f32.mrb[0].mxu0
  %172 = vdwg.mxu0
  %v177 = vunpack.c.l.b16 %v24
  %v178 = vunpack.c.l.b16 %v25
  %v179 = vunpack.c.l.b16 %v26
  %v180 = vunpack.c.l.b16 %v27
  %v181 = vpack.c.b16 %v178, %v177
  %v182 = vpack.c.b16 %v180, %v179
  %v201 = vunpack.c.l.b16 %v28
  %v202 = vunpack.c.l.b16 %v29
  %v203 = vunpack.c.l.b16 %v30
  %v204 = vunpack.c.l.b16 %v31
  %v205 = vunpack.c.l.b16 %v32
  %v206 = vunpack.c.l.b16 %v33
  %v207 = vunpack.c.l.b16 %v34
  %v208 = vunpack.c.l.b16 %v35
  %v209 = vunpack.c.l.b16 %v36
  %v210 = vunpack.c.l.b16 %v37
  %v211 = vunpack.c.l.b16 %v38
  %v212 = vunpack.c.l.b16 %v39
  %v213 = vunpack.c.l.b16 %v40
  %v214 = vunpack.c.l.b16 %v41
  %v215 = vunpack.c.l.b16 %v42
  %v216 = vunpack.c.l.b16 %v43
  %v217 = vpack.c.b16 %v202, %v201
  %v218 = vpack.c.b16 %v204, %v203
  %v219 = vpack.c.b16 %v206, %v205
  %v220 = vpack.c.b16 %v208, %v207
  %v221 = vpack.c.b16 %v210, %v209
  %v222 = vpack.c.b16 %v212, %v211
  %v223 = vpack.c.b16 %v214, %v213
  %v224 = vpack.c.b16 %v216, %v215
  %233 = vmatprep.subr.bf16.mxu0 0
  %234 = vmatpush1.bf16.msra.mxu0 %v217
  %235 = vmatprep.subr.bf16.mxu0 0
  %236 = vmatpush1.bf16.msra.mxu0 %v218
  %237 = vmatprep.subr.bf16.mxu0 0
  %238 = vmatpush1.bf16.msra.mxu0 %v219
  %239 = vmatprep.subr.bf16.mxu0 0
  %240 = vmatpush1.bf16.msra.mxu0 %v220
  %241 = vmatprep.subr.bf16.mxu0 0
  %242 = vmatpush1.bf16.msra.mxu0 %v221
  %243 = vmatprep.subr.bf16.mxu0 0
  %244 = vmatpush1.bf16.msra.mxu0 %v222
  %245 = vmatprep.subr.bf16.mxu0 0
  %246 = vmatpush1.bf16.msra.mxu0 %v223
  %247 = vmatprep.subr.bf16.mxu0 0
  %248 = vmatpush1.bf16.msra.mxu0 %v224
  %249 = vmatprep.subr.bf16.mxu0 0
  %250 = vmatpush1.bf16.msra.mxu0 0
  %251 = vmatprep.subr.bf16.mxu0 0
  %252 = vmatpush1.bf16.msra.mxu0 0
  %253 = vmatprep.subr.bf16.mxu0 0
  %254 = vmatpush1.bf16.msra.mxu0 0
  %255 = vmatprep.subr.bf16.mxu0 0
  %256 = vmatpush1.bf16.msra.mxu0 0
  %257 = vmatprep.subr.bf16.mxu0 0
  %258 = vmatpush1.bf16.msra.mxu0 0
  %259 = vmatprep.subr.bf16.mxu0 0
  %260 = vmatpush1.bf16.msra.mxu0 0
  %261 = vmatprep.subr.bf16.mxu0 0
  %262 = vmatpush1.bf16.msra.mxu0 0
  %263 = vmatprep.subr.bf16.mxu0 0
  %264 = vmatpush1.bf16.msra.mxu0 0
  %265 = vmatprep.mubr.bf16.mxu0 0
  %266 = vmatmul.mubr.bf16.gmra.mrb[0].mxu0 %v181
  %v267 = vpop.f32.mrb[0].mxu0
  %v268 = vadd.f32 %v159, %v267
  %v269 = vpop.f32.mrb[0].mxu0
  %v270 = vpop.f32.mrb[0].mxu0
  %v271 = vadd.f32 %v162, %v270
  %v272 = vpop.f32.mrb[0].mxu0
  %273 = vmatprep.mubr.bf16.mxu0 0
  %274 = vmatmul.mubr.bf16.gmra.mrb[0].mxu0 %v182
  %v275 = vpop.f32.mrb[0].mxu0
  %v276 = vadd.f32 %v167, %v275
  %v277 = vpop.f32.mrb[0].mxu0
  %v278 = vpop.f32.mrb[0].mxu0
  %v279 = vadd.f32 %v170, %v278
  %v280 = vpop.f32.mrb[0].mxu0
  %281 = vdwg.mxu0
  %v282 = vld [vmem:[%s4] sm:$0x1]
  %v284 = vlaneseq
  %v285 = vshrl.u32 %v284, 7
  %v286 = vsub.s32 0, %v285
  %v287 = vrot.slane %v282, %v286
  %v289 = vmul.f32 %v268, %v287
  %v290 = vmul.f32 %v271, %v287
  %v291 = vmul.f32 %v276, %v287
  %v292 = vmul.f32 %v279, %v287
  %v293 = vld [vmem:[%s5] sm:$0x1]
  %v295 = vlaneseq
  %v296 = vshrl.u32 %v295, 7
  %v297 = vsub.s32 0, %v296
  %v298 = vrot.slane %v293, %v297
  %v300 = vadd.f32 %v289, %v298
  %v301 = vadd.f32 %v290, %v298
  %v302 = vadd.f32 %v291, %v298
  %v303 = vadd.f32 %v292, %v298
  %v304 = vsub.f32 0.0, %v300
  %v305 = vsub.f32 0.0, %v301
  %v306 = vsub.f32 0.0, %v302
  %v307 = vsub.f32 0.0, %v303
  %v308 = vmul.f32 %v304, 1.442695
  %v309 = vpow.pop %v308
  %v310 = vmul.f32 %v305, 1.442695
  %v311 = vpow.pop %v310
  %v312 = vmul.f32 %v306, 1.442695
  %v313 = vpow.pop %v312
  %v314 = vmul.f32 %v307, 1.442695
  %v315 = vpow.pop %v314
  %v316 = vadd.f32 %v309, 1.0
  %v317 = vadd.f32 %v311, 1.0
  %v318 = vadd.f32 %v313, 1.0
  %v319 = vadd.f32 %v315, 1.0
  %v320 = vrcp.pop %v316
  %v321 = vrcp.pop %v317
  %v322 = vrcp.pop %v318
  %v323 = vrcp.pop %v319
  %v324 = vmul.f32 %v300, %v320
  %v325 = vmul.f32 %v301, %v321
  %v326 = vmul.f32 %v302, %v322
  %v327 = vmul.f32 %v303, %v323
  %v328 = vpack.c.bf16 %v325, %v324
  %v329 = vpack.c.bf16 %v327, %v326
  %v332 = vunpack.c.l.b16 %v328
  %v333 = vunpack.c.h.b16 %v328
  %v334 = vunpack.c.l.b16 %v329
  %v335 = vunpack.c.h.b16 %v329
  %v336 = vpack.c.b16 %v332, %v332
  %v337 = vpack.c.b16 %v333, %v333
  %v338 = vpack.c.b16 %v334, %v334
  %v339 = vpack.c.b16 %v335, %v335
  %344 = vst [vmem:[%s6] sm:$0xf] %v336
  %345 = vst [vmem:[%s6 + $0x4] sm:$0xf] %v337
  %346 = vst [vmem:[%s6 + $0x8] sm:$0xf] %v338
  %347 = vst [vmem:[%s6 + $0xc] sm:$0xf] %v339
  // Predicated region
  $region26: #{_lambda_.36} parent=0 // pred_check
    _
  $region27: #{_lambda_.36} parent=0 // pred_check_branch
    %349 = sbr.rel (0) target = $region29
  $region28: #{_lambda_.36} parent=0 // pred_region
    _
  $region29: #{_lambda_.36} parent=0 // pred_fallthru
    _
  // Predicated region
  $region30: #{_lambda_.36} parent=0 // pred_check
    _
  $region31: #{_lambda_.36} parent=0 // pred_check_branch
    %351 = sbr.rel (0) target = $region33
  $region32: #{_lambda_.36} parent=0 // pred_region
    _
  $region33: #{_lambda_.36} parent=0 // pred_fallthru
    _

// kernel: _lambda_.39
$region0: #{_lambda_.39}
  #allocation0 [shape = 'u32[]', space=smem, size = 0x4, offset = 0x4, fixed_abs, tag = 'smem constant byte address 0x4 - core index']
  #allocation1 [shape = 'u32[144,128]{1,0:T(1,128)}', space=vmem, size = 0x12000, scoped, tag = 'internal scratch']
  %s0 = inlined_call_operand.vmem [shape: bf16[32,128], index: 0, kind: input, shape index: {}]
  %s1 = inlined_call_operand.vmem [shape: bf16[32,128], index: 1, kind: input, shape index: {}]
  %s2 = inlined_call_operand.vmem [shape: bf16[128,128], index: 2, kind: input, shape index: {}]
  %s3 = inlined_call_operand.vmem [shape: bf16[128,128], index: 3, kind: input, shape index: {}]
  %s4 = inlined_call_operand.vmem [shape: f32[1,128], index: 4, kind: input, shape index: {}]
  %s5 = inlined_call_operand.vmem [shape: f32[1,128], index: 5, kind: input, shape index: {}]
  %s6 = inlined_call_operand.hbm [shape: f32[32,128], index: 6, kind: output, shape index: {}]
  %s7 = sld [smem:[#allocation0]]
  $region34: #{_lambda_.39} parent=0
    _
  %s9 = ssub.s32 1, %s7
  %s10 = scalar_select 0, %s9, %s7
  $region1: #{_lambda_.39} parent=0
    #allocation2 [shape = 'u8[16384]{0}', space=vmem, size = 0x4000, scoped, tag = 'output window, operand 0, single buffered']
    #allocation3 [shape = 's32[1]{0}', space=sflag, size = 0x4, scoped, tag = 'scoped memory for _lambda_.39']
    %11 = vsyncpa [#allocation3], 0
    // Predicated region
    $region2: #{_lambda_.39} parent=1 // pred_check
      _
    $region3: #{_lambda_.39} parent=1 // pred_check_branch
      %13 = sbr.rel (0) target = $region5
    $region4: #{_lambda_.39} parent=1 // pred_region
      _
    $region5: #{_lambda_.39} parent=1 // pred_fallthru
      _
    // Predicated region
    $region6: #{_lambda_.39} parent=1 // pred_check
      _
    $region7: #{_lambda_.39} parent=1 // pred_check_branch
      %15 = sbr.rel (0) target = $region9
    $region8: #{_lambda_.39} parent=1 // pred_region
      _
    $region9: #{_lambda_.39} parent=1 // pred_fallthru
      _
    // Predicated region
    $region10: #{_lambda_.39} parent=1 // pred_check
      _
    $region11: #{_lambda_.39} parent=1 // pred_check_branch
      %17 = sbr.rel (0) target = $region13
    $region12: #{_lambda_.39} parent=1 // pred_region
      _
    $region13: #{_lambda_.39} parent=1 // pred_fallthru
      _
    // Predicated region
    $region14: #{_lambda_.39} parent=1 // pred_check
      _
    $region15: #{_lambda_.39} parent=1 // pred_check_branch
      %19 = sbr.rel (0) target = $region17
    $region16: #{_lambda_.39} parent=1 // pred_region
      _
    $region17: #{_lambda_.39} parent=1 // pred_fallthru
      _
    // Predicated region
    $region18: #{_lambda_.39} parent=1 // pred_check
      _
    $region19: #{_lambda_.39} parent=1 // pred_check_branch
      %21 = sbr.rel (0) target = $region21
    $region20: #{_lambda_.39} parent=1 // pred_region
      _
    $region21: #{_lambda_.39} parent=1 // pred_fallthru
      _
    // Predicated region
    $region22: #{_lambda_.39} parent=1 // pred_check
      _
    $region23: #{_lambda_.39} parent=1 // pred_check_branch
      %23 = sbr.rel (0) target = $region25
    $region24: #{_lambda_.39} parent=1 // pred_region
      _
    $region25: #{_lambda_.39} parent=1 // pred_fallthru
      _
    %v25 = vld [vmem:[%s0] sm:$0xf]
    %v26 = vld [vmem:[%s0 + $0x4] sm:$0xf]
    %v27 = vld [vmem:[%s0 + $0x8] sm:$0xf]
    %v28 = vld [vmem:[%s0 + $0xc] sm:$0xf]
    %v29 = vld [vmem:[%s2] sm:$0xf]
    %v30 = vld [vmem:[%s2 + $0x4] sm:$0xf]
    %v31 = vld [vmem:[%s2 + $0x8] sm:$0xf]
    %v32 = vld [vmem:[%s2 + $0xc] sm:$0xf]
    %v33 = vld [vmem:[%s2 + $0x10] sm:$0xf]
    %v34 = vld [vmem:[%s2 + $0x14] sm:$0xf]
    %v35 = vld [vmem:[%s2 + $0x18] sm:$0xf]
    %v36 = vld [vmem:[%s2 + $0x1c] sm:$0xf]
    %v37 = vld [vmem:[%s2 + $0x20] sm:$0xf]
    %v38 = vld [vmem:[%s2 + $0x24] sm:$0xf]
    %v39 = vld [vmem:[%s2 + $0x28] sm:$0xf]
    %v40 = vld [vmem:[%s2 + $0x2c] sm:$0xf]
    %v41 = vld [vmem:[%s2 + $0x30] sm:$0xf]
    %v42 = vld [vmem:[%s2 + $0x34] sm:$0xf]
    %v43 = vld [vmem:[%s2 + $0x38] sm:$0xf]
    %v44 = vld [vmem:[%s2 + $0x3c] sm:$0xf]
    %v45 = vld [vmem:[%s1] sm:$0xf]
    %v46 = vld [vmem:[%s1 + $0x4] sm:$0xf]
    %v47 = vld [vmem:[%s1 + $0x8] sm:$0xf]
    %v48 = vld [vmem:[%s1 + $0xc] sm:$0xf]
    %v49 = vld [vmem:[%s3] sm:$0xf]
    %v50 = vld [vmem:[%s3 + $0x4] sm:$0xf]
    %v51 = vld [vmem:[%s3 + $0x8] sm:$0xf]
    %v52 = vld [vmem:[%s3 + $0xc] sm:$0xf]
    %v53 = vld [vmem:[%s3 + $0x10] sm:$0xf]
    %v54 = vld [vmem:[%s3 + $0x14] sm:$0xf]
    %v55 = vld [vmem:[%s3 + $0x18] sm:$0xf]
    %v56 = vld [vmem:[%s3 + $0x1c] sm:$0xf]
    %v57 = vld [vmem:[%s3 + $0x20] sm:$0xf]
    %v58 = vld [vmem:[%s3 + $0x24] sm:$0xf]
    %v59 = vld [vmem:[%s3 + $0x28] sm:$0xf]
    %v60 = vld [vmem:[%s3 + $0x2c] sm:$0xf]
    %v61 = vld [vmem:[%s3 + $0x30] sm:$0xf]
    %v62 = vld [vmem:[%s3 + $0x34] sm:$0xf]
    %v63 = vld [vmem:[%s3 + $0x38] sm:$0xf]
    %v64 = vld [vmem:[%s3 + $0x3c] sm:$0xf]
    %v69 = vunpack.c.l.b16 %v45
    %v70 = vunpack.c.l.b16 %v46
    %v71 = vunpack.c.l.b16 %v47
    %v72 = vunpack.c.l.b16 %v48
    %v73 = vpack.c.b16 %v70, %v69
    %v74 = vpack.c.b16 %v72, %v71
    %v93 = vunpack.c.l.b16 %v49
    %v94 = vunpack.c.l.b16 %v50
    %v95 = vunpack.c.l.b16 %v51
    %v96 = vunpack.c.l.b16 %v52
    %v97 = vunpack.c.l.b16 %v53
    %v98 = vunpack.c.l.b16 %v54
    %v99 = vunpack.c.l.b16 %v55
    %v100 = vunpack.c.l.b16 %v56
    %v101 = vunpack.c.l.b16 %v57
    %v102 = vunpack.c.l.b16 %v58
    %v103 = vunpack.c.l.b16 %v59
    %v104 = vunpack.c.l.b16 %v60
    %v105 = vunpack.c.l.b16 %v61
    %v106 = vunpack.c.l.b16 %v62
    %v107 = vunpack.c.l.b16 %v63
    %v108 = vunpack.c.l.b16 %v64
    %v109 = vpack.c.b16 %v94, %v93
    %v110 = vpack.c.b16 %v96, %v95
    %v111 = vpack.c.b16 %v98, %v97
    %v112 = vpack.c.b16 %v100, %v99
    %v113 = vpack.c.b16 %v102, %v101
    %v114 = vpack.c.b16 %v104, %v103
    %v115 = vpack.c.b16 %v106, %v105
    %v116 = vpack.c.b16 %v108, %v107
    %125 = vmatprep.subr.bf16.mxu0 0
    %126 = vmatpush1.bf16.msra.mxu0 %v109
    %127 = vmatprep.subr.bf16.mxu0 0
    %128 = vmatpush1.bf16.msra.mxu0 %v110
    %129 = vmatprep.subr.bf16.mxu0 0
    %130 = vmatpush1.bf16.msra.mxu0 %v111
    %131 = vmatprep.subr.bf16.mxu0 0
    %132 = vmatpush1.bf16.msra.mxu0 %v112
    %133 = vmatprep.subr.bf16.mxu0 0
    %134 = vmatpush1.bf16.msra.mxu0 %v113
    %135 = vmatprep.subr.bf16.mxu0 0
    %136 = vmatpush1.bf16.msra.mxu0 %v114
    %137 = vmatprep.subr.bf16.mxu0 0
    %138 = vmatpush1.bf16.msra.mxu0 %v115
    %139 = vmatprep.subr.bf16.mxu0 0
    %140 = vmatpush1.bf16.msra.mxu0 %v116
    %141 = vmatprep.subr.bf16.mxu0 0
    %142 = vmatpush1.bf16.msra.mxu0 0
    %143 = vmatprep.subr.bf16.mxu0 0
    %144 = vmatpush1.bf16.msra.mxu0 0
    %145 = vmatprep.subr.bf16.mxu0 0
    %146 = vmatpush1.bf16.msra.mxu0 0
    %147 = vmatprep.subr.bf16.mxu0 0
    %148 = vmatpush1.bf16.msra.mxu0 0
    %149 = vmatprep.subr.bf16.mxu0 0
    %150 = vmatpush1.bf16.msra.mxu0 0
    %151 = vmatprep.subr.bf16.mxu0 0
    %152 = vmatpush1.bf16.msra.mxu0 0
    %153 = vmatprep.subr.bf16.mxu0 0
    %154 = vmatpush1.bf16.msra.mxu0 0
    %155 = vmatprep.subr.bf16.mxu0 0
    %156 = vmatpush1.bf16.msra.mxu0 0
    %157 = vmatprep.mubr.bf16.mxu0 0
    %158 = vmatmul.mubr.bf16.gmra.mrb[0].mxu0 %v73
    %v159 = vpop.f32.mrb[0].mxu0
    %v160 = vadd.f32 0.0, %v159
    %v161 = vpop.f32.mrb[0].mxu0
    %v162 = vpop.f32.mrb[0].mxu0
    %v163 = vadd.f32 0.0, %v162
    %v164 = vpop.f32.mrb[0].mxu0
    %165 = vmatprep.mubr.bf16.mxu0 0
    %166 = vmatmul.mubr.bf16.gmra.mrb[0].mxu0 %v74
    %v167 = vpop.f32.mrb[0].mxu0
    %v168 = vadd.f32 0.0, %v167
    %v169 = vpop.f32.mrb[0].mxu0
    %v170 = vpop.f32.mrb[0].mxu0
    %v171 = vadd.f32 0.0, %v170
    %v172 = vpop.f32.mrb[0].mxu0
    %173 = vdwg.mxu0
    %v178 = vunpack.c.l.b16 %v25
    %v179 = vunpack.c.l.b16 %v26
    %v180 = vunpack.c.l.b16 %v27
    %v181 = vunpack.c.l.b16 %v28
    %v182 = vpack.c.b16 %v179, %v178
    %v183 = vpack.c.b16 %v181, %v180
    %v202 = vunpack.c.l.b16 %v29
    %v203 = vunpack.c.l.b16 %v30
    %v204 = vunpack.c.l.b16 %v31
    %v205 = vunpack.c.l.b16 %v32
    %v206 = vunpack.c.l.b16 %v33
    %v207 = vunpack.c.l.b16 %v34
    %v208 = vunpack.c.l.b16 %v35
    %v209 = vunpack.c.l.b16 %v36
    %v210 = vunpack.c.l.b16 %v37
    %v211 = vunpack.c.l.b16 %v38
    %v212 = vunpack.c.l.b16 %v39
    %v213 = vunpack.c.l.b16 %v40
    %v214 = vunpack.c.l.b16 %v41
    %v215 = vunpack.c.l.b16 %v42
    %v216 = vunpack.c.l.b16 %v43
    %v217 = vunpack.c.l.b16 %v44
    %v218 = vpack.c.b16 %v203, %v202
    %v219 = vpack.c.b16 %v205, %v204
    %v220 = vpack.c.b16 %v207, %v206
    %v221 = vpack.c.b16 %v209, %v208
    %v222 = vpack.c.b16 %v211, %v210
    %v223 = vpack.c.b16 %v213, %v212
    %v224 = vpack.c.b16 %v215, %v214
    %v225 = vpack.c.b16 %v217, %v216
    %234 = vmatprep.subr.bf16.mxu0 0
    %235 = vmatpush1.bf16.msra.mxu0 %v218
    %236 = vmatprep.subr.bf16.mxu0 0
    %237 = vmatpush1.bf16.msra.mxu0 %v219
    %238 = vmatprep.subr.bf16.mxu0 0
    %239 = vmatpush1.bf16.msra.mxu0 %v220
    %240 = vmatprep.subr.bf16.mxu0 0
    %241 = vmatpush1.bf16.msra.mxu0 %v221
    %242 = vmatprep.subr.bf16.mxu0 0
    %243 = vmatpush1.bf16.msra.mxu0 %v222
    %244 = vmatprep.subr.bf16.mxu0 0
    %245 = vmatpush1.bf16.msra.mxu0 %v223
    %246 = vmatprep.subr.bf16.mxu0 0
    %247 = vmatpush1.bf16.msra.mxu0 %v224
    %248 = vmatprep.subr.bf16.mxu0 0
    %249 = vmatpush1.bf16.msra.mxu0 %v225
    %250 = vmatprep.subr.bf16.mxu0 0
    %251 = vmatpush1.bf16.msra.mxu0 0
    %252 = vmatprep.subr.bf16.mxu0 0
    %253 = vmatpush1.bf16.msra.mxu0 0
    %254 = vmatprep.subr.bf16.mxu0 0
    %255 = vmatpush1.bf16.msra.mxu0 0
    %256 = vmatprep.subr.bf16.mxu0 0
    %257 = vmatpush1.bf16.msra.mxu0 0
    %258 = vmatprep.subr.bf16.mxu0 0
    %259 = vmatpush1.bf16.msra.mxu0 0
    %260 = vmatprep.subr.bf16.mxu0 0
    %261 = vmatpush1.bf16.msra.mxu0 0
    %262 = vmatprep.subr.bf16.mxu0 0
    %263 = vmatpush1.bf16.msra.mxu0 0
    %264 = vmatprep.subr.bf16.mxu0 0
    %265 = vmatpush1.bf16.msra.mxu0 0
    %266 = vmatprep.mubr.bf16.mxu0 0
    %267 = vmatmul.mubr.bf16.gmra.mrb[0].mxu0 %v182
    %v268 = vpop.f32.mrb[0].mxu0
    %v269 = vadd.f32 %v160, %v268
    %v270 = vpop.f32.mrb[0].mxu0
    %v271 = vpop.f32.mrb[0].mxu0
    %v272 = vadd.f32 %v163, %v271
    %v273 = vpop.f32.mrb[0].mxu0
    %274 = vmatprep.mubr.bf16.mxu0 0
    %275 = vmatmul.mubr.bf16.gmra.mrb[0].mxu0 %v183
    %v276 = vpop.f32.mrb[0].mxu0
    %v277 = vadd.f32 %v168, %v276
    %v278 = vpop.f32.mrb[0].mxu0
    %v279 = vpop.f32.mrb[0].mxu0
    %v280 = vadd.f32 %v171, %v279
    %v281 = vpop.f32.mrb[0].mxu0
    %282 = vdwg.mxu0
    %v283 = vld [vmem:[%s4] sm:$0x1]
    %v285 = vlaneseq
    %v286 = vshrl.u32 %v285, 7
    %v287 = vsub.s32 0, %v286
    %v288 = vrot.slane %v283, %v287
    %v290 = vmul.f32 %v269, %v288
    %v291 = vmul.f32 %v272, %v288
    %v292 = vmul.f32 %v277, %v288
    %v293 = vmul.f32 %v280, %v288
    %v294 = vld [vmem:[%s5] sm:$0x1]
    %v296 = vlaneseq
    %v297 = vshrl.u32 %v296, 7
    %v298 = vsub.s32 0, %v297
    %v299 = vrot.slane %v294, %v298
    %v301 = vadd.f32 %v290, %v299
    %v302 = vadd.f32 %v291, %v299
    %v303 = vadd.f32 %v292, %v299
    %v304 = vadd.f32 %v293, %v299
    %v305 = vsub.f32 0.0, %v301
    %v306 = vsub.f32 0.0, %v302
    %v307 = vsub.f32 0.0, %v303
    %v308 = vsub.f32 0.0, %v304
    %v309 = vmul.f32 %v305, 1.442695
    %v310 = vpow.pop %v309
    %v311 = vmul.f32 %v306, 1.442695
    %v312 = vpow.pop %v311
    %v313 = vmul.f32 %v307, 1.442695
    %v314 = vpow.pop %v313
    %v315 = vmul.f32 %v308, 1.442695
    %v316 = vpow.pop %v315
    %v317 = vadd.f32 %v310, 1.0
    %v318 = vadd.f32 %v312, 1.0
    %v319 = vadd.f32 %v314, 1.0
    %v320 = vadd.f32 %v316, 1.0
    %v321 = vrcp.pop %v317
    %v322 = vrcp.pop %v318
    %v323 = vrcp.pop %v319
    %v324 = vrcp.pop %v320
    %v325 = vmul.f32 %v301, %v321
    %v326 = vmul.f32 %v302, %v322
    %v327 = vmul.f32 %v303, %v323
    %v328 = vmul.f32 %v304, %v324
    %329 = vst [vmem:[#allocation2] sm:$0xff] %v325
    %330 = vst [vmem:[#allocation2 + $0x8] sm:$0xff] %v326
    %331 = vst [vmem:[#allocation2 + $0x10] sm:$0xff] %v327
    %332 = vst [vmem:[#allocation2 + $0x18] sm:$0xff] %v328
    // Predicated region
    $region26: #{_lambda_.39} parent=1 // pred_check
      _
    $region27: #{_lambda_.39} parent=1 // pred_check_branch
      %334 = sbr.rel (0) target = $region29
    $region28: #{_lambda_.39} parent=1 // pred_region
      %s336 = ssub.s32 512, 512
      %337 = vsyncadd [#allocation3], %s336
      %s338 = sshll.u32 [#allocation2], 4
      %s339 = int_to_ptr.vmem [resolvable:$true] %s338
      %344 = dma.vmem_to_hbm [thread:$0]  %s339, 512, %s6, [#allocation3], 128, 128, 8
    $region29: #{_lambda_.39} parent=1 // pred_fallthru
      _
    // Predicated region
    $region30: #{_lambda_.39} parent=1 // pred_check
      _
    $region31: #{_lambda_.39} parent=1 // pred_check_branch
      %346 = sbr.rel (0) target = $region33
    $region32: #{_lambda_.39} parent=1 // pred_region
      %347 = dma.done [#allocation3], 512
    $region33: #{_lambda_.39} parent=1 // pred_fallthru
      _
    %348 = vsyncpa [#allocation3], 1

</llo_original>
